<compile_context>
chip_gen: v7x
topology: tpu7x:2x2x1
jax: 0.10.0
libtpu: 0.0.40
codegen_flags: <defaults>
</compile_context>

<pallas_src>
import functools

import numpy as np
import jax
import jax.numpy as jnp
from jax.experimental import pallas as pl
from jax.experimental.pallas import tpu as pltpu


_VMEM = pl.BlockSpec(memory_space=pltpu.MemorySpace.VMEM)
_TAPS = [(oh, ow) for oh in (-1, 0, 1) for ow in (-1, 0, 1)]


# ----------------------------- fused Pallas kernel -------------------------- #

def _mini_unet_kernel(conv_widths, *refs):
    """Whole Mini_UNet forward; activations are (C, N*H*W) f32 VMEM values.

    refs layout (33 inputs + 1 output):
      [0]           x        (Cin, M0)       f32
      [1 + 3l + 0]  weight_l (9, Cout, Cin)  bf16  (BN scale folded in)
      [1 + 3l + 1]  shift_l  (Cout, 1)       f32   ((bias-mean)*scale+beta)
      [1 + 3l + 2]  masks_l  (9, M_conv)     f32   (3x3 tap border masks)
      [25:29]       down_l   (M_in, M_out)   f32   (stride-2 row selection)
      [29:33]       up_l     (M_in, M_out)   f32   (nearest-upsample selection)
      [33]          out      (Cin, M0)       f32
    """
    assert len(refs) == 34
    x_ref = refs[0]
    layer_refs = refs[1:25]
    down_refs = refs[25:29]
    up_refs = refs[29:33]
    o_ref = refs[-1]

    def conv_taps(x, layer):
        # 3x3 conv (stride 1, pad 1) on the flattened (C, M) activation:
        # 9 tap matmuls on rolled copies; invalid (wrapped / out-of-image)
        # lanes are zeroed by the precomputed per-tap mask.  bf16 MXU
        # operands, f32 accumulation; BN scale already folded into weights.
        w = layer_refs[3 * layer][...]          # (9, Cout, Cin) bf16
        masks = layer_refs[3 * layer + 2][...]  # (9, M) f32
        width = conv_widths[layer]
        m = x.shape[1]
        cout = w.shape[1]
        acc = jnp.zeros((cout, m), jnp.float32)
        for t, (oh, ow) in enumerate(_TAPS):
            s = oh * width + ow                 # flat row offset of this tap
            xt = x if s == 0 else jnp.roll(x, (-s) % m, axis=1)
            part = jnp.dot(w[t], xt.astype(jnp.bfloat16),
                           preferred_element_type=jnp.float32)
            if s == 0:
                acc = acc + part
            else:
                acc = acc + part * masks[t:t + 1, :]
        return acc

    def shift_of(layer):
        return layer_refs[3 * layer + 1][...]   # (Cout, 1) f32

    x0 = x_ref[...]
    k = x0
    feats = []

    # ---- encoder: Conv(stride) + BN + ReLU.  The conv runs at the input
    #      resolution; the stride is an exact row-subsample (selection matmul),
    #      which commutes with the per-channel shift and the ReLU.
    for i in range(4):
        acc = conv_taps(k, i)
        acc = jnp.dot(acc, down_refs[i][...], preferred_element_type=jnp.float32)
        k = jnp.maximum(acc + shift_of(i), 0.0)
        feats.append(k)

    # ---- decoder 0..2: nearest-upsample + Conv + BN + ReLU, then skip add.
    for i in range(3):
        up = jnp.dot(k, up_refs[i][...], preferred_element_type=jnp.float32)
        acc = conv_taps(up, 4 + i)
        k = jnp.maximum(acc + shift_of(4 + i), 0.0) + feats[2 - i]

    # ---- final decoder layer + residual with the network input.
    up = jnp.dot(k, up_refs[3][...], preferred_element_type=jnp.float32)
    acc = conv_taps(up, 7)
    o_ref[...] = jnp.maximum(acc + shift_of(7), 0.0) + x0


# --------------------------- static structure helpers ----------------------- #

def _plan(h, w):
    """Per-layer spatial plan (k=3, pad=1, PyTorch size arithmetic)."""
    enc_strides = [(1, 2), (2, 2), (2, 2), (2, 2)]
    enc = []
    hh, ww = h, w
    for sh, sw in enc_strides:
        ho, wo = (hh - 1) // sh + 1, (ww - 1) // sw + 1
        enc.append((hh, ww, ho, wo, sh, sw))
        hh, ww = ho, wo
    dec = []
    for _ in range(3):                      # Upsample(scale_factor=2)
        hu, wu = 2 * hh, 2 * ww
        dec.append((hh, ww, hu, wu))
        hh, ww = hu, wu
    dec.append((hh, ww, h, w))              # Upsample(size=(h, w))
    return enc, dec


def _tap_masks(n, h, w):
    """(9, n*h*w) 0/1 masks: valid 3x3 tap source positions (pad=1 borders)."""
    rows = []
    hh, ww = np.arange(h), np.arange(w)
    for oh, ow in _TAPS:
        mh = ((hh + oh >= 0) & (hh + oh < h)).astype(np.float32)
        mw = ((ww + ow >= 0) & (ww + ow < w)).astype(np.float32)
        rows.append(np.tile((mh[:, None] * mw[None, :]).reshape(-1), n))
    return jnp.asarray(np.stack(rows, axis=0))


def _row_select(n, h_in, w_in, h_idx, w_idx):
    """(n*h_in*w_in, n*h_out*w_out) 0/1 matrix: dst (b,i,j) <- src (b,h_idx[i],w_idx[j])."""
    h_out, w_out = len(h_idx), len(w_idx)
    mat = np.zeros((n * h_in * w_in, n * h_out * w_out), np.float32)
    dst = 0
    for b in range(n):
        for i in range(h_out):
            for j in range(w_out):
                mat[(b * h_in + h_idx[i]) * w_in + w_idx[j], dst] = 1.0
                dst += 1
    return jnp.asarray(mat)


# --------------------------- parameter creation ------------------------------ #

def init_conv_bn(key, cin, cout, scale=0.05, eps=1e-5):
    ks = jax.random.split(key, 6)
    w = jax.random.normal(ks[0], (3, 3, cin, cout), jnp.float32) * scale
    b = jax.random.normal(ks[1], (cout,), jnp.float32) * scale
    gamma = 1.0 + 0.1 * jax.random.normal(ks[2], (cout,), jnp.float32)
    beta = 0.1 * jax.random.normal(ks[3], (cout,), jnp.float32)
    mean = 0.1 * jax.random.normal(ks[4], (cout,), jnp.float32)
    var = 1.0 + 0.1 * jnp.abs(jax.random.normal(ks[5], (cout,), jnp.float32))
    s = gamma / jnp.sqrt(var + eps)
    # Fold the BN scale into the conv weight; keep only the per-channel shift.
    # w layout matches torch (Cout,Cin,kh,kw).transpose(2,3,1,0) -> (kh,kw,Cin,Cout).
    w_taps = jnp.transpose(w * s, (0, 1, 3, 2)).reshape(9, cout, cin)
    return {
        "w": w_taps.astype(jnp.bfloat16),                    # (9, Cout, Cin)
        "shift": ((b - mean) * s + beta).reshape(cout, 1),   # (Cout, 1) f32
    }


def build_mini_unet(key, n, h, w, in_channels, num_channels):
    enc_plan, dec_plan = _plan(h, w)
    pk = jax.random.split(key, 8)
    enc_cins = [in_channels, num_channels, num_channels, num_channels]
    dec_couts = [num_channels, num_channels, num_channels, in_channels]
    layers = [init_conv_bn(pk[i], enc_cins[i], num_channels) for i in range(4)]
    layers += [init_conv_bn(pk[4 + i], num_channels, dec_couts[i]) for i in range(4)]

    masks = [_tap_masks(n, hi, wi) for (hi, wi, _, _, _, _) in enc_plan]
    masks += [_tap_masks(n, hu, wu) for (_, _, hu, wu) in dec_plan]

    down = [_row_select(n, hi, wi,
                        [r * sh for r in range(ho)], [c * sw for c in range(wo)])
            for (hi, wi, ho, wo, sh, sw) in enc_plan]
    # PyTorch 'nearest': src = floor(dst * in / out)
    up = [_row_select(n, hi, wi,
                      [(r * hi) // hu for r in range(hu)],
                      [(c * wi) // wu for c in range(wu)])
          for (hi, wi, hu, wu) in dec_plan]

    params = {"layers": layers, "masks": masks, "down": down, "up": up}
    conv_widths = tuple([wi for (_, wi, _, _, _, _) in enc_plan] +
                        [wu for (_, _, _, wu) in dec_plan])
    return params, conv_widths


# --------------------------------- wrapper ----------------------------------- #

def mini_unet_forward(x_nchw, params, conv_widths):
    n, c, h, w = x_nchw.shape
    m0 = n * h * w
    x_t = jnp.transpose(x_nchw, (1, 0, 2, 3)).reshape(c, m0)   # (C, N*H*W)

    operands = [x_t]
    for layer, mask in zip(params["layers"], params["masks"]):
        operands += [layer["w"], layer["shift"], mask]
    operands += list(params["down"]) + list(params["up"])

    out_t = pl.pallas_call(
        functools.partial(_mini_unet_kernel, conv_widths),
        out_shape=jax.ShapeDtypeStruct((c, m0), jnp.float32),
        in_specs=[_VMEM] * len(operands),
        out_specs=_VMEM,
    )(*operands)
    return jnp.transpose(out_t.reshape(c, n, h, w), (1, 0, 2, 3))  # NCHW


if __name__ == "__main__":
    # Small shapes consistent with the module: Mini_UNet(h=16, w=16, ReLU,
    # in_channels=32, num_channels=8), batch=2.
    H = W = 16
    IN_C = 32
    NUM_C = 8
    N = 2

    root = jax.random.PRNGKey(0)
    kx, kp = jax.random.split(root)
    x = jax.random.normal(kx, (N, IN_C, H, W), jnp.float32)

    params, conv_widths = build_mini_unet(kp, N, H, W, IN_C, NUM_C)

    fwd = jax.jit(lambda xx, pp: mini_unet_forward(xx, pp, conv_widths))
    out = fwd(x, params)
    jax.block_until_ready(out)
    assert out.shape == (N, IN_C, H, W), out.shape
    assert out.dtype == jnp.float32
    print("KERNEL_OK")
</pallas_src>

<mosaic_0001>
module attributes {stable_mosaic.version = 11 : i64} {
  func.func @_mini_unet_kernel(%arg0: memref<32x512xf32, #tpu.memory_space<vmem>>, %arg1: memref<9x8x32xbf16, #tpu.memory_space<vmem>>, %arg2: memref<8x1xf32, #tpu.memory_space<vmem>>, %arg3: memref<9x512xf32, #tpu.memory_space<vmem>>, %arg4: memref<9x8x8xbf16, #tpu.memory_space<vmem>>, %arg5: memref<8x1xf32, #tpu.memory_space<vmem>>, %arg6: memref<9x256xf32, #tpu.memory_space<vmem>>, %arg7: memref<9x8x8xbf16, #tpu.memory_space<vmem>>, %arg8: memref<8x1xf32, #tpu.memory_space<vmem>>, %arg9: memref<9x64xf32, #tpu.memory_space<vmem>>, %arg10: memref<9x8x8xbf16, #tpu.memory_space<vmem>>, %arg11: memref<8x1xf32, #tpu.memory_space<vmem>>, %arg12: memref<9x16xf32, #tpu.memory_space<vmem>>, %arg13: memref<9x8x8xbf16, #tpu.memory_space<vmem>>, %arg14: memref<8x1xf32, #tpu.memory_space<vmem>>, %arg15: memref<9x16xf32, #tpu.memory_space<vmem>>, %arg16: memref<9x8x8xbf16, #tpu.memory_space<vmem>>, %arg17: memref<8x1xf32, #tpu.memory_space<vmem>>, %arg18: memref<9x64xf32, #tpu.memory_space<vmem>>, %arg19: memref<9x8x8xbf16, #tpu.memory_space<vmem>>, %arg20: memref<8x1xf32, #tpu.memory_space<vmem>>, %arg21: memref<9x256xf32, #tpu.memory_space<vmem>>, %arg22: memref<9x32x8xbf16, #tpu.memory_space<vmem>>, %arg23: memref<32x1xf32, #tpu.memory_space<vmem>>, %arg24: memref<9x512xf32, #tpu.memory_space<vmem>>, %arg25: memref<512x256xf32, #tpu.memory_space<vmem>>, %arg26: memref<256x64xf32, #tpu.memory_space<vmem>>, %arg27: memref<64x16xf32, #tpu.memory_space<vmem>>, %arg28: memref<16x4xf32, #tpu.memory_space<vmem>>, %arg29: memref<4x16xf32, #tpu.memory_space<vmem>>, %arg30: memref<16x64xf32, #tpu.memory_space<vmem>>, %arg31: memref<64x256xf32, #tpu.memory_space<vmem>>, %arg32: memref<256x512xf32, #tpu.memory_space<vmem>>, %arg33: memref<32x512xf32, #tpu.memory_space<vmem>>) attributes {dimension_semantics = [], scalar_prefetch = 0 : i64, scratch_operands = 0 : i64, tpu.core_type = #tpu.core_type<tc>} {
    %c0 = arith.constant 0 : index
    %c0_0 = arith.constant 0 : index
    %0 = vector.load %arg0[%c0, %c0_0] : memref<32x512xf32, #tpu.memory_space<vmem>>, vector<32x512xf32>
    %c0_1 = arith.constant 0 : index
    %c0_2 = arith.constant 0 : index
    %c0_3 = arith.constant 0 : index
    %1 = vector.load %arg1[%c0_1, %c0_2, %c0_3] : memref<9x8x32xbf16, #tpu.memory_space<vmem>>, vector<9x8x32xbf16>
    %c0_4 = arith.constant 0 : index
    %c0_5 = arith.constant 0 : index
    %2 = vector.load %arg3[%c0_4, %c0_5] : memref<9x512xf32, #tpu.memory_space<vmem>>, vector<9x512xf32>
    %cst = arith.constant 0.000000e+00 : f32
    %3 = vector.broadcast %cst : f32 to vector<8x512xf32>
    %4 = vector.extract_strided_slice %0 {offsets = [0, 495], sizes = [32, 17], strides = [1, 1]} : vector<32x512xf32> to vector<32x17xf32>
    %5 = vector.extract_strided_slice %0 {offsets = [0, 0], sizes = [32, 495], strides = [1, 1]} : vector<32x512xf32> to vector<32x495xf32>
    %6 = tpu.concatenate %4, %5 in 1 : vector<32x17xf32>, vector<32x495xf32> -> vector<32x512xf32>
    %7 = vector.extract_strided_slice %1 {offsets = [0, 0, 0], sizes = [1, 8, 32], strides = [1, 1, 1]} : vector<9x8x32xbf16> to vector<1x8x32xbf16>
    %8 = vector.shape_cast %7 : vector<1x8x32xbf16> to vector<8x32xbf16>
    %9 = arith.truncf %6 : vector<32x512xf32> to vector<32x512xbf16>
    %cst_6 = arith.constant dense<0.000000e+00> : vector<8x512xf32>
    %10 = tpu.matmul %8, %9, %cst_6 {dimension_numbers = #tpu.dot_dimension_numbers<[1], [0], [0], [1], [0, 0, 1, 1], [], []>} : vector<8x32xbf16>, vector<32x512xbf16>, vector<8x512xf32> -> vector<8x512xf32>
    %11 = vector.extract_strided_slice %2 {offsets = [0, 0], sizes = [1, 512], strides = [1, 1]} : vector<9x512xf32> to vector<1x512xf32>
    %12 = vector.broadcast %11 : vector<1x512xf32> to vector<8x512xf32>
    %13 = arith.mulf %10, %12 : vector<8x512xf32>
    %14 = arith.addf %3, %13 : vector<8x512xf32>
    %15 = vector.extract_strided_slice %0 {offsets = [0, 496], sizes = [32, 16], strides = [1, 1]} : vector<32x512xf32> to vector<32x16xf32>
    %16 = vector.extract_strided_slice %0 {offsets = [0, 0], sizes = [32, 496], strides = [1, 1]} : vector<32x512xf32> to vector<32x496xf32>
    %17 = tpu.concatenate %15, %16 in 1 : vector<32x16xf32>, vector<32x496xf32> -> vector<32x512xf32>
    %18 = vector.extract_strided_slice %1 {offsets = [1, 0, 0], sizes = [1, 8, 32], strides = [1, 1, 1]} : vector<9x8x32xbf16> to vector<1x8x32xbf16>
    %19 = vector.shape_cast %18 : vector<1x8x32xbf16> to vector<8x32xbf16>
    %20 = arith.truncf %17 : vector<32x512xf32> to vector<32x512xbf16>
    %cst_7 = arith.constant dense<0.000000e+00> : vector<8x512xf32>
    %21 = tpu.matmul %19, %20, %cst_7 {dimension_numbers = #tpu.dot_dimension_numbers<[1], [0], [0], [1], [0, 0, 1, 1], [], []>} : vector<8x32xbf16>, vector<32x512xbf16>, vector<8x512xf32> -> vector<8x512xf32>
    %22 = vector.extract_strided_slice %2 {offsets = [1, 0], sizes = [1, 512], strides = [1, 1]} : vector<9x512xf32> to vector<1x512xf32>
    %23 = vector.broadcast %22 : vector<1x512xf32> to vector<8x512xf32>
    %24 = arith.mulf %21, %23 : vector<8x512xf32>
    %25 = arith.addf %14, %24 : vector<8x512xf32>
    %26 = vector.extract_strided_slice %0 {offsets = [0, 497], sizes = [32, 15], strides = [1, 1]} : vector<32x512xf32> to vector<32x15xf32>
    %27 = vector.extract_strided_slice %0 {offsets = [0, 0], sizes = [32, 497], strides = [1, 1]} : vector<32x512xf32> to vector<32x497xf32>
    %28 = tpu.concatenate %26, %27 in 1 : vector<32x15xf32>, vector<32x497xf32> -> vector<32x512xf32>
    %29 = vector.extract_strided_slice %1 {offsets = [2, 0, 0], sizes = [1, 8, 32], strides = [1, 1, 1]} : vector<9x8x32xbf16> to vector<1x8x32xbf16>
    %30 = vector.shape_cast %29 : vector<1x8x32xbf16> to vector<8x32xbf16>
    %31 = arith.truncf %28 : vector<32x512xf32> to vector<32x512xbf16>
    %cst_8 = arith.constant dense<0.000000e+00> : vector<8x512xf32>
    %32 = tpu.matmul %30, %31, %cst_8 {dimension_numbers = #tpu.dot_dimension_numbers<[1], [0], [0], [1], [0, 0, 1, 1], [], []>} : vector<8x32xbf16>, vector<32x512xbf16>, vector<8x512xf32> -> vector<8x512xf32>
    %33 = vector.extract_strided_slice %2 {offsets = [2, 0], sizes = [1, 512], strides = [1, 1]} : vector<9x512xf32> to vector<1x512xf32>
    %34 = vector.broadcast %33 : vector<1x512xf32> to vector<8x512xf32>
    %35 = arith.mulf %32, %34 : vector<8x512xf32>
    %36 = arith.addf %25, %35 : vector<8x512xf32>
    %37 = vector.extract_strided_slice %0 {offsets = [0, 511], sizes = [32, 1], strides = [1, 1]} : vector<32x512xf32> to vector<32x1xf32>
    %38 = vector.extract_strided_slice %0 {offsets = [0, 0], sizes = [32, 511], strides = [1, 1]} : vector<32x512xf32> to vector<32x511xf32>
    %39 = tpu.concatenate %37, %38 in 1 : vector<32x1xf32>, vector<32x511xf32> -> vector<32x512xf32>
    %40 = vector.extract_strided_slice %1 {offsets = [3, 0, 0], sizes = [1, 8, 32], strides = [1, 1, 1]} : vector<9x8x32xbf16> to vector<1x8x32xbf16>
    %41 = vector.shape_cast %40 : vector<1x8x32xbf16> to vector<8x32xbf16>
    %42 = arith.truncf %39 : vector<32x512xf32> to vector<32x512xbf16>
    %cst_9 = arith.constant dense<0.000000e+00> : vector<8x512xf32>
    %43 = tpu.matmul %41, %42, %cst_9 {dimension_numbers = #tpu.dot_dimension_numbers<[1], [0], [0], [1], [0, 0, 1, 1], [], []>} : vector<8x32xbf16>, vector<32x512xbf16>, vector<8x512xf32> -> vector<8x512xf32>
    %44 = vector.extract_strided_slice %2 {offsets = [3, 0], sizes = [1, 512], strides = [1, 1]} : vector<9x512xf32> to vector<1x512xf32>
    %45 = vector.broadcast %44 : vector<1x512xf32> to vector<8x512xf32>
    %46 = arith.mulf %43, %45 : vector<8x512xf32>
    %47 = arith.addf %36, %46 : vector<8x512xf32>
    %48 = vector.extract_strided_slice %1 {offsets = [4, 0, 0], sizes = [1, 8, 32], strides = [1, 1, 1]} : vector<9x8x32xbf16> to vector<1x8x32xbf16>
    %49 = vector.shape_cast %48 : vector<1x8x32xbf16> to vector<8x32xbf16>
    %50 = arith.truncf %0 : vector<32x512xf32> to vector<32x512xbf16>
    %cst_10 = arith.constant dense<0.000000e+00> : vector<8x512xf32>
    %51 = tpu.matmul %49, %50, %cst_10 {dimension_numbers = #tpu.dot_dimension_numbers<[1], [0], [0], [1], [0, 0, 1, 1], [], []>} : vector<8x32xbf16>, vector<32x512xbf16>, vector<8x512xf32> -> vector<8x512xf32>
    %52 = arith.addf %47, %51 : vector<8x512xf32>
    %53 = vector.extract_strided_slice %0 {offsets = [0, 1], sizes = [32, 511], strides = [1, 1]} : vector<32x512xf32> to vector<32x511xf32>
    %54 = vector.extract_strided_slice %0 {offsets = [0, 0], sizes = [32, 1], strides = [1, 1]} : vector<32x512xf32> to vector<32x1xf32>
    %55 = tpu.concatenate %53, %54 in 1 : vector<32x511xf32>, vector<32x1xf32> -> vector<32x512xf32>
    %56 = vector.extract_strided_slice %1 {offsets = [5, 0, 0], sizes = [1, 8, 32], strides = [1, 1, 1]} : vector<9x8x32xbf16> to vector<1x8x32xbf16>
    %57 = vector.shape_cast %56 : vector<1x8x32xbf16> to vector<8x32xbf16>
    %58 = arith.truncf %55 : vector<32x512xf32> to vector<32x512xbf16>
    %cst_11 = arith.constant dense<0.000000e+00> : vector<8x512xf32>
    %59 = tpu.matmul %57, %58, %cst_11 {dimension_numbers = #tpu.dot_dimension_numbers<[1], [0], [0], [1], [0, 0, 1, 1], [], []>} : vector<8x32xbf16>, vector<32x512xbf16>, vector<8x512xf32> -> vector<8x512xf32>
    %60 = vector.extract_strided_slice %2 {offsets = [5, 0], sizes = [1, 512], strides = [1, 1]} : vector<9x512xf32> to vector<1x512xf32>
    %61 = vector.broadcast %60 : vector<1x512xf32> to vector<8x512xf32>
    %62 = arith.mulf %59, %61 : vector<8x512xf32>
    %63 = arith.addf %52, %62 : vector<8x512xf32>
    %64 = vector.extract_strided_slice %0 {offsets = [0, 15], sizes = [32, 497], strides = [1, 1]} : vector<32x512xf32> to vector<32x497xf32>
    %65 = vector.extract_strided_slice %0 {offsets = [0, 0], sizes = [32, 15], strides = [1, 1]} : vector<32x512xf32> to vector<32x15xf32>
    %66 = tpu.concatenate %64, %65 in 1 : vector<32x497xf32>, vector<32x15xf32> -> vector<32x512xf32>
    %67 = vector.extract_strided_slice %1 {offsets = [6, 0, 0], sizes = [1, 8, 32], strides = [1, 1, 1]} : vector<9x8x32xbf16> to vector<1x8x32xbf16>
    %68 = vector.shape_cast %67 : vector<1x8x32xbf16> to vector<8x32xbf16>
    %69 = arith.truncf %66 : vector<32x512xf32> to vector<32x512xbf16>
    %cst_12 = arith.constant dense<0.000000e+00> : vector<8x512xf32>
    %70 = tpu.matmul %68, %69, %cst_12 {dimension_numbers = #tpu.dot_dimension_numbers<[1], [0], [0], [1], [0, 0, 1, 1], [], []>} : vector<8x32xbf16>, vector<32x512xbf16>, vector<8x512xf32> -> vector<8x512xf32>
    %71 = vector.extract_strided_slice %2 {offsets = [6, 0], sizes = [1, 512], strides = [1, 1]} : vector<9x512xf32> to vector<1x512xf32>
    %72 = vector.broadcast %71 : vector<1x512xf32> to vector<8x512xf32>
    %73 = arith.mulf %70, %72 : vector<8x512xf32>
    %74 = arith.addf %63, %73 : vector<8x512xf32>
    %75 = vector.extract_strided_slice %0 {offsets = [0, 16], sizes = [32, 496], strides = [1, 1]} : vector<32x512xf32> to vector<32x496xf32>
    %76 = vector.extract_strided_slice %0 {offsets = [0, 0], sizes = [32, 16], strides = [1, 1]} : vector<32x512xf32> to vector<32x16xf32>
    %77 = tpu.concatenate %75, %76 in 1 : vector<32x496xf32>, vector<32x16xf32> -> vector<32x512xf32>
    %78 = vector.extract_strided_slice %1 {offsets = [7, 0, 0], sizes = [1, 8, 32], strides = [1, 1, 1]} : vector<9x8x32xbf16> to vector<1x8x32xbf16>
    %79 = vector.shape_cast %78 : vector<1x8x32xbf16> to vector<8x32xbf16>
    %80 = arith.truncf %77 : vector<32x512xf32> to vector<32x512xbf16>
    %cst_13 = arith.constant dense<0.000000e+00> : vector<8x512xf32>
    %81 = tpu.matmul %79, %80, %cst_13 {dimension_numbers = #tpu.dot_dimension_numbers<[1], [0], [0], [1], [0, 0, 1, 1], [], []>} : vector<8x32xbf16>, vector<32x512xbf16>, vector<8x512xf32> -> vector<8x512xf32>
    %82 = vector.extract_strided_slice %2 {offsets = [7, 0], sizes = [1, 512], strides = [1, 1]} : vector<9x512xf32> to vector<1x512xf32>
    %83 = vector.broadcast %82 : vector<1x512xf32> to vector<8x512xf32>
    %84 = arith.mulf %81, %83 : vector<8x512xf32>
    %85 = arith.addf %74, %84 : vector<8x512xf32>
    %86 = vector.extract_strided_slice %0 {offsets = [0, 17], sizes = [32, 495], strides = [1, 1]} : vector<32x512xf32> to vector<32x495xf32>
    %87 = vector.extract_strided_slice %0 {offsets = [0, 0], sizes = [32, 17], strides = [1, 1]} : vector<32x512xf32> to vector<32x17xf32>
    %88 = tpu.concatenate %86, %87 in 1 : vector<32x495xf32>, vector<32x17xf32> -> vector<32x512xf32>
    %89 = vector.extract_strided_slice %1 {offsets = [8, 0, 0], sizes = [1, 8, 32], strides = [1, 1, 1]} : vector<9x8x32xbf16> to vector<1x8x32xbf16>
    %90 = vector.shape_cast %89 : vector<1x8x32xbf16> to vector<8x32xbf16>
    %91 = arith.truncf %88 : vector<32x512xf32> to vector<32x512xbf16>
    %cst_14 = arith.constant dense<0.000000e+00> : vector<8x512xf32>
    %92 = tpu.matmul %90, %91, %cst_14 {dimension_numbers = #tpu.dot_dimension_numbers<[1], [0], [0], [1], [0, 0, 1, 1], [], []>} : vector<8x32xbf16>, vector<32x512xbf16>, vector<8x512xf32> -> vector<8x512xf32>
    %93 = vector.extract_strided_slice %2 {offsets = [8, 0], sizes = [1, 512], strides = [1, 1]} : vector<9x512xf32> to vector<1x512xf32>
    %94 = vector.broadcast %93 : vector<1x512xf32> to vector<8x512xf32>
    %95 = arith.mulf %92, %94 : vector<8x512xf32>
    %96 = arith.addf %85, %95 : vector<8x512xf32>
    %c0_15 = arith.constant 0 : index
    %c0_16 = arith.constant 0 : index
    %97 = vector.load %arg25[%c0_15, %c0_16] : memref<512x256xf32, #tpu.memory_space<vmem>>, vector<512x256xf32>
    %cst_17 = arith.constant dense<0.000000e+00> : vector<8x256xf32>
    %98 = tpu.matmul %96, %97, %cst_17 {dimension_numbers = #tpu.dot_dimension_numbers<[1], [0], [0], [1], [0, 0, 1, 1], [], []>} : vector<8x512xf32>, vector<512x256xf32>, vector<8x256xf32> -> vector<8x256xf32>
    %c0_18 = arith.constant 0 : index
    %c0_19 = arith.constant 0 : index
    %99 = vector.load %arg2[%c0_18, %c0_19] : memref<8x1xf32, #tpu.memory_space<vmem>>, vector<8x1xf32>
    %100 = vector.broadcast %99 : vector<8x1xf32> to vector<8x256xf32>
    %101 = arith.addf %98, %100 : vector<8x256xf32>
    %cst_20 = arith.constant 0.000000e+00 : f32
    %102 = vector.broadcast %cst_20 : f32 to vector<8x256xf32>
    %103 = arith.maximumf %101, %102 : vector<8x256xf32>
    %c0_21 = arith.constant 0 : index
    %c0_22 = arith.constant 0 : index
    %c0_23 = arith.constant 0 : index
    %104 = vector.load %arg4[%c0_21, %c0_22, %c0_23] : memref<9x8x8xbf16, #tpu.memory_space<vmem>>, vector<9x8x8xbf16>
    %c0_24 = arith.constant 0 : index
    %c0_25 = arith.constant 0 : index
    %105 = vector.load %arg6[%c0_24, %c0_25] : memref<9x256xf32, #tpu.memory_space<vmem>>, vector<9x256xf32>
    %cst_26 = arith.constant 0.000000e+00 : f32
    %106 = vector.broadcast %cst_26 : f32 to vector<8x256xf32>
    %107 = vector.extract_strided_slice %103 {offsets = [0, 247], sizes = [8, 9], strides = [1, 1]} : vector<8x256xf32> to vector<8x9xf32>
    %108 = vector.extract_strided_slice %103 {offsets = [0, 0], sizes = [8, 247], strides = [1, 1]} : vector<8x256xf32> to vector<8x247xf32>
    %109 = tpu.concatenate %107, %108 in 1 : vector<8x9xf32>, vector<8x247xf32> -> vector<8x256xf32>
    %110 = vector.extract_strided_slice %104 {offsets = [0, 0, 0], sizes = [1, 8, 8], strides = [1, 1, 1]} : vector<9x8x8xbf16> to vector<1x8x8xbf16>
    %111 = vector.shape_cast %110 : vector<1x8x8xbf16> to vector<8x8xbf16>
    %112 = arith.truncf %109 : vector<8x256xf32> to vector<8x256xbf16>
    %cst_27 = arith.constant dense<0.000000e+00> : vector<8x256xf32>
    %113 = tpu.matmul %111, %112, %cst_27 {dimension_numbers = #tpu.dot_dimension_numbers<[1], [0], [0], [1], [0, 0, 1, 1], [], []>} : vector<8x8xbf16>, vector<8x256xbf16>, vector<8x256xf32> -> vector<8x256xf32>
    %114 = vector.extract_strided_slice %105 {offsets = [0, 0], sizes = [1, 256], strides = [1, 1]} : vector<9x256xf32> to vector<1x256xf32>
    %115 = vector.broadcast %114 : vector<1x256xf32> to vector<8x256xf32>
    %116 = arith.mulf %113, %115 : vector<8x256xf32>
    %117 = arith.addf %106, %116 : vector<8x256xf32>
    %118 = vector.extract_strided_slice %103 {offsets = [0, 248], sizes = [8, 8], strides = [1, 1]} : vector<8x256xf32> to vector<8x8xf32>
    %119 = vector.extract_strided_slice %103 {offsets = [0, 0], sizes = [8, 248], strides = [1, 1]} : vector<8x256xf32> to vector<8x248xf32>
    %120 = tpu.concatenate %118, %119 in 1 : vector<8x8xf32>, vector<8x248xf32> -> vector<8x256xf32>
    %121 = vector.extract_strided_slice %104 {offsets = [1, 0, 0], sizes = [1, 8, 8], strides = [1, 1, 1]} : vector<9x8x8xbf16> to vector<1x8x8xbf16>
    %122 = vector.shape_cast %121 : vector<1x8x8xbf16> to vector<8x8xbf16>
    %123 = arith.truncf %120 : vector<8x256xf32> to vector<8x256xbf16>
    %cst_28 = arith.constant dense<0.000000e+00> : vector<8x256xf32>
    %124 = tpu.matmul %122, %123, %cst_28 {dimension_numbers = #tpu.dot_dimension_numbers<[1], [0], [0], [1], [0, 0, 1, 1], [], []>} : vector<8x8xbf16>, vector<8x256xbf16>, vector<8x256xf32> -> vector<8x256xf32>
    %125 = vector.extract_strided_slice %105 {offsets = [1, 0], sizes = [1, 256], strides = [1, 1]} : vector<9x256xf32> to vector<1x256xf32>
    %126 = vector.broadcast %125 : vector<1x256xf32> to vector<8x256xf32>
    %127 = arith.mulf %124, %126 : vector<8x256xf32>
    %128 = arith.addf %117, %127 : vector<8x256xf32>
    %129 = vector.extract_strided_slice %103 {offsets = [0, 249], sizes = [8, 7], strides = [1, 1]} : vector<8x256xf32> to vector<8x7xf32>
    %130 = vector.extract_strided_slice %103 {offsets = [0, 0], sizes = [8, 249], strides = [1, 1]} : vector<8x256xf32> to vector<8x249xf32>
    %131 = tpu.concatenate %129, %130 in 1 : vector<8x7xf32>, vector<8x249xf32> -> vector<8x256xf32>
    %132 = vector.extract_strided_slice %104 {offsets = [2, 0, 0], sizes = [1, 8, 8], strides = [1, 1, 1]} : vector<9x8x8xbf16> to vector<1x8x8xbf16>
    %133 = vector.shape_cast %132 : vector<1x8x8xbf16> to vector<8x8xbf16>
    %134 = arith.truncf %131 : vector<8x256xf32> to vector<8x256xbf16>
    %cst_29 = arith.constant dense<0.000000e+00> : vector<8x256xf32>
    %135 = tpu.matmul %133, %134, %cst_29 {dimension_numbers = #tpu.dot_dimension_numbers<[1], [0], [0], [1], [0, 0, 1, 1], [], []>} : vector<8x8xbf16>, vector<8x256xbf16>, vector<8x256xf32> -> vector<8x256xf32>
    %136 = vector.extract_strided_slice %105 {offsets = [2, 0], sizes = [1, 256], strides = [1, 1]} : vector<9x256xf32> to vector<1x256xf32>
    %137 = vector.broadcast %136 : vector<1x256xf32> to vector<8x256xf32>
    %138 = arith.mulf %135, %137 : vector<8x256xf32>
    %139 = arith.addf %128, %138 : vector<8x256xf32>
    %140 = vector.extract_strided_slice %103 {offsets = [0, 255], sizes = [8, 1], strides = [1, 1]} : vector<8x256xf32> to vector<8x1xf32>
    %141 = vector.extract_strided_slice %103 {offsets = [0, 0], sizes = [8, 255], strides = [1, 1]} : vector<8x256xf32> to vector<8x255xf32>
    %142 = tpu.concatenate %140, %141 in 1 : vector<8x1xf32>, vector<8x255xf32> -> vector<8x256xf32>
    %143 = vector.extract_strided_slice %104 {offsets = [3, 0, 0], sizes = [1, 8, 8], strides = [1, 1, 1]} : vector<9x8x8xbf16> to vector<1x8x8xbf16>
    %144 = vector.shape_cast %143 : vector<1x8x8xbf16> to vector<8x8xbf16>
    %145 = arith.truncf %142 : vector<8x256xf32> to vector<8x256xbf16>
    %cst_30 = arith.constant dense<0.000000e+00> : vector<8x256xf32>
    %146 = tpu.matmul %144, %145, %cst_30 {dimension_numbers = #tpu.dot_dimension_numbers<[1], [0], [0], [1], [0, 0, 1, 1], [], []>} : vector<8x8xbf16>, vector<8x256xbf16>, vector<8x256xf32> -> vector<8x256xf32>
    %147 = vector.extract_strided_slice %105 {offsets = [3, 0], sizes = [1, 256], strides = [1, 1]} : vector<9x256xf32> to vector<1x256xf32>
    %148 = vector.broadcast %147 : vector<1x256xf32> to vector<8x256xf32>
    %149 = arith.mulf %146, %148 : vector<8x256xf32>
    %150 = arith.addf %139, %149 : vector<8x256xf32>
    %151 = vector.extract_strided_slice %104 {offsets = [4, 0, 0], sizes = [1, 8, 8], strides = [1, 1, 1]} : vector<9x8x8xbf16> to vector<1x8x8xbf16>
    %152 = vector.shape_cast %151 : vector<1x8x8xbf16> to vector<8x8xbf16>
    %153 = arith.truncf %103 : vector<8x256xf32> to vector<8x256xbf16>
    %cst_31 = arith.constant dense<0.000000e+00> : vector<8x256xf32>
    %154 = tpu.matmul %152, %153, %cst_31 {dimension_numbers = #tpu.dot_dimension_numbers<[1], [0], [0], [1], [0, 0, 1, 1], [], []>} : vector<8x8xbf16>, vector<8x256xbf16>, vector<8x256xf32> -> vector<8x256xf32>
    %155 = arith.addf %150, %154 : vector<8x256xf32>
    %156 = vector.extract_strided_slice %103 {offsets = [0, 1], sizes = [8, 255], strides = [1, 1]} : vector<8x256xf32> to vector<8x255xf32>
    %157 = vector.extract_strided_slice %103 {offsets = [0, 0], sizes = [8, 1], strides = [1, 1]} : vector<8x256xf32> to vector<8x1xf32>
    %158 = tpu.concatenate %156, %157 in 1 : vector<8x255xf32>, vector<8x1xf32> -> vector<8x256xf32>
    %159 = vector.extract_strided_slice %104 {offsets = [5, 0, 0], sizes = [1, 8, 8], strides = [1, 1, 1]} : vector<9x8x8xbf16> to vector<1x8x8xbf16>
    %160 = vector.shape_cast %159 : vector<1x8x8xbf16> to vector<8x8xbf16>
    %161 = arith.truncf %158 : vector<8x256xf32> to vector<8x256xbf16>
    %cst_32 = arith.constant dense<0.000000e+00> : vector<8x256xf32>
    %162 = tpu.matmul %160, %161, %cst_32 {dimension_numbers = #tpu.dot_dimension_numbers<[1], [0], [0], [1], [0, 0, 1, 1], [], []>} : vector<8x8xbf16>, vector<8x256xbf16>, vector<8x256xf32> -> vector<8x256xf32>
    %163 = vector.extract_strided_slice %105 {offsets = [5, 0], sizes = [1, 256], strides = [1, 1]} : vector<9x256xf32> to vector<1x256xf32>
    %164 = vector.broadcast %163 : vector<1x256xf32> to vector<8x256xf32>
    %165 = arith.mulf %162, %164 : vector<8x256xf32>
    %166 = arith.addf %155, %165 : vector<8x256xf32>
    %167 = vector.extract_strided_slice %103 {offsets = [0, 7], sizes = [8, 249], strides = [1, 1]} : vector<8x256xf32> to vector<8x249xf32>
    %168 = vector.extract_strided_slice %103 {offsets = [0, 0], sizes = [8, 7], strides = [1, 1]} : vector<8x256xf32> to vector<8x7xf32>
    %169 = tpu.concatenate %167, %168 in 1 : vector<8x249xf32>, vector<8x7xf32> -> vector<8x256xf32>
    %170 = vector.extract_strided_slice %104 {offsets = [6, 0, 0], sizes = [1, 8, 8], strides = [1, 1, 1]} : vector<9x8x8xbf16> to vector<1x8x8xbf16>
    %171 = vector.shape_cast %170 : vector<1x8x8xbf16> to vector<8x8xbf16>
    %172 = arith.truncf %169 : vector<8x256xf32> to vector<8x256xbf16>
    %cst_33 = arith.constant dense<0.000000e+00> : vector<8x256xf32>
    %173 = tpu.matmul %171, %172, %cst_33 {dimension_numbers = #tpu.dot_dimension_numbers<[1], [0], [0], [1], [0, 0, 1, 1], [], []>} : vector<8x8xbf16>, vector<8x256xbf16>, vector<8x256xf32> -> vector<8x256xf32>
    %174 = vector.extract_strided_slice %105 {offsets = [6, 0], sizes = [1, 256], strides = [1, 1]} : vector<9x256xf32> to vector<1x256xf32>
    %175 = vector.broadcast %174 : vector<1x256xf32> to vector<8x256xf32>
    %176 = arith.mulf %173, %175 : vector<8x256xf32>
    %177 = arith.addf %166, %176 : vector<8x256xf32>
    %178 = vector.extract_strided_slice %103 {offsets = [0, 8], sizes = [8, 248], strides = [1, 1]} : vector<8x256xf32> to vector<8x248xf32>
    %179 = vector.extract_strided_slice %103 {offsets = [0, 0], sizes = [8, 8], strides = [1, 1]} : vector<8x256xf32> to vector<8x8xf32>
    %180 = tpu.concatenate %178, %179 in 1 : vector<8x248xf32>, vector<8x8xf32> -> vector<8x256xf32>
    %181 = vector.extract_strided_slice %104 {offsets = [7, 0, 0], sizes = [1, 8, 8], strides = [1, 1, 1]} : vector<9x8x8xbf16> to vector<1x8x8xbf16>
    %182 = vector.shape_cast %181 : vector<1x8x8xbf16> to vector<8x8xbf16>
    %183 = arith.truncf %180 : vector<8x256xf32> to vector<8x256xbf16>
    %cst_34 = arith.constant dense<0.000000e+00> : vector<8x256xf32>
    %184 = tpu.matmul %182, %183, %cst_34 {dimension_numbers = #tpu.dot_dimension_numbers<[1], [0], [0], [1], [0, 0, 1, 1], [], []>} : vector<8x8xbf16>, vector<8x256xbf16>, vector<8x256xf32> -> vector<8x256xf32>
    %185 = vector.extract_strided_slice %105 {offsets = [7, 0], sizes = [1, 256], strides = [1, 1]} : vector<9x256xf32> to vector<1x256xf32>
    %186 = vector.broadcast %185 : vector<1x256xf32> to vector<8x256xf32>
    %187 = arith.mulf %184, %186 : vector<8x256xf32>
    %188 = arith.addf %177, %187 : vector<8x256xf32>
    %189 = vector.extract_strided_slice %103 {offsets = [0, 9], sizes = [8, 247], strides = [1, 1]} : vector<8x256xf32> to vector<8x247xf32>
    %190 = vector.extract_strided_slice %103 {offsets = [0, 0], sizes = [8, 9], strides = [1, 1]} : vector<8x256xf32> to vector<8x9xf32>
    %191 = tpu.concatenate %189, %190 in 1 : vector<8x247xf32>, vector<8x9xf32> -> vector<8x256xf32>
    %192 = vector.extract_strided_slice %104 {offsets = [8, 0, 0], sizes = [1, 8, 8], strides = [1, 1, 1]} : vector<9x8x8xbf16> to vector<1x8x8xbf16>
    %193 = vector.shape_cast %192 : vector<1x8x8xbf16> to vector<8x8xbf16>
    %194 = arith.truncf %191 : vector<8x256xf32> to vector<8x256xbf16>
    %cst_35 = arith.constant dense<0.000000e+00> : vector<8x256xf32>
    %195 = tpu.matmul %193, %194, %cst_35 {dimension_numbers = #tpu.dot_dimension_numbers<[1], [0], [0], [1], [0, 0, 1, 1], [], []>} : vector<8x8xbf16>, vector<8x256xbf16>, vector<8x256xf32> -> vector<8x256xf32>
    %196 = vector.extract_strided_slice %105 {offsets = [8, 0], sizes = [1, 256], strides = [1, 1]} : vector<9x256xf32> to vector<1x256xf32>
    %197 = vector.broadcast %196 : vector<1x256xf32> to vector<8x256xf32>
    %198 = arith.mulf %195, %197 : vector<8x256xf32>
    %199 = arith.addf %188, %198 : vector<8x256xf32>
    %c0_36 = arith.constant 0 : index
    %c0_37 = arith.constant 0 : index
    %200 = vector.load %arg26[%c0_36, %c0_37] : memref<256x64xf32, #tpu.memory_space<vmem>>, vector<256x64xf32>
    %cst_38 = arith.constant dense<0.000000e+00> : vector<8x64xf32>
    %201 = tpu.matmul %199, %200, %cst_38 {dimension_numbers = #tpu.dot_dimension_numbers<[1], [0], [0], [1], [0, 0, 1, 1], [], []>} : vector<8x256xf32>, vector<256x64xf32>, vector<8x64xf32> -> vector<8x64xf32>
    %c0_39 = arith.constant 0 : index
    %c0_40 = arith.constant 0 : index
    %202 = vector.load %arg5[%c0_39, %c0_40] : memref<8x1xf32, #tpu.memory_space<vmem>>, vector<8x1xf32>
    %203 = vector.broadcast %202 : vector<8x1xf32> to vector<8x64xf32>
    %204 = arith.addf %201, %203 : vector<8x64xf32>
    %cst_41 = arith.constant 0.000000e+00 : f32
    %205 = vector.broadcast %cst_41 : f32 to vector<8x64xf32>
    %206 = arith.maximumf %204, %205 : vector<8x64xf32>
    %c0_42 = arith.constant 0 : index
    %c0_43 = arith.constant 0 : index
    %c0_44 = arith.constant 0 : index
    %207 = vector.load %arg7[%c0_42, %c0_43, %c0_44] : memref<9x8x8xbf16, #tpu.memory_space<vmem>>, vector<9x8x8xbf16>
    %c0_45 = arith.constant 0 : index
    %c0_46 = arith.constant 0 : index
    %208 = vector.load %arg9[%c0_45, %c0_46] : memref<9x64xf32, #tpu.memory_space<vmem>>, vector<9x64xf32>
    %cst_47 = arith.constant 0.000000e+00 : f32
    %209 = vector.broadcast %cst_47 : f32 to vector<8x64xf32>
    %210 = vector.extract_strided_slice %206 {offsets = [0, 59], sizes = [8, 5], strides = [1, 1]} : vector<8x64xf32> to vector<8x5xf32>
    %211 = vector.extract_strided_slice %206 {offsets = [0, 0], sizes = [8, 59], strides = [1, 1]} : vector<8x64xf32> to vector<8x59xf32>
    %212 = tpu.concatenate %210, %211 in 1 : vector<8x5xf32>, vector<8x59xf32> -> vector<8x64xf32>
    %213 = vector.extract_strided_slice %207 {offsets = [0, 0, 0], sizes = [1, 8, 8], strides = [1, 1, 1]} : vector<9x8x8xbf16> to vector<1x8x8xbf16>
    %214 = vector.shape_cast %213 : vector<1x8x8xbf16> to vector<8x8xbf16>
    %215 = arith.truncf %212 : vector<8x64xf32> to vector<8x64xbf16>
    %cst_48 = arith.constant dense<0.000000e+00> : vector<8x64xf32>
    %216 = tpu.matmul %214, %215, %cst_48 {dimension_numbers = #tpu.dot_dimension_numbers<[1], [0], [0], [1], [0, 0, 1, 1], [], []>} : vector<8x8xbf16>, vector<8x64xbf16>, vector<8x64xf32> -> vector<8x64xf32>
    %217 = vector.extract_strided_slice %208 {offsets = [0, 0], sizes = [1, 64], strides = [1, 1]} : vector<9x64xf32> to vector<1x64xf32>
    %218 = vector.broadcast %217 : vector<1x64xf32> to vector<8x64xf32>
    %219 = arith.mulf %216, %218 : vector<8x64xf32>
    %220 = arith.addf %209, %219 : vector<8x64xf32>
    %221 = vector.extract_strided_slice %206 {offsets = [0, 60], sizes = [8, 4], strides = [1, 1]} : vector<8x64xf32> to vector<8x4xf32>
    %222 = vector.extract_strided_slice %206 {offsets = [0, 0], sizes = [8, 60], strides = [1, 1]} : vector<8x64xf32> to vector<8x60xf32>
    %223 = tpu.concatenate %221, %222 in 1 : vector<8x4xf32>, vector<8x60xf32> -> vector<8x64xf32>
    %224 = vector.extract_strided_slice %207 {offsets = [1, 0, 0], sizes = [1, 8, 8], strides = [1, 1, 1]} : vector<9x8x8xbf16> to vector<1x8x8xbf16>
    %225 = vector.shape_cast %224 : vector<1x8x8xbf16> to vector<8x8xbf16>
    %226 = arith.truncf %223 : vector<8x64xf32> to vector<8x64xbf16>
    %cst_49 = arith.constant dense<0.000000e+00> : vector<8x64xf32>
    %227 = tpu.matmul %225, %226, %cst_49 {dimension_numbers = #tpu.dot_dimension_numbers<[1], [0], [0], [1], [0, 0, 1, 1], [], []>} : vector<8x8xbf16>, vector<8x64xbf16>, vector<8x64xf32> -> vector<8x64xf32>
    %228 = vector.extract_strided_slice %208 {offsets = [1, 0], sizes = [1, 64], strides = [1, 1]} : vector<9x64xf32> to vector<1x64xf32>
    %229 = vector.broadcast %228 : vector<1x64xf32> to vector<8x64xf32>
    %230 = arith.mulf %227, %229 : vector<8x64xf32>
    %231 = arith.addf %220, %230 : vector<8x64xf32>
    %232 = vector.extract_strided_slice %206 {offsets = [0, 61], sizes = [8, 3], strides = [1, 1]} : vector<8x64xf32> to vector<8x3xf32>
    %233 = vector.extract_strided_slice %206 {offsets = [0, 0], sizes = [8, 61], strides = [1, 1]} : vector<8x64xf32> to vector<8x61xf32>
    %234 = tpu.concatenate %232, %233 in 1 : vector<8x3xf32>, vector<8x61xf32> -> vector<8x64xf32>
    %235 = vector.extract_strided_slice %207 {offsets = [2, 0, 0], sizes = [1, 8, 8], strides = [1, 1, 1]} : vector<9x8x8xbf16> to vector<1x8x8xbf16>
    %236 = vector.shape_cast %235 : vector<1x8x8xbf16> to vector<8x8xbf16>
    %237 = arith.truncf %234 : vector<8x64xf32> to vector<8x64xbf16>
    %cst_50 = arith.constant dense<0.000000e+00> : vector<8x64xf32>
    %238 = tpu.matmul %236, %237, %cst_50 {dimension_numbers = #tpu.dot_dimension_numbers<[1], [0], [0], [1], [0, 0, 1, 1], [], []>} : vector<8x8xbf16>, vector<8x64xbf16>, vector<8x64xf32> -> vector<8x64xf32>
    %239 = vector.extract_strided_slice %208 {offsets = [2, 0], sizes = [1, 64], strides = [1, 1]} : vector<9x64xf32> to vector<1x64xf32>
    %240 = vector.broadcast %239 : vector<1x64xf32> to vector<8x64xf32>
    %241 = arith.mulf %238, %240 : vector<8x64xf32>
    %242 = arith.addf %231, %241 : vector<8x64xf32>
    %243 = vector.extract_strided_slice %206 {offsets = [0, 63], sizes = [8, 1], strides = [1, 1]} : vector<8x64xf32> to vector<8x1xf32>
    %244 = vector.extract_strided_slice %206 {offsets = [0, 0], sizes = [8, 63], strides = [1, 1]} : vector<8x64xf32> to vector<8x63xf32>
    %245 = tpu.concatenate %243, %244 in 1 : vector<8x1xf32>, vector<8x63xf32> -> vector<8x64xf32>
    %246 = vector.extract_strided_slice %207 {offsets = [3, 0, 0], sizes = [1, 8, 8], strides = [1, 1, 1]} : vector<9x8x8xbf16> to vector<1x8x8xbf16>
    %247 = vector.shape_cast %246 : vector<1x8x8xbf16> to vector<8x8xbf16>
    %248 = arith.truncf %245 : vector<8x64xf32> to vector<8x64xbf16>
    %cst_51 = arith.constant dense<0.000000e+00> : vector<8x64xf32>
    %249 = tpu.matmul %247, %248, %cst_51 {dimension_numbers = #tpu.dot_dimension_numbers<[1], [0], [0], [1], [0, 0, 1, 1], [], []>} : vector<8x8xbf16>, vector<8x64xbf16>, vector<8x64xf32> -> vector<8x64xf32>
    %250 = vector.extract_strided_slice %208 {offsets = [3, 0], sizes = [1, 64], strides = [1, 1]} : vector<9x64xf32> to vector<1x64xf32>
    %251 = vector.broadcast %250 : vector<1x64xf32> to vector<8x64xf32>
    %252 = arith.mulf %249, %251 : vector<8x64xf32>
    %253 = arith.addf %242, %252 : vector<8x64xf32>
    %254 = vector.extract_strided_slice %207 {offsets = [4, 0, 0], sizes = [1, 8, 8], strides = [1, 1, 1]} : vector<9x8x8xbf16> to vector<1x8x8xbf16>
    %255 = vector.shape_cast %254 : vector<1x8x8xbf16> to vector<8x8xbf16>
    %256 = arith.truncf %206 : vector<8x64xf32> to vector<8x64xbf16>
    %cst_52 = arith.constant dense<0.000000e+00> : vector<8x64xf32>
    %257 = tpu.matmul %255, %256, %cst_52 {dimension_numbers = #tpu.dot_dimension_numbers<[1], [0], [0], [1], [0, 0, 1, 1], [], []>} : vector<8x8xbf16>, vector<8x64xbf16>, vector<8x64xf32> -> vector<8x64xf32>
    %258 = arith.addf %253, %257 : vector<8x64xf32>
    %259 = vector.extract_strided_slice %206 {offsets = [0, 1], sizes = [8, 63], strides = [1, 1]} : vector<8x64xf32> to vector<8x63xf32>
    %260 = vector.extract_strided_slice %206 {offsets = [0, 0], sizes = [8, 1], strides = [1, 1]} : vector<8x64xf32> to vector<8x1xf32>
    %261 = tpu.concatenate %259, %260 in 1 : vector<8x63xf32>, vector<8x1xf32> -> vector<8x64xf32>
    %262 = vector.extract_strided_slice %207 {offsets = [5, 0, 0], sizes = [1, 8, 8], strides = [1, 1, 1]} : vector<9x8x8xbf16> to vector<1x8x8xbf16>
    %263 = vector.shape_cast %262 : vector<1x8x8xbf16> to vector<8x8xbf16>
    %264 = arith.truncf %261 : vector<8x64xf32> to vector<8x64xbf16>
    %cst_53 = arith.constant dense<0.000000e+00> : vector<8x64xf32>
    %265 = tpu.matmul %263, %264, %cst_53 {dimension_numbers = #tpu.dot_dimension_numbers<[1], [0], [0], [1], [0, 0, 1, 1], [], []>} : vector<8x8xbf16>, vector<8x64xbf16>, vector<8x64xf32> -> vector<8x64xf32>
    %266 = vector.extract_strided_slice %208 {offsets = [5, 0], sizes = [1, 64], strides = [1, 1]} : vector<9x64xf32> to vector<1x64xf32>
    %267 = vector.broadcast %266 : vector<1x64xf32> to vector<8x64xf32>
    %268 = arith.mulf %265, %267 : vector<8x64xf32>
    %269 = arith.addf %258, %268 : vector<8x64xf32>
    %270 = vector.extract_strided_slice %206 {offsets = [0, 3], sizes = [8, 61], strides = [1, 1]} : vector<8x64xf32> to vector<8x61xf32>
    %271 = vector.extract_strided_slice %206 {offsets = [0, 0], sizes = [8, 3], strides = [1, 1]} : vector<8x64xf32> to vector<8x3xf32>
    %272 = tpu.concatenate %270, %271 in 1 : vector<8x61xf32>, vector<8x3xf32> -> vector<8x64xf32>
    %273 = vector.extract_strided_slice %207 {offsets = [6, 0, 0], sizes = [1, 8, 8], strides = [1, 1, 1]} : vector<9x8x8xbf16> to vector<1x8x8xbf16>
    %274 = vector.shape_cast %273 : vector<1x8x8xbf16> to vector<8x8xbf16>
    %275 = arith.truncf %272 : vector<8x64xf32> to vector<8x64xbf16>
    %cst_54 = arith.constant dense<0.000000e+00> : vector<8x64xf32>
    %276 = tpu.matmul %274, %275, %cst_54 {dimension_numbers = #tpu.dot_dimension_numbers<[1], [0], [0], [1], [0, 0, 1, 1], [], []>} : vector<8x8xbf16>, vector<8x64xbf16>, vector<8x64xf32> -> vector<8x64xf32>
    %277 = vector.extract_strided_slice %208 {offsets = [6, 0], sizes = [1, 64], strides = [1, 1]} : vector<9x64xf32> to vector<1x64xf32>
    %278 = vector.broadcast %277 : vector<1x64xf32> to vector<8x64xf32>
    %279 = arith.mulf %276, %278 : vector<8x64xf32>
    %280 = arith.addf %269, %279 : vector<8x64xf32>
    %281 = vector.extract_strided_slice %206 {offsets = [0, 4], sizes = [8, 60], strides = [1, 1]} : vector<8x64xf32> to vector<8x60xf32>
    %282 = vector.extract_strided_slice %206 {offsets = [0, 0], sizes = [8, 4], strides = [1, 1]} : vector<8x64xf32> to vector<8x4xf32>
    %283 = tpu.concatenate %281, %282 in 1 : vector<8x60xf32>, vector<8x4xf32> -> vector<8x64xf32>
    %284 = vector.extract_strided_slice %207 {offsets = [7, 0, 0], sizes = [1, 8, 8], strides = [1, 1, 1]} : vector<9x8x8xbf16> to vector<1x8x8xbf16>
    %285 = vector.shape_cast %284 : vector<1x8x8xbf16> to vector<8x8xbf16>
    %286 = arith.truncf %283 : vector<8x64xf32> to vector<8x64xbf16>
    %cst_55 = arith.constant dense<0.000000e+00> : vector<8x64xf32>
    %287 = tpu.matmul %285, %286, %cst_55 {dimension_numbers = #tpu.dot_dimension_numbers<[1], [0], [0], [1], [0, 0, 1, 1], [], []>} : vector<8x8xbf16>, vector<8x64xbf16>, vector<8x64xf32> -> vector<8x64xf32>
    %288 = vector.extract_strided_slice %208 {offsets = [7, 0], sizes = [1, 64], strides = [1, 1]} : vector<9x64xf32> to vector<1x64xf32>
    %289 = vector.broadcast %288 : vector<1x64xf32> to vector<8x64xf32>
    %290 = arith.mulf %287, %289 : vector<8x64xf32>
    %291 = arith.addf %280, %290 : vector<8x64xf32>
    %292 = vector.extract_strided_slice %206 {offsets = [0, 5], sizes = [8, 59], strides = [1, 1]} : vector<8x64xf32> to vector<8x59xf32>
    %293 = vector.extract_strided_slice %206 {offsets = [0, 0], sizes = [8, 5], strides = [1, 1]} : vector<8x64xf32> to vector<8x5xf32>
    %294 = tpu.concatenate %292, %293 in 1 : vector<8x59xf32>, vector<8x5xf32> -> vector<8x64xf32>
    %295 = vector.extract_strided_slice %207 {offsets = [8, 0, 0], sizes = [1, 8, 8], strides = [1, 1, 1]} : vector<9x8x8xbf16> to vector<1x8x8xbf16>
    %296 = vector.shape_cast %295 : vector<1x8x8xbf16> to vector<8x8xbf16>
    %297 = arith.truncf %294 : vector<8x64xf32> to vector<8x64xbf16>
    %cst_56 = arith.constant dense<0.000000e+00> : vector<8x64xf32>
    %298 = tpu.matmul %296, %297, %cst_56 {dimension_numbers = #tpu.dot_dimension_numbers<[1], [0], [0], [1], [0, 0, 1, 1], [], []>} : vector<8x8xbf16>, vector<8x64xbf16>, vector<8x64xf32> -> vector<8x64xf32>
    %299 = vector.extract_strided_slice %208 {offsets = [8, 0], sizes = [1, 64], strides = [1, 1]} : vector<9x64xf32> to vector<1x64xf32>
    %300 = vector.broadcast %299 : vector<1x64xf32> to vector<8x64xf32>
    %301 = arith.mulf %298, %300 : vector<8x64xf32>
    %302 = arith.addf %291, %301 : vector<8x64xf32>
    %c0_57 = arith.constant 0 : index
    %c0_58 = arith.constant 0 : index
    %303 = vector.load %arg27[%c0_57, %c0_58] : memref<64x16xf32, #tpu.memory_space<vmem>>, vector<64x16xf32>
    %cst_59 = arith.constant dense<0.000000e+00> : vector<8x16xf32>
    %304 = tpu.matmul %302, %303, %cst_59 {dimension_numbers = #tpu.dot_dimension_numbers<[1], [0], [0], [1], [0, 0, 1, 1], [], []>} : vector<8x64xf32>, vector<64x16xf32>, vector<8x16xf32> -> vector<8x16xf32>
    %c0_60 = arith.constant 0 : index
    %c0_61 = arith.constant 0 : index
    %305 = vector.load %arg8[%c0_60, %c0_61] : memref<8x1xf32, #tpu.memory_space<vmem>>, vector<8x1xf32>
    %306 = vector.broadcast %305 : vector<8x1xf32> to vector<8x16xf32>
    %307 = arith.addf %304, %306 : vector<8x16xf32>
    %cst_62 = arith.constant 0.000000e+00 : f32
    %308 = vector.broadcast %cst_62 : f32 to vector<8x16xf32>
    %309 = arith.maximumf %307, %308 : vector<8x16xf32>
    %c0_63 = arith.constant 0 : index
    %c0_64 = arith.constant 0 : index
    %c0_65 = arith.constant 0 : index
    %310 = vector.load %arg10[%c0_63, %c0_64, %c0_65] : memref<9x8x8xbf16, #tpu.memory_space<vmem>>, vector<9x8x8xbf16>
    %c0_66 = arith.constant 0 : index
    %c0_67 = arith.constant 0 : index
    %311 = vector.load %arg12[%c0_66, %c0_67] : memref<9x16xf32, #tpu.memory_space<vmem>>, vector<9x16xf32>
    %cst_68 = arith.constant 0.000000e+00 : f32
    %312 = vector.broadcast %cst_68 : f32 to vector<8x16xf32>
    %313 = vector.extract_strided_slice %309 {offsets = [0, 13], sizes = [8, 3], strides = [1, 1]} : vector<8x16xf32> to vector<8x3xf32>
    %314 = vector.extract_strided_slice %309 {offsets = [0, 0], sizes = [8, 13], strides = [1, 1]} : vector<8x16xf32> to vector<8x13xf32>
    %315 = tpu.concatenate %313, %314 in 1 : vector<8x3xf32>, vector<8x13xf32> -> vector<8x16xf32>
    %316 = vector.extract_strided_slice %310 {offsets = [0, 0, 0], sizes = [1, 8, 8], strides = [1, 1, 1]} : vector<9x8x8xbf16> to vector<1x8x8xbf16>
    %317 = vector.shape_cast %316 : vector<1x8x8xbf16> to vector<8x8xbf16>
    %318 = arith.truncf %315 : vector<8x16xf32> to vector<8x16xbf16>
    %cst_69 = arith.constant dense<0.000000e+00> : vector<8x16xf32>
    %319 = tpu.matmul %317, %318, %cst_69 {dimension_numbers = #tpu.dot_dimension_numbers<[1], [0], [0], [1], [0, 0, 1, 1], [], []>} : vector<8x8xbf16>, vector<8x16xbf16>, vector<8x16xf32> -> vector<8x16xf32>
    %320 = vector.extract_strided_slice %311 {offsets = [0, 0], sizes = [1, 16], strides = [1, 1]} : vector<9x16xf32> to vector<1x16xf32>
    %321 = vector.broadcast %320 : vector<1x16xf32> to vector<8x16xf32>
    %322 = arith.mulf %319, %321 : vector<8x16xf32>
    %323 = arith.addf %312, %322 : vector<8x16xf32>
    %324 = vector.extract_strided_slice %309 {offsets = [0, 14], sizes = [8, 2], strides = [1, 1]} : vector<8x16xf32> to vector<8x2xf32>
    %325 = vector.extract_strided_slice %309 {offsets = [0, 0], sizes = [8, 14], strides = [1, 1]} : vector<8x16xf32> to vector<8x14xf32>
    %326 = tpu.concatenate %324, %325 in 1 : vector<8x2xf32>, vector<8x14xf32> -> vector<8x16xf32>
    %327 = vector.extract_strided_slice %310 {offsets = [1, 0, 0], sizes = [1, 8, 8], strides = [1, 1, 1]} : vector<9x8x8xbf16> to vector<1x8x8xbf16>
    %328 = vector.shape_cast %327 : vector<1x8x8xbf16> to vector<8x8xbf16>
    %329 = arith.truncf %326 : vector<8x16xf32> to vector<8x16xbf16>
    %cst_70 = arith.constant dense<0.000000e+00> : vector<8x16xf32>
    %330 = tpu.matmul %328, %329, %cst_70 {dimension_numbers = #tpu.dot_dimension_numbers<[1], [0], [0], [1], [0, 0, 1, 1], [], []>} : vector<8x8xbf16>, vector<8x16xbf16>, vector<8x16xf32> -> vector<8x16xf32>
    %331 = vector.extract_strided_slice %311 {offsets = [1, 0], sizes = [1, 16], strides = [1, 1]} : vector<9x16xf32> to vector<1x16xf32>
    %332 = vector.broadcast %331 : vector<1x16xf32> to vector<8x16xf32>
    %333 = arith.mulf %330, %332 : vector<8x16xf32>
    %334 = arith.addf %323, %333 : vector<8x16xf32>
    %335 = vector.extract_strided_slice %309 {offsets = [0, 15], sizes = [8, 1], strides = [1, 1]} : vector<8x16xf32> to vector<8x1xf32>
    %336 = vector.extract_strided_slice %309 {offsets = [0, 0], sizes = [8, 15], strides = [1, 1]} : vector<8x16xf32> to vector<8x15xf32>
    %337 = tpu.concatenate %335, %336 in 1 : vector<8x1xf32>, vector<8x15xf32> -> vector<8x16xf32>
    %338 = vector.extract_strided_slice %310 {offsets = [2, 0, 0], sizes = [1, 8, 8], strides = [1, 1, 1]} : vector<9x8x8xbf16> to vector<1x8x8xbf16>
    %339 = vector.shape_cast %338 : vector<1x8x8xbf16> to vector<8x8xbf16>
    %340 = arith.truncf %337 : vector<8x16xf32> to vector<8x16xbf16>
    %cst_71 = arith.constant dense<0.000000e+00> : vector<8x16xf32>
    %341 = tpu.matmul %339, %340, %cst_71 {dimension_numbers = #tpu.dot_dimension_numbers<[1], [0], [0], [1], [0, 0, 1, 1], [], []>} : vector<8x8xbf16>, vector<8x16xbf16>, vector<8x16xf32> -> vector<8x16xf32>
    %342 = vector.extract_strided_slice %311 {offsets = [2, 0], sizes = [1, 16], strides = [1, 1]} : vector<9x16xf32> to vector<1x16xf32>
    %343 = vector.broadcast %342 : vector<1x16xf32> to vector<8x16xf32>
    %344 = arith.mulf %341, %343 : vector<8x16xf32>
    %345 = arith.addf %334, %344 : vector<8x16xf32>
    %346 = vector.extract_strided_slice %309 {offsets = [0, 15], sizes = [8, 1], strides = [1, 1]} : vector<8x16xf32> to vector<8x1xf32>
    %347 = vector.extract_strided_slice %309 {offsets = [0, 0], sizes = [8, 15], strides = [1, 1]} : vector<8x16xf32> to vector<8x15xf32>
    %348 = tpu.concatenate %346, %347 in 1 : vector<8x1xf32>, vector<8x15xf32> -> vector<8x16xf32>
    %349 = vector.extract_strided_slice %310 {offsets = [3, 0, 0], sizes = [1, 8, 8], strides = [1, 1, 1]} : vector<9x8x8xbf16> to vector<1x8x8xbf16>
    %350 = vector.shape_cast %349 : vector<1x8x8xbf16> to vector<8x8xbf16>
    %351 = arith.truncf %348 : vector<8x16xf32> to vector<8x16xbf16>
    %cst_72 = arith.constant dense<0.000000e+00> : vector<8x16xf32>
    %352 = tpu.matmul %350, %351, %cst_72 {dimension_numbers = #tpu.dot_dimension_numbers<[1], [0], [0], [1], [0, 0, 1, 1], [], []>} : vector<8x8xbf16>, vector<8x16xbf16>, vector<8x16xf32> -> vector<8x16xf32>
    %353 = vector.extract_strided_slice %311 {offsets = [3, 0], sizes = [1, 16], strides = [1, 1]} : vector<9x16xf32> to vector<1x16xf32>
    %354 = vector.broadcast %353 : vector<1x16xf32> to vector<8x16xf32>
    %355 = arith.mulf %352, %354 : vector<8x16xf32>
    %356 = arith.addf %345, %355 : vector<8x16xf32>
    %357 = vector.extract_strided_slice %310 {offsets = [4, 0, 0], sizes = [1, 8, 8], strides = [1, 1, 1]} : vector<9x8x8xbf16> to vector<1x8x8xbf16>
    %358 = vector.shape_cast %357 : vector<1x8x8xbf16> to vector<8x8xbf16>
    %359 = arith.truncf %309 : vector<8x16xf32> to vector<8x16xbf16>
    %cst_73 = arith.constant dense<0.000000e+00> : vector<8x16xf32>
    %360 = tpu.matmul %358, %359, %cst_73 {dimension_numbers = #tpu.dot_dimension_numbers<[1], [0], [0], [1], [0, 0, 1, 1], [], []>} : vector<8x8xbf16>, vector<8x16xbf16>, vector<8x16xf32> -> vector<8x16xf32>
    %361 = arith.addf %356, %360 : vector<8x16xf32>
    %362 = vector.extract_strided_slice %309 {offsets = [0, 1], sizes = [8, 15], strides = [1, 1]} : vector<8x16xf32> to vector<8x15xf32>
    %363 = vector.extract_strided_slice %309 {offsets = [0, 0], sizes = [8, 1], strides = [1, 1]} : vector<8x16xf32> to vector<8x1xf32>
    %364 = tpu.concatenate %362, %363 in 1 : vector<8x15xf32>, vector<8x1xf32> -> vector<8x16xf32>
    %365 = vector.extract_strided_slice %310 {offsets = [5, 0, 0], sizes = [1, 8, 8], strides = [1, 1, 1]} : vector<9x8x8xbf16> to vector<1x8x8xbf16>
    %366 = vector.shape_cast %365 : vector<1x8x8xbf16> to vector<8x8xbf16>
    %367 = arith.truncf %364 : vector<8x16xf32> to vector<8x16xbf16>
    %cst_74 = arith.constant dense<0.000000e+00> : vector<8x16xf32>
    %368 = tpu.matmul %366, %367, %cst_74 {dimension_numbers = #tpu.dot_dimension_numbers<[1], [0], [0], [1], [0, 0, 1, 1], [], []>} : vector<8x8xbf16>, vector<8x16xbf16>, vector<8x16xf32> -> vector<8x16xf32>
    %369 = vector.extract_strided_slice %311 {offsets = [5, 0], sizes = [1, 16], strides = [1, 1]} : vector<9x16xf32> to vector<1x16xf32>
    %370 = vector.broadcast %369 : vector<1x16xf32> to vector<8x16xf32>
    %371 = arith.mulf %368, %370 : vector<8x16xf32>
    %372 = arith.addf %361, %371 : vector<8x16xf32>
    %373 = vector.extract_strided_slice %309 {offsets = [0, 1], sizes = [8, 15], strides = [1, 1]} : vector<8x16xf32> to vector<8x15xf32>
    %374 = vector.extract_strided_slice %309 {offsets = [0, 0], sizes = [8, 1], strides = [1, 1]} : vector<8x16xf32> to vector<8x1xf32>
    %375 = tpu.concatenate %373, %374 in 1 : vector<8x15xf32>, vector<8x1xf32> -> vector<8x16xf32>
    %376 = vector.extract_strided_slice %310 {offsets = [6, 0, 0], sizes = [1, 8, 8], strides = [1, 1, 1]} : vector<9x8x8xbf16> to vector<1x8x8xbf16>
    %377 = vector.shape_cast %376 : vector<1x8x8xbf16> to vector<8x8xbf16>
    %378 = arith.truncf %375 : vector<8x16xf32> to vector<8x16xbf16>
    %cst_75 = arith.constant dense<0.000000e+00> : vector<8x16xf32>
    %379 = tpu.matmul %377, %378, %cst_75 {dimension_numbers = #tpu.dot_dimension_numbers<[1], [0], [0], [1], [0, 0, 1, 1], [], []>} : vector<8x8xbf16>, vector<8x16xbf16>, vector<8x16xf32> -> vector<8x16xf32>
    %380 = vector.extract_strided_slice %311 {offsets = [6, 0], sizes = [1, 16], strides = [1, 1]} : vector<9x16xf32> to vector<1x16xf32>
    %381 = vector.broadcast %380 : vector<1x16xf32> to vector<8x16xf32>
    %382 = arith.mulf %379, %381 : vector<8x16xf32>
    %383 = arith.addf %372, %382 : vector<8x16xf32>
    %384 = vector.extract_strided_slice %309 {offsets = [0, 2], sizes = [8, 14], strides = [1, 1]} : vector<8x16xf32> to vector<8x14xf32>
    %385 = vector.extract_strided_slice %309 {offsets = [0, 0], sizes = [8, 2], strides = [1, 1]} : vector<8x16xf32> to vector<8x2xf32>
    %386 = tpu.concatenate %384, %385 in 1 : vector<8x14xf32>, vector<8x2xf32> -> vector<8x16xf32>
    %387 = vector.extract_strided_slice %310 {offsets = [7, 0, 0], sizes = [1, 8, 8], strides = [1, 1, 1]} : vector<9x8x8xbf16> to vector<1x8x8xbf16>
    %388 = vector.shape_cast %387 : vector<1x8x8xbf16> to vector<8x8xbf16>
    %389 = arith.truncf %386 : vector<8x16xf32> to vector<8x16xbf16>
    %cst_76 = arith.constant dense<0.000000e+00> : vector<8x16xf32>
    %390 = tpu.matmul %388, %389, %cst_76 {dimension_numbers = #tpu.dot_dimension_numbers<[1], [0], [0], [1], [0, 0, 1, 1], [], []>} : vector<8x8xbf16>, vector<8x16xbf16>, vector<8x16xf32> -> vector<8x16xf32>
    %391 = vector.extract_strided_slice %311 {offsets = [7, 0], sizes = [1, 16], strides = [1, 1]} : vector<9x16xf32> to vector<1x16xf32>
    %392 = vector.broadcast %391 : vector<1x16xf32> to vector<8x16xf32>
    %393 = arith.mulf %390, %392 : vector<8x16xf32>
    %394 = arith.addf %383, %393 : vector<8x16xf32>
    %395 = vector.extract_strided_slice %309 {offsets = [0, 3], sizes = [8, 13], strides = [1, 1]} : vector<8x16xf32> to vector<8x13xf32>
    %396 = vector.extract_strided_slice %309 {offsets = [0, 0], sizes = [8, 3], strides = [1, 1]} : vector<8x16xf32> to vector<8x3xf32>
    %397 = tpu.concatenate %395, %396 in 1 : vector<8x13xf32>, vector<8x3xf32> -> vector<8x16xf32>
    %398 = vector.extract_strided_slice %310 {offsets = [8, 0, 0], sizes = [1, 8, 8], strides = [1, 1, 1]} : vector<9x8x8xbf16> to vector<1x8x8xbf16>
    %399 = vector.shape_cast %398 : vector<1x8x8xbf16> to vector<8x8xbf16>
    %400 = arith.truncf %397 : vector<8x16xf32> to vector<8x16xbf16>
    %cst_77 = arith.constant dense<0.000000e+00> : vector<8x16xf32>
    %401 = tpu.matmul %399, %400, %cst_77 {dimension_numbers = #tpu.dot_dimension_numbers<[1], [0], [0], [1], [0, 0, 1, 1], [], []>} : vector<8x8xbf16>, vector<8x16xbf16>, vector<8x16xf32> -> vector<8x16xf32>
    %402 = vector.extract_strided_slice %311 {offsets = [8, 0], sizes = [1, 16], strides = [1, 1]} : vector<9x16xf32> to vector<1x16xf32>
    %403 = vector.broadcast %402 : vector<1x16xf32> to vector<8x16xf32>
    %404 = arith.mulf %401, %403 : vector<8x16xf32>
    %405 = arith.addf %394, %404 : vector<8x16xf32>
    %c0_78 = arith.constant 0 : index
    %c0_79 = arith.constant 0 : index
    %406 = vector.load %arg28[%c0_78, %c0_79] : memref<16x4xf32, #tpu.memory_space<vmem>>, vector<16x4xf32>
    %cst_80 = arith.constant dense<0.000000e+00> : vector<8x4xf32>
    %407 = tpu.matmul %405, %406, %cst_80 {dimension_numbers = #tpu.dot_dimension_numbers<[1], [0], [0], [1], [0, 0, 1, 1], [], []>} : vector<8x16xf32>, vector<16x4xf32>, vector<8x4xf32> -> vector<8x4xf32>
    %c0_81 = arith.constant 0 : index
    %c0_82 = arith.constant 0 : index
    %408 = vector.load %arg11[%c0_81, %c0_82] : memref<8x1xf32, #tpu.memory_space<vmem>>, vector<8x1xf32>
    %409 = vector.broadcast %408 : vector<8x1xf32> to vector<8x4xf32>
    %410 = arith.addf %407, %409 : vector<8x4xf32>
    %cst_83 = arith.constant 0.000000e+00 : f32
    %411 = vector.broadcast %cst_83 : f32 to vector<8x4xf32>
    %412 = arith.maximumf %410, %411 : vector<8x4xf32>
    %c0_84 = arith.constant 0 : index
    %c0_85 = arith.constant 0 : index
    %413 = vector.load %arg29[%c0_84, %c0_85] : memref<4x16xf32, #tpu.memory_space<vmem>>, vector<4x16xf32>
    %cst_86 = arith.constant dense<0.000000e+00> : vector<8x16xf32>
    %414 = tpu.matmul %412, %413, %cst_86 {dimension_numbers = #tpu.dot_dimension_numbers<[1], [0], [0], [1], [0, 0, 1, 1], [], []>} : vector<8x4xf32>, vector<4x16xf32>, vector<8x16xf32> -> vector<8x16xf32>
    %c0_87 = arith.constant 0 : index
    %c0_88 = arith.constant 0 : index
    %c0_89 = arith.constant 0 : index
    %415 = vector.load %arg13[%c0_87, %c0_88, %c0_89] : memref<9x8x8xbf16, #tpu.memory_space<vmem>>, vector<9x8x8xbf16>
    %c0_90 = arith.constant 0 : index
    %c0_91 = arith.constant 0 : index
    %416 = vector.load %arg15[%c0_90, %c0_91] : memref<9x16xf32, #tpu.memory_space<vmem>>, vector<9x16xf32>
    %cst_92 = arith.constant 0.000000e+00 : f32
    %417 = vector.broadcast %cst_92 : f32 to vector<8x16xf32>
    %418 = vector.extract_strided_slice %414 {offsets = [0, 13], sizes = [8, 3], strides = [1, 1]} : vector<8x16xf32> to vector<8x3xf32>
    %419 = vector.extract_strided_slice %414 {offsets = [0, 0], sizes = [8, 13], strides = [1, 1]} : vector<8x16xf32> to vector<8x13xf32>
    %420 = tpu.concatenate %418, %419 in 1 : vector<8x3xf32>, vector<8x13xf32> -> vector<8x16xf32>
    %421 = vector.extract_strided_slice %415 {offsets = [0, 0, 0], sizes = [1, 8, 8], strides = [1, 1, 1]} : vector<9x8x8xbf16> to vector<1x8x8xbf16>
    %422 = vector.shape_cast %421 : vector<1x8x8xbf16> to vector<8x8xbf16>
    %423 = arith.truncf %420 : vector<8x16xf32> to vector<8x16xbf16>
    %cst_93 = arith.constant dense<0.000000e+00> : vector<8x16xf32>
    %424 = tpu.matmul %422, %423, %cst_93 {dimension_numbers = #tpu.dot_dimension_numbers<[1], [0], [0], [1], [0, 0, 1, 1], [], []>} : vector<8x8xbf16>, vector<8x16xbf16>, vector<8x16xf32> -> vector<8x16xf32>
    %425 = vector.extract_strided_slice %416 {offsets = [0, 0], sizes = [1, 16], strides = [1, 1]} : vector<9x16xf32> to vector<1x16xf32>
    %426 = vector.broadcast %425 : vector<1x16xf32> to vector<8x16xf32>
    %427 = arith.mulf %424, %426 : vector<8x16xf32>
    %428 = arith.addf %417, %427 : vector<8x16xf32>
    %429 = vector.extract_strided_slice %414 {offsets = [0, 14], sizes = [8, 2], strides = [1, 1]} : vector<8x16xf32> to vector<8x2xf32>
    %430 = vector.extract_strided_slice %414 {offsets = [0, 0], sizes = [8, 14], strides = [1, 1]} : vector<8x16xf32> to vector<8x14xf32>
    %431 = tpu.concatenate %429, %430 in 1 : vector<8x2xf32>, vector<8x14xf32> -> vector<8x16xf32>
    %432 = vector.extract_strided_slice %415 {offsets = [1, 0, 0], sizes = [1, 8, 8], strides = [1, 1, 1]} : vector<9x8x8xbf16> to vector<1x8x8xbf16>
    %433 = vector.shape_cast %432 : vector<1x8x8xbf16> to vector<8x8xbf16>
    %434 = arith.truncf %431 : vector<8x16xf32> to vector<8x16xbf16>
    %cst_94 = arith.constant dense<0.000000e+00> : vector<8x16xf32>
    %435 = tpu.matmul %433, %434, %cst_94 {dimension_numbers = #tpu.dot_dimension_numbers<[1], [0], [0], [1], [0, 0, 1, 1], [], []>} : vector<8x8xbf16>, vector<8x16xbf16>, vector<8x16xf32> -> vector<8x16xf32>
    %436 = vector.extract_strided_slice %416 {offsets = [1, 0], sizes = [1, 16], strides = [1, 1]} : vector<9x16xf32> to vector<1x16xf32>
    %437 = vector.broadcast %436 : vector<1x16xf32> to vector<8x16xf32>
    %438 = arith.mulf %435, %437 : vector<8x16xf32>
    %439 = arith.addf %428, %438 : vector<8x16xf32>
    %440 = vector.extract_strided_slice %414 {offsets = [0, 15], sizes = [8, 1], strides = [1, 1]} : vector<8x16xf32> to vector<8x1xf32>
    %441 = vector.extract_strided_slice %414 {offsets = [0, 0], sizes = [8, 15], strides = [1, 1]} : vector<8x16xf32> to vector<8x15xf32>
    %442 = tpu.concatenate %440, %441 in 1 : vector<8x1xf32>, vector<8x15xf32> -> vector<8x16xf32>
    %443 = vector.extract_strided_slice %415 {offsets = [2, 0, 0], sizes = [1, 8, 8], strides = [1, 1, 1]} : vector<9x8x8xbf16> to vector<1x8x8xbf16>
    %444 = vector.shape_cast %443 : vector<1x8x8xbf16> to vector<8x8xbf16>
    %445 = arith.truncf %442 : vector<8x16xf32> to vector<8x16xbf16>
    %cst_95 = arith.constant dense<0.000000e+00> : vector<8x16xf32>
    %446 = tpu.matmul %444, %445, %cst_95 {dimension_numbers = #tpu.dot_dimension_numbers<[1], [0], [0], [1], [0, 0, 1, 1], [], []>} : vector<8x8xbf16>, vector<8x16xbf16>, vector<8x16xf32> -> vector<8x16xf32>
    %447 = vector.extract_strided_slice %416 {offsets = [2, 0], sizes = [1, 16], strides = [1, 1]} : vector<9x16xf32> to vector<1x16xf32>
    %448 = vector.broadcast %447 : vector<1x16xf32> to vector<8x16xf32>
    %449 = arith.mulf %446, %448 : vector<8x16xf32>
    %450 = arith.addf %439, %449 : vector<8x16xf32>
    %451 = vector.extract_strided_slice %414 {offsets = [0, 15], sizes = [8, 1], strides = [1, 1]} : vector<8x16xf32> to vector<8x1xf32>
    %452 = vector.extract_strided_slice %414 {offsets = [0, 0], sizes = [8, 15], strides = [1, 1]} : vector<8x16xf32> to vector<8x15xf32>
    %453 = tpu.concatenate %451, %452 in 1 : vector<8x1xf32>, vector<8x15xf32> -> vector<8x16xf32>
    %454 = vector.extract_strided_slice %415 {offsets = [3, 0, 0], sizes = [1, 8, 8], strides = [1, 1, 1]} : vector<9x8x8xbf16> to vector<1x8x8xbf16>
    %455 = vector.shape_cast %454 : vector<1x8x8xbf16> to vector<8x8xbf16>
    %456 = arith.truncf %453 : vector<8x16xf32> to vector<8x16xbf16>
    %cst_96 = arith.constant dense<0.000000e+00> : vector<8x16xf32>
    %457 = tpu.matmul %455, %456, %cst_96 {dimension_numbers = #tpu.dot_dimension_numbers<[1], [0], [0], [1], [0, 0, 1, 1], [], []>} : vector<8x8xbf16>, vector<8x16xbf16>, vector<8x16xf32> -> vector<8x16xf32>
    %458 = vector.extract_strided_slice %416 {offsets = [3, 0], sizes = [1, 16], strides = [1, 1]} : vector<9x16xf32> to vector<1x16xf32>
    %459 = vector.broadcast %458 : vector<1x16xf32> to vector<8x16xf32>
    %460 = arith.mulf %457, %459 : vector<8x16xf32>
    %461 = arith.addf %450, %460 : vector<8x16xf32>
    %462 = vector.extract_strided_slice %415 {offsets = [4, 0, 0], sizes = [1, 8, 8], strides = [1, 1, 1]} : vector<9x8x8xbf16> to vector<1x8x8xbf16>
    %463 = vector.shape_cast %462 : vector<1x8x8xbf16> to vector<8x8xbf16>
    %464 = arith.truncf %414 : vector<8x16xf32> to vector<8x16xbf16>
    %cst_97 = arith.constant dense<0.000000e+00> : vector<8x16xf32>
    %465 = tpu.matmul %463, %464, %cst_97 {dimension_numbers = #tpu.dot_dimension_numbers<[1], [0], [0], [1], [0, 0, 1, 1], [], []>} : vector<8x8xbf16>, vector<8x16xbf16>, vector<8x16xf32> -> vector<8x16xf32>
    %466 = arith.addf %461, %465 : vector<8x16xf32>
    %467 = vector.extract_strided_slice %414 {offsets = [0, 1], sizes = [8, 15], strides = [1, 1]} : vector<8x16xf32> to vector<8x15xf32>
    %468 = vector.extract_strided_slice %414 {offsets = [0, 0], sizes = [8, 1], strides = [1, 1]} : vector<8x16xf32> to vector<8x1xf32>
    %469 = tpu.concatenate %467, %468 in 1 : vector<8x15xf32>, vector<8x1xf32> -> vector<8x16xf32>
    %470 = vector.extract_strided_slice %415 {offsets = [5, 0, 0], sizes = [1, 8, 8], strides = [1, 1, 1]} : vector<9x8x8xbf16> to vector<1x8x8xbf16>
    %471 = vector.shape_cast %470 : vector<1x8x8xbf16> to vector<8x8xbf16>
    %472 = arith.truncf %469 : vector<8x16xf32> to vector<8x16xbf16>
    %cst_98 = arith.constant dense<0.000000e+00> : vector<8x16xf32>
    %473 = tpu.matmul %471, %472, %cst_98 {dimension_numbers = #tpu.dot_dimension_numbers<[1], [0], [0], [1], [0, 0, 1, 1], [], []>} : vector<8x8xbf16>, vector<8x16xbf16>, vector<8x16xf32> -> vector<8x16xf32>
    %474 = vector.extract_strided_slice %416 {offsets = [5, 0], sizes = [1, 16], strides = [1, 1]} : vector<9x16xf32> to vector<1x16xf32>
    %475 = vector.broadcast %474 : vector<1x16xf32> to vector<8x16xf32>
    %476 = arith.mulf %473, %475 : vector<8x16xf32>
    %477 = arith.addf %466, %476 : vector<8x16xf32>
    %478 = vector.extract_strided_slice %414 {offsets = [0, 1], sizes = [8, 15], strides = [1, 1]} : vector<8x16xf32> to vector<8x15xf32>
    %479 = vector.extract_strided_slice %414 {offsets = [0, 0], sizes = [8, 1], strides = [1, 1]} : vector<8x16xf32> to vector<8x1xf32>
    %480 = tpu.concatenate %478, %479 in 1 : vector<8x15xf32>, vector<8x1xf32> -> vector<8x16xf32>
    %481 = vector.extract_strided_slice %415 {offsets = [6, 0, 0], sizes = [1, 8, 8], strides = [1, 1, 1]} : vector<9x8x8xbf16> to vector<1x8x8xbf16>
    %482 = vector.shape_cast %481 : vector<1x8x8xbf16> to vector<8x8xbf16>
    %483 = arith.truncf %480 : vector<8x16xf32> to vector<8x16xbf16>
    %cst_99 = arith.constant dense<0.000000e+00> : vector<8x16xf32>
    %484 = tpu.matmul %482, %483, %cst_99 {dimension_numbers = #tpu.dot_dimension_numbers<[1], [0], [0], [1], [0, 0, 1, 1], [], []>} : vector<8x8xbf16>, vector<8x16xbf16>, vector<8x16xf32> -> vector<8x16xf32>
    %485 = vector.extract_strided_slice %416 {offsets = [6, 0], sizes = [1, 16], strides = [1, 1]} : vector<9x16xf32> to vector<1x16xf32>
    %486 = vector.broadcast %485 : vector<1x16xf32> to vector<8x16xf32>
    %487 = arith.mulf %484, %486 : vector<8x16xf32>
    %488 = arith.addf %477, %487 : vector<8x16xf32>
    %489 = vector.extract_strided_slice %414 {offsets = [0, 2], sizes = [8, 14], strides = [1, 1]} : vector<8x16xf32> to vector<8x14xf32>
    %490 = vector.extract_strided_slice %414 {offsets = [0, 0], sizes = [8, 2], strides = [1, 1]} : vector<8x16xf32> to vector<8x2xf32>
    %491 = tpu.concatenate %489, %490 in 1 : vector<8x14xf32>, vector<8x2xf32> -> vector<8x16xf32>
    %492 = vector.extract_strided_slice %415 {offsets = [7, 0, 0], sizes = [1, 8, 8], strides = [1, 1, 1]} : vector<9x8x8xbf16> to vector<1x8x8xbf16>
    %493 = vector.shape_cast %492 : vector<1x8x8xbf16> to vector<8x8xbf16>
    %494 = arith.truncf %491 : vector<8x16xf32> to vector<8x16xbf16>
    %cst_100 = arith.constant dense<0.000000e+00> : vector<8x16xf32>
    %495 = tpu.matmul %493, %494, %cst_100 {dimension_numbers = #tpu.dot_dimension_numbers<[1], [0], [0], [1], [0, 0, 1, 1], [], []>} : vector<8x8xbf16>, vector<8x16xbf16>, vector<8x16xf32> -> vector<8x16xf32>
    %496 = vector.extract_strided_slice %416 {offsets = [7, 0], sizes = [1, 16], strides = [1, 1]} : vector<9x16xf32> to vector<1x16xf32>
    %497 = vector.broadcast %496 : vector<1x16xf32> to vector<8x16xf32>
    %498 = arith.mulf %495, %497 : vector<8x16xf32>
    %499 = arith.addf %488, %498 : vector<8x16xf32>
    %500 = vector.extract_strided_slice %414 {offsets = [0, 3], sizes = [8, 13], strides = [1, 1]} : vector<8x16xf32> to vector<8x13xf32>
    %501 = vector.extract_strided_slice %414 {offsets = [0, 0], sizes = [8, 3], strides = [1, 1]} : vector<8x16xf32> to vector<8x3xf32>
    %502 = tpu.concatenate %500, %501 in 1 : vector<8x13xf32>, vector<8x3xf32> -> vector<8x16xf32>
    %503 = vector.extract_strided_slice %415 {offsets = [8, 0, 0], sizes = [1, 8, 8], strides = [1, 1, 1]} : vector<9x8x8xbf16> to vector<1x8x8xbf16>
    %504 = vector.shape_cast %503 : vector<1x8x8xbf16> to vector<8x8xbf16>
    %505 = arith.truncf %502 : vector<8x16xf32> to vector<8x16xbf16>
    %cst_101 = arith.constant dense<0.000000e+00> : vector<8x16xf32>
    %506 = tpu.matmul %504, %505, %cst_101 {dimension_numbers = #tpu.dot_dimension_numbers<[1], [0], [0], [1], [0, 0, 1, 1], [], []>} : vector<8x8xbf16>, vector<8x16xbf16>, vector<8x16xf32> -> vector<8x16xf32>
    %507 = vector.extract_strided_slice %416 {offsets = [8, 0], sizes = [1, 16], strides = [1, 1]} : vector<9x16xf32> to vector<1x16xf32>
    %508 = vector.broadcast %507 : vector<1x16xf32> to vector<8x16xf32>
    %509 = arith.mulf %506, %508 : vector<8x16xf32>
    %510 = arith.addf %499, %509 : vector<8x16xf32>
    %c0_102 = arith.constant 0 : index
    %c0_103 = arith.constant 0 : index
    %511 = vector.load %arg14[%c0_102, %c0_103] : memref<8x1xf32, #tpu.memory_space<vmem>>, vector<8x1xf32>
    %512 = vector.broadcast %511 : vector<8x1xf32> to vector<8x16xf32>
    %513 = arith.addf %510, %512 : vector<8x16xf32>
    %cst_104 = arith.constant 0.000000e+00 : f32
    %514 = vector.broadcast %cst_104 : f32 to vector<8x16xf32>
    %515 = arith.maximumf %513, %514 : vector<8x16xf32>
    %516 = arith.addf %515, %309 : vector<8x16xf32>
    %c0_105 = arith.constant 0 : index
    %c0_106 = arith.constant 0 : index
    %517 = vector.load %arg30[%c0_105, %c0_106] : memref<16x64xf32, #tpu.memory_space<vmem>>, vector<16x64xf32>
    %cst_107 = arith.constant dense<0.000000e+00> : vector<8x64xf32>
    %518 = tpu.matmul %516, %517, %cst_107 {dimension_numbers = #tpu.dot_dimension_numbers<[1], [0], [0], [1], [0, 0, 1, 1], [], []>} : vector<8x16xf32>, vector<16x64xf32>, vector<8x64xf32> -> vector<8x64xf32>
    %c0_108 = arith.constant 0 : index
    %c0_109 = arith.constant 0 : index
    %c0_110 = arith.constant 0 : index
    %519 = vector.load %arg16[%c0_108, %c0_109, %c0_110] : memref<9x8x8xbf16, #tpu.memory_space<vmem>>, vector<9x8x8xbf16>
    %c0_111 = arith.constant 0 : index
    %c0_112 = arith.constant 0 : index
    %520 = vector.load %arg18[%c0_111, %c0_112] : memref<9x64xf32, #tpu.memory_space<vmem>>, vector<9x64xf32>
    %cst_113 = arith.constant 0.000000e+00 : f32
    %521 = vector.broadcast %cst_113 : f32 to vector<8x64xf32>
    %522 = vector.extract_strided_slice %518 {offsets = [0, 59], sizes = [8, 5], strides = [1, 1]} : vector<8x64xf32> to vector<8x5xf32>
    %523 = vector.extract_strided_slice %518 {offsets = [0, 0], sizes = [8, 59], strides = [1, 1]} : vector<8x64xf32> to vector<8x59xf32>
    %524 = tpu.concatenate %522, %523 in 1 : vector<8x5xf32>, vector<8x59xf32> -> vector<8x64xf32>
    %525 = vector.extract_strided_slice %519 {offsets = [0, 0, 0], sizes = [1, 8, 8], strides = [1, 1, 1]} : vector<9x8x8xbf16> to vector<1x8x8xbf16>
    %526 = vector.shape_cast %525 : vector<1x8x8xbf16> to vector<8x8xbf16>
    %527 = arith.truncf %524 : vector<8x64xf32> to vector<8x64xbf16>
    %cst_114 = arith.constant dense<0.000000e+00> : vector<8x64xf32>
    %528 = tpu.matmul %526, %527, %cst_114 {dimension_numbers = #tpu.dot_dimension_numbers<[1], [0], [0], [1], [0, 0, 1, 1], [], []>} : vector<8x8xbf16>, vector<8x64xbf16>, vector<8x64xf32> -> vector<8x64xf32>
    %529 = vector.extract_strided_slice %520 {offsets = [0, 0], sizes = [1, 64], strides = [1, 1]} : vector<9x64xf32> to vector<1x64xf32>
    %530 = vector.broadcast %529 : vector<1x64xf32> to vector<8x64xf32>
    %531 = arith.mulf %528, %530 : vector<8x64xf32>
    %532 = arith.addf %521, %531 : vector<8x64xf32>
    %533 = vector.extract_strided_slice %518 {offsets = [0, 60], sizes = [8, 4], strides = [1, 1]} : vector<8x64xf32> to vector<8x4xf32>
    %534 = vector.extract_strided_slice %518 {offsets = [0, 0], sizes = [8, 60], strides = [1, 1]} : vector<8x64xf32> to vector<8x60xf32>
    %535 = tpu.concatenate %533, %534 in 1 : vector<8x4xf32>, vector<8x60xf32> -> vector<8x64xf32>
    %536 = vector.extract_strided_slice %519 {offsets = [1, 0, 0], sizes = [1, 8, 8], strides = [1, 1, 1]} : vector<9x8x8xbf16> to vector<1x8x8xbf16>
    %537 = vector.shape_cast %536 : vector<1x8x8xbf16> to vector<8x8xbf16>
    %538 = arith.truncf %535 : vector<8x64xf32> to vector<8x64xbf16>
    %cst_115 = arith.constant dense<0.000000e+00> : vector<8x64xf32>
    %539 = tpu.matmul %537, %538, %cst_115 {dimension_numbers = #tpu.dot_dimension_numbers<[1], [0], [0], [1], [0, 0, 1, 1], [], []>} : vector<8x8xbf16>, vector<8x64xbf16>, vector<8x64xf32> -> vector<8x64xf32>
    %540 = vector.extract_strided_slice %520 {offsets = [1, 0], sizes = [1, 64], strides = [1, 1]} : vector<9x64xf32> to vector<1x64xf32>
    %541 = vector.broadcast %540 : vector<1x64xf32> to vector<8x64xf32>
    %542 = arith.mulf %539, %541 : vector<8x64xf32>
    %543 = arith.addf %532, %542 : vector<8x64xf32>
    %544 = vector.extract_strided_slice %518 {offsets = [0, 61], sizes = [8, 3], strides = [1, 1]} : vector<8x64xf32> to vector<8x3xf32>
    %545 = vector.extract_strided_slice %518 {offsets = [0, 0], sizes = [8, 61], strides = [1, 1]} : vector<8x64xf32> to vector<8x61xf32>
    %546 = tpu.concatenate %544, %545 in 1 : vector<8x3xf32>, vector<8x61xf32> -> vector<8x64xf32>
    %547 = vector.extract_strided_slice %519 {offsets = [2, 0, 0], sizes = [1, 8, 8], strides = [1, 1, 1]} : vector<9x8x8xbf16> to vector<1x8x8xbf16>
    %548 = vector.shape_cast %547 : vector<1x8x8xbf16> to vector<8x8xbf16>
    %549 = arith.truncf %546 : vector<8x64xf32> to vector<8x64xbf16>
    %cst_116 = arith.constant dense<0.000000e+00> : vector<8x64xf32>
    %550 = tpu.matmul %548, %549, %cst_116 {dimension_numbers = #tpu.dot_dimension_numbers<[1], [0], [0], [1], [0, 0, 1, 1], [], []>} : vector<8x8xbf16>, vector<8x64xbf16>, vector<8x64xf32> -> vector<8x64xf32>
    %551 = vector.extract_strided_slice %520 {offsets = [2, 0], sizes = [1, 64], strides = [1, 1]} : vector<9x64xf32> to vector<1x64xf32>
    %552 = vector.broadcast %551 : vector<1x64xf32> to vector<8x64xf32>
    %553 = arith.mulf %550, %552 : vector<8x64xf32>
    %554 = arith.addf %543, %553 : vector<8x64xf32>
    %555 = vector.extract_strided_slice %518 {offsets = [0, 63], sizes = [8, 1], strides = [1, 1]} : vector<8x64xf32> to vector<8x1xf32>
    %556 = vector.extract_strided_slice %518 {offsets = [0, 0], sizes = [8, 63], strides = [1, 1]} : vector<8x64xf32> to vector<8x63xf32>
    %557 = tpu.concatenate %555, %556 in 1 : vector<8x1xf32>, vector<8x63xf32> -> vector<8x64xf32>
    %558 = vector.extract_strided_slice %519 {offsets = [3, 0, 0], sizes = [1, 8, 8], strides = [1, 1, 1]} : vector<9x8x8xbf16> to vector<1x8x8xbf16>
    %559 = vector.shape_cast %558 : vector<1x8x8xbf16> to vector<8x8xbf16>
    %560 = arith.truncf %557 : vector<8x64xf32> to vector<8x64xbf16>
    %cst_117 = arith.constant dense<0.000000e+00> : vector<8x64xf32>
    %561 = tpu.matmul %559, %560, %cst_117 {dimension_numbers = #tpu.dot_dimension_numbers<[1], [0], [0], [1], [0, 0, 1, 1], [], []>} : vector<8x8xbf16>, vector<8x64xbf16>, vector<8x64xf32> -> vector<8x64xf32>
    %562 = vector.extract_strided_slice %520 {offsets = [3, 0], sizes = [1, 64], strides = [1, 1]} : vector<9x64xf32> to vector<1x64xf32>
    %563 = vector.broadcast %562 : vector<1x64xf32> to vector<8x64xf32>
    %564 = arith.mulf %561, %563 : vector<8x64xf32>
    %565 = arith.addf %554, %564 : vector<8x64xf32>
    %566 = vector.extract_strided_slice %519 {offsets = [4, 0, 0], sizes = [1, 8, 8], strides = [1, 1, 1]} : vector<9x8x8xbf16> to vector<1x8x8xbf16>
    %567 = vector.shape_cast %566 : vector<1x8x8xbf16> to vector<8x8xbf16>
    %568 = arith.truncf %518 : vector<8x64xf32> to vector<8x64xbf16>
    %cst_118 = arith.constant dense<0.000000e+00> : vector<8x64xf32>
    %569 = tpu.matmul %567, %568, %cst_118 {dimension_numbers = #tpu.dot_dimension_numbers<[1], [0], [0], [1], [0, 0, 1, 1], [], []>} : vector<8x8xbf16>, vector<8x64xbf16>, vector<8x64xf32> -> vector<8x64xf32>
    %570 = arith.addf %565, %569 : vector<8x64xf32>
    %571 = vector.extract_strided_slice %518 {offsets = [0, 1], sizes = [8, 63], strides = [1, 1]} : vector<8x64xf32> to vector<8x63xf32>
    %572 = vector.extract_strided_slice %518 {offsets = [0, 0], sizes = [8, 1], strides = [1, 1]} : vector<8x64xf32> to vector<8x1xf32>
    %573 = tpu.concatenate %571, %572 in 1 : vector<8x63xf32>, vector<8x1xf32> -> vector<8x64xf32>
    %574 = vector.extract_strided_slice %519 {offsets = [5, 0, 0], sizes = [1, 8, 8], strides = [1, 1, 1]} : vector<9x8x8xbf16> to vector<1x8x8xbf16>
    %575 = vector.shape_cast %574 : vector<1x8x8xbf16> to vector<8x8xbf16>
    %576 = arith.truncf %573 : vector<8x64xf32> to vector<8x64xbf16>
    %cst_119 = arith.constant dense<0.000000e+00> : vector<8x64xf32>
    %577 = tpu.matmul %575, %576, %cst_119 {dimension_numbers = #tpu.dot_dimension_numbers<[1], [0], [0], [1], [0, 0, 1, 1], [], []>} : vector<8x8xbf16>, vector<8x64xbf16>, vector<8x64xf32> -> vector<8x64xf32>
    %578 = vector.extract_strided_slice %520 {offsets = [5, 0], sizes = [1, 64], strides = [1, 1]} : vector<9x64xf32> to vector<1x64xf32>
    %579 = vector.broadcast %578 : vector<1x64xf32> to vector<8x64xf32>
    %580 = arith.mulf %577, %579 : vector<8x64xf32>
    %581 = arith.addf %570, %580 : vector<8x64xf32>
    %582 = vector.extract_strided_slice %518 {offsets = [0, 3], sizes = [8, 61], strides = [1, 1]} : vector<8x64xf32> to vector<8x61xf32>
    %583 = vector.extract_strided_slice %518 {offsets = [0, 0], sizes = [8, 3], strides = [1, 1]} : vector<8x64xf32> to vector<8x3xf32>
    %584 = tpu.concatenate %582, %583 in 1 : vector<8x61xf32>, vector<8x3xf32> -> vector<8x64xf32>
    %585 = vector.extract_strided_slice %519 {offsets = [6, 0, 0], sizes = [1, 8, 8], strides = [1, 1, 1]} : vector<9x8x8xbf16> to vector<1x8x8xbf16>
    %586 = vector.shape_cast %585 : vector<1x8x8xbf16> to vector<8x8xbf16>
    %587 = arith.truncf %584 : vector<8x64xf32> to vector<8x64xbf16>
    %cst_120 = arith.constant dense<0.000000e+00> : vector<8x64xf32>
    %588 = tpu.matmul %586, %587, %cst_120 {dimension_numbers = #tpu.dot_dimension_numbers<[1], [0], [0], [1], [0, 0, 1, 1], [], []>} : vector<8x8xbf16>, vector<8x64xbf16>, vector<8x64xf32> -> vector<8x64xf32>
    %589 = vector.extract_strided_slice %520 {offsets = [6, 0], sizes = [1, 64], strides = [1, 1]} : vector<9x64xf32> to vector<1x64xf32>
    %590 = vector.broadcast %589 : vector<1x64xf32> to vector<8x64xf32>
    %591 = arith.mulf %588, %590 : vector<8x64xf32>
    %592 = arith.addf %581, %591 : vector<8x64xf32>
    %593 = vector.extract_strided_slice %518 {offsets = [0, 4], sizes = [8, 60], strides = [1, 1]} : vector<8x64xf32> to vector<8x60xf32>
    %594 = vector.extract_strided_slice %518 {offsets = [0, 0], sizes = [8, 4], strides = [1, 1]} : vector<8x64xf32> to vector<8x4xf32>
    %595 = tpu.concatenate %593, %594 in 1 : vector<8x60xf32>, vector<8x4xf32> -> vector<8x64xf32>
    %596 = vector.extract_strided_slice %519 {offsets = [7, 0, 0], sizes = [1, 8, 8], strides = [1, 1, 1]} : vector<9x8x8xbf16> to vector<1x8x8xbf16>
    %597 = vector.shape_cast %596 : vector<1x8x8xbf16> to vector<8x8xbf16>
    %598 = arith.truncf %595 : vector<8x64xf32> to vector<8x64xbf16>
    %cst_121 = arith.constant dense<0.000000e+00> : vector<8x64xf32>
    %599 = tpu.matmul %597, %598, %cst_121 {dimension_numbers = #tpu.dot_dimension_numbers<[1], [0], [0], [1], [0, 0, 1, 1], [], []>} : vector<8x8xbf16>, vector<8x64xbf16>, vector<8x64xf32> -> vector<8x64xf32>
    %600 = vector.extract_strided_slice %520 {offsets = [7, 0], sizes = [1, 64], strides = [1, 1]} : vector<9x64xf32> to vector<1x64xf32>
    %601 = vector.broadcast %600 : vector<1x64xf32> to vector<8x64xf32>
    %602 = arith.mulf %599, %601 : vector<8x64xf32>
    %603 = arith.addf %592, %602 : vector<8x64xf32>
    %604 = vector.extract_strided_slice %518 {offsets = [0, 5], sizes = [8, 59], strides = [1, 1]} : vector<8x64xf32> to vector<8x59xf32>
    %605 = vector.extract_strided_slice %518 {offsets = [0, 0], sizes = [8, 5], strides = [1, 1]} : vector<8x64xf32> to vector<8x5xf32>
    %606 = tpu.concatenate %604, %605 in 1 : vector<8x59xf32>, vector<8x5xf32> -> vector<8x64xf32>
    %607 = vector.extract_strided_slice %519 {offsets = [8, 0, 0], sizes = [1, 8, 8], strides = [1, 1, 1]} : vector<9x8x8xbf16> to vector<1x8x8xbf16>
    %608 = vector.shape_cast %607 : vector<1x8x8xbf16> to vector<8x8xbf16>
    %609 = arith.truncf %606 : vector<8x64xf32> to vector<8x64xbf16>
    %cst_122 = arith.constant dense<0.000000e+00> : vector<8x64xf32>
    %610 = tpu.matmul %608, %609, %cst_122 {dimension_numbers = #tpu.dot_dimension_numbers<[1], [0], [0], [1], [0, 0, 1, 1], [], []>} : vector<8x8xbf16>, vector<8x64xbf16>, vector<8x64xf32> -> vector<8x64xf32>
    %611 = vector.extract_strided_slice %520 {offsets = [8, 0], sizes = [1, 64], strides = [1, 1]} : vector<9x64xf32> to vector<1x64xf32>
    %612 = vector.broadcast %611 : vector<1x64xf32> to vector<8x64xf32>
    %613 = arith.mulf %610, %612 : vector<8x64xf32>
    %614 = arith.addf %603, %613 : vector<8x64xf32>
    %c0_123 = arith.constant 0 : index
    %c0_124 = arith.constant 0 : index
    %615 = vector.load %arg17[%c0_123, %c0_124] : memref<8x1xf32, #tpu.memory_space<vmem>>, vector<8x1xf32>
    %616 = vector.broadcast %615 : vector<8x1xf32> to vector<8x64xf32>
    %617 = arith.addf %614, %616 : vector<8x64xf32>
    %cst_125 = arith.constant 0.000000e+00 : f32
    %618 = vector.broadcast %cst_125 : f32 to vector<8x64xf32>
    %619 = arith.maximumf %617, %618 : vector<8x64xf32>
    %620 = arith.addf %619, %206 : vector<8x64xf32>
    %c0_126 = arith.constant 0 : index
    %c0_127 = arith.constant 0 : index
    %621 = vector.load %arg31[%c0_126, %c0_127] : memref<64x256xf32, #tpu.memory_space<vmem>>, vector<64x256xf32>
    %cst_128 = arith.constant dense<0.000000e+00> : vector<8x256xf32>
    %622 = tpu.matmul %620, %621, %cst_128 {dimension_numbers = #tpu.dot_dimension_numbers<[1], [0], [0], [1], [0, 0, 1, 1], [], []>} : vector<8x64xf32>, vector<64x256xf32>, vector<8x256xf32> -> vector<8x256xf32>
    %c0_129 = arith.constant 0 : index
    %c0_130 = arith.constant 0 : index
    %c0_131 = arith.constant 0 : index
    %623 = vector.load %arg19[%c0_129, %c0_130, %c0_131] : memref<9x8x8xbf16, #tpu.memory_space<vmem>>, vector<9x8x8xbf16>
    %c0_132 = arith.constant 0 : index
    %c0_133 = arith.constant 0 : index
    %624 = vector.load %arg21[%c0_132, %c0_133] : memref<9x256xf32, #tpu.memory_space<vmem>>, vector<9x256xf32>
    %cst_134 = arith.constant 0.000000e+00 : f32
    %625 = vector.broadcast %cst_134 : f32 to vector<8x256xf32>
    %626 = vector.extract_strided_slice %622 {offsets = [0, 247], sizes = [8, 9], strides = [1, 1]} : vector<8x256xf32> to vector<8x9xf32>
    %627 = vector.extract_strided_slice %622 {offsets = [0, 0], sizes = [8, 247], strides = [1, 1]} : vector<8x256xf32> to vector<8x247xf32>
    %628 = tpu.concatenate %626, %627 in 1 : vector<8x9xf32>, vector<8x247xf32> -> vector<8x256xf32>
    %629 = vector.extract_strided_slice %623 {offsets = [0, 0, 0], sizes = [1, 8, 8], strides = [1, 1, 1]} : vector<9x8x8xbf16> to vector<1x8x8xbf16>
    %630 = vector.shape_cast %629 : vector<1x8x8xbf16> to vector<8x8xbf16>
    %631 = arith.truncf %628 : vector<8x256xf32> to vector<8x256xbf16>
    %cst_135 = arith.constant dense<0.000000e+00> : vector<8x256xf32>
    %632 = tpu.matmul %630, %631, %cst_135 {dimension_numbers = #tpu.dot_dimension_numbers<[1], [0], [0], [1], [0, 0, 1, 1], [], []>} : vector<8x8xbf16>, vector<8x256xbf16>, vector<8x256xf32> -> vector<8x256xf32>
    %633 = vector.extract_strided_slice %624 {offsets = [0, 0], sizes = [1, 256], strides = [1, 1]} : vector<9x256xf32> to vector<1x256xf32>
    %634 = vector.broadcast %633 : vector<1x256xf32> to vector<8x256xf32>
    %635 = arith.mulf %632, %634 : vector<8x256xf32>
    %636 = arith.addf %625, %635 : vector<8x256xf32>
    %637 = vector.extract_strided_slice %622 {offsets = [0, 248], sizes = [8, 8], strides = [1, 1]} : vector<8x256xf32> to vector<8x8xf32>
    %638 = vector.extract_strided_slice %622 {offsets = [0, 0], sizes = [8, 248], strides = [1, 1]} : vector<8x256xf32> to vector<8x248xf32>
    %639 = tpu.concatenate %637, %638 in 1 : vector<8x8xf32>, vector<8x248xf32> -> vector<8x256xf32>
    %640 = vector.extract_strided_slice %623 {offsets = [1, 0, 0], sizes = [1, 8, 8], strides = [1, 1, 1]} : vector<9x8x8xbf16> to vector<1x8x8xbf16>
    %641 = vector.shape_cast %640 : vector<1x8x8xbf16> to vector<8x8xbf16>
    %642 = arith.truncf %639 : vector<8x256xf32> to vector<8x256xbf16>
    %cst_136 = arith.constant dense<0.000000e+00> : vector<8x256xf32>
    %643 = tpu.matmul %641, %642, %cst_136 {dimension_numbers = #tpu.dot_dimension_numbers<[1], [0], [0], [1], [0, 0, 1, 1], [], []>} : vector<8x8xbf16>, vector<8x256xbf16>, vector<8x256xf32> -> vector<8x256xf32>
    %644 = vector.extract_strided_slice %624 {offsets = [1, 0], sizes = [1, 256], strides = [1, 1]} : vector<9x256xf32> to vector<1x256xf32>
    %645 = vector.broadcast %644 : vector<1x256xf32> to vector<8x256xf32>
    %646 = arith.mulf %643, %645 : vector<8x256xf32>
    %647 = arith.addf %636, %646 : vector<8x256xf32>
    %648 = vector.extract_strided_slice %622 {offsets = [0, 249], sizes = [8, 7], strides = [1, 1]} : vector<8x256xf32> to vector<8x7xf32>
    %649 = vector.extract_strided_slice %622 {offsets = [0, 0], sizes = [8, 249], strides = [1, 1]} : vector<8x256xf32> to vector<8x249xf32>
    %650 = tpu.concatenate %648, %649 in 1 : vector<8x7xf32>, vector<8x249xf32> -> vector<8x256xf32>
    %651 = vector.extract_strided_slice %623 {offsets = [2, 0, 0], sizes = [1, 8, 8], strides = [1, 1, 1]} : vector<9x8x8xbf16> to vector<1x8x8xbf16>
    %652 = vector.shape_cast %651 : vector<1x8x8xbf16> to vector<8x8xbf16>
    %653 = arith.truncf %650 : vector<8x256xf32> to vector<8x256xbf16>
    %cst_137 = arith.constant dense<0.000000e+00> : vector<8x256xf32>
    %654 = tpu.matmul %652, %653, %cst_137 {dimension_numbers = #tpu.dot_dimension_numbers<[1], [0], [0], [1], [0, 0, 1, 1], [], []>} : vector<8x8xbf16>, vector<8x256xbf16>, vector<8x256xf32> -> vector<8x256xf32>
    %655 = vector.extract_strided_slice %624 {offsets = [2, 0], sizes = [1, 256], strides = [1, 1]} : vector<9x256xf32> to vector<1x256xf32>
    %656 = vector.broadcast %655 : vector<1x256xf32> to vector<8x256xf32>
    %657 = arith.mulf %654, %656 : vector<8x256xf32>
    %658 = arith.addf %647, %657 : vector<8x256xf32>
    %659 = vector.extract_strided_slice %622 {offsets = [0, 255], sizes = [8, 1], strides = [1, 1]} : vector<8x256xf32> to vector<8x1xf32>
    %660 = vector.extract_strided_slice %622 {offsets = [0, 0], sizes = [8, 255], strides = [1, 1]} : vector<8x256xf32> to vector<8x255xf32>
    %661 = tpu.concatenate %659, %660 in 1 : vector<8x1xf32>, vector<8x255xf32> -> vector<8x256xf32>
    %662 = vector.extract_strided_slice %623 {offsets = [3, 0, 0], sizes = [1, 8, 8], strides = [1, 1, 1]} : vector<9x8x8xbf16> to vector<1x8x8xbf16>
    %663 = vector.shape_cast %662 : vector<1x8x8xbf16> to vector<8x8xbf16>
    %664 = arith.truncf %661 : vector<8x256xf32> to vector<8x256xbf16>
    %cst_138 = arith.constant dense<0.000000e+00> : vector<8x256xf32>
    %665 = tpu.matmul %663, %664, %cst_138 {dimension_numbers = #tpu.dot_dimension_numbers<[1], [0], [0], [1], [0, 0, 1, 1], [], []>} : vector<8x8xbf16>, vector<8x256xbf16>, vector<8x256xf32> -> vector<8x256xf32>
    %666 = vector.extract_strided_slice %624 {offsets = [3, 0], sizes = [1, 256], strides = [1, 1]} : vector<9x256xf32> to vector<1x256xf32>
    %667 = vector.broadcast %666 : vector<1x256xf32> to vector<8x256xf32>
    %668 = arith.mulf %665, %667 : vector<8x256xf32>
    %669 = arith.addf %658, %668 : vector<8x256xf32>
    %670 = vector.extract_strided_slice %623 {offsets = [4, 0, 0], sizes = [1, 8, 8], strides = [1, 1, 1]} : vector<9x8x8xbf16> to vector<1x8x8xbf16>
    %671 = vector.shape_cast %670 : vector<1x8x8xbf16> to vector<8x8xbf16>
    %672 = arith.truncf %622 : vector<8x256xf32> to vector<8x256xbf16>
    %cst_139 = arith.constant dense<0.000000e+00> : vector<8x256xf32>
    %673 = tpu.matmul %671, %672, %cst_139 {dimension_numbers = #tpu.dot_dimension_numbers<[1], [0], [0], [1], [0, 0, 1, 1], [], []>} : vector<8x8xbf16>, vector<8x256xbf16>, vector<8x256xf32> -> vector<8x256xf32>
    %674 = arith.addf %669, %673 : vector<8x256xf32>
    %675 = vector.extract_strided_slice %622 {offsets = [0, 1], sizes = [8, 255], strides = [1, 1]} : vector<8x256xf32> to vector<8x255xf32>
    %676 = vector.extract_strided_slice %622 {offsets = [0, 0], sizes = [8, 1], strides = [1, 1]} : vector<8x256xf32> to vector<8x1xf32>
    %677 = tpu.concatenate %675, %676 in 1 : vector<8x255xf32>, vector<8x1xf32> -> vector<8x256xf32>
    %678 = vector.extract_strided_slice %623 {offsets = [5, 0, 0], sizes = [1, 8, 8], strides = [1, 1, 1]} : vector<9x8x8xbf16> to vector<1x8x8xbf16>
    %679 = vector.shape_cast %678 : vector<1x8x8xbf16> to vector<8x8xbf16>
    %680 = arith.truncf %677 : vector<8x256xf32> to vector<8x256xbf16>
    %cst_140 = arith.constant dense<0.000000e+00> : vector<8x256xf32>
    %681 = tpu.matmul %679, %680, %cst_140 {dimension_numbers = #tpu.dot_dimension_numbers<[1], [0], [0], [1], [0, 0, 1, 1], [], []>} : vector<8x8xbf16>, vector<8x256xbf16>, vector<8x256xf32> -> vector<8x256xf32>
    %682 = vector.extract_strided_slice %624 {offsets = [5, 0], sizes = [1, 256], strides = [1, 1]} : vector<9x256xf32> to vector<1x256xf32>
    %683 = vector.broadcast %682 : vector<1x256xf32> to vector<8x256xf32>
    %684 = arith.mulf %681, %683 : vector<8x256xf32>
    %685 = arith.addf %674, %684 : vector<8x256xf32>
    %686 = vector.extract_strided_slice %622 {offsets = [0, 7], sizes = [8, 249], strides = [1, 1]} : vector<8x256xf32> to vector<8x249xf32>
    %687 = vector.extract_strided_slice %622 {offsets = [0, 0], sizes = [8, 7], strides = [1, 1]} : vector<8x256xf32> to vector<8x7xf32>
    %688 = tpu.concatenate %686, %687 in 1 : vector<8x249xf32>, vector<8x7xf32> -> vector<8x256xf32>
    %689 = vector.extract_strided_slice %623 {offsets = [6, 0, 0], sizes = [1, 8, 8], strides = [1, 1, 1]} : vector<9x8x8xbf16> to vector<1x8x8xbf16>
    %690 = vector.shape_cast %689 : vector<1x8x8xbf16> to vector<8x8xbf16>
    %691 = arith.truncf %688 : vector<8x256xf32> to vector<8x256xbf16>
    %cst_141 = arith.constant dense<0.000000e+00> : vector<8x256xf32>
    %692 = tpu.matmul %690, %691, %cst_141 {dimension_numbers = #tpu.dot_dimension_numbers<[1], [0], [0], [1], [0, 0, 1, 1], [], []>} : vector<8x8xbf16>, vector<8x256xbf16>, vector<8x256xf32> -> vector<8x256xf32>
    %693 = vector.extract_strided_slice %624 {offsets = [6, 0], sizes = [1, 256], strides = [1, 1]} : vector<9x256xf32> to vector<1x256xf32>
    %694 = vector.broadcast %693 : vector<1x256xf32> to vector<8x256xf32>
    %695 = arith.mulf %692, %694 : vector<8x256xf32>
    %696 = arith.addf %685, %695 : vector<8x256xf32>
    %697 = vector.extract_strided_slice %622 {offsets = [0, 8], sizes = [8, 248], strides = [1, 1]} : vector<8x256xf32> to vector<8x248xf32>
    %698 = vector.extract_strided_slice %622 {offsets = [0, 0], sizes = [8, 8], strides = [1, 1]} : vector<8x256xf32> to vector<8x8xf32>
    %699 = tpu.concatenate %697, %698 in 1 : vector<8x248xf32>, vector<8x8xf32> -> vector<8x256xf32>
    %700 = vector.extract_strided_slice %623 {offsets = [7, 0, 0], sizes = [1, 8, 8], strides = [1, 1, 1]} : vector<9x8x8xbf16> to vector<1x8x8xbf16>
    %701 = vector.shape_cast %700 : vector<1x8x8xbf16> to vector<8x8xbf16>
    %702 = arith.truncf %699 : vector<8x256xf32> to vector<8x256xbf16>
    %cst_142 = arith.constant dense<0.000000e+00> : vector<8x256xf32>
    %703 = tpu.matmul %701, %702, %cst_142 {dimension_numbers = #tpu.dot_dimension_numbers<[1], [0], [0], [1], [0, 0, 1, 1], [], []>} : vector<8x8xbf16>, vector<8x256xbf16>, vector<8x256xf32> -> vector<8x256xf32>
    %704 = vector.extract_strided_slice %624 {offsets = [7, 0], sizes = [1, 256], strides = [1, 1]} : vector<9x256xf32> to vector<1x256xf32>
    %705 = vector.broadcast %704 : vector<1x256xf32> to vector<8x256xf32>
    %706 = arith.mulf %703, %705 : vector<8x256xf32>
    %707 = arith.addf %696, %706 : vector<8x256xf32>
    %708 = vector.extract_strided_slice %622 {offsets = [0, 9], sizes = [8, 247], strides = [1, 1]} : vector<8x256xf32> to vector<8x247xf32>
    %709 = vector.extract_strided_slice %622 {offsets = [0, 0], sizes = [8, 9], strides = [1, 1]} : vector<8x256xf32> to vector<8x9xf32>
    %710 = tpu.concatenate %708, %709 in 1 : vector<8x247xf32>, vector<8x9xf32> -> vector<8x256xf32>
    %711 = vector.extract_strided_slice %623 {offsets = [8, 0, 0], sizes = [1, 8, 8], strides = [1, 1, 1]} : vector<9x8x8xbf16> to vector<1x8x8xbf16>
    %712 = vector.shape_cast %711 : vector<1x8x8xbf16> to vector<8x8xbf16>
    %713 = arith.truncf %710 : vector<8x256xf32> to vector<8x256xbf16>
    %cst_143 = arith.constant dense<0.000000e+00> : vector<8x256xf32>
    %714 = tpu.matmul %712, %713, %cst_143 {dimension_numbers = #tpu.dot_dimension_numbers<[1], [0], [0], [1], [0, 0, 1, 1], [], []>} : vector<8x8xbf16>, vector<8x256xbf16>, vector<8x256xf32> -> vector<8x256xf32>
    %715 = vector.extract_strided_slice %624 {offsets = [8, 0], sizes = [1, 256], strides = [1, 1]} : vector<9x256xf32> to vector<1x256xf32>
    %716 = vector.broadcast %715 : vector<1x256xf32> to vector<8x256xf32>
    %717 = arith.mulf %714, %716 : vector<8x256xf32>
    %718 = arith.addf %707, %717 : vector<8x256xf32>
    %c0_144 = arith.constant 0 : index
    %c0_145 = arith.constant 0 : index
    %719 = vector.load %arg20[%c0_144, %c0_145] : memref<8x1xf32, #tpu.memory_space<vmem>>, vector<8x1xf32>
    %720 = vector.broadcast %719 : vector<8x1xf32> to vector<8x256xf32>
    %721 = arith.addf %718, %720 : vector<8x256xf32>
    %cst_146 = arith.constant 0.000000e+00 : f32
    %722 = vector.broadcast %cst_146 : f32 to vector<8x256xf32>
    %723 = arith.maximumf %721, %722 : vector<8x256xf32>
    %724 = arith.addf %723, %103 : vector<8x256xf32>
    %c0_147 = arith.constant 0 : index
    %c0_148 = arith.constant 0 : index
    %725 = vector.load %arg32[%c0_147, %c0_148] : memref<256x512xf32, #tpu.memory_space<vmem>>, vector<256x512xf32>
    %cst_149 = arith.constant dense<0.000000e+00> : vector<8x512xf32>
    %726 = tpu.matmul %724, %725, %cst_149 {dimension_numbers = #tpu.dot_dimension_numbers<[1], [0], [0], [1], [0, 0, 1, 1], [], []>} : vector<8x256xf32>, vector<256x512xf32>, vector<8x512xf32> -> vector<8x512xf32>
    %c0_150 = arith.constant 0 : index
    %c0_151 = arith.constant 0 : index
    %c0_152 = arith.constant 0 : index
    %727 = vector.load %arg22[%c0_150, %c0_151, %c0_152] : memref<9x32x8xbf16, #tpu.memory_space<vmem>>, vector<9x32x8xbf16>
    %c0_153 = arith.constant 0 : index
    %c0_154 = arith.constant 0 : index
    %728 = vector.load %arg24[%c0_153, %c0_154] : memref<9x512xf32, #tpu.memory_space<vmem>>, vector<9x512xf32>
    %cst_155 = arith.constant 0.000000e+00 : f32
    %729 = vector.broadcast %cst_155 : f32 to vector<32x512xf32>
    %730 = vector.extract_strided_slice %726 {offsets = [0, 495], sizes = [8, 17], strides = [1, 1]} : vector<8x512xf32> to vector<8x17xf32>
    %731 = vector.extract_strided_slice %726 {offsets = [0, 0], sizes = [8, 495], strides = [1, 1]} : vector<8x512xf32> to vector<8x495xf32>
    %732 = tpu.concatenate %730, %731 in 1 : vector<8x17xf32>, vector<8x495xf32> -> vector<8x512xf32>
    %733 = vector.extract_strided_slice %727 {offsets = [0, 0, 0], sizes = [1, 32, 8], strides = [1, 1, 1]} : vector<9x32x8xbf16> to vector<1x32x8xbf16>
    %734 = vector.shape_cast %733 : vector<1x32x8xbf16> to vector<32x8xbf16>
    %735 = arith.truncf %732 : vector<8x512xf32> to vector<8x512xbf16>
    %cst_156 = arith.constant dense<0.000000e+00> : vector<32x512xf32>
    %736 = tpu.matmul %734, %735, %cst_156 {dimension_numbers = #tpu.dot_dimension_numbers<[1], [0], [0], [1], [0, 0, 1, 1], [], []>} : vector<32x8xbf16>, vector<8x512xbf16>, vector<32x512xf32> -> vector<32x512xf32>
    %737 = vector.extract_strided_slice %728 {offsets = [0, 0], sizes = [1, 512], strides = [1, 1]} : vector<9x512xf32> to vector<1x512xf32>
    %738 = vector.broadcast %737 : vector<1x512xf32> to vector<32x512xf32>
    %739 = arith.mulf %736, %738 : vector<32x512xf32>
    %740 = arith.addf %729, %739 : vector<32x512xf32>
    %741 = vector.extract_strided_slice %726 {offsets = [0, 496], sizes = [8, 16], strides = [1, 1]} : vector<8x512xf32> to vector<8x16xf32>
    %742 = vector.extract_strided_slice %726 {offsets = [0, 0], sizes = [8, 496], strides = [1, 1]} : vector<8x512xf32> to vector<8x496xf32>
    %743 = tpu.concatenate %741, %742 in 1 : vector<8x16xf32>, vector<8x496xf32> -> vector<8x512xf32>
    %744 = vector.extract_strided_slice %727 {offsets = [1, 0, 0], sizes = [1, 32, 8], strides = [1, 1, 1]} : vector<9x32x8xbf16> to vector<1x32x8xbf16>
    %745 = vector.shape_cast %744 : vector<1x32x8xbf16> to vector<32x8xbf16>
    %746 = arith.truncf %743 : vector<8x512xf32> to vector<8x512xbf16>
    %cst_157 = arith.constant dense<0.000000e+00> : vector<32x512xf32>
    %747 = tpu.matmul %745, %746, %cst_157 {dimension_numbers = #tpu.dot_dimension_numbers<[1], [0], [0], [1], [0, 0, 1, 1], [], []>} : vector<32x8xbf16>, vector<8x512xbf16>, vector<32x512xf32> -> vector<32x512xf32>
    %748 = vector.extract_strided_slice %728 {offsets = [1, 0], sizes = [1, 512], strides = [1, 1]} : vector<9x512xf32> to vector<1x512xf32>
    %749 = vector.broadcast %748 : vector<1x512xf32> to vector<32x512xf32>
    %750 = arith.mulf %747, %749 : vector<32x512xf32>
    %751 = arith.addf %740, %750 : vector<32x512xf32>
    %752 = vector.extract_strided_slice %726 {offsets = [0, 497], sizes = [8, 15], strides = [1, 1]} : vector<8x512xf32> to vector<8x15xf32>
    %753 = vector.extract_strided_slice %726 {offsets = [0, 0], sizes = [8, 497], strides = [1, 1]} : vector<8x512xf32> to vector<8x497xf32>
    %754 = tpu.concatenate %752, %753 in 1 : vector<8x15xf32>, vector<8x497xf32> -> vector<8x512xf32>
    %755 = vector.extract_strided_slice %727 {offsets = [2, 0, 0], sizes = [1, 32, 8], strides = [1, 1, 1]} : vector<9x32x8xbf16> to vector<1x32x8xbf16>
    %756 = vector.shape_cast %755 : vector<1x32x8xbf16> to vector<32x8xbf16>
    %757 = arith.truncf %754 : vector<8x512xf32> to vector<8x512xbf16>
    %cst_158 = arith.constant dense<0.000000e+00> : vector<32x512xf32>
    %758 = tpu.matmul %756, %757, %cst_158 {dimension_numbers = #tpu.dot_dimension_numbers<[1], [0], [0], [1], [0, 0, 1, 1], [], []>} : vector<32x8xbf16>, vector<8x512xbf16>, vector<32x512xf32> -> vector<32x512xf32>
    %759 = vector.extract_strided_slice %728 {offsets = [2, 0], sizes = [1, 512], strides = [1, 1]} : vector<9x512xf32> to vector<1x512xf32>
    %760 = vector.broadcast %759 : vector<1x512xf32> to vector<32x512xf32>
    %761 = arith.mulf %758, %760 : vector<32x512xf32>
    %762 = arith.addf %751, %761 : vector<32x512xf32>
    %763 = vector.extract_strided_slice %726 {offsets = [0, 511], sizes = [8, 1], strides = [1, 1]} : vector<8x512xf32> to vector<8x1xf32>
    %764 = vector.extract_strided_slice %726 {offsets = [0, 0], sizes = [8, 511], strides = [1, 1]} : vector<8x512xf32> to vector<8x511xf32>
    %765 = tpu.concatenate %763, %764 in 1 : vector<8x1xf32>, vector<8x511xf32> -> vector<8x512xf32>
    %766 = vector.extract_strided_slice %727 {offsets = [3, 0, 0], sizes = [1, 32, 8], strides = [1, 1, 1]} : vector<9x32x8xbf16> to vector<1x32x8xbf16>
    %767 = vector.shape_cast %766 : vector<1x32x8xbf16> to vector<32x8xbf16>
    %768 = arith.truncf %765 : vector<8x512xf32> to vector<8x512xbf16>
    %cst_159 = arith.constant dense<0.000000e+00> : vector<32x512xf32>
    %769 = tpu.matmul %767, %768, %cst_159 {dimension_numbers = #tpu.dot_dimension_numbers<[1], [0], [0], [1], [0, 0, 1, 1], [], []>} : vector<32x8xbf16>, vector<8x512xbf16>, vector<32x512xf32> -> vector<32x512xf32>
    %770 = vector.extract_strided_slice %728 {offsets = [3, 0], sizes = [1, 512], strides = [1, 1]} : vector<9x512xf32> to vector<1x512xf32>
    %771 = vector.broadcast %770 : vector<1x512xf32> to vector<32x512xf32>
    %772 = arith.mulf %769, %771 : vector<32x512xf32>
    %773 = arith.addf %762, %772 : vector<32x512xf32>
    %774 = vector.extract_strided_slice %727 {offsets = [4, 0, 0], sizes = [1, 32, 8], strides = [1, 1, 1]} : vector<9x32x8xbf16> to vector<1x32x8xbf16>
    %775 = vector.shape_cast %774 : vector<1x32x8xbf16> to vector<32x8xbf16>
    %776 = arith.truncf %726 : vector<8x512xf32> to vector<8x512xbf16>
    %cst_160 = arith.constant dense<0.000000e+00> : vector<32x512xf32>
    %777 = tpu.matmul %775, %776, %cst_160 {dimension_numbers = #tpu.dot_dimension_numbers<[1], [0], [0], [1], [0, 0, 1, 1], [], []>} : vector<32x8xbf16>, vector<8x512xbf16>, vector<32x512xf32> -> vector<32x512xf32>
    %778 = arith.addf %773, %777 : vector<32x512xf32>
    %779 = vector.extract_strided_slice %726 {offsets = [0, 1], sizes = [8, 511], strides = [1, 1]} : vector<8x512xf32> to vector<8x511xf32>
    %780 = vector.extract_strided_slice %726 {offsets = [0, 0], sizes = [8, 1], strides = [1, 1]} : vector<8x512xf32> to vector<8x1xf32>
    %781 = tpu.concatenate %779, %780 in 1 : vector<8x511xf32>, vector<8x1xf32> -> vector<8x512xf32>
    %782 = vector.extract_strided_slice %727 {offsets = [5, 0, 0], sizes = [1, 32, 8], strides = [1, 1, 1]} : vector<9x32x8xbf16> to vector<1x32x8xbf16>
    %783 = vector.shape_cast %782 : vector<1x32x8xbf16> to vector<32x8xbf16>
    %784 = arith.truncf %781 : vector<8x512xf32> to vector<8x512xbf16>
    %cst_161 = arith.constant dense<0.000000e+00> : vector<32x512xf32>
    %785 = tpu.matmul %783, %784, %cst_161 {dimension_numbers = #tpu.dot_dimension_numbers<[1], [0], [0], [1], [0, 0, 1, 1], [], []>} : vector<32x8xbf16>, vector<8x512xbf16>, vector<32x512xf32> -> vector<32x512xf32>
    %786 = vector.extract_strided_slice %728 {offsets = [5, 0], sizes = [1, 512], strides = [1, 1]} : vector<9x512xf32> to vector<1x512xf32>
    %787 = vector.broadcast %786 : vector<1x512xf32> to vector<32x512xf32>
    %788 = arith.mulf %785, %787 : vector<32x512xf32>
    %789 = arith.addf %778, %788 : vector<32x512xf32>
    %790 = vector.extract_strided_slice %726 {offsets = [0, 15], sizes = [8, 497], strides = [1, 1]} : vector<8x512xf32> to vector<8x497xf32>
    %791 = vector.extract_strided_slice %726 {offsets = [0, 0], sizes = [8, 15], strides = [1, 1]} : vector<8x512xf32> to vector<8x15xf32>
    %792 = tpu.concatenate %790, %791 in 1 : vector<8x497xf32>, vector<8x15xf32> -> vector<8x512xf32>
    %793 = vector.extract_strided_slice %727 {offsets = [6, 0, 0], sizes = [1, 32, 8], strides = [1, 1, 1]} : vector<9x32x8xbf16> to vector<1x32x8xbf16>
    %794 = vector.shape_cast %793 : vector<1x32x8xbf16> to vector<32x8xbf16>
    %795 = arith.truncf %792 : vector<8x512xf32> to vector<8x512xbf16>
    %cst_162 = arith.constant dense<0.000000e+00> : vector<32x512xf32>
    %796 = tpu.matmul %794, %795, %cst_162 {dimension_numbers = #tpu.dot_dimension_numbers<[1], [0], [0], [1], [0, 0, 1, 1], [], []>} : vector<32x8xbf16>, vector<8x512xbf16>, vector<32x512xf32> -> vector<32x512xf32>
    %797 = vector.extract_strided_slice %728 {offsets = [6, 0], sizes = [1, 512], strides = [1, 1]} : vector<9x512xf32> to vector<1x512xf32>
    %798 = vector.broadcast %797 : vector<1x512xf32> to vector<32x512xf32>
    %799 = arith.mulf %796, %798 : vector<32x512xf32>
    %800 = arith.addf %789, %799 : vector<32x512xf32>
    %801 = vector.extract_strided_slice %726 {offsets = [0, 16], sizes = [8, 496], strides = [1, 1]} : vector<8x512xf32> to vector<8x496xf32>
    %802 = vector.extract_strided_slice %726 {offsets = [0, 0], sizes = [8, 16], strides = [1, 1]} : vector<8x512xf32> to vector<8x16xf32>
    %803 = tpu.concatenate %801, %802 in 1 : vector<8x496xf32>, vector<8x16xf32> -> vector<8x512xf32>
    %804 = vector.extract_strided_slice %727 {offsets = [7, 0, 0], sizes = [1, 32, 8], strides = [1, 1, 1]} : vector<9x32x8xbf16> to vector<1x32x8xbf16>
    %805 = vector.shape_cast %804 : vector<1x32x8xbf16> to vector<32x8xbf16>
    %806 = arith.truncf %803 : vector<8x512xf32> to vector<8x512xbf16>
    %cst_163 = arith.constant dense<0.000000e+00> : vector<32x512xf32>
    %807 = tpu.matmul %805, %806, %cst_163 {dimension_numbers = #tpu.dot_dimension_numbers<[1], [0], [0], [1], [0, 0, 1, 1], [], []>} : vector<32x8xbf16>, vector<8x512xbf16>, vector<32x512xf32> -> vector<32x512xf32>
    %808 = vector.extract_strided_slice %728 {offsets = [7, 0], sizes = [1, 512], strides = [1, 1]} : vector<9x512xf32> to vector<1x512xf32>
    %809 = vector.broadcast %808 : vector<1x512xf32> to vector<32x512xf32>
    %810 = arith.mulf %807, %809 : vector<32x512xf32>
    %811 = arith.addf %800, %810 : vector<32x512xf32>
    %812 = vector.extract_strided_slice %726 {offsets = [0, 17], sizes = [8, 495], strides = [1, 1]} : vector<8x512xf32> to vector<8x495xf32>
    %813 = vector.extract_strided_slice %726 {offsets = [0, 0], sizes = [8, 17], strides = [1, 1]} : vector<8x512xf32> to vector<8x17xf32>
    %814 = tpu.concatenate %812, %813 in 1 : vector<8x495xf32>, vector<8x17xf32> -> vector<8x512xf32>
    %815 = vector.extract_strided_slice %727 {offsets = [8, 0, 0], sizes = [1, 32, 8], strides = [1, 1, 1]} : vector<9x32x8xbf16> to vector<1x32x8xbf16>
    %816 = vector.shape_cast %815 : vector<1x32x8xbf16> to vector<32x8xbf16>
    %817 = arith.truncf %814 : vector<8x512xf32> to vector<8x512xbf16>
    %cst_164 = arith.constant dense<0.000000e+00> : vector<32x512xf32>
    %818 = tpu.matmul %816, %817, %cst_164 {dimension_numbers = #tpu.dot_dimension_numbers<[1], [0], [0], [1], [0, 0, 1, 1], [], []>} : vector<32x8xbf16>, vector<8x512xbf16>, vector<32x512xf32> -> vector<32x512xf32>
    %819 = vector.extract_strided_slice %728 {offsets = [8, 0], sizes = [1, 512], strides = [1, 1]} : vector<9x512xf32> to vector<1x512xf32>
    %820 = vector.broadcast %819 : vector<1x512xf32> to vector<32x512xf32>
    %821 = arith.mulf %818, %820 : vector<32x512xf32>
    %822 = arith.addf %811, %821 : vector<32x512xf32>
    %c0_165 = arith.constant 0 : index
    %c0_166 = arith.constant 0 : index
    %823 = vector.load %arg23[%c0_165, %c0_166] : memref<32x1xf32, #tpu.memory_space<vmem>>, vector<32x1xf32>
    %824 = vector.broadcast %823 : vector<32x1xf32> to vector<32x512xf32>
    %825 = arith.addf %822, %824 : vector<32x512xf32>
    %cst_167 = arith.constant 0.000000e+00 : f32
    %826 = vector.broadcast %cst_167 : f32 to vector<32x512xf32>
    %827 = arith.maximumf %825, %826 : vector<32x512xf32>
    %828 = arith.addf %827, %0 : vector<32x512xf32>
    %c0_168 = arith.constant 0 : index
    %c0_169 = arith.constant 0 : index
    %829 = vector.load %arg33[%c0_168, %c0_169] : memref<32x512xf32, #tpu.memory_space<vmem>>, vector<32x512xf32>
    tpu.vector_store %arg33[%c0_168, %c0_169], %828 {strides = array<i32>} : memref<32x512xf32, #tpu.memory_space<vmem>>, vector<32x512xf32>,
    return
  }
}

</mosaic_0001>

<llo_original>
// kernel: _lambda_.1
$region0: #{_lambda_.1}
  #allocation0 [shape = 'u32[]', space=smem, size = 0x4, offset = 0x4, fixed_abs, tag = 'smem constant byte address 0x4 - core index']
  #allocation1 [shape = 'u32[144,128]{1,0:T(1,128)}', space=vmem, size = 0x12000, scoped, tag = 'internal scratch']
  %s0 = inlined_call_operand.smem [shape: u32[34], index: -1, kind: input, shape index: {}]
  %s1 = sld [smem:[%s0]]
  %s2 = scalar_lea.smem %s0, 1
  %s3 = sld [smem:[%s2]]
  %s4 = scalar_lea.smem %s0, 2
  %s5 = sld [smem:[%s4]]
  %s6 = scalar_lea.smem %s0, 3
  %s7 = sld [smem:[%s6]]
  %s8 = scalar_lea.smem %s0, 4
  %s9 = sld [smem:[%s8]]
  %s10 = scalar_lea.smem %s0, 5
  %s11 = sld [smem:[%s10]]
  %s12 = scalar_lea.smem %s0, 6
  %s13 = sld [smem:[%s12]]
  %s14 = scalar_lea.smem %s0, 7
  %s15 = sld [smem:[%s14]]
  %s16 = scalar_lea.smem %s0, 8
  %s17 = sld [smem:[%s16]]
  %s18 = scalar_lea.smem %s0, 9
  %s19 = sld [smem:[%s18]]
  %s20 = scalar_lea.smem %s0, 10
  %s21 = sld [smem:[%s20]]
  %s22 = scalar_lea.smem %s0, 11
  %s23 = sld [smem:[%s22]]
  %s24 = scalar_lea.smem %s0, 12
  %s25 = sld [smem:[%s24]]
  %s26 = scalar_lea.smem %s0, 13
  %s27 = sld [smem:[%s26]]
  %s28 = scalar_lea.smem %s0, 14
  %s29 = sld [smem:[%s28]]
  %s30 = scalar_lea.smem %s0, 15
  %s31 = sld [smem:[%s30]]
  %s32 = scalar_lea.smem %s0, 16
  %s33 = sld [smem:[%s32]]
  %s34 = scalar_lea.smem %s0, 17
  %s35 = sld [smem:[%s34]]
  %s36 = scalar_lea.smem %s0, 18
  %s37 = sld [smem:[%s36]]
  %s38 = scalar_lea.smem %s0, 19
  %s39 = sld [smem:[%s38]]
  %s40 = scalar_lea.smem %s0, 20
  %s41 = sld [smem:[%s40]]
  %s42 = scalar_lea.smem %s0, 21
  %s43 = sld [smem:[%s42]]
  %s44 = scalar_lea.smem %s0, 22
  %s45 = sld [smem:[%s44]]
  %s46 = scalar_lea.smem %s0, 23
  %s47 = sld [smem:[%s46]]
  %s48 = scalar_lea.smem %s0, 24
  %s49 = sld [smem:[%s48]]
  %s50 = scalar_lea.smem %s0, 25
  %s51 = sld [smem:[%s50]]
  %s52 = scalar_lea.smem %s0, 26
  %s53 = sld [smem:[%s52]]
  %s54 = scalar_lea.smem %s0, 27
  %s55 = sld [smem:[%s54]]
  %s56 = scalar_lea.smem %s0, 28
  %s57 = sld [smem:[%s56]]
  %s58 = scalar_lea.smem %s0, 29
  %s59 = sld [smem:[%s58]]
  %s60 = scalar_lea.smem %s0, 30
  %s61 = sld [smem:[%s60]]
  %s62 = scalar_lea.smem %s0, 31
  %s63 = sld [smem:[%s62]]
  %s64 = scalar_lea.smem %s0, 32
  %s65 = sld [smem:[%s64]]
  %s66 = scalar_lea.smem %s0, 33
  %s67 = sld [smem:[%s66]]
  %s68 = sld [smem:[#allocation0]]
  $region146: #{_lambda_.1} parent=0
    _
  %s70 = ssub.s32 1, %s68
  %s71 = scalar_select 0, %s70, %s68
  $region1: #{_lambda_.1} parent=0
    #allocation2 [shape = 'u8[524288]{0}', space=vmem, size = 0x80000, scoped, tag = 'input window, operand 32, single buffered']
    #allocation3 [shape = 's32[1]{0}', space=sflag, size = 0x4, scoped, tag = 'scoped memory for _lambda_.1']
    %72 = vsyncpa [#allocation3], 0
    // Predicated region
    $region2: #{_lambda_.1} parent=1 // pred_check
      _
    $region3: #{_lambda_.1} parent=1 // pred_check_branch
      %74 = sbr.rel (0) target = $region5
    $region4: #{_lambda_.1} parent=1 // pred_region
      _
    $region5: #{_lambda_.1} parent=1 // pred_fallthru
      _
    // Predicated region
    $region6: #{_lambda_.1} parent=1 // pred_check
      _
    $region7: #{_lambda_.1} parent=1 // pred_check_branch
      %76 = sbr.rel (0) target = $region9
    $region8: #{_lambda_.1} parent=1 // pred_region
      _
    $region9: #{_lambda_.1} parent=1 // pred_fallthru
      _
    // Predicated region
    $region10: #{_lambda_.1} parent=1 // pred_check
      _
    $region11: #{_lambda_.1} parent=1 // pred_check_branch
      %78 = sbr.rel (0) target = $region13
    $region12: #{_lambda_.1} parent=1 // pred_region
      _
    $region13: #{_lambda_.1} parent=1 // pred_fallthru
      _
    // Predicated region
    $region14: #{_lambda_.1} parent=1 // pred_check
      _
    $region15: #{_lambda_.1} parent=1 // pred_check_branch
      %80 = sbr.rel (0) target = $region17
    $region16: #{_lambda_.1} parent=1 // pred_region
      _
    $region17: #{_lambda_.1} parent=1 // pred_fallthru
      _
    // Predicated region
    $region18: #{_lambda_.1} parent=1 // pred_check
      _
    $region19: #{_lambda_.1} parent=1 // pred_check_branch
      %82 = sbr.rel (0) target = $region21
    $region20: #{_lambda_.1} parent=1 // pred_region
      _
    $region21: #{_lambda_.1} parent=1 // pred_fallthru
      _
    // Predicated region
    $region22: #{_lambda_.1} parent=1 // pred_check
      _
    $region23: #{_lambda_.1} parent=1 // pred_check_branch
      %84 = sbr.rel (0) target = $region25
    $region24: #{_lambda_.1} parent=1 // pred_region
      _
    $region25: #{_lambda_.1} parent=1 // pred_fallthru
      _
    // Predicated region
    $region26: #{_lambda_.1} parent=1 // pred_check
      _
    $region27: #{_lambda_.1} parent=1 // pred_check_branch
      %86 = sbr.rel (0) target = $region29
    $region28: #{_lambda_.1} parent=1 // pred_region
      _
    $region29: #{_lambda_.1} parent=1 // pred_fallthru
      _
    // Predicated region
    $region30: #{_lambda_.1} parent=1 // pred_check
      _
    $region31: #{_lambda_.1} parent=1 // pred_check_branch
      %88 = sbr.rel (0) target = $region33
    $region32: #{_lambda_.1} parent=1 // pred_region
      _
    $region33: #{_lambda_.1} parent=1 // pred_fallthru
      _
    // Predicated region
    $region34: #{_lambda_.1} parent=1 // pred_check
      _
    $region35: #{_lambda_.1} parent=1 // pred_check_branch
      %90 = sbr.rel (0) target = $region37
    $region36: #{_lambda_.1} parent=1 // pred_region
      _
    $region37: #{_lambda_.1} parent=1 // pred_fallthru
      _
    // Predicated region
    $region38: #{_lambda_.1} parent=1 // pred_check
      _
    $region39: #{_lambda_.1} parent=1 // pred_check_branch
      %92 = sbr.rel (0) target = $region41
    $region40: #{_lambda_.1} parent=1 // pred_region
      _
    $region41: #{_lambda_.1} parent=1 // pred_fallthru
      _
    // Predicated region
    $region42: #{_lambda_.1} parent=1 // pred_check
      _
    $region43: #{_lambda_.1} parent=1 // pred_check_branch
      %94 = sbr.rel (0) target = $region45
    $region44: #{_lambda_.1} parent=1 // pred_region
      _
    $region45: #{_lambda_.1} parent=1 // pred_fallthru
      _
    // Predicated region
    $region46: #{_lambda_.1} parent=1 // pred_check
      _
    $region47: #{_lambda_.1} parent=1 // pred_check_branch
      %96 = sbr.rel (0) target = $region49
    $region48: #{_lambda_.1} parent=1 // pred_region
      _
    $region49: #{_lambda_.1} parent=1 // pred_fallthru
      _
    // Predicated region
    $region50: #{_lambda_.1} parent=1 // pred_check
      _
    $region51: #{_lambda_.1} parent=1 // pred_check_branch
      %98 = sbr.rel (0) target = $region53
    $region52: #{_lambda_.1} parent=1 // pred_region
      _
    $region53: #{_lambda_.1} parent=1 // pred_fallthru
      _
    // Predicated region
    $region54: #{_lambda_.1} parent=1 // pred_check
      _
    $region55: #{_lambda_.1} parent=1 // pred_check_branch
      %100 = sbr.rel (0) target = $region57
    $region56: #{_lambda_.1} parent=1 // pred_region
      _
    $region57: #{_lambda_.1} parent=1 // pred_fallthru
      _
    // Predicated region
    $region58: #{_lambda_.1} parent=1 // pred_check
      _
    $region59: #{_lambda_.1} parent=1 // pred_check_branch
      %102 = sbr.rel (0) target = $region61
    $region60: #{_lambda_.1} parent=1 // pred_region
      _
    $region61: #{_lambda_.1} parent=1 // pred_fallthru
      _
    // Predicated region
    $region62: #{_lambda_.1} parent=1 // pred_check
      _
    $region63: #{_lambda_.1} parent=1 // pred_check_branch
      %104 = sbr.rel (0) target = $region65
    $region64: #{_lambda_.1} parent=1 // pred_region
      _
    $region65: #{_lambda_.1} parent=1 // pred_fallthru
      _
    // Predicated region
    $region66: #{_lambda_.1} parent=1 // pred_check
      _
    $region67: #{_lambda_.1} parent=1 // pred_check_branch
      %106 = sbr.rel (0) target = $region69
    $region68: #{_lambda_.1} parent=1 // pred_region
      _
    $region69: #{_lambda_.1} parent=1 // pred_fallthru
      _
    // Predicated region
    $region70: #{_lambda_.1} parent=1 // pred_check
      _
    $region71: #{_lambda_.1} parent=1 // pred_check_branch
      %108 = sbr.rel (0) target = $region73
    $region72: #{_lambda_.1} parent=1 // pred_region
      _
    $region73: #{_lambda_.1} parent=1 // pred_fallthru
      _
    // Predicated region
    $region74: #{_lambda_.1} parent=1 // pred_check
      _
    $region75: #{_lambda_.1} parent=1 // pred_check_branch
      %110 = sbr.rel (0) target = $region77
    $region76: #{_lambda_.1} parent=1 // pred_region
      _
    $region77: #{_lambda_.1} parent=1 // pred_fallthru
      _
    // Predicated region
    $region78: #{_lambda_.1} parent=1 // pred_check
      _
    $region79: #{_lambda_.1} parent=1 // pred_check_branch
      %112 = sbr.rel (0) target = $region81
    $region80: #{_lambda_.1} parent=1 // pred_region
      _
    $region81: #{_lambda_.1} parent=1 // pred_fallthru
      _
    // Predicated region
    $region82: #{_lambda_.1} parent=1 // pred_check
      _
    $region83: #{_lambda_.1} parent=1 // pred_check_branch
      %114 = sbr.rel (0) target = $region85
    $region84: #{_lambda_.1} parent=1 // pred_region
      _
    $region85: #{_lambda_.1} parent=1 // pred_fallthru
      _
    // Predicated region
    $region86: #{_lambda_.1} parent=1 // pred_check
      _
    $region87: #{_lambda_.1} parent=1 // pred_check_branch
      %116 = sbr.rel (0) target = $region89
    $region88: #{_lambda_.1} parent=1 // pred_region
      _
    $region89: #{_lambda_.1} parent=1 // pred_fallthru
      _
    // Predicated region
    $region90: #{_lambda_.1} parent=1 // pred_check
      _
    $region91: #{_lambda_.1} parent=1 // pred_check_branch
      %118 = sbr.rel (0) target = $region93
    $region92: #{_lambda_.1} parent=1 // pred_region
      _
    $region93: #{_lambda_.1} parent=1 // pred_fallthru
      _
    // Predicated region
    $region94: #{_lambda_.1} parent=1 // pred_check
      _
    $region95: #{_lambda_.1} parent=1 // pred_check_branch
      %120 = sbr.rel (0) target = $region97
    $region96: #{_lambda_.1} parent=1 // pred_region
      _
    $region97: #{_lambda_.1} parent=1 // pred_fallthru
      _
    // Predicated region
    $region98: #{_lambda_.1} parent=1 // pred_check
      _
    $region99: #{_lambda_.1} parent=1 // pred_check_branch
      %122 = sbr.rel (0) target = $region101
    $region100: #{_lambda_.1} parent=1 // pred_region
      _
    $region101: #{_lambda_.1} parent=1 // pred_fallthru
      _
    // Predicated region
    $region102: #{_lambda_.1} parent=1 // pred_check
      _
    $region103: #{_lambda_.1} parent=1 // pred_check_branch
      %124 = sbr.rel (0) target = $region105
    $region104: #{_lambda_.1} parent=1 // pred_region
      _
    $region105: #{_lambda_.1} parent=1 // pred_fallthru
      _
    // Predicated region
    $region106: #{_lambda_.1} parent=1 // pred_check
      _
    $region107: #{_lambda_.1} parent=1 // pred_check_branch
      %126 = sbr.rel (0) target = $region109
    $region108: #{_lambda_.1} parent=1 // pred_region
      _
    $region109: #{_lambda_.1} parent=1 // pred_fallthru
      _
    // Predicated region
    $region110: #{_lambda_.1} parent=1 // pred_check
      _
    $region111: #{_lambda_.1} parent=1 // pred_check_branch
      %128 = sbr.rel (0) target = $region113
    $region112: #{_lambda_.1} parent=1 // pred_region
      _
    $region113: #{_lambda_.1} parent=1 // pred_fallthru
      _
    // Predicated region
    $region114: #{_lambda_.1} parent=1 // pred_check
      _
    $region115: #{_lambda_.1} parent=1 // pred_check_branch
      %130 = sbr.rel (0) target = $region117
    $region116: #{_lambda_.1} parent=1 // pred_region
      _
    $region117: #{_lambda_.1} parent=1 // pred_fallthru
      _
    // Predicated region
    $region118: #{_lambda_.1} parent=1 // pred_check
      _
    $region119: #{_lambda_.1} parent=1 // pred_check_branch
      %132 = sbr.rel (0) target = $region121
    $region120: #{_lambda_.1} parent=1 // pred_region
      _
    $region121: #{_lambda_.1} parent=1 // pred_fallthru
      _
    // Predicated region
    $region122: #{_lambda_.1} parent=1 // pred_check
      _
    $region123: #{_lambda_.1} parent=1 // pred_check_branch
      %134 = sbr.rel (0) target = $region125
    $region124: #{_lambda_.1} parent=1 // pred_region
      _
    $region125: #{_lambda_.1} parent=1 // pred_fallthru
      _
    // Predicated region
    $region126: #{_lambda_.1} parent=1 // pred_check
      _
    $region127: #{_lambda_.1} parent=1 // pred_check_branch
      %136 = sbr.rel (0) target = $region129
    $region128: #{_lambda_.1} parent=1 // pred_region
      _
    $region129: #{_lambda_.1} parent=1 // pred_fallthru
      _
    // Predicated region
    $region130: #{_lambda_.1} parent=1 // pred_check
      _
    $region131: #{_lambda_.1} parent=1 // pred_check_branch
      %138 = sbr.rel (0) target = $region133
    $region132: #{_lambda_.1} parent=1 // pred_region
      %s140 = ssub.s32 16384, 16384
      %141 = vsyncadd [#allocation3], %s140
      %s142 = sshll.u32 [#allocation2], 4
      %s143 = int_to_ptr.vmem [resolvable:$true] %s142
      %148 = dma.hbm_to_vmem [thread:$0]  %s65, 16384, %s143, [#allocation3], 512, 512, 32
    $region133: #{_lambda_.1} parent=1 // pred_fallthru
      _
    // Predicated region
    $region134: #{_lambda_.1} parent=1 // pred_check
      _
    $region135: #{_lambda_.1} parent=1 // pred_check_branch
      %150 = sbr.rel (0) target = $region137
    $region136: #{_lambda_.1} parent=1 // pred_region
      %151 = dma.done [#allocation3], 16384
    $region137: #{_lambda_.1} parent=1 // pred_fallthru
      _
    %v153 = vld [vmem:[%s1] sm:$0xff]
    %v154 = vld [vmem:[%s1 + $0x8] sm:$0xff]
    %v155 = vld [vmem:[%s1 + $0x10] sm:$0xff]
    %v156 = vld [vmem:[%s1 + $0x18] sm:$0xff]
    %v157 = vld [vmem:[%s1 + $0x20] sm:$0xff]
    %v158 = vld [vmem:[%s1 + $0x28] sm:$0xff]
    %v159 = vld [vmem:[%s1 + $0x30] sm:$0xff]
    %v160 = vld [vmem:[%s1 + $0x38] sm:$0xff]
    %v161 = vld [vmem:[%s1 + $0x40] sm:$0xff]
    %v162 = vld [vmem:[%s1 + $0x48] sm:$0xff]
    %v163 = vld [vmem:[%s1 + $0x50] sm:$0xff]
    %v164 = vld [vmem:[%s1 + $0x58] sm:$0xff]
    %v165 = vld [vmem:[%s1 + $0x60] sm:$0xff]
    %v166 = vld [vmem:[%s1 + $0x68] sm:$0xff]
    %v167 = vld [vmem:[%s1 + $0x70] sm:$0xff]
    %v168 = vld [vmem:[%s1 + $0x78] sm:$0xff]
    %v169 = vld [vmem:[%s3] sm:$0xf]
    %v170 = vld [vmem:[%s3 + $0x4] sm:$0xf]
    %v171 = vld [vmem:[%s3 + $0x8] sm:$0xf]
    %v172 = vld [vmem:[%s3 + $0xc] sm:$0xf]
    %v173 = vld [vmem:[%s3 + $0x10] sm:$0xf]
    %v174 = vld [vmem:[%s3 + $0x14] sm:$0xf]
    %v175 = vld [vmem:[%s3 + $0x18] sm:$0xf]
    %v176 = vld [vmem:[%s3 + $0x1c] sm:$0xf]
    %v177 = vld [vmem:[%s3 + $0x20] sm:$0xf]
    %v178 = vld [vmem:[%s7] sm:$0xff]
    %v179 = vld [vmem:[%s7 + $0x8] sm:$0xff]
    %v180 = vld [vmem:[%s7 + $0x10] sm:$0xff]
    %v181 = vld [vmem:[%s7 + $0x18] sm:$0xff]
    %v182 = vld [vmem:[%s7 + $0x20] sm:$0x1]
    %v183 = vld [vmem:[%s7 + $0x28] sm:$0x1]
    %v184 = vld [vmem:[%s7 + $0x30] sm:$0x1]
    %v185 = vld [vmem:[%s7 + $0x38] sm:$0x1]
    %190 = vrot.lane.b32.xlu0 %v156, 17
    %v191 = vpop.permute.xlu0 %190
    %192 = vrot.lane.b32.xlu0 %v160, 17
    %v193 = vpop.permute.xlu0 %192
    %194 = vrot.lane.b32.xlu0 %v164, 17
    %v195 = vpop.permute.xlu0 %194
    %196 = vrot.lane.b32.xlu0 %v168, 17
    %v197 = vpop.permute.xlu0 %196
    %214 = vrot.lane.b32.xlu0 %v153, 17
    %v215 = vpop.permute.xlu0 %214
    %216 = vrot.lane.b32.xlu0 %v154, 17
    %v217 = vpop.permute.xlu0 %216
    %218 = vrot.lane.b32.xlu0 %v155, 17
    %v219 = vpop.permute.xlu0 %218
    %220 = vrot.lane.b32.xlu0 %v157, 17
    %v221 = vpop.permute.xlu0 %220
    %222 = vrot.lane.b32.xlu0 %v158, 17
    %v223 = vpop.permute.xlu0 %222
    %224 = vrot.lane.b32.xlu0 %v159, 17
    %v225 = vpop.permute.xlu0 %224
    %226 = vrot.lane.b32.xlu0 %v161, 17
    %v227 = vpop.permute.xlu0 %226
    %228 = vrot.lane.b32.xlu0 %v162, 17
    %v229 = vpop.permute.xlu0 %228
    %230 = vrot.lane.b32.xlu0 %v163, 17
    %v231 = vpop.permute.xlu0 %230
    %232 = vrot.lane.b32.xlu0 %v165, 17
    %v233 = vpop.permute.xlu0 %232
    %234 = vrot.lane.b32.xlu0 %v166, 17
    %v235 = vpop.permute.xlu0 %234
    %236 = vrot.lane.b32.xlu0 %v167, 17
    %v237 = vpop.permute.xlu0 %236
    %vm238 = vcmask 138240
    %v239 = vsel %vm238, %v215, %v217
    %v240 = vsel %vm238, %v217, %v219
    %v241 = vsel %vm238, %v219, %v191
    %v242 = vsel %vm238, %v221, %v223
    %v243 = vsel %vm238, %v223, %v225
    %v244 = vsel %vm238, %v225, %v193
    %v245 = vsel %vm238, %v227, %v229
    %v246 = vsel %vm238, %v229, %v231
    %v247 = vsel %vm238, %v231, %v195
    %v248 = vsel %vm238, %v233, %v235
    %v249 = vsel %vm238, %v235, %v237
    %v250 = vsel %vm238, %v237, %v197
    %v267 = vsel %vm238, %v191, %v215
    %v268 = vsel %vm238, %v193, %v221
    %v269 = vsel %vm238, %v195, %v227
    %v270 = vsel %vm238, %v197, %v233
    %v271 = vpack.c.bf16 %v268, %v267
    %v272 = vpack.c.bf16 %v242, %v239
    %v273 = vpack.c.bf16 %v243, %v240
    %v274 = vpack.c.bf16 %v244, %v241
    %v275 = vpack.c.bf16 %v270, %v269
    %v276 = vpack.c.bf16 %v248, %v245
    %v277 = vpack.c.bf16 %v249, %v246
    %v278 = vpack.c.bf16 %v250, %v247
    %vm279 = vcmask 261120
    %v281 = vsel %vm279, %v169, 0
    %283 = vmatprep.subr.bf16.mxu0 %v272
    %284 = vmatpush1.bf16.msra.mxu0 %v271
    %285 = vmatprep.subr.bf16.mxu0 %v276
    %286 = vmatpush1.bf16.msra.mxu0 %v275
    %287 = vmatprep.subr.bf16.mxu0 0
    %288 = vmatpush1.bf16.msra.mxu0 0
    %289 = vmatprep.subr.bf16.mxu0 0
    %290 = vmatpush1.bf16.msra.mxu0 0
    %291 = vmatprep.subr.bf16.mxu0 0
    %292 = vmatpush1.bf16.msra.mxu0 0
    %293 = vmatprep.subr.bf16.mxu0 0
    %294 = vmatpush1.bf16.msra.mxu0 0
    %295 = vmatprep.subr.bf16.mxu0 0
    %296 = vmatpush1.bf16.msra.mxu0 0
    %297 = vmatprep.subr.bf16.mxu0 0
    %298 = vmatpush1.bf16.msra.mxu0 0
    %299 = vmatprep.subr.bf16.mxu0 0
    %300 = vmatpush1.bf16.msra.mxu0 0
    %301 = vmatprep.subr.bf16.mxu0 0
    %302 = vmatpush1.bf16.msra.mxu0 0
    %303 = vmatprep.subr.bf16.mxu0 0
    %304 = vmatpush1.bf16.msra.mxu0 0
    %305 = vmatprep.subr.bf16.mxu0 0
    %306 = vmatpush1.bf16.msra.mxu0 0
    %307 = vmatprep.subr.bf16.mxu0 0
    %308 = vmatpush1.bf16.msra.mxu0 0
    %309 = vmatprep.subr.bf16.mxu0 0
    %310 = vmatpush1.bf16.msra.mxu0 0
    %311 = vmatprep.subr.bf16.mxu0 0
    %312 = vmatpush1.bf16.msra.mxu0 0
    %313 = vmatprep.subr.bf16.mxu0 0
    %314 = vmatpush1.bf16.msra.mxu0 0
    %315 = vmatprep.mubr.bf16.mxu0 0
    %316 = vmatmul.mubr.bf16.gmra.mrb[0].mxu0 %v281
    %v317 = vpop.f32.mrb[0].mxu0
    %v318 = vadd.f32 0.0, %v317
    %v319 = vpop.f32.mrb[0].mxu0
    %v320 = vadd.f32 0.0, %v319
    %v321 = vpop.f32.mrb[0].mxu0
    %v322 = vpop.f32.mrb[0].mxu0
    %323 = vdwg.mxu0
    %324 = vmatprep.subr.bf16.mxu0 %v274
    %325 = vmatpush1.bf16.msra.mxu0 %v273
    %326 = vmatprep.subr.bf16.mxu0 %v278
    %327 = vmatpush1.bf16.msra.mxu0 %v277
    %328 = vmatprep.subr.bf16.mxu0 0
    %329 = vmatpush1.bf16.msra.mxu0 0
    %330 = vmatprep.subr.bf16.mxu0 0
    %331 = vmatpush1.bf16.msra.mxu0 0
    %332 = vmatprep.subr.bf16.mxu0 0
    %333 = vmatpush1.bf16.msra.mxu0 0
    %334 = vmatprep.subr.bf16.mxu0 0
    %335 = vmatpush1.bf16.msra.mxu0 0
    %336 = vmatprep.subr.bf16.mxu0 0
    %337 = vmatpush1.bf16.msra.mxu0 0
    %338 = vmatprep.subr.bf16.mxu0 0
    %339 = vmatpush1.bf16.msra.mxu0 0
    %340 = vmatprep.subr.bf16.mxu0 0
    %341 = vmatpush1.bf16.msra.mxu0 0
    %342 = vmatprep.subr.bf16.mxu0 0
    %343 = vmatpush1.bf16.msra.mxu0 0
    %344 = vmatprep.subr.bf16.mxu0 0
    %345 = vmatpush1.bf16.msra.mxu0 0
    %346 = vmatprep.subr.bf16.mxu0 0
    %347 = vmatpush1.bf16.msra.mxu0 0
    %348 = vmatprep.subr.bf16.mxu0 0
    %349 = vmatpush1.bf16.msra.mxu0 0
    %350 = vmatprep.subr.bf16.mxu0 0
    %351 = vmatpush1.bf16.msra.mxu0 0
    %352 = vmatprep.subr.bf16.mxu0 0
    %353 = vmatpush1.bf16.msra.mxu0 0
    %354 = vmatprep.subr.bf16.mxu0 0
    %355 = vmatpush1.bf16.msra.mxu0 0
    %356 = vmatprep.mubr.bf16.mxu0 0
    %357 = vmatmul.mubr.bf16.gmra.mrb[0].mxu0 %v281
    %v358 = vpop.f32.mrb[0].mxu0
    %v359 = vadd.f32 0.0, %v358
    %v360 = vpop.f32.mrb[0].mxu0
    %v361 = vadd.f32 0.0, %v360
    %v362 = vpop.f32.mrb[0].mxu0
    %v363 = vpop.f32.mrb[0].mxu0
    %364 = vdwg.mxu0
    %v365 = vlaneseq
    %v366 = vshrl.u32 %v365, 7
    %v367 = vsub.s32 0, %v366
    %v368 = vrot.slane %v178, %v367
    %v369 = vlaneseq
    %v370 = vshrl.u32 %v369, 7
    %v371 = vsub.s32 0, %v370
    %v372 = vrot.slane %v179, %v371
    %v373 = vlaneseq
    %v374 = vshrl.u32 %v373, 7
    %v375 = vsub.s32 0, %v374
    %v376 = vrot.slane %v180, %v375
    %v377 = vlaneseq
    %v378 = vshrl.u32 %v377, 7
    %v379 = vsub.s32 0, %v378
    %v380 = vrot.slane %v181, %v379
    %v381 = vmul.f32 %v318, %v368
    %v382 = vmul.f32 %v320, %v372
    %v383 = vmul.f32 %v359, %v376
    %v384 = vmul.f32 %v361, %v380
    %v385 = vadd.f32 %v381, 0.0
    %v386 = vadd.f32 %v382, 0.0
    %v387 = vadd.f32 %v383, 0.0
    %v388 = vadd.f32 %v384, 0.0
    %389 = vrot.lane.b32.xlu0 %v156, 16
    %v390 = vpop.permute.xlu0 %389
    %391 = vrot.lane.b32.xlu0 %v160, 16
    %v392 = vpop.permute.xlu0 %391
    %393 = vrot.lane.b32.xlu0 %v164, 16
    %v394 = vpop.permute.xlu0 %393
    %395 = vrot.lane.b32.xlu0 %v168, 16
    %v396 = vpop.permute.xlu0 %395
    %401 = vrot.lane.b32.xlu0 %v153, 16
    %v402 = vpop.permute.xlu0 %401
    %403 = vrot.lane.b32.xlu0 %v154, 16
    %v404 = vpop.permute.xlu0 %403
    %405 = vrot.lane.b32.xlu0 %v155, 16
    %v406 = vpop.permute.xlu0 %405
    %407 = vrot.lane.b32.xlu0 %v157, 16
    %v408 = vpop.permute.xlu0 %407
    %409 = vrot.lane.b32.xlu0 %v158, 16
    %v410 = vpop.permute.xlu0 %409
    %411 = vrot.lane.b32.xlu0 %v159, 16
    %v412 = vpop.permute.xlu0 %411
    %413 = vrot.lane.b32.xlu0 %v161, 16
    %v414 = vpop.permute.xlu0 %413
    %415 = vrot.lane.b32.xlu0 %v162, 16
    %v416 = vpop.permute.xlu0 %415
    %417 = vrot.lane.b32.xlu0 %v163, 16
    %v418 = vpop.permute.xlu0 %417
    %419 = vrot.lane.b32.xlu0 %v165, 16
    %v420 = vpop.permute.xlu0 %419
    %421 = vrot.lane.b32.xlu0 %v166, 16
    %v422 = vpop.permute.xlu0 %421
    %423 = vrot.lane.b32.xlu0 %v167, 16
    %v424 = vpop.permute.xlu0 %423
    %vm425 = vcmask 130048
    %v426 = vsel %vm425, %v402, %v404
    %v427 = vsel %vm425, %v404, %v406
    %v428 = vsel %vm425, %v406, %v390
    %v429 = vsel %vm425, %v408, %v410
    %v430 = vsel %vm425, %v410, %v412
    %v431 = vsel %vm425, %v412, %v392
    %v432 = vsel %vm425, %v414, %v416
    %v433 = vsel %vm425, %v416, %v418
    %v434 = vsel %vm425, %v418, %v394
    %v435 = vsel %vm425, %v420, %v422
    %v436 = vsel %vm425, %v422, %v424
    %v437 = vsel %vm425, %v424, %v396
    %v454 = vsel %vm425, %v390, %v402
    %v455 = vsel %vm425, %v392, %v408
    %v456 = vsel %vm425, %v394, %v414
    %v457 = vsel %vm425, %v396, %v420
    %v458 = vpack.c.bf16 %v455, %v454
    %v459 = vpack.c.bf16 %v429, %v426
    %v460 = vpack.c.bf16 %v430, %v427
    %v461 = vpack.c.bf16 %v431, %v428
    %v462 = vpack.c.bf16 %v457, %v456
    %v463 = vpack.c.bf16 %v435, %v432
    %v464 = vpack.c.bf16 %v436, %v433
    %v465 = vpack.c.bf16 %v437, %v434
    %v467 = vsel %vm279, %v170, 0
    %469 = vmatprep.subr.bf16.mxu0 %v459
    %470 = vmatpush1.bf16.msra.mxu0 %v458
    %471 = vmatprep.subr.bf16.mxu0 %v463
    %472 = vmatpush1.bf16.msra.mxu0 %v462
    %473 = vmatprep.subr.bf16.mxu0 0
    %474 = vmatpush1.bf16.msra.mxu0 0
    %475 = vmatprep.subr.bf16.mxu0 0
    %476 = vmatpush1.bf16.msra.mxu0 0
    %477 = vmatprep.subr.bf16.mxu0 0
    %478 = vmatpush1.bf16.msra.mxu0 0
    %479 = vmatprep.subr.bf16.mxu0 0
    %480 = vmatpush1.bf16.msra.mxu0 0
    %481 = vmatprep.subr.bf16.mxu0 0
    %482 = vmatpush1.bf16.msra.mxu0 0
    %483 = vmatprep.subr.bf16.mxu0 0
    %484 = vmatpush1.bf16.msra.mxu0 0
    %485 = vmatprep.subr.bf16.mxu0 0
    %486 = vmatpush1.bf16.msra.mxu0 0
    %487 = vmatprep.subr.bf16.mxu0 0
    %488 = vmatpush1.bf16.msra.mxu0 0
    %489 = vmatprep.subr.bf16.mxu0 0
    %490 = vmatpush1.bf16.msra.mxu0 0
    %491 = vmatprep.subr.bf16.mxu0 0
    %492 = vmatpush1.bf16.msra.mxu0 0
    %493 = vmatprep.subr.bf16.mxu0 0
    %494 = vmatpush1.bf16.msra.mxu0 0
    %495 = vmatprep.subr.bf16.mxu0 0
    %496 = vmatpush1.bf16.msra.mxu0 0
    %497 = vmatprep.subr.bf16.mxu0 0
    %498 = vmatpush1.bf16.msra.mxu0 0
    %499 = vmatprep.subr.bf16.mxu0 0
    %500 = vmatpush1.bf16.msra.mxu0 0
    %501 = vmatprep.mubr.bf16.mxu0 0
    %502 = vmatmul.mubr.bf16.gmra.mrb[0].mxu0 %v467
    %v503 = vpop.f32.mrb[0].mxu0
    %v504 = vadd.f32 0.0, %v503
    %v505 = vpop.f32.mrb[0].mxu0
    %v506 = vadd.f32 0.0, %v505
    %v507 = vpop.f32.mrb[0].mxu0
    %v508 = vpop.f32.mrb[0].mxu0
    %509 = vdwg.mxu0
    %510 = vmatprep.subr.bf16.mxu0 %v461
    %511 = vmatpush1.bf16.msra.mxu0 %v460
    %512 = vmatprep.subr.bf16.mxu0 %v465
    %513 = vmatpush1.bf16.msra.mxu0 %v464
    %514 = vmatprep.subr.bf16.mxu0 0
    %515 = vmatpush1.bf16.msra.mxu0 0
    %516 = vmatprep.subr.bf16.mxu0 0
    %517 = vmatpush1.bf16.msra.mxu0 0
    %518 = vmatprep.subr.bf16.mxu0 0
    %519 = vmatpush1.bf16.msra.mxu0 0
    %520 = vmatprep.subr.bf16.mxu0 0
    %521 = vmatpush1.bf16.msra.mxu0 0
    %522 = vmatprep.subr.bf16.mxu0 0
    %523 = vmatpush1.bf16.msra.mxu0 0
    %524 = vmatprep.subr.bf16.mxu0 0
    %525 = vmatpush1.bf16.msra.mxu0 0
    %526 = vmatprep.subr.bf16.mxu0 0
    %527 = vmatpush1.bf16.msra.mxu0 0
    %528 = vmatprep.subr.bf16.mxu0 0
    %529 = vmatpush1.bf16.msra.mxu0 0
    %530 = vmatprep.subr.bf16.mxu0 0
    %531 = vmatpush1.bf16.msra.mxu0 0
    %532 = vmatprep.subr.bf16.mxu0 0
    %533 = vmatpush1.bf16.msra.mxu0 0
    %534 = vmatprep.subr.bf16.mxu0 0
    %535 = vmatpush1.bf16.msra.mxu0 0
    %536 = vmatprep.subr.bf16.mxu0 0
    %537 = vmatpush1.bf16.msra.mxu0 0
    %538 = vmatprep.subr.bf16.mxu0 0
    %539 = vmatpush1.bf16.msra.mxu0 0
    %540 = vmatprep.subr.bf16.mxu0 0
    %541 = vmatpush1.bf16.msra.mxu0 0
    %542 = vmatprep.mubr.bf16.mxu0 0
    %543 = vmatmul.mubr.bf16.gmra.mrb[0].mxu0 %v467
    %v544 = vpop.f32.mrb[0].mxu0
    %v545 = vadd.f32 0.0, %v544
    %v546 = vpop.f32.mrb[0].mxu0
    %v547 = vadd.f32 0.0, %v546
    %v548 = vpop.f32.mrb[0].mxu0
    %v549 = vpop.f32.mrb[0].mxu0
    %550 = vdwg.mxu0
    %v551 = vlaneseq
    %v552 = vshrl.u32 %v551, 7
    %v553 = vsub.s32 1, %v552
    %v554 = vrot.slane %v178, %v553
    %v555 = vlaneseq
    %v556 = vshrl.u32 %v555, 7
    %v557 = vsub.s32 1, %v556
    %v558 = vrot.slane %v179, %v557
    %v559 = vlaneseq
    %v560 = vshrl.u32 %v559, 7
    %v561 = vsub.s32 1, %v560
    %v562 = vrot.slane %v180, %v561
    %v563 = vlaneseq
    %v564 = vshrl.u32 %v563, 7
    %v565 = vsub.s32 1, %v564
    %v566 = vrot.slane %v181, %v565
    %v567 = vmul.f32 %v504, %v554
    %v568 = vmul.f32 %v506, %v558
    %v569 = vmul.f32 %v545, %v562
    %v570 = vmul.f32 %v547, %v566
    %v571 = vadd.f32 %v385, %v567
    %v572 = vadd.f32 %v386, %v568
    %v573 = vadd.f32 %v387, %v569
    %v574 = vadd.f32 %v388, %v570
    %575 = vrot.lane.b32.xlu0 %v156, 15
    %v576 = vpop.permute.xlu0 %575
    %577 = vrot.lane.b32.xlu0 %v160, 15
    %v578 = vpop.permute.xlu0 %577
    %579 = vrot.lane.b32.xlu0 %v164, 15
    %v580 = vpop.permute.xlu0 %579
    %581 = vrot.lane.b32.xlu0 %v168, 15
    %v582 = vpop.permute.xlu0 %581
    %587 = vrot.lane.b32.xlu0 %v153, 15
    %v588 = vpop.permute.xlu0 %587
    %589 = vrot.lane.b32.xlu0 %v154, 15
    %v590 = vpop.permute.xlu0 %589
    %591 = vrot.lane.b32.xlu0 %v155, 15
    %v592 = vpop.permute.xlu0 %591
    %593 = vrot.lane.b32.xlu0 %v157, 15
    %v594 = vpop.permute.xlu0 %593
    %595 = vrot.lane.b32.xlu0 %v158, 15
    %v596 = vpop.permute.xlu0 %595
    %597 = vrot.lane.b32.xlu0 %v159, 15
    %v598 = vpop.permute.xlu0 %597
    %599 = vrot.lane.b32.xlu0 %v161, 15
    %v600 = vpop.permute.xlu0 %599
    %601 = vrot.lane.b32.xlu0 %v162, 15
    %v602 = vpop.permute.xlu0 %601
    %603 = vrot.lane.b32.xlu0 %v163, 15
    %v604 = vpop.permute.xlu0 %603
    %605 = vrot.lane.b32.xlu0 %v165, 15
    %v606 = vpop.permute.xlu0 %605
    %607 = vrot.lane.b32.xlu0 %v166, 15
    %v608 = vpop.permute.xlu0 %607
    %609 = vrot.lane.b32.xlu0 %v167, 15
    %v610 = vpop.permute.xlu0 %609
    %vm611 = vcmask 121856
    %v612 = vsel %vm611, %v588, %v590
    %v613 = vsel %vm611, %v590, %v592
    %v614 = vsel %vm611, %v592, %v576
    %v615 = vsel %vm611, %v594, %v596
    %v616 = vsel %vm611, %v596, %v598
    %v617 = vsel %vm611, %v598, %v578
    %v618 = vsel %vm611, %v600, %v602
    %v619 = vsel %vm611, %v602, %v604
    %v620 = vsel %vm611, %v604, %v580
    %v621 = vsel %vm611, %v606, %v608
    %v622 = vsel %vm611, %v608, %v610
    %v623 = vsel %vm611, %v610, %v582
    %v640 = vsel %vm611, %v576, %v588
    %v641 = vsel %vm611, %v578, %v594
    %v642 = vsel %vm611, %v580, %v600
    %v643 = vsel %vm611, %v582, %v606
    %v644 = vpack.c.bf16 %v641, %v640
    %v645 = vpack.c.bf16 %v615, %v612
    %v646 = vpack.c.bf16 %v616, %v613
    %v647 = vpack.c.bf16 %v617, %v614
    %v648 = vpack.c.bf16 %v643, %v642
    %v649 = vpack.c.bf16 %v621, %v618
    %v650 = vpack.c.bf16 %v622, %v619
    %v651 = vpack.c.bf16 %v623, %v620
    %v653 = vsel %vm279, %v171, 0
    %655 = vmatprep.subr.bf16.mxu0 %v645
    %656 = vmatpush1.bf16.msra.mxu0 %v644
    %657 = vmatprep.subr.bf16.mxu0 %v649
    %658 = vmatpush1.bf16.msra.mxu0 %v648
    %659 = vmatprep.subr.bf16.mxu0 0
    %660 = vmatpush1.bf16.msra.mxu0 0
    %661 = vmatprep.subr.bf16.mxu0 0
    %662 = vmatpush1.bf16.msra.mxu0 0
    %663 = vmatprep.subr.bf16.mxu0 0
    %664 = vmatpush1.bf16.msra.mxu0 0
    %665 = vmatprep.subr.bf16.mxu0 0
    %666 = vmatpush1.bf16.msra.mxu0 0
    %667 = vmatprep.subr.bf16.mxu0 0
    %668 = vmatpush1.bf16.msra.mxu0 0
    %669 = vmatprep.subr.bf16.mxu0 0
    %670 = vmatpush1.bf16.msra.mxu0 0
    %671 = vmatprep.subr.bf16.mxu0 0
    %672 = vmatpush1.bf16.msra.mxu0 0
    %673 = vmatprep.subr.bf16.mxu0 0
    %674 = vmatpush1.bf16.msra.mxu0 0
    %675 = vmatprep.subr.bf16.mxu0 0
    %676 = vmatpush1.bf16.msra.mxu0 0
    %677 = vmatprep.subr.bf16.mxu0 0
    %678 = vmatpush1.bf16.msra.mxu0 0
    %679 = vmatprep.subr.bf16.mxu0 0
    %680 = vmatpush1.bf16.msra.mxu0 0
    %681 = vmatprep.subr.bf16.mxu0 0
    %682 = vmatpush1.bf16.msra.mxu0 0
    %683 = vmatprep.subr.bf16.mxu0 0
    %684 = vmatpush1.bf16.msra.mxu0 0
    %685 = vmatprep.subr.bf16.mxu0 0
    %686 = vmatpush1.bf16.msra.mxu0 0
    %687 = vmatprep.mubr.bf16.mxu0 0
    %688 = vmatmul.mubr.bf16.gmra.mrb[0].mxu0 %v653
    %v689 = vpop.f32.mrb[0].mxu0
    %v690 = vadd.f32 0.0, %v689
    %v691 = vpop.f32.mrb[0].mxu0
    %v692 = vadd.f32 0.0, %v691
    %v693 = vpop.f32.mrb[0].mxu0
    %v694 = vpop.f32.mrb[0].mxu0
    %695 = vdwg.mxu0
    %696 = vmatprep.subr.bf16.mxu0 %v647
    %697 = vmatpush1.bf16.msra.mxu0 %v646
    %698 = vmatprep.subr.bf16.mxu0 %v651
    %699 = vmatpush1.bf16.msra.mxu0 %v650
    %700 = vmatprep.subr.bf16.mxu0 0
    %701 = vmatpush1.bf16.msra.mxu0 0
    %702 = vmatprep.subr.bf16.mxu0 0
    %703 = vmatpush1.bf16.msra.mxu0 0
    %704 = vmatprep.subr.bf16.mxu0 0
    %705 = vmatpush1.bf16.msra.mxu0 0
    %706 = vmatprep.subr.bf16.mxu0 0
    %707 = vmatpush1.bf16.msra.mxu0 0
    %708 = vmatprep.subr.bf16.mxu0 0
    %709 = vmatpush1.bf16.msra.mxu0 0
    %710 = vmatprep.subr.bf16.mxu0 0
    %711 = vmatpush1.bf16.msra.mxu0 0
    %712 = vmatprep.subr.bf16.mxu0 0
    %713 = vmatpush1.bf16.msra.mxu0 0
    %714 = vmatprep.subr.bf16.mxu0 0
    %715 = vmatpush1.bf16.msra.mxu0 0
    %716 = vmatprep.subr.bf16.mxu0 0
    %717 = vmatpush1.bf16.msra.mxu0 0
    %718 = vmatprep.subr.bf16.mxu0 0
    %719 = vmatpush1.bf16.msra.mxu0 0
    %720 = vmatprep.subr.bf16.mxu0 0
    %721 = vmatpush1.bf16.msra.mxu0 0
    %722 = vmatprep.subr.bf16.mxu0 0
    %723 = vmatpush1.bf16.msra.mxu0 0
    %724 = vmatprep.subr.bf16.mxu0 0
    %725 = vmatpush1.bf16.msra.mxu0 0
    %726 = vmatprep.subr.bf16.mxu0 0
    %727 = vmatpush1.bf16.msra.mxu0 0
    %728 = vmatprep.mubr.bf16.mxu0 0
    %729 = vmatmul.mubr.bf16.gmra.mrb[0].mxu0 %v653
    %v730 = vpop.f32.mrb[0].mxu0
    %v731 = vadd.f32 0.0, %v730
    %v732 = vpop.f32.mrb[0].mxu0
    %v733 = vadd.f32 0.0, %v732
    %v734 = vpop.f32.mrb[0].mxu0
    %v735 = vpop.f32.mrb[0].mxu0
    %736 = vdwg.mxu0
    %v737 = vlaneseq
    %v738 = vshrl.u32 %v737, 7
    %v739 = vsub.s32 2, %v738
    %v740 = vrot.slane %v178, %v739
    %v741 = vlaneseq
    %v742 = vshrl.u32 %v741, 7
    %v743 = vsub.s32 2, %v742
    %v744 = vrot.slane %v179, %v743
    %v745 = vlaneseq
    %v746 = vshrl.u32 %v745, 7
    %v747 = vsub.s32 2, %v746
    %v748 = vrot.slane %v180, %v747
    %v749 = vlaneseq
    %v750 = vshrl.u32 %v749, 7
    %v751 = vsub.s32 2, %v750
    %v752 = vrot.slane %v181, %v751
    %v753 = vmul.f32 %v690, %v740
    %v754 = vmul.f32 %v692, %v744
    %v755 = vmul.f32 %v731, %v748
    %v756 = vmul.f32 %v733, %v752
    %v757 = vadd.f32 %v571, %v753
    %v758 = vadd.f32 %v572, %v754
    %v759 = vadd.f32 %v573, %v755
    %v760 = vadd.f32 %v574, %v756
    %761 = vrot.lane.b32.xlu0 %v156, 1
    %v762 = vpop.permute.xlu0 %761
    %763 = vrot.lane.b32.xlu0 %v160, 1
    %v764 = vpop.permute.xlu0 %763
    %765 = vrot.lane.b32.xlu0 %v164, 1
    %v766 = vpop.permute.xlu0 %765
    %767 = vrot.lane.b32.xlu0 %v168, 1
    %v768 = vpop.permute.xlu0 %767
    %773 = vrot.lane.b32.xlu0 %v153, 1
    %v774 = vpop.permute.xlu0 %773
    %775 = vrot.lane.b32.xlu0 %v154, 1
    %v776 = vpop.permute.xlu0 %775
    %777 = vrot.lane.b32.xlu0 %v155, 1
    %v778 = vpop.permute.xlu0 %777
    %779 = vrot.lane.b32.xlu0 %v157, 1
    %v780 = vpop.permute.xlu0 %779
    %781 = vrot.lane.b32.xlu0 %v158, 1
    %v782 = vpop.permute.xlu0 %781
    %783 = vrot.lane.b32.xlu0 %v159, 1
    %v784 = vpop.permute.xlu0 %783
    %785 = vrot.lane.b32.xlu0 %v161, 1
    %v786 = vpop.permute.xlu0 %785
    %787 = vrot.lane.b32.xlu0 %v162, 1
    %v788 = vpop.permute.xlu0 %787
    %789 = vrot.lane.b32.xlu0 %v163, 1
    %v790 = vpop.permute.xlu0 %789
    %791 = vrot.lane.b32.xlu0 %v165, 1
    %v792 = vpop.permute.xlu0 %791
    %793 = vrot.lane.b32.xlu0 %v166, 1
    %v794 = vpop.permute.xlu0 %793
    %795 = vrot.lane.b32.xlu0 %v167, 1
    %v796 = vpop.permute.xlu0 %795
    %vm797 = vcmask 7168
    %v798 = vsel %vm797, %v774, %v776
    %v799 = vsel %vm797, %v776, %v778
    %v800 = vsel %vm797, %v778, %v762
    %v801 = vsel %vm797, %v780, %v782
    %v802 = vsel %vm797, %v782, %v784
    %v803 = vsel %vm797, %v784, %v764
    %v804 = vsel %vm797, %v786, %v788
    %v805 = vsel %vm797, %v788, %v790
    %v806 = vsel %vm797, %v790, %v766
    %v807 = vsel %vm797, %v792, %v794
    %v808 = vsel %vm797, %v794, %v796
    %v809 = vsel %vm797, %v796, %v768
    %v826 = vsel %vm797, %v762, %v774
    %v827 = vsel %vm797, %v764, %v780
    %v828 = vsel %vm797, %v766, %v786
    %v829 = vsel %vm797, %v768, %v792
    %v830 = vpack.c.bf16 %v827, %v826
    %v831 = vpack.c.bf16 %v801, %v798
    %v832 = vpack.c.bf16 %v802, %v799
    %v833 = vpack.c.bf16 %v803, %v800
    %v834 = vpack.c.bf16 %v829, %v828
    %v835 = vpack.c.bf16 %v807, %v804
    %v836 = vpack.c.bf16 %v808, %v805
    %v837 = vpack.c.bf16 %v809, %v806
    %v839 = vsel %vm279, %v172, 0
    %841 = vmatprep.subr.bf16.mxu0 %v831
    %842 = vmatpush1.bf16.msra.mxu0 %v830
    %843 = vmatprep.subr.bf16.mxu0 %v835
    %844 = vmatpush1.bf16.msra.mxu0 %v834
    %845 = vmatprep.subr.bf16.mxu0 0
    %846 = vmatpush1.bf16.msra.mxu0 0
    %847 = vmatprep.subr.bf16.mxu0 0
    %848 = vmatpush1.bf16.msra.mxu0 0
    %849 = vmatprep.subr.bf16.mxu0 0
    %850 = vmatpush1.bf16.msra.mxu0 0
    %851 = vmatprep.subr.bf16.mxu0 0
    %852 = vmatpush1.bf16.msra.mxu0 0
    %853 = vmatprep.subr.bf16.mxu0 0
    %854 = vmatpush1.bf16.msra.mxu0 0
    %855 = vmatprep.subr.bf16.mxu0 0
    %856 = vmatpush1.bf16.msra.mxu0 0
    %857 = vmatprep.subr.bf16.mxu0 0
    %858 = vmatpush1.bf16.msra.mxu0 0
    %859 = vmatprep.subr.bf16.mxu0 0
    %860 = vmatpush1.bf16.msra.mxu0 0
    %861 = vmatprep.subr.bf16.mxu0 0
    %862 = vmatpush1.bf16.msra.mxu0 0
    %863 = vmatprep.subr.bf16.mxu0 0
    %864 = vmatpush1.bf16.msra.mxu0 0
    %865 = vmatprep.subr.bf16.mxu0 0
    %866 = vmatpush1.bf16.msra.mxu0 0
    %867 = vmatprep.subr.bf16.mxu0 0
    %868 = vmatpush1.bf16.msra.mxu0 0
    %869 = vmatprep.subr.bf16.mxu0 0
    %870 = vmatpush1.bf16.msra.mxu0 0
    %871 = vmatprep.subr.bf16.mxu0 0
    %872 = vmatpush1.bf16.msra.mxu0 0
    %873 = vmatprep.mubr.bf16.mxu0 0
    %874 = vmatmul.mubr.bf16.gmra.mrb[0].mxu0 %v839
    %v875 = vpop.f32.mrb[0].mxu0
    %v876 = vadd.f32 0.0, %v875
    %v877 = vpop.f32.mrb[0].mxu0
    %v878 = vadd.f32 0.0, %v877
    %v879 = vpop.f32.mrb[0].mxu0
    %v880 = vpop.f32.mrb[0].mxu0
    %881 = vdwg.mxu0
    %882 = vmatprep.subr.bf16.mxu0 %v833
    %883 = vmatpush1.bf16.msra.mxu0 %v832
    %884 = vmatprep.subr.bf16.mxu0 %v837
    %885 = vmatpush1.bf16.msra.mxu0 %v836
    %886 = vmatprep.subr.bf16.mxu0 0
    %887 = vmatpush1.bf16.msra.mxu0 0
    %888 = vmatprep.subr.bf16.mxu0 0
    %889 = vmatpush1.bf16.msra.mxu0 0
    %890 = vmatprep.subr.bf16.mxu0 0
    %891 = vmatpush1.bf16.msra.mxu0 0
    %892 = vmatprep.subr.bf16.mxu0 0
    %893 = vmatpush1.bf16.msra.mxu0 0
    %894 = vmatprep.subr.bf16.mxu0 0
    %895 = vmatpush1.bf16.msra.mxu0 0
    %896 = vmatprep.subr.bf16.mxu0 0
    %897 = vmatpush1.bf16.msra.mxu0 0
    %898 = vmatprep.subr.bf16.mxu0 0
    %899 = vmatpush1.bf16.msra.mxu0 0
    %900 = vmatprep.subr.bf16.mxu0 0
    %901 = vmatpush1.bf16.msra.mxu0 0
    %902 = vmatprep.subr.bf16.mxu0 0
    %903 = vmatpush1.bf16.msra.mxu0 0
    %904 = vmatprep.subr.bf16.mxu0 0
    %905 = vmatpush1.bf16.msra.mxu0 0
    %906 = vmatprep.subr.bf16.mxu0 0
    %907 = vmatpush1.bf16.msra.mxu0 0
    %908 = vmatprep.subr.bf16.mxu0 0
    %909 = vmatpush1.bf16.msra.mxu0 0
    %910 = vmatprep.subr.bf16.mxu0 0
    %911 = vmatpush1.bf16.msra.mxu0 0
    %912 = vmatprep.subr.bf16.mxu0 0
    %913 = vmatpush1.bf16.msra.mxu0 0
    %914 = vmatprep.mubr.bf16.mxu0 0
    %915 = vmatmul.mubr.bf16.gmra.mrb[0].mxu0 %v839
    %v916 = vpop.f32.mrb[0].mxu0
    %v917 = vadd.f32 0.0, %v916
    %v918 = vpop.f32.mrb[0].mxu0
    %v919 = vadd.f32 0.0, %v918
    %v920 = vpop.f32.mrb[0].mxu0
    %v921 = vpop.f32.mrb[0].mxu0
    %922 = vdwg.mxu0
    %v923 = vlaneseq
    %v924 = vshrl.u32 %v923, 7
    %v925 = vsub.s32 3, %v924
    %v926 = vrot.slane %v178, %v925
    %v927 = vlaneseq
    %v928 = vshrl.u32 %v927, 7
    %v929 = vsub.s32 3, %v928
    %v930 = vrot.slane %v179, %v929
    %v931 = vlaneseq
    %v932 = vshrl.u32 %v931, 7
    %v933 = vsub.s32 3, %v932
    %v934 = vrot.slane %v180, %v933
    %v935 = vlaneseq
    %v936 = vshrl.u32 %v935, 7
    %v937 = vsub.s32 3, %v936
    %v938 = vrot.slane %v181, %v937
    %v939 = vmul.f32 %v876, %v926
    %v940 = vmul.f32 %v878, %v930
    %v941 = vmul.f32 %v917, %v934
    %v942 = vmul.f32 %v919, %v938
    %v943 = vadd.f32 %v757, %v939
    %v944 = vadd.f32 %v758, %v940
    %v945 = vadd.f32 %v759, %v941
    %v946 = vadd.f32 %v760, %v942
    %v947 = vpack.c.bf16 %v157, %v153
    %v948 = vpack.c.bf16 %v158, %v154
    %v949 = vpack.c.bf16 %v159, %v155
    %v950 = vpack.c.bf16 %v160, %v156
    %v951 = vpack.c.bf16 %v165, %v161
    %v952 = vpack.c.bf16 %v166, %v162
    %v953 = vpack.c.bf16 %v167, %v163
    %v954 = vpack.c.bf16 %v168, %v164
    %v956 = vsel %vm279, %v173, 0
    %958 = vmatprep.subr.bf16.mxu0 %v948
    %959 = vmatpush1.bf16.msra.mxu0 %v947
    %960 = vmatprep.subr.bf16.mxu0 %v952
    %961 = vmatpush1.bf16.msra.mxu0 %v951
    %962 = vmatprep.subr.bf16.mxu0 0
    %963 = vmatpush1.bf16.msra.mxu0 0
    %964 = vmatprep.subr.bf16.mxu0 0
    %965 = vmatpush1.bf16.msra.mxu0 0
    %966 = vmatprep.subr.bf16.mxu0 0
    %967 = vmatpush1.bf16.msra.mxu0 0
    %968 = vmatprep.subr.bf16.mxu0 0
    %969 = vmatpush1.bf16.msra.mxu0 0
    %970 = vmatprep.subr.bf16.mxu0 0
    %971 = vmatpush1.bf16.msra.mxu0 0
    %972 = vmatprep.subr.bf16.mxu0 0
    %973 = vmatpush1.bf16.msra.mxu0 0
    %974 = vmatprep.subr.bf16.mxu0 0
    %975 = vmatpush1.bf16.msra.mxu0 0
    %976 = vmatprep.subr.bf16.mxu0 0
    %977 = vmatpush1.bf16.msra.mxu0 0
    %978 = vmatprep.subr.bf16.mxu0 0
    %979 = vmatpush1.bf16.msra.mxu0 0
    %980 = vmatprep.subr.bf16.mxu0 0
    %981 = vmatpush1.bf16.msra.mxu0 0
    %982 = vmatprep.subr.bf16.mxu0 0
    %983 = vmatpush1.bf16.msra.mxu0 0
    %984 = vmatprep.subr.bf16.mxu0 0
    %985 = vmatpush1.bf16.msra.mxu0 0
    %986 = vmatprep.subr.bf16.mxu0 0
    %987 = vmatpush1.bf16.msra.mxu0 0
    %988 = vmatprep.subr.bf16.mxu0 0
    %989 = vmatpush1.bf16.msra.mxu0 0
    %990 = vmatprep.mubr.bf16.mxu0 0
    %991 = vmatmul.mubr.bf16.gmra.mrb[0].mxu0 %v956
    %v992 = vpop.f32.mrb[0].mxu0
    %v993 = vadd.f32 0.0, %v992
    %v994 = vpop.f32.mrb[0].mxu0
    %v995 = vadd.f32 0.0, %v994
    %v996 = vpop.f32.mrb[0].mxu0
    %v997 = vpop.f32.mrb[0].mxu0
    %998 = vdwg.mxu0
    %999 = vmatprep.subr.bf16.mxu0 %v950
    %1000 = vmatpush1.bf16.msra.mxu0 %v949
    %1001 = vmatprep.subr.bf16.mxu0 %v954
    %1002 = vmatpush1.bf16.msra.mxu0 %v953
    %1003 = vmatprep.subr.bf16.mxu0 0
    %1004 = vmatpush1.bf16.msra.mxu0 0
    %1005 = vmatprep.subr.bf16.mxu0 0
    %1006 = vmatpush1.bf16.msra.mxu0 0
    %1007 = vmatprep.subr.bf16.mxu0 0
    %1008 = vmatpush1.bf16.msra.mxu0 0
    %1009 = vmatprep.subr.bf16.mxu0 0
    %1010 = vmatpush1.bf16.msra.mxu0 0
    %1011 = vmatprep.subr.bf16.mxu0 0
    %1012 = vmatpush1.bf16.msra.mxu0 0
    %1013 = vmatprep.subr.bf16.mxu0 0
    %1014 = vmatpush1.bf16.msra.mxu0 0
    %1015 = vmatprep.subr.bf16.mxu0 0
    %1016 = vmatpush1.bf16.msra.mxu0 0
    %1017 = vmatprep.subr.bf16.mxu0 0
    %1018 = vmatpush1.bf16.msra.mxu0 0
    %1019 = vmatprep.subr.bf16.mxu0 0
    %1020 = vmatpush1.bf16.msra.mxu0 0
    %1021 = vmatprep.subr.bf16.mxu0 0
    %1022 = vmatpush1.bf16.msra.mxu0 0
    %1023 = vmatprep.subr.bf16.mxu0 0
    %1024 = vmatpush1.bf16.msra.mxu0 0
    %1025 = vmatprep.subr.bf16.mxu0 0
    %1026 = vmatpush1.bf16.msra.mxu0 0
    %1027 = vmatprep.subr.bf16.mxu0 0
    %1028 = vmatpush1.bf16.msra.mxu0 0
    %1029 = vmatprep.subr.bf16.mxu0 0
    %1030 = vmatpush1.bf16.msra.mxu0 0
    %1031 = vmatprep.mubr.bf16.mxu0 0
    %1032 = vmatmul.mubr.bf16.gmra.mrb[0].mxu0 %v956
    %v1033 = vpop.f32.mrb[0].mxu0
    %v1034 = vadd.f32 0.0, %v1033
    %v1035 = vpop.f32.mrb[0].mxu0
    %v1036 = vadd.f32 0.0, %v1035
    %v1037 = vpop.f32.mrb[0].mxu0
    %v1038 = vpop.f32.mrb[0].mxu0
    %1039 = vdwg.mxu0
    %v1040 = vadd.f32 %v943, %v993
    %v1041 = vadd.f32 %v944, %v995
    %v1042 = vadd.f32 %v945, %v1034
    %v1043 = vadd.f32 %v946, %v1036
    %1044 = vrot.lane.b32.xlu0 %v153, 127
    %v1045 = vpop.permute.xlu0 %1044
    %1046 = vrot.lane.b32.xlu0 %v154, 127
    %v1047 = vpop.permute.xlu0 %1046
    %1048 = vrot.lane.b32.xlu0 %v155, 127
    %v1049 = vpop.permute.xlu0 %1048
    %1050 = vrot.lane.b32.xlu0 %v156, 127
    %v1051 = vpop.permute.xlu0 %1050
    %1052 = vrot.lane.b32.xlu0 %v157, 127
    %v1053 = vpop.permute.xlu0 %1052
    %1054 = vrot.lane.b32.xlu0 %v158, 127
    %v1055 = vpop.permute.xlu0 %1054
    %1056 = vrot.lane.b32.xlu0 %v159, 127
    %v1057 = vpop.permute.xlu0 %1056
    %1058 = vrot.lane.b32.xlu0 %v160, 127
    %v1059 = vpop.permute.xlu0 %1058
    %1060 = vrot.lane.b32.xlu0 %v161, 127
    %v1061 = vpop.permute.xlu0 %1060
    %1062 = vrot.lane.b32.xlu0 %v162, 127
    %v1063 = vpop.permute.xlu0 %1062
    %1064 = vrot.lane.b32.xlu0 %v163, 127
    %v1065 = vpop.permute.xlu0 %1064
    %1066 = vrot.lane.b32.xlu0 %v164, 127
    %v1067 = vpop.permute.xlu0 %1066
    %1068 = vrot.lane.b32.xlu0 %v165, 127
    %v1069 = vpop.permute.xlu0 %1068
    %1070 = vrot.lane.b32.xlu0 %v166, 127
    %v1071 = vpop.permute.xlu0 %1070
    %1072 = vrot.lane.b32.xlu0 %v167, 127
    %v1073 = vpop.permute.xlu0 %1072
    %1074 = vrot.lane.b32.xlu0 %v168, 127
    %v1075 = vpop.permute.xlu0 %1074
    %vm1076 = vcmask 1039360
    %v1077 = vsel %vm1076, %v1045, %v1047
    %v1078 = vsel %vm1076, %v1047, %v1049
    %v1079 = vsel %vm1076, %v1049, %v1051
    %v1080 = vsel %vm1076, %v1053, %v1055
    %v1081 = vsel %vm1076, %v1055, %v1057
    %v1082 = vsel %vm1076, %v1057, %v1059
    %v1083 = vsel %vm1076, %v1061, %v1063
    %v1084 = vsel %vm1076, %v1063, %v1065
    %v1085 = vsel %vm1076, %v1065, %v1067
    %v1086 = vsel %vm1076, %v1069, %v1071
    %v1087 = vsel %vm1076, %v1071, %v1073
    %v1088 = vsel %vm1076, %v1073, %v1075
    %v1109 = vsel %vm1076, %v1051, %v1045
    %v1110 = vsel %vm1076, %v1059, %v1053
    %v1111 = vsel %vm1076, %v1067, %v1061
    %v1112 = vsel %vm1076, %v1075, %v1069
    %v1113 = vpack.c.bf16 %v1080, %v1077
    %v1114 = vpack.c.bf16 %v1081, %v1078
    %v1115 = vpack.c.bf16 %v1082, %v1079
    %v1116 = vpack.c.bf16 %v1110, %v1109
    %v1117 = vpack.c.bf16 %v1086, %v1083
    %v1118 = vpack.c.bf16 %v1087, %v1084
    %v1119 = vpack.c.bf16 %v1088, %v1085
    %v1120 = vpack.c.bf16 %v1112, %v1111
    %v1122 = vsel %vm279, %v174, 0
    %1124 = vmatprep.subr.bf16.mxu0 %v1114
    %1125 = vmatpush1.bf16.msra.mxu0 %v1113
    %1126 = vmatprep.subr.bf16.mxu0 %v1118
    %1127 = vmatpush1.bf16.msra.mxu0 %v1117
    %1128 = vmatprep.subr.bf16.mxu0 0
    %1129 = vmatpush1.bf16.msra.mxu0 0
    %1130 = vmatprep.subr.bf16.mxu0 0
    %1131 = vmatpush1.bf16.msra.mxu0 0
    %1132 = vmatprep.subr.bf16.mxu0 0
    %1133 = vmatpush1.bf16.msra.mxu0 0
    %1134 = vmatprep.subr.bf16.mxu0 0
    %1135 = vmatpush1.bf16.msra.mxu0 0
    %1136 = vmatprep.subr.bf16.mxu0 0
    %1137 = vmatpush1.bf16.msra.mxu0 0
    %1138 = vmatprep.subr.bf16.mxu0 0
    %1139 = vmatpush1.bf16.msra.mxu0 0
    %1140 = vmatprep.subr.bf16.mxu0 0
    %1141 = vmatpush1.bf16.msra.mxu0 0
    %1142 = vmatprep.subr.bf16.mxu0 0
    %1143 = vmatpush1.bf16.msra.mxu0 0
    %1144 = vmatprep.subr.bf16.mxu0 0
    %1145 = vmatpush1.bf16.msra.mxu0 0
    %1146 = vmatprep.subr.bf16.mxu0 0
    %1147 = vmatpush1.bf16.msra.mxu0 0
    %1148 = vmatprep.subr.bf16.mxu0 0
    %1149 = vmatpush1.bf16.msra.mxu0 0
    %1150 = vmatprep.subr.bf16.mxu0 0
    %1151 = vmatpush1.bf16.msra.mxu0 0
    %1152 = vmatprep.subr.bf16.mxu0 0
    %1153 = vmatpush1.bf16.msra.mxu0 0
    %1154 = vmatprep.subr.bf16.mxu0 0
    %1155 = vmatpush1.bf16.msra.mxu0 0
    %1156 = vmatprep.mubr.bf16.mxu0 0
    %1157 = vmatmul.mubr.bf16.gmra.mrb[0].mxu0 %v1122
    %v1158 = vpop.f32.mrb[0].mxu0
    %v1159 = vadd.f32 0.0, %v1158
    %v1160 = vpop.f32.mrb[0].mxu0
    %v1161 = vadd.f32 0.0, %v1160
    %v1162 = vpop.f32.mrb[0].mxu0
    %v1163 = vpop.f32.mrb[0].mxu0
    %1164 = vdwg.mxu0
    %1165 = vmatprep.subr.bf16.mxu0 %v1116
    %1166 = vmatpush1.bf16.msra.mxu0 %v1115
    %1167 = vmatprep.subr.bf16.mxu0 %v1120
    %1168 = vmatpush1.bf16.msra.mxu0 %v1119
    %1169 = vmatprep.subr.bf16.mxu0 0
    %1170 = vmatpush1.bf16.msra.mxu0 0
    %1171 = vmatprep.subr.bf16.mxu0 0
    %1172 = vmatpush1.bf16.msra.mxu0 0
    %1173 = vmatprep.subr.bf16.mxu0 0
    %1174 = vmatpush1.bf16.msra.mxu0 0
    %1175 = vmatprep.subr.bf16.mxu0 0
    %1176 = vmatpush1.bf16.msra.mxu0 0
    %1177 = vmatprep.subr.bf16.mxu0 0
    %1178 = vmatpush1.bf16.msra.mxu0 0
    %1179 = vmatprep.subr.bf16.mxu0 0
    %1180 = vmatpush1.bf16.msra.mxu0 0
    %1181 = vmatprep.subr.bf16.mxu0 0
    %1182 = vmatpush1.bf16.msra.mxu0 0
    %1183 = vmatprep.subr.bf16.mxu0 0
    %1184 = vmatpush1.bf16.msra.mxu0 0
    %1185 = vmatprep.subr.bf16.mxu0 0
    %1186 = vmatpush1.bf16.msra.mxu0 0
    %1187 = vmatprep.subr.bf16.mxu0 0
    %1188 = vmatpush1.bf16.msra.mxu0 0
    %1189 = vmatprep.subr.bf16.mxu0 0
    %1190 = vmatpush1.bf16.msra.mxu0 0
    %1191 = vmatprep.subr.bf16.mxu0 0
    %1192 = vmatpush1.bf16.msra.mxu0 0
    %1193 = vmatprep.subr.bf16.mxu0 0
    %1194 = vmatpush1.bf16.msra.mxu0 0
    %1195 = vmatprep.subr.bf16.mxu0 0
    %1196 = vmatpush1.bf16.msra.mxu0 0
    %1197 = vmatprep.mubr.bf16.mxu0 0
    %1198 = vmatmul.mubr.bf16.gmra.mrb[0].mxu0 %v1122
    %v1199 = vpop.f32.mrb[0].mxu0
    %v1200 = vadd.f32 0.0, %v1199
    %v1201 = vpop.f32.mrb[0].mxu0
    %v1202 = vadd.f32 0.0, %v1201
    %v1203 = vpop.f32.mrb[0].mxu0
    %v1204 = vpop.f32.mrb[0].mxu0
    %1205 = vdwg.mxu0
    %v1206 = vlaneseq
    %v1207 = vshrl.u32 %v1206, 7
    %v1208 = vsub.s32 5, %v1207
    %v1209 = vrot.slane %v178, %v1208
    %v1210 = vlaneseq
    %v1211 = vshrl.u32 %v1210, 7
    %v1212 = vsub.s32 5, %v1211
    %v1213 = vrot.slane %v179, %v1212
    %v1214 = vlaneseq
    %v1215 = vshrl.u32 %v1214, 7
    %v1216 = vsub.s32 5, %v1215
    %v1217 = vrot.slane %v180, %v1216
    %v1218 = vlaneseq
    %v1219 = vshrl.u32 %v1218, 7
    %v1220 = vsub.s32 5, %v1219
    %v1221 = vrot.slane %v181, %v1220
    %v1222 = vmul.f32 %v1159, %v1209
    %v1223 = vmul.f32 %v1161, %v1213
    %v1224 = vmul.f32 %v1200, %v1217
    %v1225 = vmul.f32 %v1202, %v1221
    %v1226 = vadd.f32 %v1040, %v1222
    %v1227 = vadd.f32 %v1041, %v1223
    %v1228 = vadd.f32 %v1042, %v1224
    %v1229 = vadd.f32 %v1043, %v1225
    %1230 = vrot.lane.b32.xlu0 %v153, 113
    %v1231 = vpop.permute.xlu0 %1230
    %1232 = vrot.lane.b32.xlu0 %v154, 113
    %v1233 = vpop.permute.xlu0 %1232
    %1234 = vrot.lane.b32.xlu0 %v155, 113
    %v1235 = vpop.permute.xlu0 %1234
    %1236 = vrot.lane.b32.xlu0 %v156, 113
    %v1237 = vpop.permute.xlu0 %1236
    %1238 = vrot.lane.b32.xlu0 %v157, 113
    %v1239 = vpop.permute.xlu0 %1238
    %1240 = vrot.lane.b32.xlu0 %v158, 113
    %v1241 = vpop.permute.xlu0 %1240
    %1242 = vrot.lane.b32.xlu0 %v159, 113
    %v1243 = vpop.permute.xlu0 %1242
    %1244 = vrot.lane.b32.xlu0 %v160, 113
    %v1245 = vpop.permute.xlu0 %1244
    %1246 = vrot.lane.b32.xlu0 %v161, 113
    %v1247 = vpop.permute.xlu0 %1246
    %1248 = vrot.lane.b32.xlu0 %v162, 113
    %v1249 = vpop.permute.xlu0 %1248
    %1250 = vrot.lane.b32.xlu0 %v163, 113
    %v1251 = vpop.permute.xlu0 %1250
    %1252 = vrot.lane.b32.xlu0 %v164, 113
    %v1253 = vpop.permute.xlu0 %1252
    %1254 = vrot.lane.b32.xlu0 %v165, 113
    %v1255 = vpop.permute.xlu0 %1254
    %1256 = vrot.lane.b32.xlu0 %v166, 113
    %v1257 = vpop.permute.xlu0 %1256
    %1258 = vrot.lane.b32.xlu0 %v167, 113
    %v1259 = vpop.permute.xlu0 %1258
    %1260 = vrot.lane.b32.xlu0 %v168, 113
    %v1261 = vpop.permute.xlu0 %1260
    %vm1262 = vcmask 924672
    %v1263 = vsel %vm1262, %v1231, %v1233
    %v1264 = vsel %vm1262, %v1233, %v1235
    %v1265 = vsel %vm1262, %v1235, %v1237
    %v1266 = vsel %vm1262, %v1239, %v1241
    %v1267 = vsel %vm1262, %v1241, %v1243
    %v1268 = vsel %vm1262, %v1243, %v1245
    %v1269 = vsel %vm1262, %v1247, %v1249
    %v1270 = vsel %vm1262, %v1249, %v1251
    %v1271 = vsel %vm1262, %v1251, %v1253
    %v1272 = vsel %vm1262, %v1255, %v1257
    %v1273 = vsel %vm1262, %v1257, %v1259
    %v1274 = vsel %vm1262, %v1259, %v1261
    %v1295 = vsel %vm1262, %v1237, %v1231
    %v1296 = vsel %vm1262, %v1245, %v1239
    %v1297 = vsel %vm1262, %v1253, %v1247
    %v1298 = vsel %vm1262, %v1261, %v1255
    %v1299 = vpack.c.bf16 %v1266, %v1263
    %v1300 = vpack.c.bf16 %v1267, %v1264
    %v1301 = vpack.c.bf16 %v1268, %v1265
    %v1302 = vpack.c.bf16 %v1296, %v1295
    %v1303 = vpack.c.bf16 %v1272, %v1269
    %v1304 = vpack.c.bf16 %v1273, %v1270
    %v1305 = vpack.c.bf16 %v1274, %v1271
    %v1306 = vpack.c.bf16 %v1298, %v1297
    %v1308 = vsel %vm279, %v175, 0
    %1310 = vmatprep.subr.bf16.mxu0 %v1300
    %1311 = vmatpush1.bf16.msra.mxu0 %v1299
    %1312 = vmatprep.subr.bf16.mxu0 %v1304
    %1313 = vmatpush1.bf16.msra.mxu0 %v1303
    %1314 = vmatprep.subr.bf16.mxu0 0
    %1315 = vmatpush1.bf16.msra.mxu0 0
    %1316 = vmatprep.subr.bf16.mxu0 0
    %1317 = vmatpush1.bf16.msra.mxu0 0
    %1318 = vmatprep.subr.bf16.mxu0 0
    %1319 = vmatpush1.bf16.msra.mxu0 0
    %1320 = vmatprep.subr.bf16.mxu0 0
    %1321 = vmatpush1.bf16.msra.mxu0 0
    %1322 = vmatprep.subr.bf16.mxu0 0
    %1323 = vmatpush1.bf16.msra.mxu0 0
    %1324 = vmatprep.subr.bf16.mxu0 0
    %1325 = vmatpush1.bf16.msra.mxu0 0
    %1326 = vmatprep.subr.bf16.mxu0 0
    %1327 = vmatpush1.bf16.msra.mxu0 0
    %1328 = vmatprep.subr.bf16.mxu0 0
    %1329 = vmatpush1.bf16.msra.mxu0 0
    %1330 = vmatprep.subr.bf16.mxu0 0
    %1331 = vmatpush1.bf16.msra.mxu0 0
    %1332 = vmatprep.subr.bf16.mxu0 0
    %1333 = vmatpush1.bf16.msra.mxu0 0
    %1334 = vmatprep.subr.bf16.mxu0 0
    %1335 = vmatpush1.bf16.msra.mxu0 0
    %1336 = vmatprep.subr.bf16.mxu0 0
    %1337 = vmatpush1.bf16.msra.mxu0 0
    %1338 = vmatprep.subr.bf16.mxu0 0
    %1339 = vmatpush1.bf16.msra.mxu0 0
    %1340 = vmatprep.subr.bf16.mxu0 0
    %1341 = vmatpush1.bf16.msra.mxu0 0
    %1342 = vmatprep.mubr.bf16.mxu0 0
    %1343 = vmatmul.mubr.bf16.gmra.mrb[0].mxu0 %v1308
    %v1344 = vpop.f32.mrb[0].mxu0
    %v1345 = vadd.f32 0.0, %v1344
    %v1346 = vpop.f32.mrb[0].mxu0
    %v1347 = vadd.f32 0.0, %v1346
    %v1348 = vpop.f32.mrb[0].mxu0
    %v1349 = vpop.f32.mrb[0].mxu0
    %1350 = vdwg.mxu0
    %1351 = vmatprep.subr.bf16.mxu0 %v1302
    %1352 = vmatpush1.bf16.msra.mxu0 %v1301
    %1353 = vmatprep.subr.bf16.mxu0 %v1306
    %1354 = vmatpush1.bf16.msra.mxu0 %v1305
    %1355 = vmatprep.subr.bf16.mxu0 0
    %1356 = vmatpush1.bf16.msra.mxu0 0
    %1357 = vmatprep.subr.bf16.mxu0 0
    %1358 = vmatpush1.bf16.msra.mxu0 0
    %1359 = vmatprep.subr.bf16.mxu0 0
    %1360 = vmatpush1.bf16.msra.mxu0 0
    %1361 = vmatprep.subr.bf16.mxu0 0
    %1362 = vmatpush1.bf16.msra.mxu0 0
    %1363 = vmatprep.subr.bf16.mxu0 0
    %1364 = vmatpush1.bf16.msra.mxu0 0
    %1365 = vmatprep.subr.bf16.mxu0 0
    %1366 = vmatpush1.bf16.msra.mxu0 0
    %1367 = vmatprep.subr.bf16.mxu0 0
    %1368 = vmatpush1.bf16.msra.mxu0 0
    %1369 = vmatprep.subr.bf16.mxu0 0
    %1370 = vmatpush1.bf16.msra.mxu0 0
    %1371 = vmatprep.subr.bf16.mxu0 0
    %1372 = vmatpush1.bf16.msra.mxu0 0
    %1373 = vmatprep.subr.bf16.mxu0 0
    %1374 = vmatpush1.bf16.msra.mxu0 0
    %1375 = vmatprep.subr.bf16.mxu0 0
    %1376 = vmatpush1.bf16.msra.mxu0 0
    %1377 = vmatprep.subr.bf16.mxu0 0
    %1378 = vmatpush1.bf16.msra.mxu0 0
    %1379 = vmatprep.subr.bf16.mxu0 0
    %1380 = vmatpush1.bf16.msra.mxu0 0
    %1381 = vmatprep.subr.bf16.mxu0 0
    %1382 = vmatpush1.bf16.msra.mxu0 0
    %1383 = vmatprep.mubr.bf16.mxu0 0
    %1384 = vmatmul.mubr.bf16.gmra.mrb[0].mxu0 %v1308
    %v1385 = vpop.f32.mrb[0].mxu0
    %v1386 = vadd.f32 0.0, %v1385
    %v1387 = vpop.f32.mrb[0].mxu0
    %v1388 = vadd.f32 0.0, %v1387
    %v1389 = vpop.f32.mrb[0].mxu0
    %v1390 = vpop.f32.mrb[0].mxu0
    %1391 = vdwg.mxu0
    %v1392 = vlaneseq
    %v1393 = vshrl.u32 %v1392, 7
    %v1394 = vsub.s32 6, %v1393
    %v1395 = vrot.slane %v178, %v1394
    %v1396 = vlaneseq
    %v1397 = vshrl.u32 %v1396, 7
    %v1398 = vsub.s32 6, %v1397
    %v1399 = vrot.slane %v179, %v1398
    %v1400 = vlaneseq
    %v1401 = vshrl.u32 %v1400, 7
    %v1402 = vsub.s32 6, %v1401
    %v1403 = vrot.slane %v180, %v1402
    %v1404 = vlaneseq
    %v1405 = vshrl.u32 %v1404, 7
    %v1406 = vsub.s32 6, %v1405
    %v1407 = vrot.slane %v181, %v1406
    %v1408 = vmul.f32 %v1345, %v1395
    %v1409 = vmul.f32 %v1347, %v1399
    %v1410 = vmul.f32 %v1386, %v1403
    %v1411 = vmul.f32 %v1388, %v1407
    %v1412 = vadd.f32 %v1226, %v1408
    %v1413 = vadd.f32 %v1227, %v1409
    %v1414 = vadd.f32 %v1228, %v1410
    %v1415 = vadd.f32 %v1229, %v1411
    %1416 = vrot.lane.b32.xlu0 %v153, 112
    %v1417 = vpop.permute.xlu0 %1416
    %1418 = vrot.lane.b32.xlu0 %v154, 112
    %v1419 = vpop.permute.xlu0 %1418
    %1420 = vrot.lane.b32.xlu0 %v155, 112
    %v1421 = vpop.permute.xlu0 %1420
    %1422 = vrot.lane.b32.xlu0 %v156, 112
    %v1423 = vpop.permute.xlu0 %1422
    %1424 = vrot.lane.b32.xlu0 %v157, 112
    %v1425 = vpop.permute.xlu0 %1424
    %1426 = vrot.lane.b32.xlu0 %v158, 112
    %v1427 = vpop.permute.xlu0 %1426
    %1428 = vrot.lane.b32.xlu0 %v159, 112
    %v1429 = vpop.permute.xlu0 %1428
    %1430 = vrot.lane.b32.xlu0 %v160, 112
    %v1431 = vpop.permute.xlu0 %1430
    %1432 = vrot.lane.b32.xlu0 %v161, 112
    %v1433 = vpop.permute.xlu0 %1432
    %1434 = vrot.lane.b32.xlu0 %v162, 112
    %v1435 = vpop.permute.xlu0 %1434
    %1436 = vrot.lane.b32.xlu0 %v163, 112
    %v1437 = vpop.permute.xlu0 %1436
    %1438 = vrot.lane.b32.xlu0 %v164, 112
    %v1439 = vpop.permute.xlu0 %1438
    %1440 = vrot.lane.b32.xlu0 %v165, 112
    %v1441 = vpop.permute.xlu0 %1440
    %1442 = vrot.lane.b32.xlu0 %v166, 112
    %v1443 = vpop.permute.xlu0 %1442
    %1444 = vrot.lane.b32.xlu0 %v167, 112
    %v1445 = vpop.permute.xlu0 %1444
    %1446 = vrot.lane.b32.xlu0 %v168, 112
    %v1447 = vpop.permute.xlu0 %1446
    %vm1448 = vcmask 916480
    %v1449 = vsel %vm1448, %v1417, %v1419
    %v1450 = vsel %vm1448, %v1419, %v1421
    %v1451 = vsel %vm1448, %v1421, %v1423
    %v1452 = vsel %vm1448, %v1425, %v1427
    %v1453 = vsel %vm1448, %v1427, %v1429
    %v1454 = vsel %vm1448, %v1429, %v1431
    %v1455 = vsel %vm1448, %v1433, %v1435
    %v1456 = vsel %vm1448, %v1435, %v1437
    %v1457 = vsel %vm1448, %v1437, %v1439
    %v1458 = vsel %vm1448, %v1441, %v1443
    %v1459 = vsel %vm1448, %v1443, %v1445
    %v1460 = vsel %vm1448, %v1445, %v1447
    %v1481 = vsel %vm1448, %v1423, %v1417
    %v1482 = vsel %vm1448, %v1431, %v1425
    %v1483 = vsel %vm1448, %v1439, %v1433
    %v1484 = vsel %vm1448, %v1447, %v1441
    %v1485 = vpack.c.bf16 %v1452, %v1449
    %v1486 = vpack.c.bf16 %v1453, %v1450
    %v1487 = vpack.c.bf16 %v1454, %v1451
    %v1488 = vpack.c.bf16 %v1482, %v1481
    %v1489 = vpack.c.bf16 %v1458, %v1455
    %v1490 = vpack.c.bf16 %v1459, %v1456
    %v1491 = vpack.c.bf16 %v1460, %v1457
    %v1492 = vpack.c.bf16 %v1484, %v1483
    %v1494 = vsel %vm279, %v176, 0
    %1496 = vmatprep.subr.bf16.mxu0 %v1486
    %1497 = vmatpush1.bf16.msra.mxu0 %v1485
    %1498 = vmatprep.subr.bf16.mxu0 %v1490
    %1499 = vmatpush1.bf16.msra.mxu0 %v1489
    %1500 = vmatprep.subr.bf16.mxu0 0
    %1501 = vmatpush1.bf16.msra.mxu0 0
    %1502 = vmatprep.subr.bf16.mxu0 0
    %1503 = vmatpush1.bf16.msra.mxu0 0
    %1504 = vmatprep.subr.bf16.mxu0 0
    %1505 = vmatpush1.bf16.msra.mxu0 0
    %1506 = vmatprep.subr.bf16.mxu0 0
    %1507 = vmatpush1.bf16.msra.mxu0 0
    %1508 = vmatprep.subr.bf16.mxu0 0
    %1509 = vmatpush1.bf16.msra.mxu0 0
    %1510 = vmatprep.subr.bf16.mxu0 0
    %1511 = vmatpush1.bf16.msra.mxu0 0
    %1512 = vmatprep.subr.bf16.mxu0 0
    %1513 = vmatpush1.bf16.msra.mxu0 0
    %1514 = vmatprep.subr.bf16.mxu0 0
    %1515 = vmatpush1.bf16.msra.mxu0 0
    %1516 = vmatprep.subr.bf16.mxu0 0
    %1517 = vmatpush1.bf16.msra.mxu0 0
    %1518 = vmatprep.subr.bf16.mxu0 0
    %1519 = vmatpush1.bf16.msra.mxu0 0
    %1520 = vmatprep.subr.bf16.mxu0 0
    %1521 = vmatpush1.bf16.msra.mxu0 0
    %1522 = vmatprep.subr.bf16.mxu0 0
    %1523 = vmatpush1.bf16.msra.mxu0 0
    %1524 = vmatprep.subr.bf16.mxu0 0
    %1525 = vmatpush1.bf16.msra.mxu0 0
    %1526 = vmatprep.subr.bf16.mxu0 0
    %1527 = vmatpush1.bf16.msra.mxu0 0
    %1528 = vmatprep.mubr.bf16.mxu0 0
    %1529 = vmatmul.mubr.bf16.gmra.mrb[0].mxu0 %v1494
    %v1530 = vpop.f32.mrb[0].mxu0
    %v1531 = vadd.f32 0.0, %v1530
    %v1532 = vpop.f32.mrb[0].mxu0
    %v1533 = vadd.f32 0.0, %v1532
    %v1534 = vpop.f32.mrb[0].mxu0
    %v1535 = vpop.f32.mrb[0].mxu0
    %1536 = vdwg.mxu0
    %1537 = vmatprep.subr.bf16.mxu0 %v1488
    %1538 = vmatpush1.bf16.msra.mxu0 %v1487
    %1539 = vmatprep.subr.bf16.mxu0 %v1492
    %1540 = vmatpush1.bf16.msra.mxu0 %v1491
    %1541 = vmatprep.subr.bf16.mxu0 0
    %1542 = vmatpush1.bf16.msra.mxu0 0
    %1543 = vmatprep.subr.bf16.mxu0 0
    %1544 = vmatpush1.bf16.msra.mxu0 0
    %1545 = vmatprep.subr.bf16.mxu0 0
    %1546 = vmatpush1.bf16.msra.mxu0 0
    %1547 = vmatprep.subr.bf16.mxu0 0
    %1548 = vmatpush1.bf16.msra.mxu0 0
    %1549 = vmatprep.subr.bf16.mxu0 0
    %1550 = vmatpush1.bf16.msra.mxu0 0
    %1551 = vmatprep.subr.bf16.mxu0 0
    %1552 = vmatpush1.bf16.msra.mxu0 0
    %1553 = vmatprep.subr.bf16.mxu0 0
    %1554 = vmatpush1.bf16.msra.mxu0 0
    %1555 = vmatprep.subr.bf16.mxu0 0
    %1556 = vmatpush1.bf16.msra.mxu0 0
    %1557 = vmatprep.subr.bf16.mxu0 0
    %1558 = vmatpush1.bf16.msra.mxu0 0
    %1559 = vmatprep.subr.bf16.mxu0 0
    %1560 = vmatpush1.bf16.msra.mxu0 0
    %1561 = vmatprep.subr.bf16.mxu0 0
    %1562 = vmatpush1.bf16.msra.mxu0 0
    %1563 = vmatprep.subr.bf16.mxu0 0
    %1564 = vmatpush1.bf16.msra.mxu0 0
    %1565 = vmatprep.subr.bf16.mxu0 0
    %1566 = vmatpush1.bf16.msra.mxu0 0
    %1567 = vmatprep.subr.bf16.mxu0 0
    %1568 = vmatpush1.bf16.msra.mxu0 0
    %1569 = vmatprep.mubr.bf16.mxu0 0
    %1570 = vmatmul.mubr.bf16.gmra.mrb[0].mxu0 %v1494
    %v1571 = vpop.f32.mrb[0].mxu0
    %v1572 = vadd.f32 0.0, %v1571
    %v1573 = vpop.f32.mrb[0].mxu0
    %v1574 = vadd.f32 0.0, %v1573
    %v1575 = vpop.f32.mrb[0].mxu0
    %v1576 = vpop.f32.mrb[0].mxu0
    %1577 = vdwg.mxu0
    %v1578 = vlaneseq
    %v1579 = vshrl.u32 %v1578, 7
    %v1580 = vsub.s32 7, %v1579
    %v1581 = vrot.slane %v178, %v1580
    %v1582 = vlaneseq
    %v1583 = vshrl.u32 %v1582, 7
    %v1584 = vsub.s32 7, %v1583
    %v1585 = vrot.slane %v179, %v1584
    %v1586 = vlaneseq
    %v1587 = vshrl.u32 %v1586, 7
    %v1588 = vsub.s32 7, %v1587
    %v1589 = vrot.slane %v180, %v1588
    %v1590 = vlaneseq
    %v1591 = vshrl.u32 %v1590, 7
    %v1592 = vsub.s32 7, %v1591
    %v1593 = vrot.slane %v181, %v1592
    %v1594 = vmul.f32 %v1531, %v1581
    %v1595 = vmul.f32 %v1533, %v1585
    %v1596 = vmul.f32 %v1572, %v1589
    %v1597 = vmul.f32 %v1574, %v1593
    %v1598 = vadd.f32 %v1412, %v1594
    %v1599 = vadd.f32 %v1413, %v1595
    %v1600 = vadd.f32 %v1414, %v1596
    %v1601 = vadd.f32 %v1415, %v1597
    %1602 = vrot.lane.b32.xlu0 %v153, 111
    %v1603 = vpop.permute.xlu0 %1602
    %1604 = vrot.lane.b32.xlu0 %v154, 111
    %v1605 = vpop.permute.xlu0 %1604
    %1606 = vrot.lane.b32.xlu0 %v155, 111
    %v1607 = vpop.permute.xlu0 %1606
    %1608 = vrot.lane.b32.xlu0 %v156, 111
    %v1609 = vpop.permute.xlu0 %1608
    %1610 = vrot.lane.b32.xlu0 %v157, 111
    %v1611 = vpop.permute.xlu0 %1610
    %1612 = vrot.lane.b32.xlu0 %v158, 111
    %v1613 = vpop.permute.xlu0 %1612
    %1614 = vrot.lane.b32.xlu0 %v159, 111
    %v1615 = vpop.permute.xlu0 %1614
    %1616 = vrot.lane.b32.xlu0 %v160, 111
    %v1617 = vpop.permute.xlu0 %1616
    %1618 = vrot.lane.b32.xlu0 %v161, 111
    %v1619 = vpop.permute.xlu0 %1618
    %1620 = vrot.lane.b32.xlu0 %v162, 111
    %v1621 = vpop.permute.xlu0 %1620
    %1622 = vrot.lane.b32.xlu0 %v163, 111
    %v1623 = vpop.permute.xlu0 %1622
    %1624 = vrot.lane.b32.xlu0 %v164, 111
    %v1625 = vpop.permute.xlu0 %1624
    %1626 = vrot.lane.b32.xlu0 %v165, 111
    %v1627 = vpop.permute.xlu0 %1626
    %1628 = vrot.lane.b32.xlu0 %v166, 111
    %v1629 = vpop.permute.xlu0 %1628
    %1630 = vrot.lane.b32.xlu0 %v167, 111
    %v1631 = vpop.permute.xlu0 %1630
    %1632 = vrot.lane.b32.xlu0 %v168, 111
    %v1633 = vpop.permute.xlu0 %1632
    %vm1634 = vcmask 908288
    %v1635 = vsel %vm1634, %v1603, %v1605
    %v1636 = vsel %vm1634, %v1605, %v1607
    %v1637 = vsel %vm1634, %v1607, %v1609
    %v1638 = vsel %vm1634, %v1611, %v1613
    %v1639 = vsel %vm1634, %v1613, %v1615
    %v1640 = vsel %vm1634, %v1615, %v1617
    %v1641 = vsel %vm1634, %v1619, %v1621
    %v1642 = vsel %vm1634, %v1621, %v1623
    %v1643 = vsel %vm1634, %v1623, %v1625
    %v1644 = vsel %vm1634, %v1627, %v1629
    %v1645 = vsel %vm1634, %v1629, %v1631
    %v1646 = vsel %vm1634, %v1631, %v1633
    %v1667 = vsel %vm1634, %v1609, %v1603
    %v1668 = vsel %vm1634, %v1617, %v1611
    %v1669 = vsel %vm1634, %v1625, %v1619
    %v1670 = vsel %vm1634, %v1633, %v1627
    %v1671 = vpack.c.bf16 %v1638, %v1635
    %v1672 = vpack.c.bf16 %v1639, %v1636
    %v1673 = vpack.c.bf16 %v1640, %v1637
    %v1674 = vpack.c.bf16 %v1668, %v1667
    %v1675 = vpack.c.bf16 %v1644, %v1641
    %v1676 = vpack.c.bf16 %v1645, %v1642
    %v1677 = vpack.c.bf16 %v1646, %v1643
    %v1678 = vpack.c.bf16 %v1670, %v1669
    %v1680 = vsel %vm279, %v177, 0
    %1682 = vmatprep.subr.bf16.mxu0 %v1672
    %1683 = vmatpush1.bf16.msra.mxu0 %v1671
    %1684 = vmatprep.subr.bf16.mxu0 %v1676
    %1685 = vmatpush1.bf16.msra.mxu0 %v1675
    %1686 = vmatprep.subr.bf16.mxu0 0
    %1687 = vmatpush1.bf16.msra.mxu0 0
    %1688 = vmatprep.subr.bf16.mxu0 0
    %1689 = vmatpush1.bf16.msra.mxu0 0
    %1690 = vmatprep.subr.bf16.mxu0 0
    %1691 = vmatpush1.bf16.msra.mxu0 0
    %1692 = vmatprep.subr.bf16.mxu0 0
    %1693 = vmatpush1.bf16.msra.mxu0 0
    %1694 = vmatprep.subr.bf16.mxu0 0
    %1695 = vmatpush1.bf16.msra.mxu0 0
    %1696 = vmatprep.subr.bf16.mxu0 0
    %1697 = vmatpush1.bf16.msra.mxu0 0
    %1698 = vmatprep.subr.bf16.mxu0 0
    %1699 = vmatpush1.bf16.msra.mxu0 0
    %1700 = vmatprep.subr.bf16.mxu0 0
    %1701 = vmatpush1.bf16.msra.mxu0 0
    %1702 = vmatprep.subr.bf16.mxu0 0
    %1703 = vmatpush1.bf16.msra.mxu0 0
    %1704 = vmatprep.subr.bf16.mxu0 0
    %1705 = vmatpush1.bf16.msra.mxu0 0
    %1706 = vmatprep.subr.bf16.mxu0 0
    %1707 = vmatpush1.bf16.msra.mxu0 0
    %1708 = vmatprep.subr.bf16.mxu0 0
    %1709 = vmatpush1.bf16.msra.mxu0 0
    %1710 = vmatprep.subr.bf16.mxu0 0
    %1711 = vmatpush1.bf16.msra.mxu0 0
    %1712 = vmatprep.subr.bf16.mxu0 0
    %1713 = vmatpush1.bf16.msra.mxu0 0
    %1714 = vmatprep.mubr.bf16.mxu0 0
    %1715 = vmatmul.mubr.bf16.gmra.mrb[0].mxu0 %v1680
    %v1716 = vpop.f32.mrb[0].mxu0
    %v1717 = vadd.f32 0.0, %v1716
    %v1718 = vpop.f32.mrb[0].mxu0
    %v1719 = vadd.f32 0.0, %v1718
    %v1720 = vpop.f32.mrb[0].mxu0
    %v1721 = vpop.f32.mrb[0].mxu0
    %1722 = vdwg.mxu0
    %1723 = vmatprep.subr.bf16.mxu0 %v1674
    %1724 = vmatpush1.bf16.msra.mxu0 %v1673
    %1725 = vmatprep.subr.bf16.mxu0 %v1678
    %1726 = vmatpush1.bf16.msra.mxu0 %v1677
    %1727 = vmatprep.subr.bf16.mxu0 0
    %1728 = vmatpush1.bf16.msra.mxu0 0
    %1729 = vmatprep.subr.bf16.mxu0 0
    %1730 = vmatpush1.bf16.msra.mxu0 0
    %1731 = vmatprep.subr.bf16.mxu0 0
    %1732 = vmatpush1.bf16.msra.mxu0 0
    %1733 = vmatprep.subr.bf16.mxu0 0
    %1734 = vmatpush1.bf16.msra.mxu0 0
    %1735 = vmatprep.subr.bf16.mxu0 0
    %1736 = vmatpush1.bf16.msra.mxu0 0
    %1737 = vmatprep.subr.bf16.mxu0 0
    %1738 = vmatpush1.bf16.msra.mxu0 0
    %1739 = vmatprep.subr.bf16.mxu0 0
    %1740 = vmatpush1.bf16.msra.mxu0 0
    %1741 = vmatprep.subr.bf16.mxu0 0
    %1742 = vmatpush1.bf16.msra.mxu0 0
    %1743 = vmatprep.subr.bf16.mxu0 0
    %1744 = vmatpush1.bf16.msra.mxu0 0
    %1745 = vmatprep.subr.bf16.mxu0 0
    %1746 = vmatpush1.bf16.msra.mxu0 0
    %1747 = vmatprep.subr.bf16.mxu0 0
    %1748 = vmatpush1.bf16.msra.mxu0 0
    %1749 = vmatprep.subr.bf16.mxu0 0
    %1750 = vmatpush1.bf16.msra.mxu0 0
    %1751 = vmatprep.subr.bf16.mxu0 0
    %1752 = vmatpush1.bf16.msra.mxu0 0
    %1753 = vmatprep.subr.bf16.mxu0 0
    %1754 = vmatpush1.bf16.msra.mxu0 0
    %1755 = vmatprep.mubr.bf16.mxu0 0
    %1756 = vmatmul.mubr.bf16.gmra.mrb[0].mxu0 %v1680
    %v1757 = vpop.f32.mrb[0].mxu0
    %v1758 = vadd.f32 0.0, %v1757
    %v1759 = vpop.f32.mrb[0].mxu0
    %v1760 = vadd.f32 0.0, %v1759
    %v1761 = vpop.f32.mrb[0].mxu0
    %v1762 = vpop.f32.mrb[0].mxu0
    %1763 = vdwg.mxu0
    %v1764 = vlaneseq
    %v1765 = vshrl.u32 %v1764, 7
    %v1766 = vsub.s32 0, %v1765
    %v1767 = vrot.slane %v182, %v1766
    %v1768 = vlaneseq
    %v1769 = vshrl.u32 %v1768, 7
    %v1770 = vsub.s32 0, %v1769
    %v1771 = vrot.slane %v183, %v1770
    %v1772 = vlaneseq
    %v1773 = vshrl.u32 %v1772, 7
    %v1774 = vsub.s32 0, %v1773
    %v1775 = vrot.slane %v184, %v1774
    %v1776 = vlaneseq
    %v1777 = vshrl.u32 %v1776, 7
    %v1778 = vsub.s32 0, %v1777
    %v1779 = vrot.slane %v185, %v1778
    %v1780 = vmul.f32 %v1717, %v1767
    %v1781 = vmul.f32 %v1719, %v1771
    %v1782 = vmul.f32 %v1758, %v1775
    %v1783 = vmul.f32 %v1760, %v1779
    %v1784 = vadd.f32 %v1598, %v1780
    %v1785 = vadd.f32 %v1599, %v1781
    %v1786 = vadd.f32 %v1600, %v1782
    %v1787 = vadd.f32 %v1601, %v1783
    %v1788 = vld [vmem:[%s51] sm:$0xff]
    %v1789 = vld [vmem:[%s51 + $0x8] sm:$0xff]
    %v1790 = vld [vmem:[%s51 + $0x10] sm:$0xff]
    %v1791 = vld [vmem:[%s51 + $0x18] sm:$0xff]
    %v1792 = vld [vmem:[%s51 + $0x20] sm:$0xff]
    %v1793 = vld [vmem:[%s51 + $0x28] sm:$0xff]
    %v1794 = vld [vmem:[%s51 + $0x30] sm:$0xff]
    %v1795 = vld [vmem:[%s51 + $0x38] sm:$0xff]
    %v1796 = vld [vmem:[%s51 + $0x40] sm:$0xff]
    %v1797 = vld [vmem:[%s51 + $0x48] sm:$0xff]
    %v1798 = vld [vmem:[%s51 + $0x50] sm:$0xff]
    %v1799 = vld [vmem:[%s51 + $0x58] sm:$0xff]
    %v1800 = vld [vmem:[%s51 + $0x60] sm:$0xff]
    %v1801 = vld [vmem:[%s51 + $0x68] sm:$0xff]
    %v1802 = vld [vmem:[%s51 + $0x70] sm:$0xff]
    %v1803 = vld [vmem:[%s51 + $0x78] sm:$0xff]
    %v1804 = vld [vmem:[%s51 + $0x80] sm:$0xff]
    %v1805 = vld [vmem:[%s51 + $0x88] sm:$0xff]
    %v1806 = vld [vmem:[%s51 + $0x90] sm:$0xff]
    %v1807 = vld [vmem:[%s51 + $0x98] sm:$0xff]
    %v1808 = vld [vmem:[%s51 + $0xa0] sm:$0xff]
    %v1809 = vld [vmem:[%s51 + $0xa8] sm:$0xff]
    %v1810 = vld [vmem:[%s51 + $0xb0] sm:$0xff]
    %v1811 = vld [vmem:[%s51 + $0xb8] sm:$0xff]
    %v1812 = vld [vmem:[%s51 + $0xc0] sm:$0xff]
    %v1813 = vld [vmem:[%s51 + $0xc8] sm:$0xff]
    %v1814 = vld [vmem:[%s51 + $0xd0] sm:$0xff]
    %v1815 = vld [vmem:[%s51 + $0xd8] sm:$0xff]
    %v1816 = vld [vmem:[%s51 + $0xe0] sm:$0xff]
    %v1817 = vld [vmem:[%s51 + $0xe8] sm:$0xff]
    %v1818 = vld [vmem:[%s51 + $0xf0] sm:$0xff]
    %v1819 = vld [vmem:[%s51 + $0xf8] sm:$0xff]
    %v1820 = vld [vmem:[%s51 + $0x100] sm:$0xff]
    %v1821 = vld [vmem:[%s51 + $0x108] sm:$0xff]
    %v1822 = vld [vmem:[%s51 + $0x110] sm:$0xff]
    %v1823 = vld [vmem:[%s51 + $0x118] sm:$0xff]
    %v1824 = vld [vmem:[%s51 + $0x120] sm:$0xff]
    %v1825 = vld [vmem:[%s51 + $0x128] sm:$0xff]
    %v1826 = vld [vmem:[%s51 + $0x130] sm:$0xff]
    %v1827 = vld [vmem:[%s51 + $0x138] sm:$0xff]
    %v1828 = vld [vmem:[%s51 + $0x140] sm:$0xff]
    %v1829 = vld [vmem:[%s51 + $0x148] sm:$0xff]
    %v1830 = vld [vmem:[%s51 + $0x150] sm:$0xff]
    %v1831 = vld [vmem:[%s51 + $0x158] sm:$0xff]
    %v1832 = vld [vmem:[%s51 + $0x160] sm:$0xff]
    %v1833 = vld [vmem:[%s51 + $0x168] sm:$0xff]
    %v1834 = vld [vmem:[%s51 + $0x170] sm:$0xff]
    %v1835 = vld [vmem:[%s51 + $0x178] sm:$0xff]
    %v1836 = vld [vmem:[%s51 + $0x180] sm:$0xff]
    %v1837 = vld [vmem:[%s51 + $0x188] sm:$0xff]
    %v1838 = vld [vmem:[%s51 + $0x190] sm:$0xff]
    %v1839 = vld [vmem:[%s51 + $0x198] sm:$0xff]
    %v1840 = vld [vmem:[%s51 + $0x1a0] sm:$0xff]
    %v1841 = vld [vmem:[%s51 + $0x1a8] sm:$0xff]
    %v1842 = vld [vmem:[%s51 + $0x1b0] sm:$0xff]
    %v1843 = vld [vmem:[%s51 + $0x1b8] sm:$0xff]
    %v1844 = vld [vmem:[%s51 + $0x1c0] sm:$0xff]
    %v1845 = vld [vmem:[%s51 + $0x1c8] sm:$0xff]
    %v1846 = vld [vmem:[%s51 + $0x1d0] sm:$0xff]
    %v1847 = vld [vmem:[%s51 + $0x1d8] sm:$0xff]
    %v1848 = vld [vmem:[%s51 + $0x1e0] sm:$0xff]
    %v1849 = vld [vmem:[%s51 + $0x1e8] sm:$0xff]
    %v1850 = vld [vmem:[%s51 + $0x1f0] sm:$0xff]
    %v1851 = vld [vmem:[%s51 + $0x1f8] sm:$0xff]
    %v1852 = vld [vmem:[%s51 + $0x200] sm:$0xff]
    %v1853 = vld [vmem:[%s51 + $0x208] sm:$0xff]
    %v1854 = vld [vmem:[%s51 + $0x210] sm:$0xff]
    %v1855 = vld [vmem:[%s51 + $0x218] sm:$0xff]
    %v1856 = vld [vmem:[%s51 + $0x220] sm:$0xff]
    %v1857 = vld [vmem:[%s51 + $0x228] sm:$0xff]
    %v1858 = vld [vmem:[%s51 + $0x230] sm:$0xff]
    %v1859 = vld [vmem:[%s51 + $0x238] sm:$0xff]
    %v1860 = vld [vmem:[%s51 + $0x240] sm:$0xff]
    %v1861 = vld [vmem:[%s51 + $0x248] sm:$0xff]
    %v1862 = vld [vmem:[%s51 + $0x250] sm:$0xff]
    %v1863 = vld [vmem:[%s51 + $0x258] sm:$0xff]
    %v1864 = vld [vmem:[%s51 + $0x260] sm:$0xff]
    %v1865 = vld [vmem:[%s51 + $0x268] sm:$0xff]
    %v1866 = vld [vmem:[%s51 + $0x270] sm:$0xff]
    %v1867 = vld [vmem:[%s51 + $0x278] sm:$0xff]
    %v1868 = vld [vmem:[%s51 + $0x280] sm:$0xff]
    %v1869 = vld [vmem:[%s51 + $0x288] sm:$0xff]
    %v1870 = vld [vmem:[%s51 + $0x290] sm:$0xff]
    %v1871 = vld [vmem:[%s51 + $0x298] sm:$0xff]
    %v1872 = vld [vmem:[%s51 + $0x2a0] sm:$0xff]
    %v1873 = vld [vmem:[%s51 + $0x2a8] sm:$0xff]
    %v1874 = vld [vmem:[%s51 + $0x2b0] sm:$0xff]
    %v1875 = vld [vmem:[%s51 + $0x2b8] sm:$0xff]
    %v1876 = vld [vmem:[%s51 + $0x2c0] sm:$0xff]
    %v1877 = vld [vmem:[%s51 + $0x2c8] sm:$0xff]
    %v1878 = vld [vmem:[%s51 + $0x2d0] sm:$0xff]
    %v1879 = vld [vmem:[%s51 + $0x2d8] sm:$0xff]
    %v1880 = vld [vmem:[%s51 + $0x2e0] sm:$0xff]
    %v1881 = vld [vmem:[%s51 + $0x2e8] sm:$0xff]
    %v1882 = vld [vmem:[%s51 + $0x2f0] sm:$0xff]
    %v1883 = vld [vmem:[%s51 + $0x2f8] sm:$0xff]
    %v1884 = vld [vmem:[%s51 + $0x300] sm:$0xff]
    %v1885 = vld [vmem:[%s51 + $0x308] sm:$0xff]
    %v1886 = vld [vmem:[%s51 + $0x310] sm:$0xff]
    %v1887 = vld [vmem:[%s51 + $0x318] sm:$0xff]
    %v1888 = vld [vmem:[%s51 + $0x320] sm:$0xff]
    %v1889 = vld [vmem:[%s51 + $0x328] sm:$0xff]
    %v1890 = vld [vmem:[%s51 + $0x330] sm:$0xff]
    %v1891 = vld [vmem:[%s51 + $0x338] sm:$0xff]
    %v1892 = vld [vmem:[%s51 + $0x340] sm:$0xff]
    %v1893 = vld [vmem:[%s51 + $0x348] sm:$0xff]
    %v1894 = vld [vmem:[%s51 + $0x350] sm:$0xff]
    %v1895 = vld [vmem:[%s51 + $0x358] sm:$0xff]
    %v1896 = vld [vmem:[%s51 + $0x360] sm:$0xff]
    %v1897 = vld [vmem:[%s51 + $0x368] sm:$0xff]
    %v1898 = vld [vmem:[%s51 + $0x370] sm:$0xff]
    %v1899 = vld [vmem:[%s51 + $0x378] sm:$0xff]
    %v1900 = vld [vmem:[%s51 + $0x380] sm:$0xff]
    %v1901 = vld [vmem:[%s51 + $0x388] sm:$0xff]
    %v1902 = vld [vmem:[%s51 + $0x390] sm:$0xff]
    %v1903 = vld [vmem:[%s51 + $0x398] sm:$0xff]
    %v1904 = vld [vmem:[%s51 + $0x3a0] sm:$0xff]
    %v1905 = vld [vmem:[%s51 + $0x3a8] sm:$0xff]
    %v1906 = vld [vmem:[%s51 + $0x3b0] sm:$0xff]
    %v1907 = vld [vmem:[%s51 + $0x3b8] sm:$0xff]
    %v1908 = vld [vmem:[%s51 + $0x3c0] sm:$0xff]
    %v1909 = vld [vmem:[%s51 + $0x3c8] sm:$0xff]
    %v1910 = vld [vmem:[%s51 + $0x3d0] sm:$0xff]
    %v1911 = vld [vmem:[%s51 + $0x3d8] sm:$0xff]
    %v1912 = vld [vmem:[%s51 + $0x3e0] sm:$0xff]
    %v1913 = vld [vmem:[%s51 + $0x3e8] sm:$0xff]
    %v1914 = vld [vmem:[%s51 + $0x3f0] sm:$0xff]
    %v1915 = vld [vmem:[%s51 + $0x3f8] sm:$0xff]
    %v1916 = vld [vmem:[%s5] sm:$0xff]
    %1918 = vset.pattern.permute.xlu0 0
    %1919 = vperm.xlu0 %1918, %v1916
    %v1920 = vpop.permute.xlu0 %1919
    %1922 = vmatprep.subr.mxu0 %v1789
    %1923 = vmatpush1.msra.mxu0 %v1788
    %1924 = vmatprep.subr.mxu0 %v1791
    %1925 = vmatpush1.msra.mxu0 %v1790
    %1926 = vmatprep.subr.mxu0 %v1793
    %1927 = vmatpush1.msra.mxu0 %v1792
    %1928 = vmatprep.subr.mxu0 %v1795
    %1929 = vmatpush1.msra.mxu0 %v1794
    %1930 = vmatprep.subr.mxu0 %v1797
    %1931 = vmatpush1.msra.mxu0 %v1796
    %1932 = vmatprep.subr.mxu0 %v1799
    %1933 = vmatpush1.msra.mxu0 %v1798
    %1934 = vmatprep.subr.mxu0 %v1801
    %1935 = vmatpush1.msra.mxu0 %v1800
    %1936 = vmatprep.subr.mxu0 %v1803
    %1937 = vmatpush1.msra.mxu0 %v1802
    %1938 = vmatprep.subr.mxu0 %v1805
    %1939 = vmatpush1.msra.mxu0 %v1804
    %1940 = vmatprep.subr.mxu0 %v1807
    %1941 = vmatpush1.msra.mxu0 %v1806
    %1942 = vmatprep.subr.mxu0 %v1809
    %1943 = vmatpush1.msra.mxu0 %v1808
    %1944 = vmatprep.subr.mxu0 %v1811
    %1945 = vmatpush1.msra.mxu0 %v1810
    %1946 = vmatprep.subr.mxu0 %v1813
    %1947 = vmatpush1.msra.mxu0 %v1812
    %1948 = vmatprep.subr.mxu0 %v1815
    %1949 = vmatpush1.msra.mxu0 %v1814
    %1950 = vmatprep.subr.mxu0 %v1817
    %1951 = vmatpush1.msra.mxu0 %v1816
    %1952 = vmatprep.subr.mxu0 %v1819
    %1953 = vmatpush1.msra.mxu0 %v1818
    %1954 = vmatprep.subr.mxu0 %v1821
    %1955 = vmatpush1.msra.mxu0 %v1820
    %1956 = vmatprep.subr.mxu0 %v1823
    %1957 = vmatpush1.msra.mxu0 %v1822
    %1958 = vmatprep.subr.mxu0 %v1825
    %1959 = vmatpush1.msra.mxu0 %v1824
    %1960 = vmatprep.subr.mxu0 %v1827
    %1961 = vmatpush1.msra.mxu0 %v1826
    %1962 = vmatprep.subr.mxu0 %v1829
    %1963 = vmatpush1.msra.mxu0 %v1828
    %1964 = vmatprep.subr.mxu0 %v1831
    %1965 = vmatpush1.msra.mxu0 %v1830
    %1966 = vmatprep.subr.mxu0 %v1833
    %1967 = vmatpush1.msra.mxu0 %v1832
    %1968 = vmatprep.subr.mxu0 %v1835
    %1969 = vmatpush1.msra.mxu0 %v1834
    %1970 = vmatprep.subr.mxu0 %v1837
    %1971 = vmatpush1.msra.mxu0 %v1836
    %1972 = vmatprep.subr.mxu0 %v1839
    %1973 = vmatpush1.msra.mxu0 %v1838
    %1974 = vmatprep.subr.mxu0 %v1841
    %1975 = vmatpush1.msra.mxu0 %v1840
    %1976 = vmatprep.subr.mxu0 %v1843
    %1977 = vmatpush1.msra.mxu0 %v1842
    %1978 = vmatprep.subr.mxu0 %v1845
    %1979 = vmatpush1.msra.mxu0 %v1844
    %1980 = vmatprep.subr.mxu0 %v1847
    %1981 = vmatpush1.msra.mxu0 %v1846
    %1982 = vmatprep.subr.mxu0 %v1849
    %1983 = vmatpush1.msra.mxu0 %v1848
    %1984 = vmatprep.subr.mxu0 %v1851
    %1985 = vmatpush1.msra.mxu0 %v1850
    %1986 = vmatprep.mubr.f32.mxu0 %v1785
    %1987 = vmatmul.mubr.f32.gmra.mrb[0].mxu0 %v1784
    %v1988 = vpop.f32.mrb[0].mxu0
    %v1989 = vadd.f32 %v1920, %v1988
    %v1990 = vpop.f32.mrb[0].mxu0
    %v1991 = vadd.f32 %v1920, %v1990
    %1992 = vdwg.mxu0
    %1993 = vmatprep.subr.mxu0 %v1853
    %1994 = vmatpush1.msra.mxu0 %v1852
    %1995 = vmatprep.subr.mxu0 %v1855
    %1996 = vmatpush1.msra.mxu0 %v1854
    %1997 = vmatprep.subr.mxu0 %v1857
    %1998 = vmatpush1.msra.mxu0 %v1856
    %1999 = vmatprep.subr.mxu0 %v1859
    %2000 = vmatpush1.msra.mxu0 %v1858
    %2001 = vmatprep.subr.mxu0 %v1861
    %2002 = vmatpush1.msra.mxu0 %v1860
    %2003 = vmatprep.subr.mxu0 %v1863
    %2004 = vmatpush1.msra.mxu0 %v1862
    %2005 = vmatprep.subr.mxu0 %v1865
    %2006 = vmatpush1.msra.mxu0 %v1864
    %2007 = vmatprep.subr.mxu0 %v1867
    %2008 = vmatpush1.msra.mxu0 %v1866
    %2009 = vmatprep.subr.mxu0 %v1869
    %2010 = vmatpush1.msra.mxu0 %v1868
    %2011 = vmatprep.subr.mxu0 %v1871
    %2012 = vmatpush1.msra.mxu0 %v1870
    %2013 = vmatprep.subr.mxu0 %v1873
    %2014 = vmatpush1.msra.mxu0 %v1872
    %2015 = vmatprep.subr.mxu0 %v1875
    %2016 = vmatpush1.msra.mxu0 %v1874
    %2017 = vmatprep.subr.mxu0 %v1877
    %2018 = vmatpush1.msra.mxu0 %v1876
    %2019 = vmatprep.subr.mxu0 %v1879
    %2020 = vmatpush1.msra.mxu0 %v1878
    %2021 = vmatprep.subr.mxu0 %v1881
    %2022 = vmatpush1.msra.mxu0 %v1880
    %2023 = vmatprep.subr.mxu0 %v1883
    %2024 = vmatpush1.msra.mxu0 %v1882
    %2025 = vmatprep.subr.mxu0 %v1885
    %2026 = vmatpush1.msra.mxu0 %v1884
    %2027 = vmatprep.subr.mxu0 %v1887
    %2028 = vmatpush1.msra.mxu0 %v1886
    %2029 = vmatprep.subr.mxu0 %v1889
    %2030 = vmatpush1.msra.mxu0 %v1888
    %2031 = vmatprep.subr.mxu0 %v1891
    %2032 = vmatpush1.msra.mxu0 %v1890
    %2033 = vmatprep.subr.mxu0 %v1893
    %2034 = vmatpush1.msra.mxu0 %v1892
    %2035 = vmatprep.subr.mxu0 %v1895
    %2036 = vmatpush1.msra.mxu0 %v1894
    %2037 = vmatprep.subr.mxu0 %v1897
    %2038 = vmatpush1.msra.mxu0 %v1896
    %2039 = vmatprep.subr.mxu0 %v1899
    %2040 = vmatpush1.msra.mxu0 %v1898
    %2041 = vmatprep.subr.mxu0 %v1901
    %2042 = vmatpush1.msra.mxu0 %v1900
    %2043 = vmatprep.subr.mxu0 %v1903
    %2044 = vmatpush1.msra.mxu0 %v1902
    %2045 = vmatprep.subr.mxu0 %v1905
    %2046 = vmatpush1.msra.mxu0 %v1904
    %2047 = vmatprep.subr.mxu0 %v1907
    %2048 = vmatpush1.msra.mxu0 %v1906
    %2049 = vmatprep.subr.mxu0 %v1909
    %2050 = vmatpush1.msra.mxu0 %v1908
    %2051 = vmatprep.subr.mxu0 %v1911
    %2052 = vmatpush1.msra.mxu0 %v1910
    %2053 = vmatprep.subr.mxu0 %v1913
    %2054 = vmatpush1.msra.mxu0 %v1912
    %2055 = vmatprep.subr.mxu0 %v1915
    %2056 = vmatpush1.msra.mxu0 %v1914
    %2057 = vmatprep.mubr.f32.mxu0 %v1787
    %2058 = vmatmul.mubr.f32.gmra.mrb[0].mxu0 %v1786
    %v2059 = vpop.f32.mrb[0].mxu0
    %v2060 = vadd.f32 %v1989, %v2059
    %v2061 = vpop.f32.mrb[0].mxu0
    %v2062 = vadd.f32 %v1991, %v2061
    %2063 = vdwg.mxu0
    %v2064 = vmax.f32 %v2060, 0.0
    %v2065 = vmax.f32 %v2062, 0.0
    %v2066 = vld [vmem:[%s9] sm:$0xf]
    %v2067 = vld [vmem:[%s9 + $0x4] sm:$0xf]
    %v2068 = vld [vmem:[%s9 + $0x8] sm:$0xf]
    %v2069 = vld [vmem:[%s9 + $0xc] sm:$0xf]
    %v2070 = vld [vmem:[%s9 + $0x10] sm:$0xf]
    %v2071 = vld [vmem:[%s9 + $0x14] sm:$0xf]
    %v2072 = vld [vmem:[%s9 + $0x18] sm:$0xf]
    %v2073 = vld [vmem:[%s9 + $0x1c] sm:$0xf]
    %v2074 = vld [vmem:[%s9 + $0x20] sm:$0xf]
    %v2075 = vld [vmem:[%s13] sm:$0xff]
    %v2076 = vld [vmem:[%s13 + $0x8] sm:$0xff]
    %v2077 = vld [vmem:[%s13 + $0x10] sm:$0x1]
    %v2078 = vld [vmem:[%s13 + $0x18] sm:$0x1]
    %2080 = vrot.lane.b32.xlu0 %v2065, 9
    %v2081 = vpop.permute.xlu0 %2080
    %2084 = vrot.lane.b32.xlu0 %v2064, 9
    %v2085 = vpop.permute.xlu0 %2084
    %vm2086 = vcmask 72704
    %v2087 = vsel %vm2086, %v2085, %v2081
    %v2090 = vsel %vm2086, %v2081, %v2085
    %v2091 = vpack.c.bf16 %v2090, %v2090
    %v2092 = vpack.c.bf16 %v2087, %v2087
    %vm2093 = vcmask 64512
    %v2095 = vsel %vm2093, %v2066, 0
    %vm2097 = vcmask 1043456
    %v2099 = vsel %vm2097, %v2091, 0
    %v2102 = vsel %vm2097, %v2092, 0
    %2104 = vmatprep.subr.bf16.mxu0 %v2102
    %2105 = vmatpush1.bf16.msra.mxu0 %v2099
    %2106 = vmatprep.subr.bf16.mxu0 0
    %2107 = vmatpush1.bf16.msra.mxu0 0
    %2108 = vmatprep.subr.bf16.mxu0 0
    %2109 = vmatpush1.bf16.msra.mxu0 0
    %2110 = vmatprep.subr.bf16.mxu0 0
    %2111 = vmatpush1.bf16.msra.mxu0 0
    %2112 = vmatprep.subr.bf16.mxu0 0
    %2113 = vmatpush1.bf16.msra.mxu0 0
    %2114 = vmatprep.subr.bf16.mxu0 0
    %2115 = vmatpush1.bf16.msra.mxu0 0
    %2116 = vmatprep.subr.bf16.mxu0 0
    %2117 = vmatpush1.bf16.msra.mxu0 0
    %2118 = vmatprep.subr.bf16.mxu0 0
    %2119 = vmatpush1.bf16.msra.mxu0 0
    %2120 = vmatprep.subr.bf16.mxu0 0
    %2121 = vmatpush1.bf16.msra.mxu0 0
    %2122 = vmatprep.subr.bf16.mxu0 0
    %2123 = vmatpush1.bf16.msra.mxu0 0
    %2124 = vmatprep.subr.bf16.mxu0 0
    %2125 = vmatpush1.bf16.msra.mxu0 0
    %2126 = vmatprep.subr.bf16.mxu0 0
    %2127 = vmatpush1.bf16.msra.mxu0 0
    %2128 = vmatprep.subr.bf16.mxu0 0
    %2129 = vmatpush1.bf16.msra.mxu0 0
    %2130 = vmatprep.subr.bf16.mxu0 0
    %2131 = vmatpush1.bf16.msra.mxu0 0
    %2132 = vmatprep.subr.bf16.mxu0 0
    %2133 = vmatpush1.bf16.msra.mxu0 0
    %2134 = vmatprep.subr.bf16.mxu0 0
    %2135 = vmatpush1.bf16.msra.mxu0 0
    %2136 = vmatprep.mubr.bf16.mxu0 0
    %2137 = vmatmul.mubr.bf16.gmra.mrb[0].mxu0 %v2095
    %v2138 = vpop.f32.mrb[0].mxu0
    %v2139 = vadd.f32 0.0, %v2138
    %v2140 = vpop.f32.mrb[0].mxu0
    %v2141 = vadd.f32 0.0, %v2140
    %v2142 = vpop.f32.mrb[0].mxu0
    %v2143 = vpop.f32.mrb[0].mxu0
    %2144 = vdwg.mxu0
    %v2145 = vlaneseq
    %v2146 = vshrl.u32 %v2145, 7
    %v2147 = vsub.s32 0, %v2146
    %v2148 = vrot.slane %v2075, %v2147
    %v2149 = vlaneseq
    %v2150 = vshrl.u32 %v2149, 7
    %v2151 = vsub.s32 0, %v2150
    %v2152 = vrot.slane %v2076, %v2151
    %v2153 = vmul.f32 %v2139, %v2148
    %v2154 = vmul.f32 %v2141, %v2152
    %v2155 = vadd.f32 %v2153, 0.0
    %v2156 = vadd.f32 %v2154, 0.0
    %2157 = vrot.lane.b32.xlu0 %v2065, 8
    %v2158 = vpop.permute.xlu0 %2157
    %2160 = vrot.lane.b32.xlu0 %v2064, 8
    %v2161 = vpop.permute.xlu0 %2160
    %v2162 = vsel %vm2093, %v2161, %v2158
    %v2165 = vsel %vm2093, %v2158, %v2161
    %v2166 = vpack.c.bf16 %v2165, %v2165
    %v2167 = vpack.c.bf16 %v2162, %v2162
    %v2169 = vsel %vm2093, %v2067, 0
    %v2172 = vsel %vm2097, %v2166, 0
    %v2175 = vsel %vm2097, %v2167, 0
    %2177 = vmatprep.subr.bf16.mxu0 %v2175
    %2178 = vmatpush1.bf16.msra.mxu0 %v2172
    %2179 = vmatprep.subr.bf16.mxu0 0
    %2180 = vmatpush1.bf16.msra.mxu0 0
    %2181 = vmatprep.subr.bf16.mxu0 0
    %2182 = vmatpush1.bf16.msra.mxu0 0
    %2183 = vmatprep.subr.bf16.mxu0 0
    %2184 = vmatpush1.bf16.msra.mxu0 0
    %2185 = vmatprep.subr.bf16.mxu0 0
    %2186 = vmatpush1.bf16.msra.mxu0 0
    %2187 = vmatprep.subr.bf16.mxu0 0
    %2188 = vmatpush1.bf16.msra.mxu0 0
    %2189 = vmatprep.subr.bf16.mxu0 0
    %2190 = vmatpush1.bf16.msra.mxu0 0
    %2191 = vmatprep.subr.bf16.mxu0 0
    %2192 = vmatpush1.bf16.msra.mxu0 0
    %2193 = vmatprep.subr.bf16.mxu0 0
    %2194 = vmatpush1.bf16.msra.mxu0 0
    %2195 = vmatprep.subr.bf16.mxu0 0
    %2196 = vmatpush1.bf16.msra.mxu0 0
    %2197 = vmatprep.subr.bf16.mxu0 0
    %2198 = vmatpush1.bf16.msra.mxu0 0
    %2199 = vmatprep.subr.bf16.mxu0 0
    %2200 = vmatpush1.bf16.msra.mxu0 0
    %2201 = vmatprep.subr.bf16.mxu0 0
    %2202 = vmatpush1.bf16.msra.mxu0 0
    %2203 = vmatprep.subr.bf16.mxu0 0
    %2204 = vmatpush1.bf16.msra.mxu0 0
    %2205 = vmatprep.subr.bf16.mxu0 0
    %2206 = vmatpush1.bf16.msra.mxu0 0
    %2207 = vmatprep.subr.bf16.mxu0 0
    %2208 = vmatpush1.bf16.msra.mxu0 0
    %2209 = vmatprep.mubr.bf16.mxu0 0
    %2210 = vmatmul.mubr.bf16.gmra.mrb[0].mxu0 %v2169
    %v2211 = vpop.f32.mrb[0].mxu0
    %v2212 = vadd.f32 0.0, %v2211
    %v2213 = vpop.f32.mrb[0].mxu0
    %v2214 = vadd.f32 0.0, %v2213
    %v2215 = vpop.f32.mrb[0].mxu0
    %v2216 = vpop.f32.mrb[0].mxu0
    %2217 = vdwg.mxu0
    %v2218 = vlaneseq
    %v2219 = vshrl.u32 %v2218, 7
    %v2220 = vsub.s32 1, %v2219
    %v2221 = vrot.slane %v2075, %v2220
    %v2222 = vlaneseq
    %v2223 = vshrl.u32 %v2222, 7
    %v2224 = vsub.s32 1, %v2223
    %v2225 = vrot.slane %v2076, %v2224
    %v2226 = vmul.f32 %v2212, %v2221
    %v2227 = vmul.f32 %v2214, %v2225
    %v2228 = vadd.f32 %v2155, %v2226
    %v2229 = vadd.f32 %v2156, %v2227
    %2230 = vrot.lane.b32.xlu0 %v2065, 7
    %v2231 = vpop.permute.xlu0 %2230
    %2233 = vrot.lane.b32.xlu0 %v2064, 7
    %v2234 = vpop.permute.xlu0 %2233
    %vm2235 = vcmask 56320
    %v2236 = vsel %vm2235, %v2234, %v2231
    %v2239 = vsel %vm2235, %v2231, %v2234
    %v2240 = vpack.c.bf16 %v2239, %v2239
    %v2241 = vpack.c.bf16 %v2236, %v2236
    %v2243 = vsel %vm2093, %v2068, 0
    %v2246 = vsel %vm2097, %v2240, 0
    %v2249 = vsel %vm2097, %v2241, 0
    %2251 = vmatprep.subr.bf16.mxu0 %v2249
    %2252 = vmatpush1.bf16.msra.mxu0 %v2246
    %2253 = vmatprep.subr.bf16.mxu0 0
    %2254 = vmatpush1.bf16.msra.mxu0 0
    %2255 = vmatprep.subr.bf16.mxu0 0
    %2256 = vmatpush1.bf16.msra.mxu0 0
    %2257 = vmatprep.subr.bf16.mxu0 0
    %2258 = vmatpush1.bf16.msra.mxu0 0
    %2259 = vmatprep.subr.bf16.mxu0 0
    %2260 = vmatpush1.bf16.msra.mxu0 0
    %2261 = vmatprep.subr.bf16.mxu0 0
    %2262 = vmatpush1.bf16.msra.mxu0 0
    %2263 = vmatprep.subr.bf16.mxu0 0
    %2264 = vmatpush1.bf16.msra.mxu0 0
    %2265 = vmatprep.subr.bf16.mxu0 0
    %2266 = vmatpush1.bf16.msra.mxu0 0
    %2267 = vmatprep.subr.bf16.mxu0 0
    %2268 = vmatpush1.bf16.msra.mxu0 0
    %2269 = vmatprep.subr.bf16.mxu0 0
    %2270 = vmatpush1.bf16.msra.mxu0 0
    %2271 = vmatprep.subr.bf16.mxu0 0
    %2272 = vmatpush1.bf16.msra.mxu0 0
    %2273 = vmatprep.subr.bf16.mxu0 0
    %2274 = vmatpush1.bf16.msra.mxu0 0
    %2275 = vmatprep.subr.bf16.mxu0 0
    %2276 = vmatpush1.bf16.msra.mxu0 0
    %2277 = vmatprep.subr.bf16.mxu0 0
    %2278 = vmatpush1.bf16.msra.mxu0 0
    %2279 = vmatprep.subr.bf16.mxu0 0
    %2280 = vmatpush1.bf16.msra.mxu0 0
    %2281 = vmatprep.subr.bf16.mxu0 0
    %2282 = vmatpush1.bf16.msra.mxu0 0
    %2283 = vmatprep.mubr.bf16.mxu0 0
    %2284 = vmatmul.mubr.bf16.gmra.mrb[0].mxu0 %v2243
    %v2285 = vpop.f32.mrb[0].mxu0
    %v2286 = vadd.f32 0.0, %v2285
    %v2287 = vpop.f32.mrb[0].mxu0
    %v2288 = vadd.f32 0.0, %v2287
    %v2289 = vpop.f32.mrb[0].mxu0
    %v2290 = vpop.f32.mrb[0].mxu0
    %2291 = vdwg.mxu0
    %v2292 = vlaneseq
    %v2293 = vshrl.u32 %v2292, 7
    %v2294 = vsub.s32 2, %v2293
    %v2295 = vrot.slane %v2075, %v2294
    %v2296 = vlaneseq
    %v2297 = vshrl.u32 %v2296, 7
    %v2298 = vsub.s32 2, %v2297
    %v2299 = vrot.slane %v2076, %v2298
    %v2300 = vmul.f32 %v2286, %v2295
    %v2301 = vmul.f32 %v2288, %v2299
    %v2302 = vadd.f32 %v2228, %v2300
    %v2303 = vadd.f32 %v2229, %v2301
    %2304 = vrot.lane.b32.xlu0 %v2065, 1
    %v2305 = vpop.permute.xlu0 %2304
    %2307 = vrot.lane.b32.xlu0 %v2064, 1
    %v2308 = vpop.permute.xlu0 %2307
    %v2309 = vsel %vm797, %v2308, %v2305
    %v2312 = vsel %vm797, %v2305, %v2308
    %v2313 = vpack.c.bf16 %v2312, %v2312
    %v2314 = vpack.c.bf16 %v2309, %v2309
    %v2316 = vsel %vm2093, %v2069, 0
    %v2319 = vsel %vm2097, %v2313, 0
    %v2322 = vsel %vm2097, %v2314, 0
    %2324 = vmatprep.subr.bf16.mxu0 %v2322
    %2325 = vmatpush1.bf16.msra.mxu0 %v2319
    %2326 = vmatprep.subr.bf16.mxu0 0
    %2327 = vmatpush1.bf16.msra.mxu0 0
    %2328 = vmatprep.subr.bf16.mxu0 0
    %2329 = vmatpush1.bf16.msra.mxu0 0
    %2330 = vmatprep.subr.bf16.mxu0 0
    %2331 = vmatpush1.bf16.msra.mxu0 0
    %2332 = vmatprep.subr.bf16.mxu0 0
    %2333 = vmatpush1.bf16.msra.mxu0 0
    %2334 = vmatprep.subr.bf16.mxu0 0
    %2335 = vmatpush1.bf16.msra.mxu0 0
    %2336 = vmatprep.subr.bf16.mxu0 0
    %2337 = vmatpush1.bf16.msra.mxu0 0
    %2338 = vmatprep.subr.bf16.mxu0 0
    %2339 = vmatpush1.bf16.msra.mxu0 0
    %2340 = vmatprep.subr.bf16.mxu0 0
    %2341 = vmatpush1.bf16.msra.mxu0 0
    %2342 = vmatprep.subr.bf16.mxu0 0
    %2343 = vmatpush1.bf16.msra.mxu0 0
    %2344 = vmatprep.subr.bf16.mxu0 0
    %2345 = vmatpush1.bf16.msra.mxu0 0
    %2346 = vmatprep.subr.bf16.mxu0 0
    %2347 = vmatpush1.bf16.msra.mxu0 0
    %2348 = vmatprep.subr.bf16.mxu0 0
    %2349 = vmatpush1.bf16.msra.mxu0 0
    %2350 = vmatprep.subr.bf16.mxu0 0
    %2351 = vmatpush1.bf16.msra.mxu0 0
    %2352 = vmatprep.subr.bf16.mxu0 0
    %2353 = vmatpush1.bf16.msra.mxu0 0
    %2354 = vmatprep.subr.bf16.mxu0 0
    %2355 = vmatpush1.bf16.msra.mxu0 0
    %2356 = vmatprep.mubr.bf16.mxu0 0
    %2357 = vmatmul.mubr.bf16.gmra.mrb[0].mxu0 %v2316
    %v2358 = vpop.f32.mrb[0].mxu0
    %v2359 = vadd.f32 0.0, %v2358
    %v2360 = vpop.f32.mrb[0].mxu0
    %v2361 = vadd.f32 0.0, %v2360
    %v2362 = vpop.f32.mrb[0].mxu0
    %v2363 = vpop.f32.mrb[0].mxu0
    %2364 = vdwg.mxu0
    %v2365 = vlaneseq
    %v2366 = vshrl.u32 %v2365, 7
    %v2367 = vsub.s32 3, %v2366
    %v2368 = vrot.slane %v2075, %v2367
    %v2369 = vlaneseq
    %v2370 = vshrl.u32 %v2369, 7
    %v2371 = vsub.s32 3, %v2370
    %v2372 = vrot.slane %v2076, %v2371
    %v2373 = vmul.f32 %v2359, %v2368
    %v2374 = vmul.f32 %v2361, %v2372
    %v2375 = vadd.f32 %v2302, %v2373
    %v2376 = vadd.f32 %v2303, %v2374
    %v2377 = vpack.c.bf16 %v2064, %v2064
    %v2378 = vpack.c.bf16 %v2065, %v2065
    %v2380 = vsel %vm2093, %v2070, 0
    %v2383 = vsel %vm2097, %v2377, 0
    %v2386 = vsel %vm2097, %v2378, 0
    %2388 = vmatprep.subr.bf16.mxu0 %v2386
    %2389 = vmatpush1.bf16.msra.mxu0 %v2383
    %2390 = vmatprep.subr.bf16.mxu0 0
    %2391 = vmatpush1.bf16.msra.mxu0 0
    %2392 = vmatprep.subr.bf16.mxu0 0
    %2393 = vmatpush1.bf16.msra.mxu0 0
    %2394 = vmatprep.subr.bf16.mxu0 0
    %2395 = vmatpush1.bf16.msra.mxu0 0
    %2396 = vmatprep.subr.bf16.mxu0 0
    %2397 = vmatpush1.bf16.msra.mxu0 0
    %2398 = vmatprep.subr.bf16.mxu0 0
    %2399 = vmatpush1.bf16.msra.mxu0 0
    %2400 = vmatprep.subr.bf16.mxu0 0
    %2401 = vmatpush1.bf16.msra.mxu0 0
    %2402 = vmatprep.subr.bf16.mxu0 0
    %2403 = vmatpush1.bf16.msra.mxu0 0
    %2404 = vmatprep.subr.bf16.mxu0 0
    %2405 = vmatpush1.bf16.msra.mxu0 0
    %2406 = vmatprep.subr.bf16.mxu0 0
    %2407 = vmatpush1.bf16.msra.mxu0 0
    %2408 = vmatprep.subr.bf16.mxu0 0
    %2409 = vmatpush1.bf16.msra.mxu0 0
    %2410 = vmatprep.subr.bf16.mxu0 0
    %2411 = vmatpush1.bf16.msra.mxu0 0
    %2412 = vmatprep.subr.bf16.mxu0 0
    %2413 = vmatpush1.bf16.msra.mxu0 0
    %2414 = vmatprep.subr.bf16.mxu0 0
    %2415 = vmatpush1.bf16.msra.mxu0 0
    %2416 = vmatprep.subr.bf16.mxu0 0
    %2417 = vmatpush1.bf16.msra.mxu0 0
    %2418 = vmatprep.subr.bf16.mxu0 0
    %2419 = vmatpush1.bf16.msra.mxu0 0
    %2420 = vmatprep.mubr.bf16.mxu0 0
    %2421 = vmatmul.mubr.bf16.gmra.mrb[0].mxu0 %v2380
    %v2422 = vpop.f32.mrb[0].mxu0
    %v2423 = vadd.f32 0.0, %v2422
    %v2424 = vpop.f32.mrb[0].mxu0
    %v2425 = vadd.f32 0.0, %v2424
    %v2426 = vpop.f32.mrb[0].mxu0
    %v2427 = vpop.f32.mrb[0].mxu0
    %2428 = vdwg.mxu0
    %v2429 = vadd.f32 %v2375, %v2423
    %v2430 = vadd.f32 %v2376, %v2425
    %2431 = vrot.lane.b32.xlu0 %v2064, 127
    %v2432 = vpop.permute.xlu0 %2431
    %2433 = vrot.lane.b32.xlu0 %v2065, 127
    %v2434 = vpop.permute.xlu0 %2433
    %v2435 = vsel %vm1076, %v2432, %v2434
    %v2439 = vsel %vm1076, %v2434, %v2432
    %v2440 = vpack.c.bf16 %v2435, %v2435
    %v2441 = vpack.c.bf16 %v2439, %v2439
    %v2443 = vsel %vm2093, %v2071, 0
    %v2446 = vsel %vm2097, %v2440, 0
    %v2449 = vsel %vm2097, %v2441, 0
    %2451 = vmatprep.subr.bf16.mxu0 %v2449
    %2452 = vmatpush1.bf16.msra.mxu0 %v2446
    %2453 = vmatprep.subr.bf16.mxu0 0
    %2454 = vmatpush1.bf16.msra.mxu0 0
    %2455 = vmatprep.subr.bf16.mxu0 0
    %2456 = vmatpush1.bf16.msra.mxu0 0
    %2457 = vmatprep.subr.bf16.mxu0 0
    %2458 = vmatpush1.bf16.msra.mxu0 0
    %2459 = vmatprep.subr.bf16.mxu0 0
    %2460 = vmatpush1.bf16.msra.mxu0 0
    %2461 = vmatprep.subr.bf16.mxu0 0
    %2462 = vmatpush1.bf16.msra.mxu0 0
    %2463 = vmatprep.subr.bf16.mxu0 0
    %2464 = vmatpush1.bf16.msra.mxu0 0
    %2465 = vmatprep.subr.bf16.mxu0 0
    %2466 = vmatpush1.bf16.msra.mxu0 0
    %2467 = vmatprep.subr.bf16.mxu0 0
    %2468 = vmatpush1.bf16.msra.mxu0 0
    %2469 = vmatprep.subr.bf16.mxu0 0
    %2470 = vmatpush1.bf16.msra.mxu0 0
    %2471 = vmatprep.subr.bf16.mxu0 0
    %2472 = vmatpush1.bf16.msra.mxu0 0
    %2473 = vmatprep.subr.bf16.mxu0 0
    %2474 = vmatpush1.bf16.msra.mxu0 0
    %2475 = vmatprep.subr.bf16.mxu0 0
    %2476 = vmatpush1.bf16.msra.mxu0 0
    %2477 = vmatprep.subr.bf16.mxu0 0
    %2478 = vmatpush1.bf16.msra.mxu0 0
    %2479 = vmatprep.subr.bf16.mxu0 0
    %2480 = vmatpush1.bf16.msra.mxu0 0
    %2481 = vmatprep.subr.bf16.mxu0 0
    %2482 = vmatpush1.bf16.msra.mxu0 0
    %2483 = vmatprep.mubr.bf16.mxu0 0
    %2484 = vmatmul.mubr.bf16.gmra.mrb[0].mxu0 %v2443
    %v2485 = vpop.f32.mrb[0].mxu0
    %v2486 = vadd.f32 0.0, %v2485
    %v2487 = vpop.f32.mrb[0].mxu0
    %v2488 = vadd.f32 0.0, %v2487
    %v2489 = vpop.f32.mrb[0].mxu0
    %v2490 = vpop.f32.mrb[0].mxu0
    %2491 = vdwg.mxu0
    %v2492 = vlaneseq
    %v2493 = vshrl.u32 %v2492, 7
    %v2494 = vsub.s32 5, %v2493
    %v2495 = vrot.slane %v2075, %v2494
    %v2496 = vlaneseq
    %v2497 = vshrl.u32 %v2496, 7
    %v2498 = vsub.s32 5, %v2497
    %v2499 = vrot.slane %v2076, %v2498
    %v2500 = vmul.f32 %v2486, %v2495
    %v2501 = vmul.f32 %v2488, %v2499
    %v2502 = vadd.f32 %v2429, %v2500
    %v2503 = vadd.f32 %v2430, %v2501
    %2504 = vrot.lane.b32.xlu0 %v2064, 121
    %v2505 = vpop.permute.xlu0 %2504
    %2506 = vrot.lane.b32.xlu0 %v2065, 121
    %v2507 = vpop.permute.xlu0 %2506
    %vm2508 = vcmask 990208
    %v2509 = vsel %vm2508, %v2505, %v2507
    %v2513 = vsel %vm2508, %v2507, %v2505
    %v2514 = vpack.c.bf16 %v2509, %v2509
    %v2515 = vpack.c.bf16 %v2513, %v2513
    %v2517 = vsel %vm2093, %v2072, 0
    %v2520 = vsel %vm2097, %v2514, 0
    %v2523 = vsel %vm2097, %v2515, 0
    %2525 = vmatprep.subr.bf16.mxu0 %v2523
    %2526 = vmatpush1.bf16.msra.mxu0 %v2520
    %2527 = vmatprep.subr.bf16.mxu0 0
    %2528 = vmatpush1.bf16.msra.mxu0 0
    %2529 = vmatprep.subr.bf16.mxu0 0
    %2530 = vmatpush1.bf16.msra.mxu0 0
    %2531 = vmatprep.subr.bf16.mxu0 0
    %2532 = vmatpush1.bf16.msra.mxu0 0
    %2533 = vmatprep.subr.bf16.mxu0 0
    %2534 = vmatpush1.bf16.msra.mxu0 0
    %2535 = vmatprep.subr.bf16.mxu0 0
    %2536 = vmatpush1.bf16.msra.mxu0 0
    %2537 = vmatprep.subr.bf16.mxu0 0
    %2538 = vmatpush1.bf16.msra.mxu0 0
    %2539 = vmatprep.subr.bf16.mxu0 0
    %2540 = vmatpush1.bf16.msra.mxu0 0
    %2541 = vmatprep.subr.bf16.mxu0 0
    %2542 = vmatpush1.bf16.msra.mxu0 0
    %2543 = vmatprep.subr.bf16.mxu0 0
    %2544 = vmatpush1.bf16.msra.mxu0 0
    %2545 = vmatprep.subr.bf16.mxu0 0
    %2546 = vmatpush1.bf16.msra.mxu0 0
    %2547 = vmatprep.subr.bf16.mxu0 0
    %2548 = vmatpush1.bf16.msra.mxu0 0
    %2549 = vmatprep.subr.bf16.mxu0 0
    %2550 = vmatpush1.bf16.msra.mxu0 0
    %2551 = vmatprep.subr.bf16.mxu0 0
    %2552 = vmatpush1.bf16.msra.mxu0 0
    %2553 = vmatprep.subr.bf16.mxu0 0
    %2554 = vmatpush1.bf16.msra.mxu0 0
    %2555 = vmatprep.subr.bf16.mxu0 0
    %2556 = vmatpush1.bf16.msra.mxu0 0
    %2557 = vmatprep.mubr.bf16.mxu0 0
    %2558 = vmatmul.mubr.bf16.gmra.mrb[0].mxu0 %v2517
    %v2559 = vpop.f32.mrb[0].mxu0
    %v2560 = vadd.f32 0.0, %v2559
    %v2561 = vpop.f32.mrb[0].mxu0
    %v2562 = vadd.f32 0.0, %v2561
    %v2563 = vpop.f32.mrb[0].mxu0
    %v2564 = vpop.f32.mrb[0].mxu0
    %2565 = vdwg.mxu0
    %v2566 = vlaneseq
    %v2567 = vshrl.u32 %v2566, 7
    %v2568 = vsub.s32 6, %v2567
    %v2569 = vrot.slane %v2075, %v2568
    %v2570 = vlaneseq
    %v2571 = vshrl.u32 %v2570, 7
    %v2572 = vsub.s32 6, %v2571
    %v2573 = vrot.slane %v2076, %v2572
    %v2574 = vmul.f32 %v2560, %v2569
    %v2575 = vmul.f32 %v2562, %v2573
    %v2576 = vadd.f32 %v2502, %v2574
    %v2577 = vadd.f32 %v2503, %v2575
    %2578 = vrot.lane.b32.xlu0 %v2064, 120
    %v2579 = vpop.permute.xlu0 %2578
    %2580 = vrot.lane.b32.xlu0 %v2065, 120
    %v2581 = vpop.permute.xlu0 %2580
    %vm2582 = vcmask 982016
    %v2583 = vsel %vm2582, %v2579, %v2581
    %v2587 = vsel %vm2582, %v2581, %v2579
    %v2588 = vpack.c.bf16 %v2583, %v2583
    %v2589 = vpack.c.bf16 %v2587, %v2587
    %v2591 = vsel %vm2093, %v2073, 0
    %v2594 = vsel %vm2097, %v2588, 0
    %v2597 = vsel %vm2097, %v2589, 0
    %2599 = vmatprep.subr.bf16.mxu0 %v2597
    %2600 = vmatpush1.bf16.msra.mxu0 %v2594
    %2601 = vmatprep.subr.bf16.mxu0 0
    %2602 = vmatpush1.bf16.msra.mxu0 0
    %2603 = vmatprep.subr.bf16.mxu0 0
    %2604 = vmatpush1.bf16.msra.mxu0 0
    %2605 = vmatprep.subr.bf16.mxu0 0
    %2606 = vmatpush1.bf16.msra.mxu0 0
    %2607 = vmatprep.subr.bf16.mxu0 0
    %2608 = vmatpush1.bf16.msra.mxu0 0
    %2609 = vmatprep.subr.bf16.mxu0 0
    %2610 = vmatpush1.bf16.msra.mxu0 0
    %2611 = vmatprep.subr.bf16.mxu0 0
    %2612 = vmatpush1.bf16.msra.mxu0 0
    %2613 = vmatprep.subr.bf16.mxu0 0
    %2614 = vmatpush1.bf16.msra.mxu0 0
    %2615 = vmatprep.subr.bf16.mxu0 0
    %2616 = vmatpush1.bf16.msra.mxu0 0
    %2617 = vmatprep.subr.bf16.mxu0 0
    %2618 = vmatpush1.bf16.msra.mxu0 0
    %2619 = vmatprep.subr.bf16.mxu0 0
    %2620 = vmatpush1.bf16.msra.mxu0 0
    %2621 = vmatprep.subr.bf16.mxu0 0
    %2622 = vmatpush1.bf16.msra.mxu0 0
    %2623 = vmatprep.subr.bf16.mxu0 0
    %2624 = vmatpush1.bf16.msra.mxu0 0
    %2625 = vmatprep.subr.bf16.mxu0 0
    %2626 = vmatpush1.bf16.msra.mxu0 0
    %2627 = vmatprep.subr.bf16.mxu0 0
    %2628 = vmatpush1.bf16.msra.mxu0 0
    %2629 = vmatprep.subr.bf16.mxu0 0
    %2630 = vmatpush1.bf16.msra.mxu0 0
    %2631 = vmatprep.mubr.bf16.mxu0 0
    %2632 = vmatmul.mubr.bf16.gmra.mrb[0].mxu0 %v2591
    %v2633 = vpop.f32.mrb[0].mxu0
    %v2634 = vadd.f32 0.0, %v2633
    %v2635 = vpop.f32.mrb[0].mxu0
    %v2636 = vadd.f32 0.0, %v2635
    %v2637 = vpop.f32.mrb[0].mxu0
    %v2638 = vpop.f32.mrb[0].mxu0
    %2639 = vdwg.mxu0
    %v2640 = vlaneseq
    %v2641 = vshrl.u32 %v2640, 7
    %v2642 = vsub.s32 7, %v2641
    %v2643 = vrot.slane %v2075, %v2642
    %v2644 = vlaneseq
    %v2645 = vshrl.u32 %v2644, 7
    %v2646 = vsub.s32 7, %v2645
    %v2647 = vrot.slane %v2076, %v2646
    %v2648 = vmul.f32 %v2634, %v2643
    %v2649 = vmul.f32 %v2636, %v2647
    %v2650 = vadd.f32 %v2576, %v2648
    %v2651 = vadd.f32 %v2577, %v2649
    %2652 = vrot.lane.b32.xlu0 %v2064, 119
    %v2653 = vpop.permute.xlu0 %2652
    %2654 = vrot.lane.b32.xlu0 %v2065, 119
    %v2655 = vpop.permute.xlu0 %2654
    %vm2656 = vcmask 973824
    %v2657 = vsel %vm2656, %v2653, %v2655
    %v2661 = vsel %vm2656, %v2655, %v2653
    %v2662 = vpack.c.bf16 %v2657, %v2657
    %v2663 = vpack.c.bf16 %v2661, %v2661
    %v2665 = vsel %vm2093, %v2074, 0
    %v2668 = vsel %vm2097, %v2662, 0
    %v2671 = vsel %vm2097, %v2663, 0
    %2673 = vmatprep.subr.bf16.mxu0 %v2671
    %2674 = vmatpush1.bf16.msra.mxu0 %v2668
    %2675 = vmatprep.subr.bf16.mxu0 0
    %2676 = vmatpush1.bf16.msra.mxu0 0
    %2677 = vmatprep.subr.bf16.mxu0 0
    %2678 = vmatpush1.bf16.msra.mxu0 0
    %2679 = vmatprep.subr.bf16.mxu0 0
    %2680 = vmatpush1.bf16.msra.mxu0 0
    %2681 = vmatprep.subr.bf16.mxu0 0
    %2682 = vmatpush1.bf16.msra.mxu0 0
    %2683 = vmatprep.subr.bf16.mxu0 0
    %2684 = vmatpush1.bf16.msra.mxu0 0
    %2685 = vmatprep.subr.bf16.mxu0 0
    %2686 = vmatpush1.bf16.msra.mxu0 0
    %2687 = vmatprep.subr.bf16.mxu0 0
    %2688 = vmatpush1.bf16.msra.mxu0 0
    %2689 = vmatprep.subr.bf16.mxu0 0
    %2690 = vmatpush1.bf16.msra.mxu0 0
    %2691 = vmatprep.subr.bf16.mxu0 0
    %2692 = vmatpush1.bf16.msra.mxu0 0
    %2693 = vmatprep.subr.bf16.mxu0 0
    %2694 = vmatpush1.bf16.msra.mxu0 0
    %2695 = vmatprep.subr.bf16.mxu0 0
    %2696 = vmatpush1.bf16.msra.mxu0 0
    %2697 = vmatprep.subr.bf16.mxu0 0
    %2698 = vmatpush1.bf16.msra.mxu0 0
    %2699 = vmatprep.subr.bf16.mxu0 0
    %2700 = vmatpush1.bf16.msra.mxu0 0
    %2701 = vmatprep.subr.bf16.mxu0 0
    %2702 = vmatpush1.bf16.msra.mxu0 0
    %2703 = vmatprep.subr.bf16.mxu0 0
    %2704 = vmatpush1.bf16.msra.mxu0 0
    %2705 = vmatprep.mubr.bf16.mxu0 0
    %2706 = vmatmul.mubr.bf16.gmra.mrb[0].mxu0 %v2665
    %v2707 = vpop.f32.mrb[0].mxu0
    %v2708 = vadd.f32 0.0, %v2707
    %v2709 = vpop.f32.mrb[0].mxu0
    %v2710 = vadd.f32 0.0, %v2709
    %v2711 = vpop.f32.mrb[0].mxu0
    %v2712 = vpop.f32.mrb[0].mxu0
    %2713 = vdwg.mxu0
    %v2714 = vlaneseq
    %v2715 = vshrl.u32 %v2714, 7
    %v2716 = vsub.s32 0, %v2715
    %v2717 = vrot.slane %v2077, %v2716
    %v2718 = vlaneseq
    %v2719 = vshrl.u32 %v2718, 7
    %v2720 = vsub.s32 0, %v2719
    %v2721 = vrot.slane %v2078, %v2720
    %v2722 = vmul.f32 %v2708, %v2717
    %v2723 = vmul.f32 %v2710, %v2721
    %v2724 = vadd.f32 %v2650, %v2722
    %v2725 = vadd.f32 %v2651, %v2723
    %v2726 = vld [vmem:[%s53] sm:$0xff]
    %v2727 = vld [vmem:[%s53 + $0x8] sm:$0xff]
    %v2728 = vld [vmem:[%s53 + $0x10] sm:$0xff]
    %v2729 = vld [vmem:[%s53 + $0x18] sm:$0xff]
    %v2730 = vld [vmem:[%s53 + $0x20] sm:$0xff]
    %v2731 = vld [vmem:[%s53 + $0x28] sm:$0xff]
    %v2732 = vld [vmem:[%s53 + $0x30] sm:$0xff]
    %v2733 = vld [vmem:[%s53 + $0x38] sm:$0xff]
    %v2734 = vld [vmem:[%s53 + $0x40] sm:$0xff]
    %v2735 = vld [vmem:[%s53 + $0x48] sm:$0xff]
    %v2736 = vld [vmem:[%s53 + $0x50] sm:$0xff]
    %v2737 = vld [vmem:[%s53 + $0x58] sm:$0xff]
    %v2738 = vld [vmem:[%s53 + $0x60] sm:$0xff]
    %v2739 = vld [vmem:[%s53 + $0x68] sm:$0xff]
    %v2740 = vld [vmem:[%s53 + $0x70] sm:$0xff]
    %v2741 = vld [vmem:[%s53 + $0x78] sm:$0xff]
    %v2742 = vld [vmem:[%s53 + $0x80] sm:$0xff]
    %v2743 = vld [vmem:[%s53 + $0x88] sm:$0xff]
    %v2744 = vld [vmem:[%s53 + $0x90] sm:$0xff]
    %v2745 = vld [vmem:[%s53 + $0x98] sm:$0xff]
    %v2746 = vld [vmem:[%s53 + $0xa0] sm:$0xff]
    %v2747 = vld [vmem:[%s53 + $0xa8] sm:$0xff]
    %v2748 = vld [vmem:[%s53 + $0xb0] sm:$0xff]
    %v2749 = vld [vmem:[%s53 + $0xb8] sm:$0xff]
    %v2750 = vld [vmem:[%s53 + $0xc0] sm:$0xff]
    %v2751 = vld [vmem:[%s53 + $0xc8] sm:$0xff]
    %v2752 = vld [vmem:[%s53 + $0xd0] sm:$0xff]
    %v2753 = vld [vmem:[%s53 + $0xd8] sm:$0xff]
    %v2754 = vld [vmem:[%s53 + $0xe0] sm:$0xff]
    %v2755 = vld [vmem:[%s53 + $0xe8] sm:$0xff]
    %v2756 = vld [vmem:[%s53 + $0xf0] sm:$0xff]
    %v2757 = vld [vmem:[%s53 + $0xf8] sm:$0xff]
    %v2758 = vld [vmem:[%s11] sm:$0xff]
    %2760 = vset.pattern.permute.xlu0 0
    %2761 = vperm.xlu0 %2760, %v2758
    %v2762 = vpop.permute.xlu0 %2761
    %2764 = vmatprep.subr.mxu0 0.0
    %2765 = vmatpush1.msra.mxu0 %v2726
    %2766 = vmatprep.subr.mxu0 0.0
    %2767 = vmatpush1.msra.mxu0 %v2727
    %2768 = vmatprep.subr.mxu0 0.0
    %2769 = vmatpush1.msra.mxu0 %v2728
    %2770 = vmatprep.subr.mxu0 0.0
    %2771 = vmatpush1.msra.mxu0 %v2729
    %2772 = vmatprep.subr.mxu0 0.0
    %2773 = vmatpush1.msra.mxu0 %v2730
    %2774 = vmatprep.subr.mxu0 0.0
    %2775 = vmatpush1.msra.mxu0 %v2731
    %2776 = vmatprep.subr.mxu0 0.0
    %2777 = vmatpush1.msra.mxu0 %v2732
    %2778 = vmatprep.subr.mxu0 0.0
    %2779 = vmatpush1.msra.mxu0 %v2733
    %2780 = vmatprep.subr.mxu0 0.0
    %2781 = vmatpush1.msra.mxu0 %v2734
    %2782 = vmatprep.subr.mxu0 0.0
    %2783 = vmatpush1.msra.mxu0 %v2735
    %2784 = vmatprep.subr.mxu0 0.0
    %2785 = vmatpush1.msra.mxu0 %v2736
    %2786 = vmatprep.subr.mxu0 0.0
    %2787 = vmatpush1.msra.mxu0 %v2737
    %2788 = vmatprep.subr.mxu0 0.0
    %2789 = vmatpush1.msra.mxu0 %v2738
    %2790 = vmatprep.subr.mxu0 0.0
    %2791 = vmatpush1.msra.mxu0 %v2739
    %2792 = vmatprep.subr.mxu0 0.0
    %2793 = vmatpush1.msra.mxu0 %v2740
    %2794 = vmatprep.subr.mxu0 0.0
    %2795 = vmatpush1.msra.mxu0 %v2741
    %2796 = vmatprep.subr.mxu0 0.0
    %2797 = vmatpush1.msra.mxu0 %v2742
    %2798 = vmatprep.subr.mxu0 0.0
    %2799 = vmatpush1.msra.mxu0 %v2743
    %2800 = vmatprep.subr.mxu0 0.0
    %2801 = vmatpush1.msra.mxu0 %v2744
    %2802 = vmatprep.subr.mxu0 0.0
    %2803 = vmatpush1.msra.mxu0 %v2745
    %2804 = vmatprep.subr.mxu0 0.0
    %2805 = vmatpush1.msra.mxu0 %v2746
    %2806 = vmatprep.subr.mxu0 0.0
    %2807 = vmatpush1.msra.mxu0 %v2747
    %2808 = vmatprep.subr.mxu0 0.0
    %2809 = vmatpush1.msra.mxu0 %v2748
    %2810 = vmatprep.subr.mxu0 0.0
    %2811 = vmatpush1.msra.mxu0 %v2749
    %2812 = vmatprep.subr.mxu0 0.0
    %2813 = vmatpush1.msra.mxu0 %v2750
    %2814 = vmatprep.subr.mxu0 0.0
    %2815 = vmatpush1.msra.mxu0 %v2751
    %2816 = vmatprep.subr.mxu0 0.0
    %2817 = vmatpush1.msra.mxu0 %v2752
    %2818 = vmatprep.subr.mxu0 0.0
    %2819 = vmatpush1.msra.mxu0 %v2753
    %2820 = vmatprep.subr.mxu0 0.0
    %2821 = vmatpush1.msra.mxu0 %v2754
    %2822 = vmatprep.subr.mxu0 0.0
    %2823 = vmatpush1.msra.mxu0 %v2755
    %2824 = vmatprep.subr.mxu0 0.0
    %2825 = vmatpush1.msra.mxu0 %v2756
    %2826 = vmatprep.subr.mxu0 0.0
    %2827 = vmatpush1.msra.mxu0 %v2757
    %2828 = vmatprep.mubr.f32.mxu0 %v2725
    %2829 = vmatmul.mubr.f32.gmra.mrb[0].mxu0 %v2724
    %v2830 = vpop.f32.mrb[0].mxu0
    %v2831 = vadd.f32 %v2762, %v2830
    %v2832 = vpop.f32.mrb[0].mxu0
    %2833 = vdwg.mxu0
    %v2834 = vmax.f32 %v2831, 0.0
    %v2835 = vld [vmem:[%s15] sm:$0xf]
    %v2836 = vld [vmem:[%s15 + $0x4] sm:$0xf]
    %v2837 = vld [vmem:[%s15 + $0x8] sm:$0xf]
    %v2838 = vld [vmem:[%s15 + $0xc] sm:$0xf]
    %v2839 = vld [vmem:[%s15 + $0x10] sm:$0xf]
    %v2840 = vld [vmem:[%s15 + $0x14] sm:$0xf]
    %v2841 = vld [vmem:[%s15 + $0x18] sm:$0xf]
    %v2842 = vld [vmem:[%s15 + $0x1c] sm:$0xf]
    %v2843 = vld [vmem:[%s15 + $0x20] sm:$0xf]
    %v2844 = vld [vmem:[%s19] sm:$0xff]
    %v2845 = vld [vmem:[%s19 + $0x8] sm:$0x1]
    %2847 = vrot.lane.b32.xlu0 %v2834, 69
    %v2848 = vpop.permute.xlu0 %2847
    %2850 = vrot.lane.b32.xlu0 %v2834, 5
    %v2851 = vpop.permute.xlu0 %2850
    %vm2853 = vcmask 39936
    %v2854 = vsel %vm2853, %v2848, %v2851
    %v2855 = vpack.c.bf16 %v2854, %v2854
    %v2857 = vsel %vm2093, %v2835, 0
    %v2860 = vsel %vm2097, %v2855, 0
    %2862 = vmatprep.subr.bf16.mxu0 0
    %2863 = vmatpush1.bf16.msra.mxu0 %v2860
    %2864 = vmatprep.subr.bf16.mxu0 0
    %2865 = vmatpush1.bf16.msra.mxu0 0
    %2866 = vmatprep.subr.bf16.mxu0 0
    %2867 = vmatpush1.bf16.msra.mxu0 0
    %2868 = vmatprep.subr.bf16.mxu0 0
    %2869 = vmatpush1.bf16.msra.mxu0 0
    %2870 = vmatprep.subr.bf16.mxu0 0
    %2871 = vmatpush1.bf16.msra.mxu0 0
    %2872 = vmatprep.subr.bf16.mxu0 0
    %2873 = vmatpush1.bf16.msra.mxu0 0
    %2874 = vmatprep.subr.bf16.mxu0 0
    %2875 = vmatpush1.bf16.msra.mxu0 0
    %2876 = vmatprep.subr.bf16.mxu0 0
    %2877 = vmatpush1.bf16.msra.mxu0 0
    %2878 = vmatprep.subr.bf16.mxu0 0
    %2879 = vmatpush1.bf16.msra.mxu0 0
    %2880 = vmatprep.subr.bf16.mxu0 0
    %2881 = vmatpush1.bf16.msra.mxu0 0
    %2882 = vmatprep.subr.bf16.mxu0 0
    %2883 = vmatpush1.bf16.msra.mxu0 0
    %2884 = vmatprep.subr.bf16.mxu0 0
    %2885 = vmatpush1.bf16.msra.mxu0 0
    %2886 = vmatprep.subr.bf16.mxu0 0
    %2887 = vmatpush1.bf16.msra.mxu0 0
    %2888 = vmatprep.subr.bf16.mxu0 0
    %2889 = vmatpush1.bf16.msra.mxu0 0
    %2890 = vmatprep.subr.bf16.mxu0 0
    %2891 = vmatpush1.bf16.msra.mxu0 0
    %2892 = vmatprep.subr.bf16.mxu0 0
    %2893 = vmatpush1.bf16.msra.mxu0 0
    %2894 = vmatprep.mubr.bf16.mxu0 0
    %2895 = vmatmul.mubr.bf16.gmra.mrb[0].mxu0 %v2857
    %v2896 = vpop.f32.mrb[0].mxu0
    %v2897 = vadd.f32 0.0, %v2896
    %v2898 = vpop.f32.mrb[0].mxu0
    %v2899 = vpop.f32.mrb[0].mxu0
    %v2900 = vpop.f32.mrb[0].mxu0
    %2901 = vdwg.mxu0
    %v2902 = vlaneseq
    %v2903 = vshrl.u32 %v2902, 7
    %v2904 = vsub.s32 0, %v2903
    %v2905 = vrot.slane %v2844, %v2904
    %v2906 = vmul.f32 %v2897, %v2905
    %v2907 = vadd.f32 %v2906, 0.0
    %2908 = vrot.lane.b32.xlu0 %v2834, 68
    %v2909 = vpop.permute.xlu0 %2908
    %2911 = vrot.lane.b32.xlu0 %v2834, 4
    %v2912 = vpop.permute.xlu0 %2911
    %vm2914 = vcmask 31744
    %v2915 = vsel %vm2914, %v2909, %v2912
    %v2916 = vpack.c.bf16 %v2915, %v2915
    %v2918 = vsel %vm2093, %v2836, 0
    %v2921 = vsel %vm2097, %v2916, 0
    %2923 = vmatprep.subr.bf16.mxu0 0
    %2924 = vmatpush1.bf16.msra.mxu0 %v2921
    %2925 = vmatprep.subr.bf16.mxu0 0
    %2926 = vmatpush1.bf16.msra.mxu0 0
    %2927 = vmatprep.subr.bf16.mxu0 0
    %2928 = vmatpush1.bf16.msra.mxu0 0
    %2929 = vmatprep.subr.bf16.mxu0 0
    %2930 = vmatpush1.bf16.msra.mxu0 0
    %2931 = vmatprep.subr.bf16.mxu0 0
    %2932 = vmatpush1.bf16.msra.mxu0 0
    %2933 = vmatprep.subr.bf16.mxu0 0
    %2934 = vmatpush1.bf16.msra.mxu0 0
    %2935 = vmatprep.subr.bf16.mxu0 0
    %2936 = vmatpush1.bf16.msra.mxu0 0
    %2937 = vmatprep.subr.bf16.mxu0 0
    %2938 = vmatpush1.bf16.msra.mxu0 0
    %2939 = vmatprep.subr.bf16.mxu0 0
    %2940 = vmatpush1.bf16.msra.mxu0 0
    %2941 = vmatprep.subr.bf16.mxu0 0
    %2942 = vmatpush1.bf16.msra.mxu0 0
    %2943 = vmatprep.subr.bf16.mxu0 0
    %2944 = vmatpush1.bf16.msra.mxu0 0
    %2945 = vmatprep.subr.bf16.mxu0 0
    %2946 = vmatpush1.bf16.msra.mxu0 0
    %2947 = vmatprep.subr.bf16.mxu0 0
    %2948 = vmatpush1.bf16.msra.mxu0 0
    %2949 = vmatprep.subr.bf16.mxu0 0
    %2950 = vmatpush1.bf16.msra.mxu0 0
    %2951 = vmatprep.subr.bf16.mxu0 0
    %2952 = vmatpush1.bf16.msra.mxu0 0
    %2953 = vmatprep.subr.bf16.mxu0 0
    %2954 = vmatpush1.bf16.msra.mxu0 0
    %2955 = vmatprep.mubr.bf16.mxu0 0
    %2956 = vmatmul.mubr.bf16.gmra.mrb[0].mxu0 %v2918
    %v2957 = vpop.f32.mrb[0].mxu0
    %v2958 = vadd.f32 0.0, %v2957
    %v2959 = vpop.f32.mrb[0].mxu0
    %v2960 = vpop.f32.mrb[0].mxu0
    %v2961 = vpop.f32.mrb[0].mxu0
    %2962 = vdwg.mxu0
    %v2963 = vlaneseq
    %v2964 = vshrl.u32 %v2963, 7
    %v2965 = vsub.s32 1, %v2964
    %v2966 = vrot.slane %v2844, %v2965
    %v2967 = vmul.f32 %v2958, %v2966
    %v2968 = vadd.f32 %v2907, %v2967
    %2969 = vrot.lane.b32.xlu0 %v2834, 67
    %v2970 = vpop.permute.xlu0 %2969
    %2972 = vrot.lane.b32.xlu0 %v2834, 3
    %v2973 = vpop.permute.xlu0 %2972
    %vm2975 = vcmask 23552
    %v2976 = vsel %vm2975, %v2970, %v2973
    %v2977 = vpack.c.bf16 %v2976, %v2976
    %v2979 = vsel %vm2093, %v2837, 0
    %v2982 = vsel %vm2097, %v2977, 0
    %2984 = vmatprep.subr.bf16.mxu0 0
    %2985 = vmatpush1.bf16.msra.mxu0 %v2982
    %2986 = vmatprep.subr.bf16.mxu0 0
    %2987 = vmatpush1.bf16.msra.mxu0 0
    %2988 = vmatprep.subr.bf16.mxu0 0
    %2989 = vmatpush1.bf16.msra.mxu0 0
    %2990 = vmatprep.subr.bf16.mxu0 0
    %2991 = vmatpush1.bf16.msra.mxu0 0
    %2992 = vmatprep.subr.bf16.mxu0 0
    %2993 = vmatpush1.bf16.msra.mxu0 0
    %2994 = vmatprep.subr.bf16.mxu0 0
    %2995 = vmatpush1.bf16.msra.mxu0 0
    %2996 = vmatprep.subr.bf16.mxu0 0
    %2997 = vmatpush1.bf16.msra.mxu0 0
    %2998 = vmatprep.subr.bf16.mxu0 0
    %2999 = vmatpush1.bf16.msra.mxu0 0
    %3000 = vmatprep.subr.bf16.mxu0 0
    %3001 = vmatpush1.bf16.msra.mxu0 0
    %3002 = vmatprep.subr.bf16.mxu0 0
    %3003 = vmatpush1.bf16.msra.mxu0 0
    %3004 = vmatprep.subr.bf16.mxu0 0
    %3005 = vmatpush1.bf16.msra.mxu0 0
    %3006 = vmatprep.subr.bf16.mxu0 0
    %3007 = vmatpush1.bf16.msra.mxu0 0
    %3008 = vmatprep.subr.bf16.mxu0 0
    %3009 = vmatpush1.bf16.msra.mxu0 0
    %3010 = vmatprep.subr.bf16.mxu0 0
    %3011 = vmatpush1.bf16.msra.mxu0 0
    %3012 = vmatprep.subr.bf16.mxu0 0
    %3013 = vmatpush1.bf16.msra.mxu0 0
    %3014 = vmatprep.subr.bf16.mxu0 0
    %3015 = vmatpush1.bf16.msra.mxu0 0
    %3016 = vmatprep.mubr.bf16.mxu0 0
    %3017 = vmatmul.mubr.bf16.gmra.mrb[0].mxu0 %v2979
    %v3018 = vpop.f32.mrb[0].mxu0
    %v3019 = vadd.f32 0.0, %v3018
    %v3020 = vpop.f32.mrb[0].mxu0
    %v3021 = vpop.f32.mrb[0].mxu0
    %v3022 = vpop.f32.mrb[0].mxu0
    %3023 = vdwg.mxu0
    %v3024 = vlaneseq
    %v3025 = vshrl.u32 %v3024, 7
    %v3026 = vsub.s32 2, %v3025
    %v3027 = vrot.slane %v2844, %v3026
    %v3028 = vmul.f32 %v3019, %v3027
    %v3029 = vadd.f32 %v2968, %v3028
    %3030 = vrot.lane.b32.xlu0 %v2834, 65
    %v3031 = vpop.permute.xlu0 %3030
    %3033 = vrot.lane.b32.xlu0 %v2834, 1
    %v3034 = vpop.permute.xlu0 %3033
    %v3036 = vsel %vm797, %v3031, %v3034
    %v3037 = vpack.c.bf16 %v3036, %v3036
    %v3039 = vsel %vm2093, %v2838, 0
    %v3042 = vsel %vm2097, %v3037, 0
    %3044 = vmatprep.subr.bf16.mxu0 0
    %3045 = vmatpush1.bf16.msra.mxu0 %v3042
    %3046 = vmatprep.subr.bf16.mxu0 0
    %3047 = vmatpush1.bf16.msra.mxu0 0
    %3048 = vmatprep.subr.bf16.mxu0 0
    %3049 = vmatpush1.bf16.msra.mxu0 0
    %3050 = vmatprep.subr.bf16.mxu0 0
    %3051 = vmatpush1.bf16.msra.mxu0 0
    %3052 = vmatprep.subr.bf16.mxu0 0
    %3053 = vmatpush1.bf16.msra.mxu0 0
    %3054 = vmatprep.subr.bf16.mxu0 0
    %3055 = vmatpush1.bf16.msra.mxu0 0
    %3056 = vmatprep.subr.bf16.mxu0 0
    %3057 = vmatpush1.bf16.msra.mxu0 0
    %3058 = vmatprep.subr.bf16.mxu0 0
    %3059 = vmatpush1.bf16.msra.mxu0 0
    %3060 = vmatprep.subr.bf16.mxu0 0
    %3061 = vmatpush1.bf16.msra.mxu0 0
    %3062 = vmatprep.subr.bf16.mxu0 0
    %3063 = vmatpush1.bf16.msra.mxu0 0
    %3064 = vmatprep.subr.bf16.mxu0 0
    %3065 = vmatpush1.bf16.msra.mxu0 0
    %3066 = vmatprep.subr.bf16.mxu0 0
    %3067 = vmatpush1.bf16.msra.mxu0 0
    %3068 = vmatprep.subr.bf16.mxu0 0
    %3069 = vmatpush1.bf16.msra.mxu0 0
    %3070 = vmatprep.subr.bf16.mxu0 0
    %3071 = vmatpush1.bf16.msra.mxu0 0
    %3072 = vmatprep.subr.bf16.mxu0 0
    %3073 = vmatpush1.bf16.msra.mxu0 0
    %3074 = vmatprep.subr.bf16.mxu0 0
    %3075 = vmatpush1.bf16.msra.mxu0 0
    %3076 = vmatprep.mubr.bf16.mxu0 0
    %3077 = vmatmul.mubr.bf16.gmra.mrb[0].mxu0 %v3039
    %v3078 = vpop.f32.mrb[0].mxu0
    %v3079 = vadd.f32 0.0, %v3078
    %v3080 = vpop.f32.mrb[0].mxu0
    %v3081 = vpop.f32.mrb[0].mxu0
    %v3082 = vpop.f32.mrb[0].mxu0
    %3083 = vdwg.mxu0
    %v3084 = vlaneseq
    %v3085 = vshrl.u32 %v3084, 7
    %v3086 = vsub.s32 3, %v3085
    %v3087 = vrot.slane %v2844, %v3086
    %v3088 = vmul.f32 %v3079, %v3087
    %v3089 = vadd.f32 %v3029, %v3088
    %v3090 = vpack.c.bf16 %v2834, %v2834
    %v3092 = vsel %vm2093, %v2839, 0
    %v3095 = vsel %vm2097, %v3090, 0
    %3097 = vmatprep.subr.bf16.mxu0 0
    %3098 = vmatpush1.bf16.msra.mxu0 %v3095
    %3099 = vmatprep.subr.bf16.mxu0 0
    %3100 = vmatpush1.bf16.msra.mxu0 0
    %3101 = vmatprep.subr.bf16.mxu0 0
    %3102 = vmatpush1.bf16.msra.mxu0 0
    %3103 = vmatprep.subr.bf16.mxu0 0
    %3104 = vmatpush1.bf16.msra.mxu0 0
    %3105 = vmatprep.subr.bf16.mxu0 0
    %3106 = vmatpush1.bf16.msra.mxu0 0
    %3107 = vmatprep.subr.bf16.mxu0 0
    %3108 = vmatpush1.bf16.msra.mxu0 0
    %3109 = vmatprep.subr.bf16.mxu0 0
    %3110 = vmatpush1.bf16.msra.mxu0 0
    %3111 = vmatprep.subr.bf16.mxu0 0
    %3112 = vmatpush1.bf16.msra.mxu0 0
    %3113 = vmatprep.subr.bf16.mxu0 0
    %3114 = vmatpush1.bf16.msra.mxu0 0
    %3115 = vmatprep.subr.bf16.mxu0 0
    %3116 = vmatpush1.bf16.msra.mxu0 0
    %3117 = vmatprep.subr.bf16.mxu0 0
    %3118 = vmatpush1.bf16.msra.mxu0 0
    %3119 = vmatprep.subr.bf16.mxu0 0
    %3120 = vmatpush1.bf16.msra.mxu0 0
    %3121 = vmatprep.subr.bf16.mxu0 0
    %3122 = vmatpush1.bf16.msra.mxu0 0
    %3123 = vmatprep.subr.bf16.mxu0 0
    %3124 = vmatpush1.bf16.msra.mxu0 0
    %3125 = vmatprep.subr.bf16.mxu0 0
    %3126 = vmatpush1.bf16.msra.mxu0 0
    %3127 = vmatprep.subr.bf16.mxu0 0
    %3128 = vmatpush1.bf16.msra.mxu0 0
    %3129 = vmatprep.mubr.bf16.mxu0 0
    %3130 = vmatmul.mubr.bf16.gmra.mrb[0].mxu0 %v3092
    %v3131 = vpop.f32.mrb[0].mxu0
    %v3132 = vadd.f32 0.0, %v3131
    %v3133 = vpop.f32.mrb[0].mxu0
    %v3134 = vpop.f32.mrb[0].mxu0
    %v3135 = vpop.f32.mrb[0].mxu0
    %3136 = vdwg.mxu0
    %v3137 = vadd.f32 %v3089, %v3132
    %3138 = vrot.lane.b32.xlu0 %v2834, 127
    %v3139 = vpop.permute.xlu0 %3138
    %3141 = vrot.lane.b32.xlu0 %v2834, 63
    %v3142 = vpop.permute.xlu0 %3141
    %vm3144 = vcmask 515072
    %v3145 = vsel %vm3144, %v3139, %v3142
    %v3146 = vpack.c.bf16 %v3145, %v3145
    %v3148 = vsel %vm2093, %v2840, 0
    %v3151 = vsel %vm2097, %v3146, 0
    %3153 = vmatprep.subr.bf16.mxu0 0
    %3154 = vmatpush1.bf16.msra.mxu0 %v3151
    %3155 = vmatprep.subr.bf16.mxu0 0
    %3156 = vmatpush1.bf16.msra.mxu0 0
    %3157 = vmatprep.subr.bf16.mxu0 0
    %3158 = vmatpush1.bf16.msra.mxu0 0
    %3159 = vmatprep.subr.bf16.mxu0 0
    %3160 = vmatpush1.bf16.msra.mxu0 0
    %3161 = vmatprep.subr.bf16.mxu0 0
    %3162 = vmatpush1.bf16.msra.mxu0 0
    %3163 = vmatprep.subr.bf16.mxu0 0
    %3164 = vmatpush1.bf16.msra.mxu0 0
    %3165 = vmatprep.subr.bf16.mxu0 0
    %3166 = vmatpush1.bf16.msra.mxu0 0
    %3167 = vmatprep.subr.bf16.mxu0 0
    %3168 = vmatpush1.bf16.msra.mxu0 0
    %3169 = vmatprep.subr.bf16.mxu0 0
    %3170 = vmatpush1.bf16.msra.mxu0 0
    %3171 = vmatprep.subr.bf16.mxu0 0
    %3172 = vmatpush1.bf16.msra.mxu0 0
    %3173 = vmatprep.subr.bf16.mxu0 0
    %3174 = vmatpush1.bf16.msra.mxu0 0
    %3175 = vmatprep.subr.bf16.mxu0 0
    %3176 = vmatpush1.bf16.msra.mxu0 0
    %3177 = vmatprep.subr.bf16.mxu0 0
    %3178 = vmatpush1.bf16.msra.mxu0 0
    %3179 = vmatprep.subr.bf16.mxu0 0
    %3180 = vmatpush1.bf16.msra.mxu0 0
    %3181 = vmatprep.subr.bf16.mxu0 0
    %3182 = vmatpush1.bf16.msra.mxu0 0
    %3183 = vmatprep.subr.bf16.mxu0 0
    %3184 = vmatpush1.bf16.msra.mxu0 0
    %3185 = vmatprep.mubr.bf16.mxu0 0
    %3186 = vmatmul.mubr.bf16.gmra.mrb[0].mxu0 %v3148
    %v3187 = vpop.f32.mrb[0].mxu0
    %v3188 = vadd.f32 0.0, %v3187
    %v3189 = vpop.f32.mrb[0].mxu0
    %v3190 = vpop.f32.mrb[0].mxu0
    %v3191 = vpop.f32.mrb[0].mxu0
    %3192 = vdwg.mxu0
    %v3193 = vlaneseq
    %v3194 = vshrl.u32 %v3193, 7
    %v3195 = vsub.s32 5, %v3194
    %v3196 = vrot.slane %v2844, %v3195
    %v3197 = vmul.f32 %v3188, %v3196
    %v3198 = vadd.f32 %v3137, %v3197
    %3199 = vrot.lane.b32.xlu0 %v2834, 125
    %v3200 = vpop.permute.xlu0 %3199
    %3202 = vrot.lane.b32.xlu0 %v2834, 61
    %v3203 = vpop.permute.xlu0 %3202
    %vm3205 = vcmask 498688
    %v3206 = vsel %vm3205, %v3200, %v3203
    %v3207 = vpack.c.bf16 %v3206, %v3206
    %v3209 = vsel %vm2093, %v2841, 0
    %v3212 = vsel %vm2097, %v3207, 0
    %3214 = vmatprep.subr.bf16.mxu0 0
    %3215 = vmatpush1.bf16.msra.mxu0 %v3212
    %3216 = vmatprep.subr.bf16.mxu0 0
    %3217 = vmatpush1.bf16.msra.mxu0 0
    %3218 = vmatprep.subr.bf16.mxu0 0
    %3219 = vmatpush1.bf16.msra.mxu0 0
    %3220 = vmatprep.subr.bf16.mxu0 0
    %3221 = vmatpush1.bf16.msra.mxu0 0
    %3222 = vmatprep.subr.bf16.mxu0 0
    %3223 = vmatpush1.bf16.msra.mxu0 0
    %3224 = vmatprep.subr.bf16.mxu0 0
    %3225 = vmatpush1.bf16.msra.mxu0 0
    %3226 = vmatprep.subr.bf16.mxu0 0
    %3227 = vmatpush1.bf16.msra.mxu0 0
    %3228 = vmatprep.subr.bf16.mxu0 0
    %3229 = vmatpush1.bf16.msra.mxu0 0
    %3230 = vmatprep.subr.bf16.mxu0 0
    %3231 = vmatpush1.bf16.msra.mxu0 0
    %3232 = vmatprep.subr.bf16.mxu0 0
    %3233 = vmatpush1.bf16.msra.mxu0 0
    %3234 = vmatprep.subr.bf16.mxu0 0
    %3235 = vmatpush1.bf16.msra.mxu0 0
    %3236 = vmatprep.subr.bf16.mxu0 0
    %3237 = vmatpush1.bf16.msra.mxu0 0
    %3238 = vmatprep.subr.bf16.mxu0 0
    %3239 = vmatpush1.bf16.msra.mxu0 0
    %3240 = vmatprep.subr.bf16.mxu0 0
    %3241 = vmatpush1.bf16.msra.mxu0 0
    %3242 = vmatprep.subr.bf16.mxu0 0
    %3243 = vmatpush1.bf16.msra.mxu0 0
    %3244 = vmatprep.subr.bf16.mxu0 0
    %3245 = vmatpush1.bf16.msra.mxu0 0
    %3246 = vmatprep.mubr.bf16.mxu0 0
    %3247 = vmatmul.mubr.bf16.gmra.mrb[0].mxu0 %v3209
    %v3248 = vpop.f32.mrb[0].mxu0
    %v3249 = vadd.f32 0.0, %v3248
    %v3250 = vpop.f32.mrb[0].mxu0
    %v3251 = vpop.f32.mrb[0].mxu0
    %v3252 = vpop.f32.mrb[0].mxu0
    %3253 = vdwg.mxu0
    %v3254 = vlaneseq
    %v3255 = vshrl.u32 %v3254, 7
    %v3256 = vsub.s32 6, %v3255
    %v3257 = vrot.slane %v2844, %v3256
    %v3258 = vmul.f32 %v3249, %v3257
    %v3259 = vadd.f32 %v3198, %v3258
    %3260 = vrot.lane.b32.xlu0 %v2834, 124
    %v3261 = vpop.permute.xlu0 %3260
    %3263 = vrot.lane.b32.xlu0 %v2834, 60
    %v3264 = vpop.permute.xlu0 %3263
    %vm3266 = vcmask 490496
    %v3267 = vsel %vm3266, %v3261, %v3264
    %v3268 = vpack.c.bf16 %v3267, %v3267
    %v3270 = vsel %vm2093, %v2842, 0
    %v3273 = vsel %vm2097, %v3268, 0
    %3275 = vmatprep.subr.bf16.mxu0 0
    %3276 = vmatpush1.bf16.msra.mxu0 %v3273
    %3277 = vmatprep.subr.bf16.mxu0 0
    %3278 = vmatpush1.bf16.msra.mxu0 0
    %3279 = vmatprep.subr.bf16.mxu0 0
    %3280 = vmatpush1.bf16.msra.mxu0 0
    %3281 = vmatprep.subr.bf16.mxu0 0
    %3282 = vmatpush1.bf16.msra.mxu0 0
    %3283 = vmatprep.subr.bf16.mxu0 0
    %3284 = vmatpush1.bf16.msra.mxu0 0
    %3285 = vmatprep.subr.bf16.mxu0 0
    %3286 = vmatpush1.bf16.msra.mxu0 0
    %3287 = vmatprep.subr.bf16.mxu0 0
    %3288 = vmatpush1.bf16.msra.mxu0 0
    %3289 = vmatprep.subr.bf16.mxu0 0
    %3290 = vmatpush1.bf16.msra.mxu0 0
    %3291 = vmatprep.subr.bf16.mxu0 0
    %3292 = vmatpush1.bf16.msra.mxu0 0
    %3293 = vmatprep.subr.bf16.mxu0 0
    %3294 = vmatpush1.bf16.msra.mxu0 0
    %3295 = vmatprep.subr.bf16.mxu0 0
    %3296 = vmatpush1.bf16.msra.mxu0 0
    %3297 = vmatprep.subr.bf16.mxu0 0
    %3298 = vmatpush1.bf16.msra.mxu0 0
    %3299 = vmatprep.subr.bf16.mxu0 0
    %3300 = vmatpush1.bf16.msra.mxu0 0
    %3301 = vmatprep.subr.bf16.mxu0 0
    %3302 = vmatpush1.bf16.msra.mxu0 0
    %3303 = vmatprep.subr.bf16.mxu0 0
    %3304 = vmatpush1.bf16.msra.mxu0 0
    %3305 = vmatprep.subr.bf16.mxu0 0
    %3306 = vmatpush1.bf16.msra.mxu0 0
    %3307 = vmatprep.mubr.bf16.mxu0 0
    %3308 = vmatmul.mubr.bf16.gmra.mrb[0].mxu0 %v3270
    %v3309 = vpop.f32.mrb[0].mxu0
    %v3310 = vadd.f32 0.0, %v3309
    %v3311 = vpop.f32.mrb[0].mxu0
    %v3312 = vpop.f32.mrb[0].mxu0
    %v3313 = vpop.f32.mrb[0].mxu0
    %3314 = vdwg.mxu0
    %v3315 = vlaneseq
    %v3316 = vshrl.u32 %v3315, 7
    %v3317 = vsub.s32 7, %v3316
    %v3318 = vrot.slane %v2844, %v3317
    %v3319 = vmul.f32 %v3310, %v3318
    %v3320 = vadd.f32 %v3259, %v3319
    %3321 = vrot.lane.b32.xlu0 %v2834, 123
    %v3322 = vpop.permute.xlu0 %3321
    %3324 = vrot.lane.b32.xlu0 %v2834, 59
    %v3325 = vpop.permute.xlu0 %3324
    %vm3327 = vcmask 482304
    %v3328 = vsel %vm3327, %v3322, %v3325
    %v3329 = vpack.c.bf16 %v3328, %v3328
    %v3331 = vsel %vm2093, %v2843, 0
    %v3334 = vsel %vm2097, %v3329, 0
    %3336 = vmatprep.subr.bf16.mxu0 0
    %3337 = vmatpush1.bf16.msra.mxu0 %v3334
    %3338 = vmatprep.subr.bf16.mxu0 0
    %3339 = vmatpush1.bf16.msra.mxu0 0
    %3340 = vmatprep.subr.bf16.mxu0 0
    %3341 = vmatpush1.bf16.msra.mxu0 0
    %3342 = vmatprep.subr.bf16.mxu0 0
    %3343 = vmatpush1.bf16.msra.mxu0 0
    %3344 = vmatprep.subr.bf16.mxu0 0
    %3345 = vmatpush1.bf16.msra.mxu0 0
    %3346 = vmatprep.subr.bf16.mxu0 0
    %3347 = vmatpush1.bf16.msra.mxu0 0
    %3348 = vmatprep.subr.bf16.mxu0 0
    %3349 = vmatpush1.bf16.msra.mxu0 0
    %3350 = vmatprep.subr.bf16.mxu0 0
    %3351 = vmatpush1.bf16.msra.mxu0 0
    %3352 = vmatprep.subr.bf16.mxu0 0
    %3353 = vmatpush1.bf16.msra.mxu0 0
    %3354 = vmatprep.subr.bf16.mxu0 0
    %3355 = vmatpush1.bf16.msra.mxu0 0
    %3356 = vmatprep.subr.bf16.mxu0 0
    %3357 = vmatpush1.bf16.msra.mxu0 0
    %3358 = vmatprep.subr.bf16.mxu0 0
    %3359 = vmatpush1.bf16.msra.mxu0 0
    %3360 = vmatprep.subr.bf16.mxu0 0
    %3361 = vmatpush1.bf16.msra.mxu0 0
    %3362 = vmatprep.subr.bf16.mxu0 0
    %3363 = vmatpush1.bf16.msra.mxu0 0
    %3364 = vmatprep.subr.bf16.mxu0 0
    %3365 = vmatpush1.bf16.msra.mxu0 0
    %3366 = vmatprep.subr.bf16.mxu0 0
    %3367 = vmatpush1.bf16.msra.mxu0 0
    %3368 = vmatprep.mubr.bf16.mxu0 0
    %3369 = vmatmul.mubr.bf16.gmra.mrb[0].mxu0 %v3331
    %v3370 = vpop.f32.mrb[0].mxu0
    %v3371 = vadd.f32 0.0, %v3370
    %v3372 = vpop.f32.mrb[0].mxu0
    %v3373 = vpop.f32.mrb[0].mxu0
    %v3374 = vpop.f32.mrb[0].mxu0
    %3375 = vdwg.mxu0
    %v3376 = vlaneseq
    %v3377 = vshrl.u32 %v3376, 7
    %v3378 = vsub.s32 0, %v3377
    %v3379 = vrot.slane %v2845, %v3378
    %v3380 = vmul.f32 %v3371, %v3379
    %v3381 = vadd.f32 %v3320, %v3380
    %v3382 = vld [vmem:[%s55] sm:$0xff]
    %v3383 = vld [vmem:[%s55 + $0x8] sm:$0xff]
    %v3384 = vld [vmem:[%s55 + $0x10] sm:$0xff]
    %v3385 = vld [vmem:[%s55 + $0x18] sm:$0xff]
    %v3386 = vld [vmem:[%s55 + $0x20] sm:$0xff]
    %v3387 = vld [vmem:[%s55 + $0x28] sm:$0xff]
    %v3388 = vld [vmem:[%s55 + $0x30] sm:$0xff]
    %v3389 = vld [vmem:[%s55 + $0x38] sm:$0xff]
    %v3390 = vld [vmem:[%s17] sm:$0xff]
    %3392 = vset.pattern.permute.xlu0 0
    %3393 = vperm.xlu0 %3392, %v3390
    %v3394 = vpop.permute.xlu0 %3393
    %vm3396 = vcmask 523264
    %v3398 = vsel %vm3396, %v3381, 0
    %3400 = vmatprep.subr.mxu0 0.0
    %3401 = vmatpush1.msra.mxu0 %v3382
    %3402 = vmatprep.subr.mxu0 0.0
    %3403 = vmatpush1.msra.mxu0 %v3383
    %3404 = vmatprep.subr.mxu0 0.0
    %3405 = vmatpush1.msra.mxu0 %v3384
    %3406 = vmatprep.subr.mxu0 0.0
    %3407 = vmatpush1.msra.mxu0 %v3385
    %3408 = vmatprep.subr.mxu0 0.0
    %3409 = vmatpush1.msra.mxu0 %v3386
    %3410 = vmatprep.subr.mxu0 0.0
    %3411 = vmatpush1.msra.mxu0 %v3387
    %3412 = vmatprep.subr.mxu0 0.0
    %3413 = vmatpush1.msra.mxu0 %v3388
    %3414 = vmatprep.subr.mxu0 0.0
    %3415 = vmatpush1.msra.mxu0 %v3389
    %3416 = vmatprep.subr.mxu0 0.0
    %3417 = vmatpush1.msra.mxu0 0.0
    %3418 = vmatprep.subr.mxu0 0.0
    %3419 = vmatpush1.msra.mxu0 0.0
    %3420 = vmatprep.subr.mxu0 0.0
    %3421 = vmatpush1.msra.mxu0 0.0
    %3422 = vmatprep.subr.mxu0 0.0
    %3423 = vmatpush1.msra.mxu0 0.0
    %3424 = vmatprep.subr.mxu0 0.0
    %3425 = vmatpush1.msra.mxu0 0.0
    %3426 = vmatprep.subr.mxu0 0.0
    %3427 = vmatpush1.msra.mxu0 0.0
    %3428 = vmatprep.subr.mxu0 0.0
    %3429 = vmatpush1.msra.mxu0 0.0
    %3430 = vmatprep.subr.mxu0 0.0
    %3431 = vmatpush1.msra.mxu0 0.0
    %3432 = vmatprep.subr.mxu0 0.0
    %3433 = vmatpush1.msra.mxu0 0.0
    %3434 = vmatprep.subr.mxu0 0.0
    %3435 = vmatpush1.msra.mxu0 0.0
    %3436 = vmatprep.subr.mxu0 0.0
    %3437 = vmatpush1.msra.mxu0 0.0
    %3438 = vmatprep.subr.mxu0 0.0
    %3439 = vmatpush1.msra.mxu0 0.0
    %3440 = vmatprep.subr.mxu0 0.0
    %3441 = vmatpush1.msra.mxu0 0.0
    %3442 = vmatprep.subr.mxu0 0.0
    %3443 = vmatpush1.msra.mxu0 0.0
    %3444 = vmatprep.subr.mxu0 0.0
    %3445 = vmatpush1.msra.mxu0 0.0
    %3446 = vmatprep.subr.mxu0 0.0
    %3447 = vmatpush1.msra.mxu0 0.0
    %3448 = vmatprep.subr.mxu0 0.0
    %3449 = vmatpush1.msra.mxu0 0.0
    %3450 = vmatprep.subr.mxu0 0.0
    %3451 = vmatpush1.msra.mxu0 0.0
    %3452 = vmatprep.subr.mxu0 0.0
    %3453 = vmatpush1.msra.mxu0 0.0
    %3454 = vmatprep.subr.mxu0 0.0
    %3455 = vmatpush1.msra.mxu0 0.0
    %3456 = vmatprep.subr.mxu0 0.0
    %3457 = vmatpush1.msra.mxu0 0.0
    %3458 = vmatprep.subr.mxu0 0.0
    %3459 = vmatpush1.msra.mxu0 0.0
    %3460 = vmatprep.subr.mxu0 0.0
    %3461 = vmatpush1.msra.mxu0 0.0
    %3462 = vmatprep.subr.mxu0 0.0
    %3463 = vmatpush1.msra.mxu0 0.0
    %3464 = vmatprep.mubr.f32.mxu0 0.0
    %3465 = vmatmul.mubr.f32.gmra.mrb[0].mxu0 %v3398
    %v3466 = vpop.f32.mrb[0].mxu0
    %v3467 = vadd.f32 %v3394, %v3466
    %v3468 = vpop.f32.mrb[0].mxu0
    %3469 = vdwg.mxu0
    %v3470 = vmax.f32 %v3467, 0.0
    %v3471 = vld [vmem:[%s21] sm:$0xf]
    %v3472 = vld [vmem:[%s21 + $0x4] sm:$0xf]
    %v3473 = vld [vmem:[%s21 + $0x8] sm:$0xf]
    %v3474 = vld [vmem:[%s21 + $0xc] sm:$0xf]
    %v3475 = vld [vmem:[%s21 + $0x10] sm:$0xf]
    %v3476 = vld [vmem:[%s21 + $0x14] sm:$0xf]
    %v3477 = vld [vmem:[%s21 + $0x18] sm:$0xf]
    %v3478 = vld [vmem:[%s21 + $0x1c] sm:$0xf]
    %v3479 = vld [vmem:[%s21 + $0x20] sm:$0xf]
    %v3480 = vld [vmem:[%s25] sm:$0xff]
    %v3481 = vld [vmem:[%s25 + $0x8] sm:$0x1]
    %3483 = vrot.lane.b32.xlu0 %v3470, 115
    %v3484 = vpop.permute.xlu0 %3483
    %3486 = vrot.lane.b32.xlu0 %v3470, 3
    %v3487 = vpop.permute.xlu0 %3486
    %v3489 = vsel %vm2975, %v3484, %v3487
    %v3490 = vpack.c.bf16 %v3489, %v3489
    %v3492 = vsel %vm2093, %v3471, 0
    %v3495 = vsel %vm2097, %v3490, 0
    %3497 = vmatprep.subr.bf16.mxu0 0
    %3498 = vmatpush1.bf16.msra.mxu0 %v3495
    %3499 = vmatprep.subr.bf16.mxu0 0
    %3500 = vmatpush1.bf16.msra.mxu0 0
    %3501 = vmatprep.subr.bf16.mxu0 0
    %3502 = vmatpush1.bf16.msra.mxu0 0
    %3503 = vmatprep.subr.bf16.mxu0 0
    %3504 = vmatpush1.bf16.msra.mxu0 0
    %3505 = vmatprep.subr.bf16.mxu0 0
    %3506 = vmatpush1.bf16.msra.mxu0 0
    %3507 = vmatprep.subr.bf16.mxu0 0
    %3508 = vmatpush1.bf16.msra.mxu0 0
    %3509 = vmatprep.subr.bf16.mxu0 0
    %3510 = vmatpush1.bf16.msra.mxu0 0
    %3511 = vmatprep.subr.bf16.mxu0 0
    %3512 = vmatpush1.bf16.msra.mxu0 0
    %3513 = vmatprep.subr.bf16.mxu0 0
    %3514 = vmatpush1.bf16.msra.mxu0 0
    %3515 = vmatprep.subr.bf16.mxu0 0
    %3516 = vmatpush1.bf16.msra.mxu0 0
    %3517 = vmatprep.subr.bf16.mxu0 0
    %3518 = vmatpush1.bf16.msra.mxu0 0
    %3519 = vmatprep.subr.bf16.mxu0 0
    %3520 = vmatpush1.bf16.msra.mxu0 0
    %3521 = vmatprep.subr.bf16.mxu0 0
    %3522 = vmatpush1.bf16.msra.mxu0 0
    %3523 = vmatprep.subr.bf16.mxu0 0
    %3524 = vmatpush1.bf16.msra.mxu0 0
    %3525 = vmatprep.subr.bf16.mxu0 0
    %3526 = vmatpush1.bf16.msra.mxu0 0
    %3527 = vmatprep.subr.bf16.mxu0 0
    %3528 = vmatpush1.bf16.msra.mxu0 0
    %3529 = vmatprep.mubr.bf16.mxu0 0
    %3530 = vmatmul.mubr.bf16.gmra.mrb[0].mxu0 %v3492
    %v3531 = vpop.f32.mrb[0].mxu0
    %v3532 = vadd.f32 0.0, %v3531
    %v3533 = vpop.f32.mrb[0].mxu0
    %v3534 = vpop.f32.mrb[0].mxu0
    %v3535 = vpop.f32.mrb[0].mxu0
    %3536 = vdwg.mxu0
    %v3537 = vlaneseq
    %v3538 = vshrl.u32 %v3537, 7
    %v3539 = vsub.s32 0, %v3538
    %v3540 = vrot.slane %v3480, %v3539
    %v3541 = vmul.f32 %v3532, %v3540
    %v3542 = vadd.f32 %v3541, 0.0
    %3543 = vrot.lane.b32.xlu0 %v3470, 114
    %v3544 = vpop.permute.xlu0 %3543
    %3546 = vrot.lane.b32.xlu0 %v3470, 2
    %v3547 = vpop.permute.xlu0 %3546
    %vm3549 = vcmask 15360
    %v3550 = vsel %vm3549, %v3544, %v3547
    %v3551 = vpack.c.bf16 %v3550, %v3550
    %v3553 = vsel %vm2093, %v3472, 0
    %v3556 = vsel %vm2097, %v3551, 0
    %3558 = vmatprep.subr.bf16.mxu0 0
    %3559 = vmatpush1.bf16.msra.mxu0 %v3556
    %3560 = vmatprep.subr.bf16.mxu0 0
    %3561 = vmatpush1.bf16.msra.mxu0 0
    %3562 = vmatprep.subr.bf16.mxu0 0
    %3563 = vmatpush1.bf16.msra.mxu0 0
    %3564 = vmatprep.subr.bf16.mxu0 0
    %3565 = vmatpush1.bf16.msra.mxu0 0
    %3566 = vmatprep.subr.bf16.mxu0 0
    %3567 = vmatpush1.bf16.msra.mxu0 0
    %3568 = vmatprep.subr.bf16.mxu0 0
    %3569 = vmatpush1.bf16.msra.mxu0 0
    %3570 = vmatprep.subr.bf16.mxu0 0
    %3571 = vmatpush1.bf16.msra.mxu0 0
    %3572 = vmatprep.subr.bf16.mxu0 0
    %3573 = vmatpush1.bf16.msra.mxu0 0
    %3574 = vmatprep.subr.bf16.mxu0 0
    %3575 = vmatpush1.bf16.msra.mxu0 0
    %3576 = vmatprep.subr.bf16.mxu0 0
    %3577 = vmatpush1.bf16.msra.mxu0 0
    %3578 = vmatprep.subr.bf16.mxu0 0
    %3579 = vmatpush1.bf16.msra.mxu0 0
    %3580 = vmatprep.subr.bf16.mxu0 0
    %3581 = vmatpush1.bf16.msra.mxu0 0
    %3582 = vmatprep.subr.bf16.mxu0 0
    %3583 = vmatpush1.bf16.msra.mxu0 0
    %3584 = vmatprep.subr.bf16.mxu0 0
    %3585 = vmatpush1.bf16.msra.mxu0 0
    %3586 = vmatprep.subr.bf16.mxu0 0
    %3587 = vmatpush1.bf16.msra.mxu0 0
    %3588 = vmatprep.subr.bf16.mxu0 0
    %3589 = vmatpush1.bf16.msra.mxu0 0
    %3590 = vmatprep.mubr.bf16.mxu0 0
    %3591 = vmatmul.mubr.bf16.gmra.mrb[0].mxu0 %v3553
    %v3592 = vpop.f32.mrb[0].mxu0
    %v3593 = vadd.f32 0.0, %v3592
    %v3594 = vpop.f32.mrb[0].mxu0
    %v3595 = vpop.f32.mrb[0].mxu0
    %v3596 = vpop.f32.mrb[0].mxu0
    %3597 = vdwg.mxu0
    %v3598 = vlaneseq
    %v3599 = vshrl.u32 %v3598, 7
    %v3600 = vsub.s32 1, %v3599
    %v3601 = vrot.slane %v3480, %v3600
    %v3602 = vmul.f32 %v3593, %v3601
    %v3603 = vadd.f32 %v3542, %v3602
    %3604 = vrot.lane.b32.xlu0 %v3470, 113
    %v3605 = vpop.permute.xlu0 %3604
    %3607 = vrot.lane.b32.xlu0 %v3470, 1
    %v3608 = vpop.permute.xlu0 %3607
    %v3610 = vsel %vm797, %v3605, %v3608
    %v3611 = vpack.c.bf16 %v3610, %v3610
    %v3613 = vsel %vm2093, %v3473, 0
    %v3616 = vsel %vm2097, %v3611, 0
    %3618 = vmatprep.subr.bf16.mxu0 0
    %3619 = vmatpush1.bf16.msra.mxu0 %v3616
    %3620 = vmatprep.subr.bf16.mxu0 0
    %3621 = vmatpush1.bf16.msra.mxu0 0
    %3622 = vmatprep.subr.bf16.mxu0 0
    %3623 = vmatpush1.bf16.msra.mxu0 0
    %3624 = vmatprep.subr.bf16.mxu0 0
    %3625 = vmatpush1.bf16.msra.mxu0 0
    %3626 = vmatprep.subr.bf16.mxu0 0
    %3627 = vmatpush1.bf16.msra.mxu0 0
    %3628 = vmatprep.subr.bf16.mxu0 0
    %3629 = vmatpush1.bf16.msra.mxu0 0
    %3630 = vmatprep.subr.bf16.mxu0 0
    %3631 = vmatpush1.bf16.msra.mxu0 0
    %3632 = vmatprep.subr.bf16.mxu0 0
    %3633 = vmatpush1.bf16.msra.mxu0 0
    %3634 = vmatprep.subr.bf16.mxu0 0
    %3635 = vmatpush1.bf16.msra.mxu0 0
    %3636 = vmatprep.subr.bf16.mxu0 0
    %3637 = vmatpush1.bf16.msra.mxu0 0
    %3638 = vmatprep.subr.bf16.mxu0 0
    %3639 = vmatpush1.bf16.msra.mxu0 0
    %3640 = vmatprep.subr.bf16.mxu0 0
    %3641 = vmatpush1.bf16.msra.mxu0 0
    %3642 = vmatprep.subr.bf16.mxu0 0
    %3643 = vmatpush1.bf16.msra.mxu0 0
    %3644 = vmatprep.subr.bf16.mxu0 0
    %3645 = vmatpush1.bf16.msra.mxu0 0
    %3646 = vmatprep.subr.bf16.mxu0 0
    %3647 = vmatpush1.bf16.msra.mxu0 0
    %3648 = vmatprep.subr.bf16.mxu0 0
    %3649 = vmatpush1.bf16.msra.mxu0 0
    %3650 = vmatprep.mubr.bf16.mxu0 0
    %3651 = vmatmul.mubr.bf16.gmra.mrb[0].mxu0 %v3613
    %v3652 = vpop.f32.mrb[0].mxu0
    %v3653 = vadd.f32 0.0, %v3652
    %v3654 = vpop.f32.mrb[0].mxu0
    %v3655 = vpop.f32.mrb[0].mxu0
    %v3656 = vpop.f32.mrb[0].mxu0
    %3657 = vdwg.mxu0
    %v3658 = vlaneseq
    %v3659 = vshrl.u32 %v3658, 7
    %v3660 = vsub.s32 2, %v3659
    %v3661 = vrot.slane %v3480, %v3660
    %v3662 = vmul.f32 %v3653, %v3661
    %v3663 = vadd.f32 %v3603, %v3662
    %v3665 = vsel %vm2093, %v3474, 0
    %3667 = vmatprep.subr.bf16.mxu0 0
    %3668 = vmatpush1.bf16.msra.mxu0 %v3616
    %3669 = vmatprep.subr.bf16.mxu0 0
    %3670 = vmatpush1.bf16.msra.mxu0 0
    %3671 = vmatprep.subr.bf16.mxu0 0
    %3672 = vmatpush1.bf16.msra.mxu0 0
    %3673 = vmatprep.subr.bf16.mxu0 0
    %3674 = vmatpush1.bf16.msra.mxu0 0
    %3675 = vmatprep.subr.bf16.mxu0 0
    %3676 = vmatpush1.bf16.msra.mxu0 0
    %3677 = vmatprep.subr.bf16.mxu0 0
    %3678 = vmatpush1.bf16.msra.mxu0 0
    %3679 = vmatprep.subr.bf16.mxu0 0
    %3680 = vmatpush1.bf16.msra.mxu0 0
    %3681 = vmatprep.subr.bf16.mxu0 0
    %3682 = vmatpush1.bf16.msra.mxu0 0
    %3683 = vmatprep.subr.bf16.mxu0 0
    %3684 = vmatpush1.bf16.msra.mxu0 0
    %3685 = vmatprep.subr.bf16.mxu0 0
    %3686 = vmatpush1.bf16.msra.mxu0 0
    %3687 = vmatprep.subr.bf16.mxu0 0
    %3688 = vmatpush1.bf16.msra.mxu0 0
    %3689 = vmatprep.subr.bf16.mxu0 0
    %3690 = vmatpush1.bf16.msra.mxu0 0
    %3691 = vmatprep.subr.bf16.mxu0 0
    %3692 = vmatpush1.bf16.msra.mxu0 0
    %3693 = vmatprep.subr.bf16.mxu0 0
    %3694 = vmatpush1.bf16.msra.mxu0 0
    %3695 = vmatprep.subr.bf16.mxu0 0
    %3696 = vmatpush1.bf16.msra.mxu0 0
    %3697 = vmatprep.subr.bf16.mxu0 0
    %3698 = vmatpush1.bf16.msra.mxu0 0
    %3699 = vmatprep.mubr.bf16.mxu0 0
    %3700 = vmatmul.mubr.bf16.gmra.mrb[0].mxu0 %v3665
    %v3701 = vpop.f32.mrb[0].mxu0
    %v3702 = vadd.f32 0.0, %v3701
    %v3703 = vpop.f32.mrb[0].mxu0
    %v3704 = vpop.f32.mrb[0].mxu0
    %v3705 = vpop.f32.mrb[0].mxu0
    %3706 = vdwg.mxu0
    %v3707 = vlaneseq
    %v3708 = vshrl.u32 %v3707, 7
    %v3709 = vsub.s32 3, %v3708
    %v3710 = vrot.slane %v3480, %v3709
    %v3711 = vmul.f32 %v3702, %v3710
    %v3712 = vadd.f32 %v3663, %v3711
    %v3713 = vpack.c.bf16 %v3470, %v3470
    %v3715 = vsel %vm2093, %v3475, 0
    %v3718 = vsel %vm2097, %v3713, 0
    %3720 = vmatprep.subr.bf16.mxu0 0
    %3721 = vmatpush1.bf16.msra.mxu0 %v3718
    %3722 = vmatprep.subr.bf16.mxu0 0
    %3723 = vmatpush1.bf16.msra.mxu0 0
    %3724 = vmatprep.subr.bf16.mxu0 0
    %3725 = vmatpush1.bf16.msra.mxu0 0
    %3726 = vmatprep.subr.bf16.mxu0 0
    %3727 = vmatpush1.bf16.msra.mxu0 0
    %3728 = vmatprep.subr.bf16.mxu0 0
    %3729 = vmatpush1.bf16.msra.mxu0 0
    %3730 = vmatprep.subr.bf16.mxu0 0
    %3731 = vmatpush1.bf16.msra.mxu0 0
    %3732 = vmatprep.subr.bf16.mxu0 0
    %3733 = vmatpush1.bf16.msra.mxu0 0
    %3734 = vmatprep.subr.bf16.mxu0 0
    %3735 = vmatpush1.bf16.msra.mxu0 0
    %3736 = vmatprep.subr.bf16.mxu0 0
    %3737 = vmatpush1.bf16.msra.mxu0 0
    %3738 = vmatprep.subr.bf16.mxu0 0
    %3739 = vmatpush1.bf16.msra.mxu0 0
    %3740 = vmatprep.subr.bf16.mxu0 0
    %3741 = vmatpush1.bf16.msra.mxu0 0
    %3742 = vmatprep.subr.bf16.mxu0 0
    %3743 = vmatpush1.bf16.msra.mxu0 0
    %3744 = vmatprep.subr.bf16.mxu0 0
    %3745 = vmatpush1.bf16.msra.mxu0 0
    %3746 = vmatprep.subr.bf16.mxu0 0
    %3747 = vmatpush1.bf16.msra.mxu0 0
    %3748 = vmatprep.subr.bf16.mxu0 0
    %3749 = vmatpush1.bf16.msra.mxu0 0
    %3750 = vmatprep.subr.bf16.mxu0 0
    %3751 = vmatpush1.bf16.msra.mxu0 0
    %3752 = vmatprep.mubr.bf16.mxu0 0
    %3753 = vmatmul.mubr.bf16.gmra.mrb[0].mxu0 %v3715
    %v3754 = vpop.f32.mrb[0].mxu0
    %v3755 = vadd.f32 0.0, %v3754
    %v3756 = vpop.f32.mrb[0].mxu0
    %v3757 = vpop.f32.mrb[0].mxu0
    %v3758 = vpop.f32.mrb[0].mxu0
    %3759 = vdwg.mxu0
    %v3760 = vadd.f32 %v3712, %v3755
    %3761 = vrot.lane.b32.xlu0 %v3470, 127
    %v3762 = vpop.permute.xlu0 %3761
    %3764 = vrot.lane.b32.xlu0 %v3470, 15
    %v3765 = vpop.permute.xlu0 %3764
    %v3767 = vsel %vm611, %v3762, %v3765
    %v3768 = vpack.c.bf16 %v3767, %v3767
    %v3770 = vsel %vm2093, %v3476, 0
    %v3773 = vsel %vm2097, %v3768, 0
    %3775 = vmatprep.subr.bf16.mxu0 0
    %3776 = vmatpush1.bf16.msra.mxu0 %v3773
    %3777 = vmatprep.subr.bf16.mxu0 0
    %3778 = vmatpush1.bf16.msra.mxu0 0
    %3779 = vmatprep.subr.bf16.mxu0 0
    %3780 = vmatpush1.bf16.msra.mxu0 0
    %3781 = vmatprep.subr.bf16.mxu0 0
    %3782 = vmatpush1.bf16.msra.mxu0 0
    %3783 = vmatprep.subr.bf16.mxu0 0
    %3784 = vmatpush1.bf16.msra.mxu0 0
    %3785 = vmatprep.subr.bf16.mxu0 0
    %3786 = vmatpush1.bf16.msra.mxu0 0
    %3787 = vmatprep.subr.bf16.mxu0 0
    %3788 = vmatpush1.bf16.msra.mxu0 0
    %3789 = vmatprep.subr.bf16.mxu0 0
    %3790 = vmatpush1.bf16.msra.mxu0 0
    %3791 = vmatprep.subr.bf16.mxu0 0
    %3792 = vmatpush1.bf16.msra.mxu0 0
    %3793 = vmatprep.subr.bf16.mxu0 0
    %3794 = vmatpush1.bf16.msra.mxu0 0
    %3795 = vmatprep.subr.bf16.mxu0 0
    %3796 = vmatpush1.bf16.msra.mxu0 0
    %3797 = vmatprep.subr.bf16.mxu0 0
    %3798 = vmatpush1.bf16.msra.mxu0 0
    %3799 = vmatprep.subr.bf16.mxu0 0
    %3800 = vmatpush1.bf16.msra.mxu0 0
    %3801 = vmatprep.subr.bf16.mxu0 0
    %3802 = vmatpush1.bf16.msra.mxu0 0
    %3803 = vmatprep.subr.bf16.mxu0 0
    %3804 = vmatpush1.bf16.msra.mxu0 0
    %3805 = vmatprep.subr.bf16.mxu0 0
    %3806 = vmatpush1.bf16.msra.mxu0 0
    %3807 = vmatprep.mubr.bf16.mxu0 0
    %3808 = vmatmul.mubr.bf16.gmra.mrb[0].mxu0 %v3770
    %v3809 = vpop.f32.mrb[0].mxu0
    %v3810 = vadd.f32 0.0, %v3809
    %v3811 = vpop.f32.mrb[0].mxu0
    %v3812 = vpop.f32.mrb[0].mxu0
    %v3813 = vpop.f32.mrb[0].mxu0
    %3814 = vdwg.mxu0
    %v3815 = vlaneseq
    %v3816 = vshrl.u32 %v3815, 7
    %v3817 = vsub.s32 5, %v3816
    %v3818 = vrot.slane %v3480, %v3817
    %v3819 = vmul.f32 %v3810, %v3818
    %v3820 = vadd.f32 %v3760, %v3819
    %v3822 = vsel %vm2093, %v3477, 0
    %3824 = vmatprep.subr.bf16.mxu0 0
    %3825 = vmatpush1.bf16.msra.mxu0 %v3773
    %3826 = vmatprep.subr.bf16.mxu0 0
    %3827 = vmatpush1.bf16.msra.mxu0 0
    %3828 = vmatprep.subr.bf16.mxu0 0
    %3829 = vmatpush1.bf16.msra.mxu0 0
    %3830 = vmatprep.subr.bf16.mxu0 0
    %3831 = vmatpush1.bf16.msra.mxu0 0
    %3832 = vmatprep.subr.bf16.mxu0 0
    %3833 = vmatpush1.bf16.msra.mxu0 0
    %3834 = vmatprep.subr.bf16.mxu0 0
    %3835 = vmatpush1.bf16.msra.mxu0 0
    %3836 = vmatprep.subr.bf16.mxu0 0
    %3837 = vmatpush1.bf16.msra.mxu0 0
    %3838 = vmatprep.subr.bf16.mxu0 0
    %3839 = vmatpush1.bf16.msra.mxu0 0
    %3840 = vmatprep.subr.bf16.mxu0 0
    %3841 = vmatpush1.bf16.msra.mxu0 0
    %3842 = vmatprep.subr.bf16.mxu0 0
    %3843 = vmatpush1.bf16.msra.mxu0 0
    %3844 = vmatprep.subr.bf16.mxu0 0
    %3845 = vmatpush1.bf16.msra.mxu0 0
    %3846 = vmatprep.subr.bf16.mxu0 0
    %3847 = vmatpush1.bf16.msra.mxu0 0
    %3848 = vmatprep.subr.bf16.mxu0 0
    %3849 = vmatpush1.bf16.msra.mxu0 0
    %3850 = vmatprep.subr.bf16.mxu0 0
    %3851 = vmatpush1.bf16.msra.mxu0 0
    %3852 = vmatprep.subr.bf16.mxu0 0
    %3853 = vmatpush1.bf16.msra.mxu0 0
    %3854 = vmatprep.subr.bf16.mxu0 0
    %3855 = vmatpush1.bf16.msra.mxu0 0
    %3856 = vmatprep.mubr.bf16.mxu0 0
    %3857 = vmatmul.mubr.bf16.gmra.mrb[0].mxu0 %v3822
    %v3858 = vpop.f32.mrb[0].mxu0
    %v3859 = vadd.f32 0.0, %v3858
    %v3860 = vpop.f32.mrb[0].mxu0
    %v3861 = vpop.f32.mrb[0].mxu0
    %v3862 = vpop.f32.mrb[0].mxu0
    %3863 = vdwg.mxu0
    %v3864 = vlaneseq
    %v3865 = vshrl.u32 %v3864, 7
    %v3866 = vsub.s32 6, %v3865
    %v3867 = vrot.slane %v3480, %v3866
    %v3868 = vmul.f32 %v3859, %v3867
    %v3869 = vadd.f32 %v3820, %v3868
    %3870 = vrot.lane.b32.xlu0 %v3470, 126
    %v3871 = vpop.permute.xlu0 %3870
    %3873 = vrot.lane.b32.xlu0 %v3470, 14
    %v3874 = vpop.permute.xlu0 %3873
    %vm3876 = vcmask 113664
    %v3877 = vsel %vm3876, %v3871, %v3874
    %v3878 = vpack.c.bf16 %v3877, %v3877
    %v3880 = vsel %vm2093, %v3478, 0
    %v3883 = vsel %vm2097, %v3878, 0
    %3885 = vmatprep.subr.bf16.mxu0 0
    %3886 = vmatpush1.bf16.msra.mxu0 %v3883
    %3887 = vmatprep.subr.bf16.mxu0 0
    %3888 = vmatpush1.bf16.msra.mxu0 0
    %3889 = vmatprep.subr.bf16.mxu0 0
    %3890 = vmatpush1.bf16.msra.mxu0 0
    %3891 = vmatprep.subr.bf16.mxu0 0
    %3892 = vmatpush1.bf16.msra.mxu0 0
    %3893 = vmatprep.subr.bf16.mxu0 0
    %3894 = vmatpush1.bf16.msra.mxu0 0
    %3895 = vmatprep.subr.bf16.mxu0 0
    %3896 = vmatpush1.bf16.msra.mxu0 0
    %3897 = vmatprep.subr.bf16.mxu0 0
    %3898 = vmatpush1.bf16.msra.mxu0 0
    %3899 = vmatprep.subr.bf16.mxu0 0
    %3900 = vmatpush1.bf16.msra.mxu0 0
    %3901 = vmatprep.subr.bf16.mxu0 0
    %3902 = vmatpush1.bf16.msra.mxu0 0
    %3903 = vmatprep.subr.bf16.mxu0 0
    %3904 = vmatpush1.bf16.msra.mxu0 0
    %3905 = vmatprep.subr.bf16.mxu0 0
    %3906 = vmatpush1.bf16.msra.mxu0 0
    %3907 = vmatprep.subr.bf16.mxu0 0
    %3908 = vmatpush1.bf16.msra.mxu0 0
    %3909 = vmatprep.subr.bf16.mxu0 0
    %3910 = vmatpush1.bf16.msra.mxu0 0
    %3911 = vmatprep.subr.bf16.mxu0 0
    %3912 = vmatpush1.bf16.msra.mxu0 0
    %3913 = vmatprep.subr.bf16.mxu0 0
    %3914 = vmatpush1.bf16.msra.mxu0 0
    %3915 = vmatprep.subr.bf16.mxu0 0
    %3916 = vmatpush1.bf16.msra.mxu0 0
    %3917 = vmatprep.mubr.bf16.mxu0 0
    %3918 = vmatmul.mubr.bf16.gmra.mrb[0].mxu0 %v3880
    %v3919 = vpop.f32.mrb[0].mxu0
    %v3920 = vadd.f32 0.0, %v3919
    %v3921 = vpop.f32.mrb[0].mxu0
    %v3922 = vpop.f32.mrb[0].mxu0
    %v3923 = vpop.f32.mrb[0].mxu0
    %3924 = vdwg.mxu0
    %v3925 = vlaneseq
    %v3926 = vshrl.u32 %v3925, 7
    %v3927 = vsub.s32 7, %v3926
    %v3928 = vrot.slane %v3480, %v3927
    %v3929 = vmul.f32 %v3920, %v3928
    %v3930 = vadd.f32 %v3869, %v3929
    %3931 = vrot.lane.b32.xlu0 %v3470, 125
    %v3932 = vpop.permute.xlu0 %3931
    %3934 = vrot.lane.b32.xlu0 %v3470, 13
    %v3935 = vpop.permute.xlu0 %3934
    %vm3937 = vcmask 105472
    %v3938 = vsel %vm3937, %v3932, %v3935
    %v3939 = vpack.c.bf16 %v3938, %v3938
    %v3941 = vsel %vm2093, %v3479, 0
    %v3944 = vsel %vm2097, %v3939, 0
    %3946 = vmatprep.subr.bf16.mxu0 0
    %3947 = vmatpush1.bf16.msra.mxu0 %v3944
    %3948 = vmatprep.subr.bf16.mxu0 0
    %3949 = vmatpush1.bf16.msra.mxu0 0
    %3950 = vmatprep.subr.bf16.mxu0 0
    %3951 = vmatpush1.bf16.msra.mxu0 0
    %3952 = vmatprep.subr.bf16.mxu0 0
    %3953 = vmatpush1.bf16.msra.mxu0 0
    %3954 = vmatprep.subr.bf16.mxu0 0
    %3955 = vmatpush1.bf16.msra.mxu0 0
    %3956 = vmatprep.subr.bf16.mxu0 0
    %3957 = vmatpush1.bf16.msra.mxu0 0
    %3958 = vmatprep.subr.bf16.mxu0 0
    %3959 = vmatpush1.bf16.msra.mxu0 0
    %3960 = vmatprep.subr.bf16.mxu0 0
    %3961 = vmatpush1.bf16.msra.mxu0 0
    %3962 = vmatprep.subr.bf16.mxu0 0
    %3963 = vmatpush1.bf16.msra.mxu0 0
    %3964 = vmatprep.subr.bf16.mxu0 0
    %3965 = vmatpush1.bf16.msra.mxu0 0
    %3966 = vmatprep.subr.bf16.mxu0 0
    %3967 = vmatpush1.bf16.msra.mxu0 0
    %3968 = vmatprep.subr.bf16.mxu0 0
    %3969 = vmatpush1.bf16.msra.mxu0 0
    %3970 = vmatprep.subr.bf16.mxu0 0
    %3971 = vmatpush1.bf16.msra.mxu0 0
    %3972 = vmatprep.subr.bf16.mxu0 0
    %3973 = vmatpush1.bf16.msra.mxu0 0
    %3974 = vmatprep.subr.bf16.mxu0 0
    %3975 = vmatpush1.bf16.msra.mxu0 0
    %3976 = vmatprep.subr.bf16.mxu0 0
    %3977 = vmatpush1.bf16.msra.mxu0 0
    %3978 = vmatprep.mubr.bf16.mxu0 0
    %3979 = vmatmul.mubr.bf16.gmra.mrb[0].mxu0 %v3941
    %v3980 = vpop.f32.mrb[0].mxu0
    %v3981 = vadd.f32 0.0, %v3980
    %v3982 = vpop.f32.mrb[0].mxu0
    %v3983 = vpop.f32.mrb[0].mxu0
    %v3984 = vpop.f32.mrb[0].mxu0
    %3985 = vdwg.mxu0
    %v3986 = vlaneseq
    %v3987 = vshrl.u32 %v3986, 7
    %v3988 = vsub.s32 0, %v3987
    %v3989 = vrot.slane %v3481, %v3988
    %v3990 = vmul.f32 %v3981, %v3989
    %v3991 = vadd.f32 %v3930, %v3990
    %v3992 = vld [vmem:[%s57] sm:$0xff]
    %v3993 = vld [vmem:[%s57 + $0x8] sm:$0xff]
    %v3994 = vld [vmem:[%s23] sm:$0xff]
    %3996 = vset.pattern.permute.xlu0 0
    %3997 = vperm.xlu0 %3996, %v3994
    %v3998 = vpop.permute.xlu0 %3997
    %v4001 = vsel %vm425, %v3991, 0
    %4003 = vmatprep.subr.mxu0 0.0
    %4004 = vmatpush1.msra.mxu0 %v3992
    %4005 = vmatprep.subr.mxu0 0.0
    %4006 = vmatpush1.msra.mxu0 %v3993
    %4007 = vmatprep.subr.mxu0 0.0
    %4008 = vmatpush1.msra.mxu0 0.0
    %4009 = vmatprep.subr.mxu0 0.0
    %4010 = vmatpush1.msra.mxu0 0.0
    %4011 = vmatprep.subr.mxu0 0.0
    %4012 = vmatpush1.msra.mxu0 0.0
    %4013 = vmatprep.subr.mxu0 0.0
    %4014 = vmatpush1.msra.mxu0 0.0
    %4015 = vmatprep.subr.mxu0 0.0
    %4016 = vmatpush1.msra.mxu0 0.0
    %4017 = vmatprep.subr.mxu0 0.0
    %4018 = vmatpush1.msra.mxu0 0.0
    %4019 = vmatprep.subr.mxu0 0.0
    %4020 = vmatpush1.msra.mxu0 0.0
    %4021 = vmatprep.subr.mxu0 0.0
    %4022 = vmatpush1.msra.mxu0 0.0
    %4023 = vmatprep.subr.mxu0 0.0
    %4024 = vmatpush1.msra.mxu0 0.0
    %4025 = vmatprep.subr.mxu0 0.0
    %4026 = vmatpush1.msra.mxu0 0.0
    %4027 = vmatprep.subr.mxu0 0.0
    %4028 = vmatpush1.msra.mxu0 0.0
    %4029 = vmatprep.subr.mxu0 0.0
    %4030 = vmatpush1.msra.mxu0 0.0
    %4031 = vmatprep.subr.mxu0 0.0
    %4032 = vmatpush1.msra.mxu0 0.0
    %4033 = vmatprep.subr.mxu0 0.0
    %4034 = vmatpush1.msra.mxu0 0.0
    %4035 = vmatprep.subr.mxu0 0.0
    %4036 = vmatpush1.msra.mxu0 0.0
    %4037 = vmatprep.subr.mxu0 0.0
    %4038 = vmatpush1.msra.mxu0 0.0
    %4039 = vmatprep.subr.mxu0 0.0
    %4040 = vmatpush1.msra.mxu0 0.0
    %4041 = vmatprep.subr.mxu0 0.0
    %4042 = vmatpush1.msra.mxu0 0.0
    %4043 = vmatprep.subr.mxu0 0.0
    %4044 = vmatpush1.msra.mxu0 0.0
    %4045 = vmatprep.subr.mxu0 0.0
    %4046 = vmatpush1.msra.mxu0 0.0
    %4047 = vmatprep.subr.mxu0 0.0
    %4048 = vmatpush1.msra.mxu0 0.0
    %4049 = vmatprep.subr.mxu0 0.0
    %4050 = vmatpush1.msra.mxu0 0.0
    %4051 = vmatprep.subr.mxu0 0.0
    %4052 = vmatpush1.msra.mxu0 0.0
    %4053 = vmatprep.subr.mxu0 0.0
    %4054 = vmatpush1.msra.mxu0 0.0
    %4055 = vmatprep.subr.mxu0 0.0
    %4056 = vmatpush1.msra.mxu0 0.0
    %4057 = vmatprep.subr.mxu0 0.0
    %4058 = vmatpush1.msra.mxu0 0.0
    %4059 = vmatprep.subr.mxu0 0.0
    %4060 = vmatpush1.msra.mxu0 0.0
    %4061 = vmatprep.subr.mxu0 0.0
    %4062 = vmatpush1.msra.mxu0 0.0
    %4063 = vmatprep.subr.mxu0 0.0
    %4064 = vmatpush1.msra.mxu0 0.0
    %4065 = vmatprep.subr.mxu0 0.0
    %4066 = vmatpush1.msra.mxu0 0.0
    %4067 = vmatprep.mubr.f32.mxu0 0.0
    %4068 = vmatmul.mubr.f32.gmra.mrb[0].mxu0 %v4001
    %v4069 = vpop.f32.mrb[0].mxu0
    %v4070 = vadd.f32 %v3998, %v4069
    %v4071 = vpop.f32.mrb[0].mxu0
    %4072 = vdwg.mxu0
    %v4073 = vmax.f32 %v4070, 0.0
    %v4074 = vld [vmem:[%s59] sm:$0xf]
    %v4076 = vsel %vm2914, %v4073, 0
    %v4079 = vsel %vm2097, %v4074, 0
    %4081 = vmatprep.subr.mxu0 0.0
    %4082 = vmatpush1.msra.mxu0 %v4079
    %4083 = vmatprep.subr.mxu0 0.0
    %4084 = vmatpush1.msra.mxu0 0.0
    %4085 = vmatprep.subr.mxu0 0.0
    %4086 = vmatpush1.msra.mxu0 0.0
    %4087 = vmatprep.subr.mxu0 0.0
    %4088 = vmatpush1.msra.mxu0 0.0
    %4089 = vmatprep.subr.mxu0 0.0
    %4090 = vmatpush1.msra.mxu0 0.0
    %4091 = vmatprep.subr.mxu0 0.0
    %4092 = vmatpush1.msra.mxu0 0.0
    %4093 = vmatprep.subr.mxu0 0.0
    %4094 = vmatpush1.msra.mxu0 0.0
    %4095 = vmatprep.subr.mxu0 0.0
    %4096 = vmatpush1.msra.mxu0 0.0
    %4097 = vmatprep.subr.mxu0 0.0
    %4098 = vmatpush1.msra.mxu0 0.0
    %4099 = vmatprep.subr.mxu0 0.0
    %4100 = vmatpush1.msra.mxu0 0.0
    %4101 = vmatprep.subr.mxu0 0.0
    %4102 = vmatpush1.msra.mxu0 0.0
    %4103 = vmatprep.subr.mxu0 0.0
    %4104 = vmatpush1.msra.mxu0 0.0
    %4105 = vmatprep.subr.mxu0 0.0
    %4106 = vmatpush1.msra.mxu0 0.0
    %4107 = vmatprep.subr.mxu0 0.0
    %4108 = vmatpush1.msra.mxu0 0.0
    %4109 = vmatprep.subr.mxu0 0.0
    %4110 = vmatpush1.msra.mxu0 0.0
    %4111 = vmatprep.subr.mxu0 0.0
    %4112 = vmatpush1.msra.mxu0 0.0
    %4113 = vmatprep.subr.mxu0 0.0
    %4114 = vmatpush1.msra.mxu0 0.0
    %4115 = vmatprep.subr.mxu0 0.0
    %4116 = vmatpush1.msra.mxu0 0.0
    %4117 = vmatprep.subr.mxu0 0.0
    %4118 = vmatpush1.msra.mxu0 0.0
    %4119 = vmatprep.subr.mxu0 0.0
    %4120 = vmatpush1.msra.mxu0 0.0
    %4121 = vmatprep.subr.mxu0 0.0
    %4122 = vmatpush1.msra.mxu0 0.0
    %4123 = vmatprep.subr.mxu0 0.0
    %4124 = vmatpush1.msra.mxu0 0.0
    %4125 = vmatprep.subr.mxu0 0.0
    %4126 = vmatpush1.msra.mxu0 0.0
    %4127 = vmatprep.subr.mxu0 0.0
    %4128 = vmatpush1.msra.mxu0 0.0
    %4129 = vmatprep.subr.mxu0 0.0
    %4130 = vmatpush1.msra.mxu0 0.0
    %4131 = vmatprep.subr.mxu0 0.0
    %4132 = vmatpush1.msra.mxu0 0.0
    %4133 = vmatprep.subr.mxu0 0.0
    %4134 = vmatpush1.msra.mxu0 0.0
    %4135 = vmatprep.subr.mxu0 0.0
    %4136 = vmatpush1.msra.mxu0 0.0
    %4137 = vmatprep.subr.mxu0 0.0
    %4138 = vmatpush1.msra.mxu0 0.0
    %4139 = vmatprep.subr.mxu0 0.0
    %4140 = vmatpush1.msra.mxu0 0.0
    %4141 = vmatprep.subr.mxu0 0.0
    %4142 = vmatpush1.msra.mxu0 0.0
    %4143 = vmatprep.subr.mxu0 0.0
    %4144 = vmatpush1.msra.mxu0 0.0
    %4145 = vmatprep.mubr.f32.mxu0 0.0
    %4146 = vmatmul.mubr.f32.gmra.mrb[0].mxu0 %v4076
    %v4147 = vpop.f32.mrb[0].mxu0
    %v4148 = vadd.f32 0.0, %v4147
    %v4149 = vpop.f32.mrb[0].mxu0
    %4150 = vdwg.mxu0
    %v4151 = vld [vmem:[%s27] sm:$0xf]
    %v4152 = vld [vmem:[%s27 + $0x4] sm:$0xf]
    %v4153 = vld [vmem:[%s27 + $0x8] sm:$0xf]
    %v4154 = vld [vmem:[%s27 + $0xc] sm:$0xf]
    %v4155 = vld [vmem:[%s27 + $0x10] sm:$0xf]
    %v4156 = vld [vmem:[%s27 + $0x14] sm:$0xf]
    %v4157 = vld [vmem:[%s27 + $0x18] sm:$0xf]
    %v4158 = vld [vmem:[%s27 + $0x1c] sm:$0xf]
    %v4159 = vld [vmem:[%s27 + $0x20] sm:$0xf]
    %v4160 = vld [vmem:[%s31] sm:$0xff]
    %v4161 = vld [vmem:[%s31 + $0x8] sm:$0x1]
    %4163 = vrot.lane.b32.xlu0 %v4148, 115
    %v4164 = vpop.permute.xlu0 %4163
    %4166 = vrot.lane.b32.xlu0 %v4148, 3
    %v4167 = vpop.permute.xlu0 %4166
    %v4169 = vsel %vm2975, %v4164, %v4167
    %v4170 = vpack.c.bf16 %v4169, %v4169
    %v4172 = vsel %vm2093, %v4151, 0
    %v4175 = vsel %vm2097, %v4170, 0
    %4177 = vmatprep.subr.bf16.mxu0 0
    %4178 = vmatpush1.bf16.msra.mxu0 %v4175
    %4179 = vmatprep.subr.bf16.mxu0 0
    %4180 = vmatpush1.bf16.msra.mxu0 0
    %4181 = vmatprep.subr.bf16.mxu0 0
    %4182 = vmatpush1.bf16.msra.mxu0 0
    %4183 = vmatprep.subr.bf16.mxu0 0
    %4184 = vmatpush1.bf16.msra.mxu0 0
    %4185 = vmatprep.subr.bf16.mxu0 0
    %4186 = vmatpush1.bf16.msra.mxu0 0
    %4187 = vmatprep.subr.bf16.mxu0 0
    %4188 = vmatpush1.bf16.msra.mxu0 0
    %4189 = vmatprep.subr.bf16.mxu0 0
    %4190 = vmatpush1.bf16.msra.mxu0 0
    %4191 = vmatprep.subr.bf16.mxu0 0
    %4192 = vmatpush1.bf16.msra.mxu0 0
    %4193 = vmatprep.subr.bf16.mxu0 0
    %4194 = vmatpush1.bf16.msra.mxu0 0
    %4195 = vmatprep.subr.bf16.mxu0 0
    %4196 = vmatpush1.bf16.msra.mxu0 0
    %4197 = vmatprep.subr.bf16.mxu0 0
    %4198 = vmatpush1.bf16.msra.mxu0 0
    %4199 = vmatprep.subr.bf16.mxu0 0
    %4200 = vmatpush1.bf16.msra.mxu0 0
    %4201 = vmatprep.subr.bf16.mxu0 0
    %4202 = vmatpush1.bf16.msra.mxu0 0
    %4203 = vmatprep.subr.bf16.mxu0 0
    %4204 = vmatpush1.bf16.msra.mxu0 0
    %4205 = vmatprep.subr.bf16.mxu0 0
    %4206 = vmatpush1.bf16.msra.mxu0 0
    %4207 = vmatprep.subr.bf16.mxu0 0
    %4208 = vmatpush1.bf16.msra.mxu0 0
    %4209 = vmatprep.mubr.bf16.mxu0 0
    %4210 = vmatmul.mubr.bf16.gmra.mrb[0].mxu0 %v4172
    %v4211 = vpop.f32.mrb[0].mxu0
    %v4212 = vadd.f32 0.0, %v4211
    %v4213 = vpop.f32.mrb[0].mxu0
    %v4214 = vpop.f32.mrb[0].mxu0
    %v4215 = vpop.f32.mrb[0].mxu0
    %4216 = vdwg.mxu0
    %v4217 = vlaneseq
    %v4218 = vshrl.u32 %v4217, 7
    %v4219 = vsub.s32 0, %v4218
    %v4220 = vrot.slane %v4160, %v4219
    %v4221 = vmul.f32 %v4212, %v4220
    %v4222 = vadd.f32 %v4221, 0.0
    %4223 = vrot.lane.b32.xlu0 %v4148, 114
    %v4224 = vpop.permute.xlu0 %4223
    %4226 = vrot.lane.b32.xlu0 %v4148, 2
    %v4227 = vpop.permute.xlu0 %4226
    %v4229 = vsel %vm3549, %v4224, %v4227
    %v4230 = vpack.c.bf16 %v4229, %v4229
    %v4232 = vsel %vm2093, %v4152, 0
    %v4235 = vsel %vm2097, %v4230, 0
    %4237 = vmatprep.subr.bf16.mxu0 0
    %4238 = vmatpush1.bf16.msra.mxu0 %v4235
    %4239 = vmatprep.subr.bf16.mxu0 0
    %4240 = vmatpush1.bf16.msra.mxu0 0
    %4241 = vmatprep.subr.bf16.mxu0 0
    %4242 = vmatpush1.bf16.msra.mxu0 0
    %4243 = vmatprep.subr.bf16.mxu0 0
    %4244 = vmatpush1.bf16.msra.mxu0 0
    %4245 = vmatprep.subr.bf16.mxu0 0
    %4246 = vmatpush1.bf16.msra.mxu0 0
    %4247 = vmatprep.subr.bf16.mxu0 0
    %4248 = vmatpush1.bf16.msra.mxu0 0
    %4249 = vmatprep.subr.bf16.mxu0 0
    %4250 = vmatpush1.bf16.msra.mxu0 0
    %4251 = vmatprep.subr.bf16.mxu0 0
    %4252 = vmatpush1.bf16.msra.mxu0 0
    %4253 = vmatprep.subr.bf16.mxu0 0
    %4254 = vmatpush1.bf16.msra.mxu0 0
    %4255 = vmatprep.subr.bf16.mxu0 0
    %4256 = vmatpush1.bf16.msra.mxu0 0
    %4257 = vmatprep.subr.bf16.mxu0 0
    %4258 = vmatpush1.bf16.msra.mxu0 0
    %4259 = vmatprep.subr.bf16.mxu0 0
    %4260 = vmatpush1.bf16.msra.mxu0 0
    %4261 = vmatprep.subr.bf16.mxu0 0
    %4262 = vmatpush1.bf16.msra.mxu0 0
    %4263 = vmatprep.subr.bf16.mxu0 0
    %4264 = vmatpush1.bf16.msra.mxu0 0
    %4265 = vmatprep.subr.bf16.mxu0 0
    %4266 = vmatpush1.bf16.msra.mxu0 0
    %4267 = vmatprep.subr.bf16.mxu0 0
    %4268 = vmatpush1.bf16.msra.mxu0 0
    %4269 = vmatprep.mubr.bf16.mxu0 0
    %4270 = vmatmul.mubr.bf16.gmra.mrb[0].mxu0 %v4232
    %v4271 = vpop.f32.mrb[0].mxu0
    %v4272 = vadd.f32 0.0, %v4271
    %v4273 = vpop.f32.mrb[0].mxu0
    %v4274 = vpop.f32.mrb[0].mxu0
    %v4275 = vpop.f32.mrb[0].mxu0
    %4276 = vdwg.mxu0
    %v4277 = vlaneseq
    %v4278 = vshrl.u32 %v4277, 7
    %v4279 = vsub.s32 1, %v4278
    %v4280 = vrot.slane %v4160, %v4279
    %v4281 = vmul.f32 %v4272, %v4280
    %v4282 = vadd.f32 %v4222, %v4281
    %4283 = vrot.lane.b32.xlu0 %v4148, 113
    %v4284 = vpop.permute.xlu0 %4283
    %4286 = vrot.lane.b32.xlu0 %v4148, 1
    %v4287 = vpop.permute.xlu0 %4286
    %v4289 = vsel %vm797, %v4284, %v4287
    %v4290 = vpack.c.bf16 %v4289, %v4289
    %v4292 = vsel %vm2093, %v4153, 0
    %v4295 = vsel %vm2097, %v4290, 0
    %4297 = vmatprep.subr.bf16.mxu0 0
    %4298 = vmatpush1.bf16.msra.mxu0 %v4295
    %4299 = vmatprep.subr.bf16.mxu0 0
    %4300 = vmatpush1.bf16.msra.mxu0 0
    %4301 = vmatprep.subr.bf16.mxu0 0
    %4302 = vmatpush1.bf16.msra.mxu0 0
    %4303 = vmatprep.subr.bf16.mxu0 0
    %4304 = vmatpush1.bf16.msra.mxu0 0
    %4305 = vmatprep.subr.bf16.mxu0 0
    %4306 = vmatpush1.bf16.msra.mxu0 0
    %4307 = vmatprep.subr.bf16.mxu0 0
    %4308 = vmatpush1.bf16.msra.mxu0 0
    %4309 = vmatprep.subr.bf16.mxu0 0
    %4310 = vmatpush1.bf16.msra.mxu0 0
    %4311 = vmatprep.subr.bf16.mxu0 0
    %4312 = vmatpush1.bf16.msra.mxu0 0
    %4313 = vmatprep.subr.bf16.mxu0 0
    %4314 = vmatpush1.bf16.msra.mxu0 0
    %4315 = vmatprep.subr.bf16.mxu0 0
    %4316 = vmatpush1.bf16.msra.mxu0 0
    %4317 = vmatprep.subr.bf16.mxu0 0
    %4318 = vmatpush1.bf16.msra.mxu0 0
    %4319 = vmatprep.subr.bf16.mxu0 0
    %4320 = vmatpush1.bf16.msra.mxu0 0
    %4321 = vmatprep.subr.bf16.mxu0 0
    %4322 = vmatpush1.bf16.msra.mxu0 0
    %4323 = vmatprep.subr.bf16.mxu0 0
    %4324 = vmatpush1.bf16.msra.mxu0 0
    %4325 = vmatprep.subr.bf16.mxu0 0
    %4326 = vmatpush1.bf16.msra.mxu0 0
    %4327 = vmatprep.subr.bf16.mxu0 0
    %4328 = vmatpush1.bf16.msra.mxu0 0
    %4329 = vmatprep.mubr.bf16.mxu0 0
    %4330 = vmatmul.mubr.bf16.gmra.mrb[0].mxu0 %v4292
    %v4331 = vpop.f32.mrb[0].mxu0
    %v4332 = vadd.f32 0.0, %v4331
    %v4333 = vpop.f32.mrb[0].mxu0
    %v4334 = vpop.f32.mrb[0].mxu0
    %v4335 = vpop.f32.mrb[0].mxu0
    %4336 = vdwg.mxu0
    %v4337 = vlaneseq
    %v4338 = vshrl.u32 %v4337, 7
    %v4339 = vsub.s32 2, %v4338
    %v4340 = vrot.slane %v4160, %v4339
    %v4341 = vmul.f32 %v4332, %v4340
    %v4342 = vadd.f32 %v4282, %v4341
    %v4344 = vsel %vm2093, %v4154, 0
    %4346 = vmatprep.subr.bf16.mxu0 0
    %4347 = vmatpush1.bf16.msra.mxu0 %v4295
    %4348 = vmatprep.subr.bf16.mxu0 0
    %4349 = vmatpush1.bf16.msra.mxu0 0
    %4350 = vmatprep.subr.bf16.mxu0 0
    %4351 = vmatpush1.bf16.msra.mxu0 0
    %4352 = vmatprep.subr.bf16.mxu0 0
    %4353 = vmatpush1.bf16.msra.mxu0 0
    %4354 = vmatprep.subr.bf16.mxu0 0
    %4355 = vmatpush1.bf16.msra.mxu0 0
    %4356 = vmatprep.subr.bf16.mxu0 0
    %4357 = vmatpush1.bf16.msra.mxu0 0
    %4358 = vmatprep.subr.bf16.mxu0 0
    %4359 = vmatpush1.bf16.msra.mxu0 0
    %4360 = vmatprep.subr.bf16.mxu0 0
    %4361 = vmatpush1.bf16.msra.mxu0 0
    %4362 = vmatprep.subr.bf16.mxu0 0
    %4363 = vmatpush1.bf16.msra.mxu0 0
    %4364 = vmatprep.subr.bf16.mxu0 0
    %4365 = vmatpush1.bf16.msra.mxu0 0
    %4366 = vmatprep.subr.bf16.mxu0 0
    %4367 = vmatpush1.bf16.msra.mxu0 0
    %4368 = vmatprep.subr.bf16.mxu0 0
    %4369 = vmatpush1.bf16.msra.mxu0 0
    %4370 = vmatprep.subr.bf16.mxu0 0
    %4371 = vmatpush1.bf16.msra.mxu0 0
    %4372 = vmatprep.subr.bf16.mxu0 0
    %4373 = vmatpush1.bf16.msra.mxu0 0
    %4374 = vmatprep.subr.bf16.mxu0 0
    %4375 = vmatpush1.bf16.msra.mxu0 0
    %4376 = vmatprep.subr.bf16.mxu0 0
    %4377 = vmatpush1.bf16.msra.mxu0 0
    %4378 = vmatprep.mubr.bf16.mxu0 0
    %4379 = vmatmul.mubr.bf16.gmra.mrb[0].mxu0 %v4344
    %v4380 = vpop.f32.mrb[0].mxu0
    %v4381 = vadd.f32 0.0, %v4380
    %v4382 = vpop.f32.mrb[0].mxu0
    %v4383 = vpop.f32.mrb[0].mxu0
    %v4384 = vpop.f32.mrb[0].mxu0
    %4385 = vdwg.mxu0
    %v4386 = vlaneseq
    %v4387 = vshrl.u32 %v4386, 7
    %v4388 = vsub.s32 3, %v4387
    %v4389 = vrot.slane %v4160, %v4388
    %v4390 = vmul.f32 %v4381, %v4389
    %v4391 = vadd.f32 %v4342, %v4390
    %v4392 = vpack.c.bf16 %v4148, %v4148
    %v4394 = vsel %vm2093, %v4155, 0
    %v4397 = vsel %vm2097, %v4392, 0
    %4399 = vmatprep.subr.bf16.mxu0 0
    %4400 = vmatpush1.bf16.msra.mxu0 %v4397
    %4401 = vmatprep.subr.bf16.mxu0 0
    %4402 = vmatpush1.bf16.msra.mxu0 0
    %4403 = vmatprep.subr.bf16.mxu0 0
    %4404 = vmatpush1.bf16.msra.mxu0 0
    %4405 = vmatprep.subr.bf16.mxu0 0
    %4406 = vmatpush1.bf16.msra.mxu0 0
    %4407 = vmatprep.subr.bf16.mxu0 0
    %4408 = vmatpush1.bf16.msra.mxu0 0
    %4409 = vmatprep.subr.bf16.mxu0 0
    %4410 = vmatpush1.bf16.msra.mxu0 0
    %4411 = vmatprep.subr.bf16.mxu0 0
    %4412 = vmatpush1.bf16.msra.mxu0 0
    %4413 = vmatprep.subr.bf16.mxu0 0
    %4414 = vmatpush1.bf16.msra.mxu0 0
    %4415 = vmatprep.subr.bf16.mxu0 0
    %4416 = vmatpush1.bf16.msra.mxu0 0
    %4417 = vmatprep.subr.bf16.mxu0 0
    %4418 = vmatpush1.bf16.msra.mxu0 0
    %4419 = vmatprep.subr.bf16.mxu0 0
    %4420 = vmatpush1.bf16.msra.mxu0 0
    %4421 = vmatprep.subr.bf16.mxu0 0
    %4422 = vmatpush1.bf16.msra.mxu0 0
    %4423 = vmatprep.subr.bf16.mxu0 0
    %4424 = vmatpush1.bf16.msra.mxu0 0
    %4425 = vmatprep.subr.bf16.mxu0 0
    %4426 = vmatpush1.bf16.msra.mxu0 0
    %4427 = vmatprep.subr.bf16.mxu0 0
    %4428 = vmatpush1.bf16.msra.mxu0 0
    %4429 = vmatprep.subr.bf16.mxu0 0
    %4430 = vmatpush1.bf16.msra.mxu0 0
    %4431 = vmatprep.mubr.bf16.mxu0 0
    %4432 = vmatmul.mubr.bf16.gmra.mrb[0].mxu0 %v4394
    %v4433 = vpop.f32.mrb[0].mxu0
    %v4434 = vadd.f32 0.0, %v4433
    %v4435 = vpop.f32.mrb[0].mxu0
    %v4436 = vpop.f32.mrb[0].mxu0
    %v4437 = vpop.f32.mrb[0].mxu0
    %4438 = vdwg.mxu0
    %v4439 = vadd.f32 %v4391, %v4434
    %4440 = vrot.lane.b32.xlu0 %v4148, 127
    %v4441 = vpop.permute.xlu0 %4440
    %4443 = vrot.lane.b32.xlu0 %v4148, 15
    %v4444 = vpop.permute.xlu0 %4443
    %v4446 = vsel %vm611, %v4441, %v4444
    %v4447 = vpack.c.bf16 %v4446, %v4446
    %v4449 = vsel %vm2093, %v4156, 0
    %v4452 = vsel %vm2097, %v4447, 0
    %4454 = vmatprep.subr.bf16.mxu0 0
    %4455 = vmatpush1.bf16.msra.mxu0 %v4452
    %4456 = vmatprep.subr.bf16.mxu0 0
    %4457 = vmatpush1.bf16.msra.mxu0 0
    %4458 = vmatprep.subr.bf16.mxu0 0
    %4459 = vmatpush1.bf16.msra.mxu0 0
    %4460 = vmatprep.subr.bf16.mxu0 0
    %4461 = vmatpush1.bf16.msra.mxu0 0
    %4462 = vmatprep.subr.bf16.mxu0 0
    %4463 = vmatpush1.bf16.msra.mxu0 0
    %4464 = vmatprep.subr.bf16.mxu0 0
    %4465 = vmatpush1.bf16.msra.mxu0 0
    %4466 = vmatprep.subr.bf16.mxu0 0
    %4467 = vmatpush1.bf16.msra.mxu0 0
    %4468 = vmatprep.subr.bf16.mxu0 0
    %4469 = vmatpush1.bf16.msra.mxu0 0
    %4470 = vmatprep.subr.bf16.mxu0 0
    %4471 = vmatpush1.bf16.msra.mxu0 0
    %4472 = vmatprep.subr.bf16.mxu0 0
    %4473 = vmatpush1.bf16.msra.mxu0 0
    %4474 = vmatprep.subr.bf16.mxu0 0
    %4475 = vmatpush1.bf16.msra.mxu0 0
    %4476 = vmatprep.subr.bf16.mxu0 0
    %4477 = vmatpush1.bf16.msra.mxu0 0
    %4478 = vmatprep.subr.bf16.mxu0 0
    %4479 = vmatpush1.bf16.msra.mxu0 0
    %4480 = vmatprep.subr.bf16.mxu0 0
    %4481 = vmatpush1.bf16.msra.mxu0 0
    %4482 = vmatprep.subr.bf16.mxu0 0
    %4483 = vmatpush1.bf16.msra.mxu0 0
    %4484 = vmatprep.subr.bf16.mxu0 0
    %4485 = vmatpush1.bf16.msra.mxu0 0
    %4486 = vmatprep.mubr.bf16.mxu0 0
    %4487 = vmatmul.mubr.bf16.gmra.mrb[0].mxu0 %v4449
    %v4488 = vpop.f32.mrb[0].mxu0
    %v4489 = vadd.f32 0.0, %v4488
    %v4490 = vpop.f32.mrb[0].mxu0
    %v4491 = vpop.f32.mrb[0].mxu0
    %v4492 = vpop.f32.mrb[0].mxu0
    %4493 = vdwg.mxu0
    %v4494 = vlaneseq
    %v4495 = vshrl.u32 %v4494, 7
    %v4496 = vsub.s32 5, %v4495
    %v4497 = vrot.slane %v4160, %v4496
    %v4498 = vmul.f32 %v4489, %v4497
    %v4499 = vadd.f32 %v4439, %v4498
    %v4501 = vsel %vm2093, %v4157, 0
    %4503 = vmatprep.subr.bf16.mxu0 0
    %4504 = vmatpush1.bf16.msra.mxu0 %v4452
    %4505 = vmatprep.subr.bf16.mxu0 0
    %4506 = vmatpush1.bf16.msra.mxu0 0
    %4507 = vmatprep.subr.bf16.mxu0 0
    %4508 = vmatpush1.bf16.msra.mxu0 0
    %4509 = vmatprep.subr.bf16.mxu0 0
    %4510 = vmatpush1.bf16.msra.mxu0 0
    %4511 = vmatprep.subr.bf16.mxu0 0
    %4512 = vmatpush1.bf16.msra.mxu0 0
    %4513 = vmatprep.subr.bf16.mxu0 0
    %4514 = vmatpush1.bf16.msra.mxu0 0
    %4515 = vmatprep.subr.bf16.mxu0 0
    %4516 = vmatpush1.bf16.msra.mxu0 0
    %4517 = vmatprep.subr.bf16.mxu0 0
    %4518 = vmatpush1.bf16.msra.mxu0 0
    %4519 = vmatprep.subr.bf16.mxu0 0
    %4520 = vmatpush1.bf16.msra.mxu0 0
    %4521 = vmatprep.subr.bf16.mxu0 0
    %4522 = vmatpush1.bf16.msra.mxu0 0
    %4523 = vmatprep.subr.bf16.mxu0 0
    %4524 = vmatpush1.bf16.msra.mxu0 0
    %4525 = vmatprep.subr.bf16.mxu0 0
    %4526 = vmatpush1.bf16.msra.mxu0 0
    %4527 = vmatprep.subr.bf16.mxu0 0
    %4528 = vmatpush1.bf16.msra.mxu0 0
    %4529 = vmatprep.subr.bf16.mxu0 0
    %4530 = vmatpush1.bf16.msra.mxu0 0
    %4531 = vmatprep.subr.bf16.mxu0 0
    %4532 = vmatpush1.bf16.msra.mxu0 0
    %4533 = vmatprep.subr.bf16.mxu0 0
    %4534 = vmatpush1.bf16.msra.mxu0 0
    %4535 = vmatprep.mubr.bf16.mxu0 0
    %4536 = vmatmul.mubr.bf16.gmra.mrb[0].mxu0 %v4501
    %v4537 = vpop.f32.mrb[0].mxu0
    %v4538 = vadd.f32 0.0, %v4537
    %v4539 = vpop.f32.mrb[0].mxu0
    %v4540 = vpop.f32.mrb[0].mxu0
    %v4541 = vpop.f32.mrb[0].mxu0
    %4542 = vdwg.mxu0
    %v4543 = vlaneseq
    %v4544 = vshrl.u32 %v4543, 7
    %v4545 = vsub.s32 6, %v4544
    %v4546 = vrot.slane %v4160, %v4545
    %v4547 = vmul.f32 %v4538, %v4546
    %v4548 = vadd.f32 %v4499, %v4547
    %4549 = vrot.lane.b32.xlu0 %v4148, 126
    %v4550 = vpop.permute.xlu0 %4549
    %4552 = vrot.lane.b32.xlu0 %v4148, 14
    %v4553 = vpop.permute.xlu0 %4552
    %v4555 = vsel %vm3876, %v4550, %v4553
    %v4556 = vpack.c.bf16 %v4555, %v4555
    %v4558 = vsel %vm2093, %v4158, 0
    %v4561 = vsel %vm2097, %v4556, 0
    %4563 = vmatprep.subr.bf16.mxu0 0
    %4564 = vmatpush1.bf16.msra.mxu0 %v4561
    %4565 = vmatprep.subr.bf16.mxu0 0
    %4566 = vmatpush1.bf16.msra.mxu0 0
    %4567 = vmatprep.subr.bf16.mxu0 0
    %4568 = vmatpush1.bf16.msra.mxu0 0
    %4569 = vmatprep.subr.bf16.mxu0 0
    %4570 = vmatpush1.bf16.msra.mxu0 0
    %4571 = vmatprep.subr.bf16.mxu0 0
    %4572 = vmatpush1.bf16.msra.mxu0 0
    %4573 = vmatprep.subr.bf16.mxu0 0
    %4574 = vmatpush1.bf16.msra.mxu0 0
    %4575 = vmatprep.subr.bf16.mxu0 0
    %4576 = vmatpush1.bf16.msra.mxu0 0
    %4577 = vmatprep.subr.bf16.mxu0 0
    %4578 = vmatpush1.bf16.msra.mxu0 0
    %4579 = vmatprep.subr.bf16.mxu0 0
    %4580 = vmatpush1.bf16.msra.mxu0 0
    %4581 = vmatprep.subr.bf16.mxu0 0
    %4582 = vmatpush1.bf16.msra.mxu0 0
    %4583 = vmatprep.subr.bf16.mxu0 0
    %4584 = vmatpush1.bf16.msra.mxu0 0
    %4585 = vmatprep.subr.bf16.mxu0 0
    %4586 = vmatpush1.bf16.msra.mxu0 0
    %4587 = vmatprep.subr.bf16.mxu0 0
    %4588 = vmatpush1.bf16.msra.mxu0 0
    %4589 = vmatprep.subr.bf16.mxu0 0
    %4590 = vmatpush1.bf16.msra.mxu0 0
    %4591 = vmatprep.subr.bf16.mxu0 0
    %4592 = vmatpush1.bf16.msra.mxu0 0
    %4593 = vmatprep.subr.bf16.mxu0 0
    %4594 = vmatpush1.bf16.msra.mxu0 0
    %4595 = vmatprep.mubr.bf16.mxu0 0
    %4596 = vmatmul.mubr.bf16.gmra.mrb[0].mxu0 %v4558
    %v4597 = vpop.f32.mrb[0].mxu0
    %v4598 = vadd.f32 0.0, %v4597
    %v4599 = vpop.f32.mrb[0].mxu0
    %v4600 = vpop.f32.mrb[0].mxu0
    %v4601 = vpop.f32.mrb[0].mxu0
    %4602 = vdwg.mxu0
    %v4603 = vlaneseq
    %v4604 = vshrl.u32 %v4603, 7
    %v4605 = vsub.s32 7, %v4604
    %v4606 = vrot.slane %v4160, %v4605
    %v4607 = vmul.f32 %v4598, %v4606
    %v4608 = vadd.f32 %v4548, %v4607
    %4609 = vrot.lane.b32.xlu0 %v4148, 125
    %v4610 = vpop.permute.xlu0 %4609
    %4612 = vrot.lane.b32.xlu0 %v4148, 13
    %v4613 = vpop.permute.xlu0 %4612
    %v4615 = vsel %vm3937, %v4610, %v4613
    %v4616 = vpack.c.bf16 %v4615, %v4615
    %v4618 = vsel %vm2093, %v4159, 0
    %v4621 = vsel %vm2097, %v4616, 0
    %4623 = vmatprep.subr.bf16.mxu0 0
    %4624 = vmatpush1.bf16.msra.mxu0 %v4621
    %4625 = vmatprep.subr.bf16.mxu0 0
    %4626 = vmatpush1.bf16.msra.mxu0 0
    %4627 = vmatprep.subr.bf16.mxu0 0
    %4628 = vmatpush1.bf16.msra.mxu0 0
    %4629 = vmatprep.subr.bf16.mxu0 0
    %4630 = vmatpush1.bf16.msra.mxu0 0
    %4631 = vmatprep.subr.bf16.mxu0 0
    %4632 = vmatpush1.bf16.msra.mxu0 0
    %4633 = vmatprep.subr.bf16.mxu0 0
    %4634 = vmatpush1.bf16.msra.mxu0 0
    %4635 = vmatprep.subr.bf16.mxu0 0
    %4636 = vmatpush1.bf16.msra.mxu0 0
    %4637 = vmatprep.subr.bf16.mxu0 0
    %4638 = vmatpush1.bf16.msra.mxu0 0
    %4639 = vmatprep.subr.bf16.mxu0 0
    %4640 = vmatpush1.bf16.msra.mxu0 0
    %4641 = vmatprep.subr.bf16.mxu0 0
    %4642 = vmatpush1.bf16.msra.mxu0 0
    %4643 = vmatprep.subr.bf16.mxu0 0
    %4644 = vmatpush1.bf16.msra.mxu0 0
    %4645 = vmatprep.subr.bf16.mxu0 0
    %4646 = vmatpush1.bf16.msra.mxu0 0
    %4647 = vmatprep.subr.bf16.mxu0 0
    %4648 = vmatpush1.bf16.msra.mxu0 0
    %4649 = vmatprep.subr.bf16.mxu0 0
    %4650 = vmatpush1.bf16.msra.mxu0 0
    %4651 = vmatprep.subr.bf16.mxu0 0
    %4652 = vmatpush1.bf16.msra.mxu0 0
    %4653 = vmatprep.subr.bf16.mxu0 0
    %4654 = vmatpush1.bf16.msra.mxu0 0
    %4655 = vmatprep.mubr.bf16.mxu0 0
    %4656 = vmatmul.mubr.bf16.gmra.mrb[0].mxu0 %v4618
    %v4657 = vpop.f32.mrb[0].mxu0
    %v4658 = vadd.f32 0.0, %v4657
    %v4659 = vpop.f32.mrb[0].mxu0
    %v4660 = vpop.f32.mrb[0].mxu0
    %v4661 = vpop.f32.mrb[0].mxu0
    %4662 = vdwg.mxu0
    %v4663 = vlaneseq
    %v4664 = vshrl.u32 %v4663, 7
    %v4665 = vsub.s32 0, %v4664
    %v4666 = vrot.slane %v4161, %v4665
    %v4667 = vmul.f32 %v4658, %v4666
    %v4668 = vadd.f32 %v4608, %v4667
    %v4669 = vld [vmem:[%s29] sm:$0xff]
    %4671 = vset.pattern.permute.xlu0 0
    %4672 = vperm.xlu0 %4671, %v4669
    %v4673 = vpop.permute.xlu0 %4672
    %v4675 = vadd.f32 %v4668, %v4673
    %v4676 = vmax.f32 %v4675, 0.0
    %v4677 = vadd.f32 %v4676, %v3470
    %v4678 = vld [vmem:[%s61] sm:$0xff]
    %v4679 = vld [vmem:[%s61 + $0x8] sm:$0xff]
    %v4681 = vsel %vm425, %v4677, 0
    %4683 = vmatprep.subr.mxu0 0.0
    %4684 = vmatpush1.msra.mxu0 %v4678
    %4685 = vmatprep.subr.mxu0 0.0
    %4686 = vmatpush1.msra.mxu0 %v4679
    %4687 = vmatprep.subr.mxu0 0.0
    %4688 = vmatpush1.msra.mxu0 0.0
    %4689 = vmatprep.subr.mxu0 0.0
    %4690 = vmatpush1.msra.mxu0 0.0
    %4691 = vmatprep.subr.mxu0 0.0
    %4692 = vmatpush1.msra.mxu0 0.0
    %4693 = vmatprep.subr.mxu0 0.0
    %4694 = vmatpush1.msra.mxu0 0.0
    %4695 = vmatprep.subr.mxu0 0.0
    %4696 = vmatpush1.msra.mxu0 0.0
    %4697 = vmatprep.subr.mxu0 0.0
    %4698 = vmatpush1.msra.mxu0 0.0
    %4699 = vmatprep.subr.mxu0 0.0
    %4700 = vmatpush1.msra.mxu0 0.0
    %4701 = vmatprep.subr.mxu0 0.0
    %4702 = vmatpush1.msra.mxu0 0.0
    %4703 = vmatprep.subr.mxu0 0.0
    %4704 = vmatpush1.msra.mxu0 0.0
    %4705 = vmatprep.subr.mxu0 0.0
    %4706 = vmatpush1.msra.mxu0 0.0
    %4707 = vmatprep.subr.mxu0 0.0
    %4708 = vmatpush1.msra.mxu0 0.0
    %4709 = vmatprep.subr.mxu0 0.0
    %4710 = vmatpush1.msra.mxu0 0.0
    %4711 = vmatprep.subr.mxu0 0.0
    %4712 = vmatpush1.msra.mxu0 0.0
    %4713 = vmatprep.subr.mxu0 0.0
    %4714 = vmatpush1.msra.mxu0 0.0
    %4715 = vmatprep.subr.mxu0 0.0
    %4716 = vmatpush1.msra.mxu0 0.0
    %4717 = vmatprep.subr.mxu0 0.0
    %4718 = vmatpush1.msra.mxu0 0.0
    %4719 = vmatprep.subr.mxu0 0.0
    %4720 = vmatpush1.msra.mxu0 0.0
    %4721 = vmatprep.subr.mxu0 0.0
    %4722 = vmatpush1.msra.mxu0 0.0
    %4723 = vmatprep.subr.mxu0 0.0
    %4724 = vmatpush1.msra.mxu0 0.0
    %4725 = vmatprep.subr.mxu0 0.0
    %4726 = vmatpush1.msra.mxu0 0.0
    %4727 = vmatprep.subr.mxu0 0.0
    %4728 = vmatpush1.msra.mxu0 0.0
    %4729 = vmatprep.subr.mxu0 0.0
    %4730 = vmatpush1.msra.mxu0 0.0
    %4731 = vmatprep.subr.mxu0 0.0
    %4732 = vmatpush1.msra.mxu0 0.0
    %4733 = vmatprep.subr.mxu0 0.0
    %4734 = vmatpush1.msra.mxu0 0.0
    %4735 = vmatprep.subr.mxu0 0.0
    %4736 = vmatpush1.msra.mxu0 0.0
    %4737 = vmatprep.subr.mxu0 0.0
    %4738 = vmatpush1.msra.mxu0 0.0
    %4739 = vmatprep.subr.mxu0 0.0
    %4740 = vmatpush1.msra.mxu0 0.0
    %4741 = vmatprep.subr.mxu0 0.0
    %4742 = vmatpush1.msra.mxu0 0.0
    %4743 = vmatprep.subr.mxu0 0.0
    %4744 = vmatpush1.msra.mxu0 0.0
    %4745 = vmatprep.subr.mxu0 0.0
    %4746 = vmatpush1.msra.mxu0 0.0
    %4747 = vmatprep.mubr.f32.mxu0 0.0
    %4748 = vmatmul.mubr.f32.gmra.mrb[0].mxu0 %v4681
    %v4749 = vpop.f32.mrb[0].mxu0
    %v4750 = vadd.f32 0.0, %v4749
    %v4751 = vpop.f32.mrb[0].mxu0
    %4752 = vdwg.mxu0
    %v4753 = vld [vmem:[%s33] sm:$0xf]
    %v4754 = vld [vmem:[%s33 + $0x4] sm:$0xf]
    %v4755 = vld [vmem:[%s33 + $0x8] sm:$0xf]
    %v4756 = vld [vmem:[%s33 + $0xc] sm:$0xf]
    %v4757 = vld [vmem:[%s33 + $0x10] sm:$0xf]
    %v4758 = vld [vmem:[%s33 + $0x14] sm:$0xf]
    %v4759 = vld [vmem:[%s33 + $0x18] sm:$0xf]
    %v4760 = vld [vmem:[%s33 + $0x1c] sm:$0xf]
    %v4761 = vld [vmem:[%s33 + $0x20] sm:$0xf]
    %v4762 = vld [vmem:[%s37] sm:$0xff]
    %v4763 = vld [vmem:[%s37 + $0x8] sm:$0x1]
    %4765 = vrot.lane.b32.xlu0 %v4750, 69
    %v4766 = vpop.permute.xlu0 %4765
    %4768 = vrot.lane.b32.xlu0 %v4750, 5
    %v4769 = vpop.permute.xlu0 %4768
    %v4771 = vsel %vm2853, %v4766, %v4769
    %v4772 = vpack.c.bf16 %v4771, %v4771
    %v4774 = vsel %vm2093, %v4753, 0
    %v4777 = vsel %vm2097, %v4772, 0
    %4779 = vmatprep.subr.bf16.mxu0 0
    %4780 = vmatpush1.bf16.msra.mxu0 %v4777
    %4781 = vmatprep.subr.bf16.mxu0 0
    %4782 = vmatpush1.bf16.msra.mxu0 0
    %4783 = vmatprep.subr.bf16.mxu0 0
    %4784 = vmatpush1.bf16.msra.mxu0 0
    %4785 = vmatprep.subr.bf16.mxu0 0
    %4786 = vmatpush1.bf16.msra.mxu0 0
    %4787 = vmatprep.subr.bf16.mxu0 0
    %4788 = vmatpush1.bf16.msra.mxu0 0
    %4789 = vmatprep.subr.bf16.mxu0 0
    %4790 = vmatpush1.bf16.msra.mxu0 0
    %4791 = vmatprep.subr.bf16.mxu0 0
    %4792 = vmatpush1.bf16.msra.mxu0 0
    %4793 = vmatprep.subr.bf16.mxu0 0
    %4794 = vmatpush1.bf16.msra.mxu0 0
    %4795 = vmatprep.subr.bf16.mxu0 0
    %4796 = vmatpush1.bf16.msra.mxu0 0
    %4797 = vmatprep.subr.bf16.mxu0 0
    %4798 = vmatpush1.bf16.msra.mxu0 0
    %4799 = vmatprep.subr.bf16.mxu0 0
    %4800 = vmatpush1.bf16.msra.mxu0 0
    %4801 = vmatprep.subr.bf16.mxu0 0
    %4802 = vmatpush1.bf16.msra.mxu0 0
    %4803 = vmatprep.subr.bf16.mxu0 0
    %4804 = vmatpush1.bf16.msra.mxu0 0
    %4805 = vmatprep.subr.bf16.mxu0 0
    %4806 = vmatpush1.bf16.msra.mxu0 0
    %4807 = vmatprep.subr.bf16.mxu0 0
    %4808 = vmatpush1.bf16.msra.mxu0 0
    %4809 = vmatprep.subr.bf16.mxu0 0
    %4810 = vmatpush1.bf16.msra.mxu0 0
    %4811 = vmatprep.mubr.bf16.mxu0 0
    %4812 = vmatmul.mubr.bf16.gmra.mrb[0].mxu0 %v4774
    %v4813 = vpop.f32.mrb[0].mxu0
    %v4814 = vadd.f32 0.0, %v4813
    %v4815 = vpop.f32.mrb[0].mxu0
    %v4816 = vpop.f32.mrb[0].mxu0
    %v4817 = vpop.f32.mrb[0].mxu0
    %4818 = vdwg.mxu0
    %v4819 = vlaneseq
    %v4820 = vshrl.u32 %v4819, 7
    %v4821 = vsub.s32 0, %v4820
    %v4822 = vrot.slane %v4762, %v4821
    %v4823 = vmul.f32 %v4814, %v4822
    %v4824 = vadd.f32 %v4823, 0.0
    %4825 = vrot.lane.b32.xlu0 %v4750, 68
    %v4826 = vpop.permute.xlu0 %4825
    %4828 = vrot.lane.b32.xlu0 %v4750, 4
    %v4829 = vpop.permute.xlu0 %4828
    %v4831 = vsel %vm2914, %v4826, %v4829
    %v4832 = vpack.c.bf16 %v4831, %v4831
    %v4834 = vsel %vm2093, %v4754, 0
    %v4837 = vsel %vm2097, %v4832, 0
    %4839 = vmatprep.subr.bf16.mxu0 0
    %4840 = vmatpush1.bf16.msra.mxu0 %v4837
    %4841 = vmatprep.subr.bf16.mxu0 0
    %4842 = vmatpush1.bf16.msra.mxu0 0
    %4843 = vmatprep.subr.bf16.mxu0 0
    %4844 = vmatpush1.bf16.msra.mxu0 0
    %4845 = vmatprep.subr.bf16.mxu0 0
    %4846 = vmatpush1.bf16.msra.mxu0 0
    %4847 = vmatprep.subr.bf16.mxu0 0
    %4848 = vmatpush1.bf16.msra.mxu0 0
    %4849 = vmatprep.subr.bf16.mxu0 0
    %4850 = vmatpush1.bf16.msra.mxu0 0
    %4851 = vmatprep.subr.bf16.mxu0 0
    %4852 = vmatpush1.bf16.msra.mxu0 0
    %4853 = vmatprep.subr.bf16.mxu0 0
    %4854 = vmatpush1.bf16.msra.mxu0 0
    %4855 = vmatprep.subr.bf16.mxu0 0
    %4856 = vmatpush1.bf16.msra.mxu0 0
    %4857 = vmatprep.subr.bf16.mxu0 0
    %4858 = vmatpush1.bf16.msra.mxu0 0
    %4859 = vmatprep.subr.bf16.mxu0 0
    %4860 = vmatpush1.bf16.msra.mxu0 0
    %4861 = vmatprep.subr.bf16.mxu0 0
    %4862 = vmatpush1.bf16.msra.mxu0 0
    %4863 = vmatprep.subr.bf16.mxu0 0
    %4864 = vmatpush1.bf16.msra.mxu0 0
    %4865 = vmatprep.subr.bf16.mxu0 0
    %4866 = vmatpush1.bf16.msra.mxu0 0
    %4867 = vmatprep.subr.bf16.mxu0 0
    %4868 = vmatpush1.bf16.msra.mxu0 0
    %4869 = vmatprep.subr.bf16.mxu0 0
    %4870 = vmatpush1.bf16.msra.mxu0 0
    %4871 = vmatprep.mubr.bf16.mxu0 0
    %4872 = vmatmul.mubr.bf16.gmra.mrb[0].mxu0 %v4834
    %v4873 = vpop.f32.mrb[0].mxu0
    %v4874 = vadd.f32 0.0, %v4873
    %v4875 = vpop.f32.mrb[0].mxu0
    %v4876 = vpop.f32.mrb[0].mxu0
    %v4877 = vpop.f32.mrb[0].mxu0
    %4878 = vdwg.mxu0
    %v4879 = vlaneseq
    %v4880 = vshrl.u32 %v4879, 7
    %v4881 = vsub.s32 1, %v4880
    %v4882 = vrot.slane %v4762, %v4881
    %v4883 = vmul.f32 %v4874, %v4882
    %v4884 = vadd.f32 %v4824, %v4883
    %4885 = vrot.lane.b32.xlu0 %v4750, 67
    %v4886 = vpop.permute.xlu0 %4885
    %4888 = vrot.lane.b32.xlu0 %v4750, 3
    %v4889 = vpop.permute.xlu0 %4888
    %v4891 = vsel %vm2975, %v4886, %v4889
    %v4892 = vpack.c.bf16 %v4891, %v4891
    %v4894 = vsel %vm2093, %v4755, 0
    %v4897 = vsel %vm2097, %v4892, 0
    %4899 = vmatprep.subr.bf16.mxu0 0
    %4900 = vmatpush1.bf16.msra.mxu0 %v4897
    %4901 = vmatprep.subr.bf16.mxu0 0
    %4902 = vmatpush1.bf16.msra.mxu0 0
    %4903 = vmatprep.subr.bf16.mxu0 0
    %4904 = vmatpush1.bf16.msra.mxu0 0
    %4905 = vmatprep.subr.bf16.mxu0 0
    %4906 = vmatpush1.bf16.msra.mxu0 0
    %4907 = vmatprep.subr.bf16.mxu0 0
    %4908 = vmatpush1.bf16.msra.mxu0 0
    %4909 = vmatprep.subr.bf16.mxu0 0
    %4910 = vmatpush1.bf16.msra.mxu0 0
    %4911 = vmatprep.subr.bf16.mxu0 0
    %4912 = vmatpush1.bf16.msra.mxu0 0
    %4913 = vmatprep.subr.bf16.mxu0 0
    %4914 = vmatpush1.bf16.msra.mxu0 0
    %4915 = vmatprep.subr.bf16.mxu0 0
    %4916 = vmatpush1.bf16.msra.mxu0 0
    %4917 = vmatprep.subr.bf16.mxu0 0
    %4918 = vmatpush1.bf16.msra.mxu0 0
    %4919 = vmatprep.subr.bf16.mxu0 0
    %4920 = vmatpush1.bf16.msra.mxu0 0
    %4921 = vmatprep.subr.bf16.mxu0 0
    %4922 = vmatpush1.bf16.msra.mxu0 0
    %4923 = vmatprep.subr.bf16.mxu0 0
    %4924 = vmatpush1.bf16.msra.mxu0 0
    %4925 = vmatprep.subr.bf16.mxu0 0
    %4926 = vmatpush1.bf16.msra.mxu0 0
    %4927 = vmatprep.subr.bf16.mxu0 0
    %4928 = vmatpush1.bf16.msra.mxu0 0
    %4929 = vmatprep.subr.bf16.mxu0 0
    %4930 = vmatpush1.bf16.msra.mxu0 0
    %4931 = vmatprep.mubr.bf16.mxu0 0
    %4932 = vmatmul.mubr.bf16.gmra.mrb[0].mxu0 %v4894
    %v4933 = vpop.f32.mrb[0].mxu0
    %v4934 = vadd.f32 0.0, %v4933
    %v4935 = vpop.f32.mrb[0].mxu0
    %v4936 = vpop.f32.mrb[0].mxu0
    %v4937 = vpop.f32.mrb[0].mxu0
    %4938 = vdwg.mxu0
    %v4939 = vlaneseq
    %v4940 = vshrl.u32 %v4939, 7
    %v4941 = vsub.s32 2, %v4940
    %v4942 = vrot.slane %v4762, %v4941
    %v4943 = vmul.f32 %v4934, %v4942
    %v4944 = vadd.f32 %v4884, %v4943
    %4945 = vrot.lane.b32.xlu0 %v4750, 65
    %v4946 = vpop.permute.xlu0 %4945
    %4948 = vrot.lane.b32.xlu0 %v4750, 1
    %v4949 = vpop.permute.xlu0 %4948
    %v4951 = vsel %vm797, %v4946, %v4949
    %v4952 = vpack.c.bf16 %v4951, %v4951
    %v4954 = vsel %vm2093, %v4756, 0
    %v4957 = vsel %vm2097, %v4952, 0
    %4959 = vmatprep.subr.bf16.mxu0 0
    %4960 = vmatpush1.bf16.msra.mxu0 %v4957
    %4961 = vmatprep.subr.bf16.mxu0 0
    %4962 = vmatpush1.bf16.msra.mxu0 0
    %4963 = vmatprep.subr.bf16.mxu0 0
    %4964 = vmatpush1.bf16.msra.mxu0 0
    %4965 = vmatprep.subr.bf16.mxu0 0
    %4966 = vmatpush1.bf16.msra.mxu0 0
    %4967 = vmatprep.subr.bf16.mxu0 0
    %4968 = vmatpush1.bf16.msra.mxu0 0
    %4969 = vmatprep.subr.bf16.mxu0 0
    %4970 = vmatpush1.bf16.msra.mxu0 0
    %4971 = vmatprep.subr.bf16.mxu0 0
    %4972 = vmatpush1.bf16.msra.mxu0 0
    %4973 = vmatprep.subr.bf16.mxu0 0
    %4974 = vmatpush1.bf16.msra.mxu0 0
    %4975 = vmatprep.subr.bf16.mxu0 0
    %4976 = vmatpush1.bf16.msra.mxu0 0
    %4977 = vmatprep.subr.bf16.mxu0 0
    %4978 = vmatpush1.bf16.msra.mxu0 0
    %4979 = vmatprep.subr.bf16.mxu0 0
    %4980 = vmatpush1.bf16.msra.mxu0 0
    %4981 = vmatprep.subr.bf16.mxu0 0
    %4982 = vmatpush1.bf16.msra.mxu0 0
    %4983 = vmatprep.subr.bf16.mxu0 0
    %4984 = vmatpush1.bf16.msra.mxu0 0
    %4985 = vmatprep.subr.bf16.mxu0 0
    %4986 = vmatpush1.bf16.msra.mxu0 0
    %4987 = vmatprep.subr.bf16.mxu0 0
    %4988 = vmatpush1.bf16.msra.mxu0 0
    %4989 = vmatprep.subr.bf16.mxu0 0
    %4990 = vmatpush1.bf16.msra.mxu0 0
    %4991 = vmatprep.mubr.bf16.mxu0 0
    %4992 = vmatmul.mubr.bf16.gmra.mrb[0].mxu0 %v4954
    %v4993 = vpop.f32.mrb[0].mxu0
    %v4994 = vadd.f32 0.0, %v4993
    %v4995 = vpop.f32.mrb[0].mxu0
    %v4996 = vpop.f32.mrb[0].mxu0
    %v4997 = vpop.f32.mrb[0].mxu0
    %4998 = vdwg.mxu0
    %v4999 = vlaneseq
    %v5000 = vshrl.u32 %v4999, 7
    %v5001 = vsub.s32 3, %v5000
    %v5002 = vrot.slane %v4762, %v5001
    %v5003 = vmul.f32 %v4994, %v5002
    %v5004 = vadd.f32 %v4944, %v5003
    %v5005 = vpack.c.bf16 %v4750, %v4750
    %v5007 = vsel %vm2093, %v4757, 0
    %v5010 = vsel %vm2097, %v5005, 0
    %5012 = vmatprep.subr.bf16.mxu0 0
    %5013 = vmatpush1.bf16.msra.mxu0 %v5010
    %5014 = vmatprep.subr.bf16.mxu0 0
    %5015 = vmatpush1.bf16.msra.mxu0 0
    %5016 = vmatprep.subr.bf16.mxu0 0
    %5017 = vmatpush1.bf16.msra.mxu0 0
    %5018 = vmatprep.subr.bf16.mxu0 0
    %5019 = vmatpush1.bf16.msra.mxu0 0
    %5020 = vmatprep.subr.bf16.mxu0 0
    %5021 = vmatpush1.bf16.msra.mxu0 0
    %5022 = vmatprep.subr.bf16.mxu0 0
    %5023 = vmatpush1.bf16.msra.mxu0 0
    %5024 = vmatprep.subr.bf16.mxu0 0
    %5025 = vmatpush1.bf16.msra.mxu0 0
    %5026 = vmatprep.subr.bf16.mxu0 0
    %5027 = vmatpush1.bf16.msra.mxu0 0
    %5028 = vmatprep.subr.bf16.mxu0 0
    %5029 = vmatpush1.bf16.msra.mxu0 0
    %5030 = vmatprep.subr.bf16.mxu0 0
    %5031 = vmatpush1.bf16.msra.mxu0 0
    %5032 = vmatprep.subr.bf16.mxu0 0
    %5033 = vmatpush1.bf16.msra.mxu0 0
    %5034 = vmatprep.subr.bf16.mxu0 0
    %5035 = vmatpush1.bf16.msra.mxu0 0
    %5036 = vmatprep.subr.bf16.mxu0 0
    %5037 = vmatpush1.bf16.msra.mxu0 0
    %5038 = vmatprep.subr.bf16.mxu0 0
    %5039 = vmatpush1.bf16.msra.mxu0 0
    %5040 = vmatprep.subr.bf16.mxu0 0
    %5041 = vmatpush1.bf16.msra.mxu0 0
    %5042 = vmatprep.subr.bf16.mxu0 0
    %5043 = vmatpush1.bf16.msra.mxu0 0
    %5044 = vmatprep.mubr.bf16.mxu0 0
    %5045 = vmatmul.mubr.bf16.gmra.mrb[0].mxu0 %v5007
    %v5046 = vpop.f32.mrb[0].mxu0
    %v5047 = vadd.f32 0.0, %v5046
    %v5048 = vpop.f32.mrb[0].mxu0
    %v5049 = vpop.f32.mrb[0].mxu0
    %v5050 = vpop.f32.mrb[0].mxu0
    %5051 = vdwg.mxu0
    %v5052 = vadd.f32 %v5004, %v5047
    %5053 = vrot.lane.b32.xlu0 %v4750, 127
    %v5054 = vpop.permute.xlu0 %5053
    %5056 = vrot.lane.b32.xlu0 %v4750, 63
    %v5057 = vpop.permute.xlu0 %5056
    %v5059 = vsel %vm3144, %v5054, %v5057
    %v5060 = vpack.c.bf16 %v5059, %v5059
    %v5062 = vsel %vm2093, %v4758, 0
    %v5065 = vsel %vm2097, %v5060, 0
    %5067 = vmatprep.subr.bf16.mxu0 0
    %5068 = vmatpush1.bf16.msra.mxu0 %v5065
    %5069 = vmatprep.subr.bf16.mxu0 0
    %5070 = vmatpush1.bf16.msra.mxu0 0
    %5071 = vmatprep.subr.bf16.mxu0 0
    %5072 = vmatpush1.bf16.msra.mxu0 0
    %5073 = vmatprep.subr.bf16.mxu0 0
    %5074 = vmatpush1.bf16.msra.mxu0 0
    %5075 = vmatprep.subr.bf16.mxu0 0
    %5076 = vmatpush1.bf16.msra.mxu0 0
    %5077 = vmatprep.subr.bf16.mxu0 0
    %5078 = vmatpush1.bf16.msra.mxu0 0
    %5079 = vmatprep.subr.bf16.mxu0 0
    %5080 = vmatpush1.bf16.msra.mxu0 0
    %5081 = vmatprep.subr.bf16.mxu0 0
    %5082 = vmatpush1.bf16.msra.mxu0 0
    %5083 = vmatprep.subr.bf16.mxu0 0
    %5084 = vmatpush1.bf16.msra.mxu0 0
    %5085 = vmatprep.subr.bf16.mxu0 0
    %5086 = vmatpush1.bf16.msra.mxu0 0
    %5087 = vmatprep.subr.bf16.mxu0 0
    %5088 = vmatpush1.bf16.msra.mxu0 0
    %5089 = vmatprep.subr.bf16.mxu0 0
    %5090 = vmatpush1.bf16.msra.mxu0 0
    %5091 = vmatprep.subr.bf16.mxu0 0
    %5092 = vmatpush1.bf16.msra.mxu0 0
    %5093 = vmatprep.subr.bf16.mxu0 0
    %5094 = vmatpush1.bf16.msra.mxu0 0
    %5095 = vmatprep.subr.bf16.mxu0 0
    %5096 = vmatpush1.bf16.msra.mxu0 0
    %5097 = vmatprep.subr.bf16.mxu0 0
    %5098 = vmatpush1.bf16.msra.mxu0 0
    %5099 = vmatprep.mubr.bf16.mxu0 0
    %5100 = vmatmul.mubr.bf16.gmra.mrb[0].mxu0 %v5062
    %v5101 = vpop.f32.mrb[0].mxu0
    %v5102 = vadd.f32 0.0, %v5101
    %v5103 = vpop.f32.mrb[0].mxu0
    %v5104 = vpop.f32.mrb[0].mxu0
    %v5105 = vpop.f32.mrb[0].mxu0
    %5106 = vdwg.mxu0
    %v5107 = vlaneseq
    %v5108 = vshrl.u32 %v5107, 7
    %v5109 = vsub.s32 5, %v5108
    %v5110 = vrot.slane %v4762, %v5109
    %v5111 = vmul.f32 %v5102, %v5110
    %v5112 = vadd.f32 %v5052, %v5111
    %5113 = vrot.lane.b32.xlu0 %v4750, 125
    %v5114 = vpop.permute.xlu0 %5113
    %5116 = vrot.lane.b32.xlu0 %v4750, 61
    %v5117 = vpop.permute.xlu0 %5116
    %v5119 = vsel %vm3205, %v5114, %v5117
    %v5120 = vpack.c.bf16 %v5119, %v5119
    %v5122 = vsel %vm2093, %v4759, 0
    %v5125 = vsel %vm2097, %v5120, 0
    %5127 = vmatprep.subr.bf16.mxu0 0
    %5128 = vmatpush1.bf16.msra.mxu0 %v5125
    %5129 = vmatprep.subr.bf16.mxu0 0
    %5130 = vmatpush1.bf16.msra.mxu0 0
    %5131 = vmatprep.subr.bf16.mxu0 0
    %5132 = vmatpush1.bf16.msra.mxu0 0
    %5133 = vmatprep.subr.bf16.mxu0 0
    %5134 = vmatpush1.bf16.msra.mxu0 0
    %5135 = vmatprep.subr.bf16.mxu0 0
    %5136 = vmatpush1.bf16.msra.mxu0 0
    %5137 = vmatprep.subr.bf16.mxu0 0
    %5138 = vmatpush1.bf16.msra.mxu0 0
    %5139 = vmatprep.subr.bf16.mxu0 0
    %5140 = vmatpush1.bf16.msra.mxu0 0
    %5141 = vmatprep.subr.bf16.mxu0 0
    %5142 = vmatpush1.bf16.msra.mxu0 0
    %5143 = vmatprep.subr.bf16.mxu0 0
    %5144 = vmatpush1.bf16.msra.mxu0 0
    %5145 = vmatprep.subr.bf16.mxu0 0
    %5146 = vmatpush1.bf16.msra.mxu0 0
    %5147 = vmatprep.subr.bf16.mxu0 0
    %5148 = vmatpush1.bf16.msra.mxu0 0
    %5149 = vmatprep.subr.bf16.mxu0 0
    %5150 = vmatpush1.bf16.msra.mxu0 0
    %5151 = vmatprep.subr.bf16.mxu0 0
    %5152 = vmatpush1.bf16.msra.mxu0 0
    %5153 = vmatprep.subr.bf16.mxu0 0
    %5154 = vmatpush1.bf16.msra.mxu0 0
    %5155 = vmatprep.subr.bf16.mxu0 0
    %5156 = vmatpush1.bf16.msra.mxu0 0
    %5157 = vmatprep.subr.bf16.mxu0 0
    %5158 = vmatpush1.bf16.msra.mxu0 0
    %5159 = vmatprep.mubr.bf16.mxu0 0
    %5160 = vmatmul.mubr.bf16.gmra.mrb[0].mxu0 %v5122
    %v5161 = vpop.f32.mrb[0].mxu0
    %v5162 = vadd.f32 0.0, %v5161
    %v5163 = vpop.f32.mrb[0].mxu0
    %v5164 = vpop.f32.mrb[0].mxu0
    %v5165 = vpop.f32.mrb[0].mxu0
    %5166 = vdwg.mxu0
    %v5167 = vlaneseq
    %v5168 = vshrl.u32 %v5167, 7
    %v5169 = vsub.s32 6, %v5168
    %v5170 = vrot.slane %v4762, %v5169
    %v5171 = vmul.f32 %v5162, %v5170
    %v5172 = vadd.f32 %v5112, %v5171
    %5173 = vrot.lane.b32.xlu0 %v4750, 124
    %v5174 = vpop.permute.xlu0 %5173
    %5176 = vrot.lane.b32.xlu0 %v4750, 60
    %v5177 = vpop.permute.xlu0 %5176
    %v5179 = vsel %vm3266, %v5174, %v5177
    %v5180 = vpack.c.bf16 %v5179, %v5179
    %v5182 = vsel %vm2093, %v4760, 0
    %v5185 = vsel %vm2097, %v5180, 0
    %5187 = vmatprep.subr.bf16.mxu0 0
    %5188 = vmatpush1.bf16.msra.mxu0 %v5185
    %5189 = vmatprep.subr.bf16.mxu0 0
    %5190 = vmatpush1.bf16.msra.mxu0 0
    %5191 = vmatprep.subr.bf16.mxu0 0
    %5192 = vmatpush1.bf16.msra.mxu0 0
    %5193 = vmatprep.subr.bf16.mxu0 0
    %5194 = vmatpush1.bf16.msra.mxu0 0
    %5195 = vmatprep.subr.bf16.mxu0 0
    %5196 = vmatpush1.bf16.msra.mxu0 0
    %5197 = vmatprep.subr.bf16.mxu0 0
    %5198 = vmatpush1.bf16.msra.mxu0 0
    %5199 = vmatprep.subr.bf16.mxu0 0
    %5200 = vmatpush1.bf16.msra.mxu0 0
    %5201 = vmatprep.subr.bf16.mxu0 0
    %5202 = vmatpush1.bf16.msra.mxu0 0
    %5203 = vmatprep.subr.bf16.mxu0 0
    %5204 = vmatpush1.bf16.msra.mxu0 0
    %5205 = vmatprep.subr.bf16.mxu0 0
    %5206 = vmatpush1.bf16.msra.mxu0 0
    %5207 = vmatprep.subr.bf16.mxu0 0
    %5208 = vmatpush1.bf16.msra.mxu0 0
    %5209 = vmatprep.subr.bf16.mxu0 0
    %5210 = vmatpush1.bf16.msra.mxu0 0
    %5211 = vmatprep.subr.bf16.mxu0 0
    %5212 = vmatpush1.bf16.msra.mxu0 0
    %5213 = vmatprep.subr.bf16.mxu0 0
    %5214 = vmatpush1.bf16.msra.mxu0 0
    %5215 = vmatprep.subr.bf16.mxu0 0
    %5216 = vmatpush1.bf16.msra.mxu0 0
    %5217 = vmatprep.subr.bf16.mxu0 0
    %5218 = vmatpush1.bf16.msra.mxu0 0
    %5219 = vmatprep.mubr.bf16.mxu0 0
    %5220 = vmatmul.mubr.bf16.gmra.mrb[0].mxu0 %v5182
    %v5221 = vpop.f32.mrb[0].mxu0
    %v5222 = vadd.f32 0.0, %v5221
    %v5223 = vpop.f32.mrb[0].mxu0
    %v5224 = vpop.f32.mrb[0].mxu0
    %v5225 = vpop.f32.mrb[0].mxu0
    %5226 = vdwg.mxu0
    %v5227 = vlaneseq
    %v5228 = vshrl.u32 %v5227, 7
    %v5229 = vsub.s32 7, %v5228
    %v5230 = vrot.slane %v4762, %v5229
    %v5231 = vmul.f32 %v5222, %v5230
    %v5232 = vadd.f32 %v5172, %v5231
    %5233 = vrot.lane.b32.xlu0 %v4750, 123
    %v5234 = vpop.permute.xlu0 %5233
    %5236 = vrot.lane.b32.xlu0 %v4750, 59
    %v5237 = vpop.permute.xlu0 %5236
    %v5239 = vsel %vm3327, %v5234, %v5237
    %v5240 = vpack.c.bf16 %v5239, %v5239
    %v5242 = vsel %vm2093, %v4761, 0
    %v5245 = vsel %vm2097, %v5240, 0
    %5247 = vmatprep.subr.bf16.mxu0 0
    %5248 = vmatpush1.bf16.msra.mxu0 %v5245
    %5249 = vmatprep.subr.bf16.mxu0 0
    %5250 = vmatpush1.bf16.msra.mxu0 0
    %5251 = vmatprep.subr.bf16.mxu0 0
    %5252 = vmatpush1.bf16.msra.mxu0 0
    %5253 = vmatprep.subr.bf16.mxu0 0
    %5254 = vmatpush1.bf16.msra.mxu0 0
    %5255 = vmatprep.subr.bf16.mxu0 0
    %5256 = vmatpush1.bf16.msra.mxu0 0
    %5257 = vmatprep.subr.bf16.mxu0 0
    %5258 = vmatpush1.bf16.msra.mxu0 0
    %5259 = vmatprep.subr.bf16.mxu0 0
    %5260 = vmatpush1.bf16.msra.mxu0 0
    %5261 = vmatprep.subr.bf16.mxu0 0
    %5262 = vmatpush1.bf16.msra.mxu0 0
    %5263 = vmatprep.subr.bf16.mxu0 0
    %5264 = vmatpush1.bf16.msra.mxu0 0
    %5265 = vmatprep.subr.bf16.mxu0 0
    %5266 = vmatpush1.bf16.msra.mxu0 0
    %5267 = vmatprep.subr.bf16.mxu0 0
    %5268 = vmatpush1.bf16.msra.mxu0 0
    %5269 = vmatprep.subr.bf16.mxu0 0
    %5270 = vmatpush1.bf16.msra.mxu0 0
    %5271 = vmatprep.subr.bf16.mxu0 0
    %5272 = vmatpush1.bf16.msra.mxu0 0
    %5273 = vmatprep.subr.bf16.mxu0 0
    %5274 = vmatpush1.bf16.msra.mxu0 0
    %5275 = vmatprep.subr.bf16.mxu0 0
    %5276 = vmatpush1.bf16.msra.mxu0 0
    %5277 = vmatprep.subr.bf16.mxu0 0
    %5278 = vmatpush1.bf16.msra.mxu0 0
    %5279 = vmatprep.mubr.bf16.mxu0 0
    %5280 = vmatmul.mubr.bf16.gmra.mrb[0].mxu0 %v5242
    %v5281 = vpop.f32.mrb[0].mxu0
    %v5282 = vadd.f32 0.0, %v5281
    %v5283 = vpop.f32.mrb[0].mxu0
    %v5284 = vpop.f32.mrb[0].mxu0
    %v5285 = vpop.f32.mrb[0].mxu0
    %5286 = vdwg.mxu0
    %v5287 = vlaneseq
    %v5288 = vshrl.u32 %v5287, 7
    %v5289 = vsub.s32 0, %v5288
    %v5290 = vrot.slane %v4763, %v5289
    %v5291 = vmul.f32 %v5282, %v5290
    %v5292 = vadd.f32 %v5232, %v5291
    %v5293 = vld [vmem:[%s35] sm:$0xff]
    %5295 = vset.pattern.permute.xlu0 0
    %5296 = vperm.xlu0 %5295, %v5293
    %v5297 = vpop.permute.xlu0 %5296
    %v5299 = vadd.f32 %v5292, %v5297
    %v5300 = vmax.f32 %v5299, 0.0
    %v5301 = vadd.f32 %v5300, %v2834
    %v5302 = vld [vmem:[%s63] sm:$0xff]
    %v5303 = vld [vmem:[%s63 + $0x8] sm:$0xff]
    %v5304 = vld [vmem:[%s63 + $0x10] sm:$0xff]
    %v5305 = vld [vmem:[%s63 + $0x18] sm:$0xff]
    %v5306 = vld [vmem:[%s63 + $0x20] sm:$0xff]
    %v5307 = vld [vmem:[%s63 + $0x28] sm:$0xff]
    %v5308 = vld [vmem:[%s63 + $0x30] sm:$0xff]
    %v5309 = vld [vmem:[%s63 + $0x38] sm:$0xff]
    %v5310 = vld [vmem:[%s63 + $0x40] sm:$0xff]
    %v5311 = vld [vmem:[%s63 + $0x48] sm:$0xff]
    %v5312 = vld [vmem:[%s63 + $0x50] sm:$0xff]
    %v5313 = vld [vmem:[%s63 + $0x58] sm:$0xff]
    %v5314 = vld [vmem:[%s63 + $0x60] sm:$0xff]
    %v5315 = vld [vmem:[%s63 + $0x68] sm:$0xff]
    %v5316 = vld [vmem:[%s63 + $0x70] sm:$0xff]
    %v5317 = vld [vmem:[%s63 + $0x78] sm:$0xff]
    %v5319 = vsel %vm3396, %v5301, 0
    %5321 = vmatprep.subr.mxu0 %v5303
    %5322 = vmatpush1.msra.mxu0 %v5302
    %5323 = vmatprep.subr.mxu0 %v5305
    %5324 = vmatpush1.msra.mxu0 %v5304
    %5325 = vmatprep.subr.mxu0 %v5307
    %5326 = vmatpush1.msra.mxu0 %v5306
    %5327 = vmatprep.subr.mxu0 %v5309
    %5328 = vmatpush1.msra.mxu0 %v5308
    %5329 = vmatprep.subr.mxu0 %v5311
    %5330 = vmatpush1.msra.mxu0 %v5310
    %5331 = vmatprep.subr.mxu0 %v5313
    %5332 = vmatpush1.msra.mxu0 %v5312
    %5333 = vmatprep.subr.mxu0 %v5315
    %5334 = vmatpush1.msra.mxu0 %v5314
    %5335 = vmatprep.subr.mxu0 %v5317
    %5336 = vmatpush1.msra.mxu0 %v5316
    %5337 = vmatprep.subr.mxu0 0.0
    %5338 = vmatpush1.msra.mxu0 0.0
    %5339 = vmatprep.subr.mxu0 0.0
    %5340 = vmatpush1.msra.mxu0 0.0
    %5341 = vmatprep.subr.mxu0 0.0
    %5342 = vmatpush1.msra.mxu0 0.0
    %5343 = vmatprep.subr.mxu0 0.0
    %5344 = vmatpush1.msra.mxu0 0.0
    %5345 = vmatprep.subr.mxu0 0.0
    %5346 = vmatpush1.msra.mxu0 0.0
    %5347 = vmatprep.subr.mxu0 0.0
    %5348 = vmatpush1.msra.mxu0 0.0
    %5349 = vmatprep.subr.mxu0 0.0
    %5350 = vmatpush1.msra.mxu0 0.0
    %5351 = vmatprep.subr.mxu0 0.0
    %5352 = vmatpush1.msra.mxu0 0.0
    %5353 = vmatprep.subr.mxu0 0.0
    %5354 = vmatpush1.msra.mxu0 0.0
    %5355 = vmatprep.subr.mxu0 0.0
    %5356 = vmatpush1.msra.mxu0 0.0
    %5357 = vmatprep.subr.mxu0 0.0
    %5358 = vmatpush1.msra.mxu0 0.0
    %5359 = vmatprep.subr.mxu0 0.0
    %5360 = vmatpush1.msra.mxu0 0.0
    %5361 = vmatprep.subr.mxu0 0.0
    %5362 = vmatpush1.msra.mxu0 0.0
    %5363 = vmatprep.subr.mxu0 0.0
    %5364 = vmatpush1.msra.mxu0 0.0
    %5365 = vmatprep.subr.mxu0 0.0
    %5366 = vmatpush1.msra.mxu0 0.0
    %5367 = vmatprep.subr.mxu0 0.0
    %5368 = vmatpush1.msra.mxu0 0.0
    %5369 = vmatprep.subr.mxu0 0.0
    %5370 = vmatpush1.msra.mxu0 0.0
    %5371 = vmatprep.subr.mxu0 0.0
    %5372 = vmatpush1.msra.mxu0 0.0
    %5373 = vmatprep.subr.mxu0 0.0
    %5374 = vmatpush1.msra.mxu0 0.0
    %5375 = vmatprep.subr.mxu0 0.0
    %5376 = vmatpush1.msra.mxu0 0.0
    %5377 = vmatprep.subr.mxu0 0.0
    %5378 = vmatpush1.msra.mxu0 0.0
    %5379 = vmatprep.subr.mxu0 0.0
    %5380 = vmatpush1.msra.mxu0 0.0
    %5381 = vmatprep.subr.mxu0 0.0
    %5382 = vmatpush1.msra.mxu0 0.0
    %5383 = vmatprep.subr.mxu0 0.0
    %5384 = vmatpush1.msra.mxu0 0.0
    %5385 = vmatprep.mubr.f32.mxu0 0.0
    %5386 = vmatmul.mubr.f32.gmra.mrb[0].mxu0 %v5319
    %v5387 = vpop.f32.mrb[0].mxu0
    %v5388 = vadd.f32 0.0, %v5387
    %v5389 = vpop.f32.mrb[0].mxu0
    %v5390 = vadd.f32 0.0, %v5389
    %5391 = vdwg.mxu0
    %v5392 = vld [vmem:[%s39] sm:$0xf]
    %v5393 = vld [vmem:[%s39 + $0x4] sm:$0xf]
    %v5394 = vld [vmem:[%s39 + $0x8] sm:$0xf]
    %v5395 = vld [vmem:[%s39 + $0xc] sm:$0xf]
    %v5396 = vld [vmem:[%s39 + $0x10] sm:$0xf]
    %v5397 = vld [vmem:[%s39 + $0x14] sm:$0xf]
    %v5398 = vld [vmem:[%s39 + $0x18] sm:$0xf]
    %v5399 = vld [vmem:[%s39 + $0x1c] sm:$0xf]
    %v5400 = vld [vmem:[%s39 + $0x20] sm:$0xf]
    %v5401 = vld [vmem:[%s43] sm:$0xff]
    %v5402 = vld [vmem:[%s43 + $0x8] sm:$0xff]
    %v5403 = vld [vmem:[%s43 + $0x10] sm:$0x1]
    %v5404 = vld [vmem:[%s43 + $0x18] sm:$0x1]
    %5406 = vrot.lane.b32.xlu0 %v5390, 9
    %v5407 = vpop.permute.xlu0 %5406
    %5410 = vrot.lane.b32.xlu0 %v5388, 9
    %v5411 = vpop.permute.xlu0 %5410
    %v5412 = vsel %vm2086, %v5411, %v5407
    %v5415 = vsel %vm2086, %v5407, %v5411
    %v5416 = vpack.c.bf16 %v5415, %v5415
    %v5417 = vpack.c.bf16 %v5412, %v5412
    %v5419 = vsel %vm2093, %v5392, 0
    %v5422 = vsel %vm2097, %v5416, 0
    %v5425 = vsel %vm2097, %v5417, 0
    %5427 = vmatprep.subr.bf16.mxu0 %v5425
    %5428 = vmatpush1.bf16.msra.mxu0 %v5422
    %5429 = vmatprep.subr.bf16.mxu0 0
    %5430 = vmatpush1.bf16.msra.mxu0 0
    %5431 = vmatprep.subr.bf16.mxu0 0
    %5432 = vmatpush1.bf16.msra.mxu0 0
    %5433 = vmatprep.subr.bf16.mxu0 0
    %5434 = vmatpush1.bf16.msra.mxu0 0
    %5435 = vmatprep.subr.bf16.mxu0 0
    %5436 = vmatpush1.bf16.msra.mxu0 0
    %5437 = vmatprep.subr.bf16.mxu0 0
    %5438 = vmatpush1.bf16.msra.mxu0 0
    %5439 = vmatprep.subr.bf16.mxu0 0
    %5440 = vmatpush1.bf16.msra.mxu0 0
    %5441 = vmatprep.subr.bf16.mxu0 0
    %5442 = vmatpush1.bf16.msra.mxu0 0
    %5443 = vmatprep.subr.bf16.mxu0 0
    %5444 = vmatpush1.bf16.msra.mxu0 0
    %5445 = vmatprep.subr.bf16.mxu0 0
    %5446 = vmatpush1.bf16.msra.mxu0 0
    %5447 = vmatprep.subr.bf16.mxu0 0
    %5448 = vmatpush1.bf16.msra.mxu0 0
    %5449 = vmatprep.subr.bf16.mxu0 0
    %5450 = vmatpush1.bf16.msra.mxu0 0
    %5451 = vmatprep.subr.bf16.mxu0 0
    %5452 = vmatpush1.bf16.msra.mxu0 0
    %5453 = vmatprep.subr.bf16.mxu0 0
    %5454 = vmatpush1.bf16.msra.mxu0 0
    %5455 = vmatprep.subr.bf16.mxu0 0
    %5456 = vmatpush1.bf16.msra.mxu0 0
    %5457 = vmatprep.subr.bf16.mxu0 0
    %5458 = vmatpush1.bf16.msra.mxu0 0
    %5459 = vmatprep.mubr.bf16.mxu0 0
    %5460 = vmatmul.mubr.bf16.gmra.mrb[0].mxu0 %v5419
    %v5461 = vpop.f32.mrb[0].mxu0
    %v5462 = vadd.f32 0.0, %v5461
    %v5463 = vpop.f32.mrb[0].mxu0
    %v5464 = vadd.f32 0.0, %v5463
    %v5465 = vpop.f32.mrb[0].mxu0
    %v5466 = vpop.f32.mrb[0].mxu0
    %5467 = vdwg.mxu0
    %v5468 = vlaneseq
    %v5469 = vshrl.u32 %v5468, 7
    %v5470 = vsub.s32 0, %v5469
    %v5471 = vrot.slane %v5401, %v5470
    %v5472 = vlaneseq
    %v5473 = vshrl.u32 %v5472, 7
    %v5474 = vsub.s32 0, %v5473
    %v5475 = vrot.slane %v5402, %v5474
    %v5476 = vmul.f32 %v5462, %v5471
    %v5477 = vmul.f32 %v5464, %v5475
    %v5478 = vadd.f32 %v5476, 0.0
    %v5479 = vadd.f32 %v5477, 0.0
    %5480 = vrot.lane.b32.xlu0 %v5390, 8
    %v5481 = vpop.permute.xlu0 %5480
    %5483 = vrot.lane.b32.xlu0 %v5388, 8
    %v5484 = vpop.permute.xlu0 %5483
    %v5485 = vsel %vm2093, %v5484, %v5481
    %v5488 = vsel %vm2093, %v5481, %v5484
    %v5489 = vpack.c.bf16 %v5488, %v5488
    %v5490 = vpack.c.bf16 %v5485, %v5485
    %v5492 = vsel %vm2093, %v5393, 0
    %v5495 = vsel %vm2097, %v5489, 0
    %v5498 = vsel %vm2097, %v5490, 0
    %5500 = vmatprep.subr.bf16.mxu0 %v5498
    %5501 = vmatpush1.bf16.msra.mxu0 %v5495
    %5502 = vmatprep.subr.bf16.mxu0 0
    %5503 = vmatpush1.bf16.msra.mxu0 0
    %5504 = vmatprep.subr.bf16.mxu0 0
    %5505 = vmatpush1.bf16.msra.mxu0 0
    %5506 = vmatprep.subr.bf16.mxu0 0
    %5507 = vmatpush1.bf16.msra.mxu0 0
    %5508 = vmatprep.subr.bf16.mxu0 0
    %5509 = vmatpush1.bf16.msra.mxu0 0
    %5510 = vmatprep.subr.bf16.mxu0 0
    %5511 = vmatpush1.bf16.msra.mxu0 0
    %5512 = vmatprep.subr.bf16.mxu0 0
    %5513 = vmatpush1.bf16.msra.mxu0 0
    %5514 = vmatprep.subr.bf16.mxu0 0
    %5515 = vmatpush1.bf16.msra.mxu0 0
    %5516 = vmatprep.subr.bf16.mxu0 0
    %5517 = vmatpush1.bf16.msra.mxu0 0
    %5518 = vmatprep.subr.bf16.mxu0 0
    %5519 = vmatpush1.bf16.msra.mxu0 0
    %5520 = vmatprep.subr.bf16.mxu0 0
    %5521 = vmatpush1.bf16.msra.mxu0 0
    %5522 = vmatprep.subr.bf16.mxu0 0
    %5523 = vmatpush1.bf16.msra.mxu0 0
    %5524 = vmatprep.subr.bf16.mxu0 0
    %5525 = vmatpush1.bf16.msra.mxu0 0
    %5526 = vmatprep.subr.bf16.mxu0 0
    %5527 = vmatpush1.bf16.msra.mxu0 0
    %5528 = vmatprep.subr.bf16.mxu0 0
    %5529 = vmatpush1.bf16.msra.mxu0 0
    %5530 = vmatprep.subr.bf16.mxu0 0
    %5531 = vmatpush1.bf16.msra.mxu0 0
    %5532 = vmatprep.mubr.bf16.mxu0 0
    %5533 = vmatmul.mubr.bf16.gmra.mrb[0].mxu0 %v5492
    %v5534 = vpop.f32.mrb[0].mxu0
    %v5535 = vadd.f32 0.0, %v5534
    %v5536 = vpop.f32.mrb[0].mxu0
    %v5537 = vadd.f32 0.0, %v5536
    %v5538 = vpop.f32.mrb[0].mxu0
    %v5539 = vpop.f32.mrb[0].mxu0
    %5540 = vdwg.mxu0
    %v5541 = vlaneseq
    %v5542 = vshrl.u32 %v5541, 7
    %v5543 = vsub.s32 1, %v5542
    %v5544 = vrot.slane %v5401, %v5543
    %v5545 = vlaneseq
    %v5546 = vshrl.u32 %v5545, 7
    %v5547 = vsub.s32 1, %v5546
    %v5548 = vrot.slane %v5402, %v5547
    %v5549 = vmul.f32 %v5535, %v5544
    %v5550 = vmul.f32 %v5537, %v5548
    %v5551 = vadd.f32 %v5478, %v5549
    %v5552 = vadd.f32 %v5479, %v5550
    %5553 = vrot.lane.b32.xlu0 %v5390, 7
    %v5554 = vpop.permute.xlu0 %5553
    %5556 = vrot.lane.b32.xlu0 %v5388, 7
    %v5557 = vpop.permute.xlu0 %5556
    %v5558 = vsel %vm2235, %v5557, %v5554
    %v5561 = vsel %vm2235, %v5554, %v5557
    %v5562 = vpack.c.bf16 %v5561, %v5561
    %v5563 = vpack.c.bf16 %v5558, %v5558
    %v5565 = vsel %vm2093, %v5394, 0
    %v5568 = vsel %vm2097, %v5562, 0
    %v5571 = vsel %vm2097, %v5563, 0
    %5573 = vmatprep.subr.bf16.mxu0 %v5571
    %5574 = vmatpush1.bf16.msra.mxu0 %v5568
    %5575 = vmatprep.subr.bf16.mxu0 0
    %5576 = vmatpush1.bf16.msra.mxu0 0
    %5577 = vmatprep.subr.bf16.mxu0 0
    %5578 = vmatpush1.bf16.msra.mxu0 0
    %5579 = vmatprep.subr.bf16.mxu0 0
    %5580 = vmatpush1.bf16.msra.mxu0 0
    %5581 = vmatprep.subr.bf16.mxu0 0
    %5582 = vmatpush1.bf16.msra.mxu0 0
    %5583 = vmatprep.subr.bf16.mxu0 0
    %5584 = vmatpush1.bf16.msra.mxu0 0
    %5585 = vmatprep.subr.bf16.mxu0 0
    %5586 = vmatpush1.bf16.msra.mxu0 0
    %5587 = vmatprep.subr.bf16.mxu0 0
    %5588 = vmatpush1.bf16.msra.mxu0 0
    %5589 = vmatprep.subr.bf16.mxu0 0
    %5590 = vmatpush1.bf16.msra.mxu0 0
    %5591 = vmatprep.subr.bf16.mxu0 0
    %5592 = vmatpush1.bf16.msra.mxu0 0
    %5593 = vmatprep.subr.bf16.mxu0 0
    %5594 = vmatpush1.bf16.msra.mxu0 0
    %5595 = vmatprep.subr.bf16.mxu0 0
    %5596 = vmatpush1.bf16.msra.mxu0 0
    %5597 = vmatprep.subr.bf16.mxu0 0
    %5598 = vmatpush1.bf16.msra.mxu0 0
    %5599 = vmatprep.subr.bf16.mxu0 0
    %5600 = vmatpush1.bf16.msra.mxu0 0
    %5601 = vmatprep.subr.bf16.mxu0 0
    %5602 = vmatpush1.bf16.msra.mxu0 0
    %5603 = vmatprep.subr.bf16.mxu0 0
    %5604 = vmatpush1.bf16.msra.mxu0 0
    %5605 = vmatprep.mubr.bf16.mxu0 0
    %5606 = vmatmul.mubr.bf16.gmra.mrb[0].mxu0 %v5565
    %v5607 = vpop.f32.mrb[0].mxu0
    %v5608 = vadd.f32 0.0, %v5607
    %v5609 = vpop.f32.mrb[0].mxu0
    %v5610 = vadd.f32 0.0, %v5609
    %v5611 = vpop.f32.mrb[0].mxu0
    %v5612 = vpop.f32.mrb[0].mxu0
    %5613 = vdwg.mxu0
    %v5614 = vlaneseq
    %v5615 = vshrl.u32 %v5614, 7
    %v5616 = vsub.s32 2, %v5615
    %v5617 = vrot.slane %v5401, %v5616
    %v5618 = vlaneseq
    %v5619 = vshrl.u32 %v5618, 7
    %v5620 = vsub.s32 2, %v5619
    %v5621 = vrot.slane %v5402, %v5620
    %v5622 = vmul.f32 %v5608, %v5617
    %v5623 = vmul.f32 %v5610, %v5621
    %v5624 = vadd.f32 %v5551, %v5622
    %v5625 = vadd.f32 %v5552, %v5623
    %5626 = vrot.lane.b32.xlu0 %v5390, 1
    %v5627 = vpop.permute.xlu0 %5626
    %5629 = vrot.lane.b32.xlu0 %v5388, 1
    %v5630 = vpop.permute.xlu0 %5629
    %v5631 = vsel %vm797, %v5630, %v5627
    %v5634 = vsel %vm797, %v5627, %v5630
    %v5635 = vpack.c.bf16 %v5634, %v5634
    %v5636 = vpack.c.bf16 %v5631, %v5631
    %v5638 = vsel %vm2093, %v5395, 0
    %v5641 = vsel %vm2097, %v5635, 0
    %v5644 = vsel %vm2097, %v5636, 0
    %5646 = vmatprep.subr.bf16.mxu0 %v5644
    %5647 = vmatpush1.bf16.msra.mxu0 %v5641
    %5648 = vmatprep.subr.bf16.mxu0 0
    %5649 = vmatpush1.bf16.msra.mxu0 0
    %5650 = vmatprep.subr.bf16.mxu0 0
    %5651 = vmatpush1.bf16.msra.mxu0 0
    %5652 = vmatprep.subr.bf16.mxu0 0
    %5653 = vmatpush1.bf16.msra.mxu0 0
    %5654 = vmatprep.subr.bf16.mxu0 0
    %5655 = vmatpush1.bf16.msra.mxu0 0
    %5656 = vmatprep.subr.bf16.mxu0 0
    %5657 = vmatpush1.bf16.msra.mxu0 0
    %5658 = vmatprep.subr.bf16.mxu0 0
    %5659 = vmatpush1.bf16.msra.mxu0 0
    %5660 = vmatprep.subr.bf16.mxu0 0
    %5661 = vmatpush1.bf16.msra.mxu0 0
    %5662 = vmatprep.subr.bf16.mxu0 0
    %5663 = vmatpush1.bf16.msra.mxu0 0
    %5664 = vmatprep.subr.bf16.mxu0 0
    %5665 = vmatpush1.bf16.msra.mxu0 0
    %5666 = vmatprep.subr.bf16.mxu0 0
    %5667 = vmatpush1.bf16.msra.mxu0 0
    %5668 = vmatprep.subr.bf16.mxu0 0
    %5669 = vmatpush1.bf16.msra.mxu0 0
    %5670 = vmatprep.subr.bf16.mxu0 0
    %5671 = vmatpush1.bf16.msra.mxu0 0
    %5672 = vmatprep.subr.bf16.mxu0 0
    %5673 = vmatpush1.bf16.msra.mxu0 0
    %5674 = vmatprep.subr.bf16.mxu0 0
    %5675 = vmatpush1.bf16.msra.mxu0 0
    %5676 = vmatprep.subr.bf16.mxu0 0
    %5677 = vmatpush1.bf16.msra.mxu0 0
    %5678 = vmatprep.mubr.bf16.mxu0 0
    %5679 = vmatmul.mubr.bf16.gmra.mrb[0].mxu0 %v5638
    %v5680 = vpop.f32.mrb[0].mxu0
    %v5681 = vadd.f32 0.0, %v5680
    %v5682 = vpop.f32.mrb[0].mxu0
    %v5683 = vadd.f32 0.0, %v5682
    %v5684 = vpop.f32.mrb[0].mxu0
    %v5685 = vpop.f32.mrb[0].mxu0
    %5686 = vdwg.mxu0
    %v5687 = vlaneseq
    %v5688 = vshrl.u32 %v5687, 7
    %v5689 = vsub.s32 3, %v5688
    %v5690 = vrot.slane %v5401, %v5689
    %v5691 = vlaneseq
    %v5692 = vshrl.u32 %v5691, 7
    %v5693 = vsub.s32 3, %v5692
    %v5694 = vrot.slane %v5402, %v5693
    %v5695 = vmul.f32 %v5681, %v5690
    %v5696 = vmul.f32 %v5683, %v5694
    %v5697 = vadd.f32 %v5624, %v5695
    %v5698 = vadd.f32 %v5625, %v5696
    %v5699 = vpack.c.bf16 %v5388, %v5388
    %v5700 = vpack.c.bf16 %v5390, %v5390
    %v5702 = vsel %vm2093, %v5396, 0
    %v5705 = vsel %vm2097, %v5699, 0
    %v5708 = vsel %vm2097, %v5700, 0
    %5710 = vmatprep.subr.bf16.mxu0 %v5708
    %5711 = vmatpush1.bf16.msra.mxu0 %v5705
    %5712 = vmatprep.subr.bf16.mxu0 0
    %5713 = vmatpush1.bf16.msra.mxu0 0
    %5714 = vmatprep.subr.bf16.mxu0 0
    %5715 = vmatpush1.bf16.msra.mxu0 0
    %5716 = vmatprep.subr.bf16.mxu0 0
    %5717 = vmatpush1.bf16.msra.mxu0 0
    %5718 = vmatprep.subr.bf16.mxu0 0
    %5719 = vmatpush1.bf16.msra.mxu0 0
    %5720 = vmatprep.subr.bf16.mxu0 0
    %5721 = vmatpush1.bf16.msra.mxu0 0
    %5722 = vmatprep.subr.bf16.mxu0 0
    %5723 = vmatpush1.bf16.msra.mxu0 0
    %5724 = vmatprep.subr.bf16.mxu0 0
    %5725 = vmatpush1.bf16.msra.mxu0 0
    %5726 = vmatprep.subr.bf16.mxu0 0
    %5727 = vmatpush1.bf16.msra.mxu0 0
    %5728 = vmatprep.subr.bf16.mxu0 0
    %5729 = vmatpush1.bf16.msra.mxu0 0
    %5730 = vmatprep.subr.bf16.mxu0 0
    %5731 = vmatpush1.bf16.msra.mxu0 0
    %5732 = vmatprep.subr.bf16.mxu0 0
    %5733 = vmatpush1.bf16.msra.mxu0 0
    %5734 = vmatprep.subr.bf16.mxu0 0
    %5735 = vmatpush1.bf16.msra.mxu0 0
    %5736 = vmatprep.subr.bf16.mxu0 0
    %5737 = vmatpush1.bf16.msra.mxu0 0
    %5738 = vmatprep.subr.bf16.mxu0 0
    %5739 = vmatpush1.bf16.msra.mxu0 0
    %5740 = vmatprep.subr.bf16.mxu0 0
    %5741 = vmatpush1.bf16.msra.mxu0 0
    %5742 = vmatprep.mubr.bf16.mxu0 0
    %5743 = vmatmul.mubr.bf16.gmra.mrb[0].mxu0 %v5702
    %v5744 = vpop.f32.mrb[0].mxu0
    %v5745 = vadd.f32 0.0, %v5744
    %v5746 = vpop.f32.mrb[0].mxu0
    %v5747 = vadd.f32 0.0, %v5746
    %v5748 = vpop.f32.mrb[0].mxu0
    %v5749 = vpop.f32.mrb[0].mxu0
    %5750 = vdwg.mxu0
    %v5751 = vadd.f32 %v5697, %v5745
    %v5752 = vadd.f32 %v5698, %v5747
    %5753 = vrot.lane.b32.xlu0 %v5388, 127
    %v5754 = vpop.permute.xlu0 %5753
    %5755 = vrot.lane.b32.xlu0 %v5390, 127
    %v5756 = vpop.permute.xlu0 %5755
    %v5757 = vsel %vm1076, %v5754, %v5756
    %v5761 = vsel %vm1076, %v5756, %v5754
    %v5762 = vpack.c.bf16 %v5757, %v5757
    %v5763 = vpack.c.bf16 %v5761, %v5761
    %v5765 = vsel %vm2093, %v5397, 0
    %v5768 = vsel %vm2097, %v5762, 0
    %v5771 = vsel %vm2097, %v5763, 0
    %5773 = vmatprep.subr.bf16.mxu0 %v5771
    %5774 = vmatpush1.bf16.msra.mxu0 %v5768
    %5775 = vmatprep.subr.bf16.mxu0 0
    %5776 = vmatpush1.bf16.msra.mxu0 0
    %5777 = vmatprep.subr.bf16.mxu0 0
    %5778 = vmatpush1.bf16.msra.mxu0 0
    %5779 = vmatprep.subr.bf16.mxu0 0
    %5780 = vmatpush1.bf16.msra.mxu0 0
    %5781 = vmatprep.subr.bf16.mxu0 0
    %5782 = vmatpush1.bf16.msra.mxu0 0
    %5783 = vmatprep.subr.bf16.mxu0 0
    %5784 = vmatpush1.bf16.msra.mxu0 0
    %5785 = vmatprep.subr.bf16.mxu0 0
    %5786 = vmatpush1.bf16.msra.mxu0 0
    %5787 = vmatprep.subr.bf16.mxu0 0
    %5788 = vmatpush1.bf16.msra.mxu0 0
    %5789 = vmatprep.subr.bf16.mxu0 0
    %5790 = vmatpush1.bf16.msra.mxu0 0
    %5791 = vmatprep.subr.bf16.mxu0 0
    %5792 = vmatpush1.bf16.msra.mxu0 0
    %5793 = vmatprep.subr.bf16.mxu0 0
    %5794 = vmatpush1.bf16.msra.mxu0 0
    %5795 = vmatprep.subr.bf16.mxu0 0
    %5796 = vmatpush1.bf16.msra.mxu0 0
    %5797 = vmatprep.subr.bf16.mxu0 0
    %5798 = vmatpush1.bf16.msra.mxu0 0
    %5799 = vmatprep.subr.bf16.mxu0 0
    %5800 = vmatpush1.bf16.msra.mxu0 0
    %5801 = vmatprep.subr.bf16.mxu0 0
    %5802 = vmatpush1.bf16.msra.mxu0 0
    %5803 = vmatprep.subr.bf16.mxu0 0
    %5804 = vmatpush1.bf16.msra.mxu0 0
    %5805 = vmatprep.mubr.bf16.mxu0 0
    %5806 = vmatmul.mubr.bf16.gmra.mrb[0].mxu0 %v5765
    %v5807 = vpop.f32.mrb[0].mxu0
    %v5808 = vadd.f32 0.0, %v5807
    %v5809 = vpop.f32.mrb[0].mxu0
    %v5810 = vadd.f32 0.0, %v5809
    %v5811 = vpop.f32.mrb[0].mxu0
    %v5812 = vpop.f32.mrb[0].mxu0
    %5813 = vdwg.mxu0
    %v5814 = vlaneseq
    %v5815 = vshrl.u32 %v5814, 7
    %v5816 = vsub.s32 5, %v5815
    %v5817 = vrot.slane %v5401, %v5816
    %v5818 = vlaneseq
    %v5819 = vshrl.u32 %v5818, 7
    %v5820 = vsub.s32 5, %v5819
    %v5821 = vrot.slane %v5402, %v5820
    %v5822 = vmul.f32 %v5808, %v5817
    %v5823 = vmul.f32 %v5810, %v5821
    %v5824 = vadd.f32 %v5751, %v5822
    %v5825 = vadd.f32 %v5752, %v5823
    %5826 = vrot.lane.b32.xlu0 %v5388, 121
    %v5827 = vpop.permute.xlu0 %5826
    %5828 = vrot.lane.b32.xlu0 %v5390, 121
    %v5829 = vpop.permute.xlu0 %5828
    %v5830 = vsel %vm2508, %v5827, %v5829
    %v5834 = vsel %vm2508, %v5829, %v5827
    %v5835 = vpack.c.bf16 %v5830, %v5830
    %v5836 = vpack.c.bf16 %v5834, %v5834
    %v5838 = vsel %vm2093, %v5398, 0
    %v5841 = vsel %vm2097, %v5835, 0
    %v5844 = vsel %vm2097, %v5836, 0
    %5846 = vmatprep.subr.bf16.mxu0 %v5844
    %5847 = vmatpush1.bf16.msra.mxu0 %v5841
    %5848 = vmatprep.subr.bf16.mxu0 0
    %5849 = vmatpush1.bf16.msra.mxu0 0
    %5850 = vmatprep.subr.bf16.mxu0 0
    %5851 = vmatpush1.bf16.msra.mxu0 0
    %5852 = vmatprep.subr.bf16.mxu0 0
    %5853 = vmatpush1.bf16.msra.mxu0 0
    %5854 = vmatprep.subr.bf16.mxu0 0
    %5855 = vmatpush1.bf16.msra.mxu0 0
    %5856 = vmatprep.subr.bf16.mxu0 0
    %5857 = vmatpush1.bf16.msra.mxu0 0
    %5858 = vmatprep.subr.bf16.mxu0 0
    %5859 = vmatpush1.bf16.msra.mxu0 0
    %5860 = vmatprep.subr.bf16.mxu0 0
    %5861 = vmatpush1.bf16.msra.mxu0 0
    %5862 = vmatprep.subr.bf16.mxu0 0
    %5863 = vmatpush1.bf16.msra.mxu0 0
    %5864 = vmatprep.subr.bf16.mxu0 0
    %5865 = vmatpush1.bf16.msra.mxu0 0
    %5866 = vmatprep.subr.bf16.mxu0 0
    %5867 = vmatpush1.bf16.msra.mxu0 0
    %5868 = vmatprep.subr.bf16.mxu0 0
    %5869 = vmatpush1.bf16.msra.mxu0 0
    %5870 = vmatprep.subr.bf16.mxu0 0
    %5871 = vmatpush1.bf16.msra.mxu0 0
    %5872 = vmatprep.subr.bf16.mxu0 0
    %5873 = vmatpush1.bf16.msra.mxu0 0
    %5874 = vmatprep.subr.bf16.mxu0 0
    %5875 = vmatpush1.bf16.msra.mxu0 0
    %5876 = vmatprep.subr.bf16.mxu0 0
    %5877 = vmatpush1.bf16.msra.mxu0 0
    %5878 = vmatprep.mubr.bf16.mxu0 0
    %5879 = vmatmul.mubr.bf16.gmra.mrb[0].mxu0 %v5838
    %v5880 = vpop.f32.mrb[0].mxu0
    %v5881 = vadd.f32 0.0, %v5880
    %v5882 = vpop.f32.mrb[0].mxu0
    %v5883 = vadd.f32 0.0, %v5882
    %v5884 = vpop.f32.mrb[0].mxu0
    %v5885 = vpop.f32.mrb[0].mxu0
    %5886 = vdwg.mxu0
    %v5887 = vlaneseq
    %v5888 = vshrl.u32 %v5887, 7
    %v5889 = vsub.s32 6, %v5888
    %v5890 = vrot.slane %v5401, %v5889
    %v5891 = vlaneseq
    %v5892 = vshrl.u32 %v5891, 7
    %v5893 = vsub.s32 6, %v5892
    %v5894 = vrot.slane %v5402, %v5893
    %v5895 = vmul.f32 %v5881, %v5890
    %v5896 = vmul.f32 %v5883, %v5894
    %v5897 = vadd.f32 %v5824, %v5895
    %v5898 = vadd.f32 %v5825, %v5896
    %5899 = vrot.lane.b32.xlu0 %v5388, 120
    %v5900 = vpop.permute.xlu0 %5899
    %5901 = vrot.lane.b32.xlu0 %v5390, 120
    %v5902 = vpop.permute.xlu0 %5901
    %v5903 = vsel %vm2582, %v5900, %v5902
    %v5907 = vsel %vm2582, %v5902, %v5900
    %v5908 = vpack.c.bf16 %v5903, %v5903
    %v5909 = vpack.c.bf16 %v5907, %v5907
    %v5911 = vsel %vm2093, %v5399, 0
    %v5914 = vsel %vm2097, %v5908, 0
    %v5917 = vsel %vm2097, %v5909, 0
    %5919 = vmatprep.subr.bf16.mxu0 %v5917
    %5920 = vmatpush1.bf16.msra.mxu0 %v5914
    %5921 = vmatprep.subr.bf16.mxu0 0
    %5922 = vmatpush1.bf16.msra.mxu0 0
    %5923 = vmatprep.subr.bf16.mxu0 0
    %5924 = vmatpush1.bf16.msra.mxu0 0
    %5925 = vmatprep.subr.bf16.mxu0 0
    %5926 = vmatpush1.bf16.msra.mxu0 0
    %5927 = vmatprep.subr.bf16.mxu0 0
    %5928 = vmatpush1.bf16.msra.mxu0 0
    %5929 = vmatprep.subr.bf16.mxu0 0
    %5930 = vmatpush1.bf16.msra.mxu0 0
    %5931 = vmatprep.subr.bf16.mxu0 0
    %5932 = vmatpush1.bf16.msra.mxu0 0
    %5933 = vmatprep.subr.bf16.mxu0 0
    %5934 = vmatpush1.bf16.msra.mxu0 0
    %5935 = vmatprep.subr.bf16.mxu0 0
    %5936 = vmatpush1.bf16.msra.mxu0 0
    %5937 = vmatprep.subr.bf16.mxu0 0
    %5938 = vmatpush1.bf16.msra.mxu0 0
    %5939 = vmatprep.subr.bf16.mxu0 0
    %5940 = vmatpush1.bf16.msra.mxu0 0
    %5941 = vmatprep.subr.bf16.mxu0 0
    %5942 = vmatpush1.bf16.msra.mxu0 0
    %5943 = vmatprep.subr.bf16.mxu0 0
    %5944 = vmatpush1.bf16.msra.mxu0 0
    %5945 = vmatprep.subr.bf16.mxu0 0
    %5946 = vmatpush1.bf16.msra.mxu0 0
    %5947 = vmatprep.subr.bf16.mxu0 0
    %5948 = vmatpush1.bf16.msra.mxu0 0
    %5949 = vmatprep.subr.bf16.mxu0 0
    %5950 = vmatpush1.bf16.msra.mxu0 0
    %5951 = vmatprep.mubr.bf16.mxu0 0
    %5952 = vmatmul.mubr.bf16.gmra.mrb[0].mxu0 %v5911
    %v5953 = vpop.f32.mrb[0].mxu0
    %v5954 = vadd.f32 0.0, %v5953
    %v5955 = vpop.f32.mrb[0].mxu0
    %v5956 = vadd.f32 0.0, %v5955
    %v5957 = vpop.f32.mrb[0].mxu0
    %v5958 = vpop.f32.mrb[0].mxu0
    %5959 = vdwg.mxu0
    %v5960 = vlaneseq
    %v5961 = vshrl.u32 %v5960, 7
    %v5962 = vsub.s32 7, %v5961
    %v5963 = vrot.slane %v5401, %v5962
    %v5964 = vlaneseq
    %v5965 = vshrl.u32 %v5964, 7
    %v5966 = vsub.s32 7, %v5965
    %v5967 = vrot.slane %v5402, %v5966
    %v5968 = vmul.f32 %v5954, %v5963
    %v5969 = vmul.f32 %v5956, %v5967
    %v5970 = vadd.f32 %v5897, %v5968
    %v5971 = vadd.f32 %v5898, %v5969
    %5972 = vrot.lane.b32.xlu0 %v5388, 119
    %v5973 = vpop.permute.xlu0 %5972
    %5974 = vrot.lane.b32.xlu0 %v5390, 119
    %v5975 = vpop.permute.xlu0 %5974
    %v5976 = vsel %vm2656, %v5973, %v5975
    %v5980 = vsel %vm2656, %v5975, %v5973
    %v5981 = vpack.c.bf16 %v5976, %v5976
    %v5982 = vpack.c.bf16 %v5980, %v5980
    %v5984 = vsel %vm2093, %v5400, 0
    %v5987 = vsel %vm2097, %v5981, 0
    %v5990 = vsel %vm2097, %v5982, 0
    %5992 = vmatprep.subr.bf16.mxu0 %v5990
    %5993 = vmatpush1.bf16.msra.mxu0 %v5987
    %5994 = vmatprep.subr.bf16.mxu0 0
    %5995 = vmatpush1.bf16.msra.mxu0 0
    %5996 = vmatprep.subr.bf16.mxu0 0
    %5997 = vmatpush1.bf16.msra.mxu0 0
    %5998 = vmatprep.subr.bf16.mxu0 0
    %5999 = vmatpush1.bf16.msra.mxu0 0
    %6000 = vmatprep.subr.bf16.mxu0 0
    %6001 = vmatpush1.bf16.msra.mxu0 0
    %6002 = vmatprep.subr.bf16.mxu0 0
    %6003 = vmatpush1.bf16.msra.mxu0 0
    %6004 = vmatprep.subr.bf16.mxu0 0
    %6005 = vmatpush1.bf16.msra.mxu0 0
    %6006 = vmatprep.subr.bf16.mxu0 0
    %6007 = vmatpush1.bf16.msra.mxu0 0
    %6008 = vmatprep.subr.bf16.mxu0 0
    %6009 = vmatpush1.bf16.msra.mxu0 0
    %6010 = vmatprep.subr.bf16.mxu0 0
    %6011 = vmatpush1.bf16.msra.mxu0 0
    %6012 = vmatprep.subr.bf16.mxu0 0
    %6013 = vmatpush1.bf16.msra.mxu0 0
    %6014 = vmatprep.subr.bf16.mxu0 0
    %6015 = vmatpush1.bf16.msra.mxu0 0
    %6016 = vmatprep.subr.bf16.mxu0 0
    %6017 = vmatpush1.bf16.msra.mxu0 0
    %6018 = vmatprep.subr.bf16.mxu0 0
    %6019 = vmatpush1.bf16.msra.mxu0 0
    %6020 = vmatprep.subr.bf16.mxu0 0
    %6021 = vmatpush1.bf16.msra.mxu0 0
    %6022 = vmatprep.subr.bf16.mxu0 0
    %6023 = vmatpush1.bf16.msra.mxu0 0
    %6024 = vmatprep.mubr.bf16.mxu0 0
    %6025 = vmatmul.mubr.bf16.gmra.mrb[0].mxu0 %v5984
    %v6026 = vpop.f32.mrb[0].mxu0
    %v6027 = vadd.f32 0.0, %v6026
    %v6028 = vpop.f32.mrb[0].mxu0
    %v6029 = vadd.f32 0.0, %v6028
    %v6030 = vpop.f32.mrb[0].mxu0
    %v6031 = vpop.f32.mrb[0].mxu0
    %6032 = vdwg.mxu0
    %v6033 = vlaneseq
    %v6034 = vshrl.u32 %v6033, 7
    %v6035 = vsub.s32 0, %v6034
    %v6036 = vrot.slane %v5403, %v6035
    %v6037 = vlaneseq
    %v6038 = vshrl.u32 %v6037, 7
    %v6039 = vsub.s32 0, %v6038
    %v6040 = vrot.slane %v5404, %v6039
    %v6041 = vmul.f32 %v6027, %v6036
    %v6042 = vmul.f32 %v6029, %v6040
    %v6043 = vadd.f32 %v5970, %v6041
    %v6044 = vadd.f32 %v5971, %v6042
    %v6045 = vld [vmem:[%s41] sm:$0xff]
    %6047 = vset.pattern.permute.xlu0 0
    %6048 = vperm.xlu0 %6047, %v6045
    %v6049 = vpop.permute.xlu0 %6048
    %v6051 = vadd.f32 %v6043, %v6049
    %v6052 = vadd.f32 %v6044, %v6049
    %v6053 = vmax.f32 %v6051, 0.0
    %v6054 = vmax.f32 %v6052, 0.0
    %v6055 = vadd.f32 %v6053, %v2064
    %v6056 = vadd.f32 %v6054, %v2065
    %v6057 = vld [vmem:[#allocation2] sm:$0xff]
    %v6058 = vld [vmem:[#allocation2 + $0x8] sm:$0xff]
    %v6059 = vld [vmem:[#allocation2 + $0x10] sm:$0xff]
    %v6060 = vld [vmem:[#allocation2 + $0x18] sm:$0xff]
    %v6061 = vld [vmem:[#allocation2 + $0x20] sm:$0xff]
    %v6062 = vld [vmem:[#allocation2 + $0x28] sm:$0xff]
    %v6063 = vld [vmem:[#allocation2 + $0x30] sm:$0xff]
    %v6064 = vld [vmem:[#allocation2 + $0x38] sm:$0xff]
    %v6065 = vld [vmem:[#allocation2 + $0x40] sm:$0xff]
    %v6066 = vld [vmem:[#allocation2 + $0x48] sm:$0xff]
    %v6067 = vld [vmem:[#allocation2 + $0x50] sm:$0xff]
    %v6068 = vld [vmem:[#allocation2 + $0x58] sm:$0xff]
    %v6069 = vld [vmem:[#allocation2 + $0x60] sm:$0xff]
    %v6070 = vld [vmem:[#allocation2 + $0x68] sm:$0xff]
    %v6071 = vld [vmem:[#allocation2 + $0x70] sm:$0xff]
    %v6072 = vld [vmem:[#allocation2 + $0x78] sm:$0xff]
    %v6073 = vld [vmem:[#allocation2 + $0x80] sm:$0xff]
    %v6074 = vld [vmem:[#allocation2 + $0x88] sm:$0xff]
    %v6075 = vld [vmem:[#allocation2 + $0x90] sm:$0xff]
    %v6076 = vld [vmem:[#allocation2 + $0x98] sm:$0xff]
    %v6077 = vld [vmem:[#allocation2 + $0xa0] sm:$0xff]
    %v6078 = vld [vmem:[#allocation2 + $0xa8] sm:$0xff]
    %v6079 = vld [vmem:[#allocation2 + $0xb0] sm:$0xff]
    %v6080 = vld [vmem:[#allocation2 + $0xb8] sm:$0xff]
    %v6081 = vld [vmem:[#allocation2 + $0xc0] sm:$0xff]
    %v6082 = vld [vmem:[#allocation2 + $0xc8] sm:$0xff]
    %v6083 = vld [vmem:[#allocation2 + $0xd0] sm:$0xff]
    %v6084 = vld [vmem:[#allocation2 + $0xd8] sm:$0xff]
    %v6085 = vld [vmem:[#allocation2 + $0xe0] sm:$0xff]
    %v6086 = vld [vmem:[#allocation2 + $0xe8] sm:$0xff]
    %v6087 = vld [vmem:[#allocation2 + $0xf0] sm:$0xff]
    %v6088 = vld [vmem:[#allocation2 + $0xf8] sm:$0xff]
    %v6089 = vld [vmem:[#allocation2 + $0x100] sm:$0xff]
    %v6090 = vld [vmem:[#allocation2 + $0x108] sm:$0xff]
    %v6091 = vld [vmem:[#allocation2 + $0x110] sm:$0xff]
    %v6092 = vld [vmem:[#allocation2 + $0x118] sm:$0xff]
    %v6093 = vld [vmem:[#allocation2 + $0x120] sm:$0xff]
    %v6094 = vld [vmem:[#allocation2 + $0x128] sm:$0xff]
    %v6095 = vld [vmem:[#allocation2 + $0x130] sm:$0xff]
    %v6096 = vld [vmem:[#allocation2 + $0x138] sm:$0xff]
    %v6097 = vld [vmem:[#allocation2 + $0x140] sm:$0xff]
    %v6098 = vld [vmem:[#allocation2 + $0x148] sm:$0xff]
    %v6099 = vld [vmem:[#allocation2 + $0x150] sm:$0xff]
    %v6100 = vld [vmem:[#allocation2 + $0x158] sm:$0xff]
    %v6101 = vld [vmem:[#allocation2 + $0x160] sm:$0xff]
    %v6102 = vld [vmem:[#allocation2 + $0x168] sm:$0xff]
    %v6103 = vld [vmem:[#allocation2 + $0x170] sm:$0xff]
    %v6104 = vld [vmem:[#allocation2 + $0x178] sm:$0xff]
    %v6105 = vld [vmem:[#allocation2 + $0x180] sm:$0xff]
    %v6106 = vld [vmem:[#allocation2 + $0x188] sm:$0xff]
    %v6107 = vld [vmem:[#allocation2 + $0x190] sm:$0xff]
    %v6108 = vld [vmem:[#allocation2 + $0x198] sm:$0xff]
    %v6109 = vld [vmem:[#allocation2 + $0x1a0] sm:$0xff]
    %v6110 = vld [vmem:[#allocation2 + $0x1a8] sm:$0xff]
    %v6111 = vld [vmem:[#allocation2 + $0x1b0] sm:$0xff]
    %v6112 = vld [vmem:[#allocation2 + $0x1b8] sm:$0xff]
    %v6113 = vld [vmem:[#allocation2 + $0x1c0] sm:$0xff]
    %v6114 = vld [vmem:[#allocation2 + $0x1c8] sm:$0xff]
    %v6115 = vld [vmem:[#allocation2 + $0x1d0] sm:$0xff]
    %v6116 = vld [vmem:[#allocation2 + $0x1d8] sm:$0xff]
    %v6117 = vld [vmem:[#allocation2 + $0x1e0] sm:$0xff]
    %v6118 = vld [vmem:[#allocation2 + $0x1e8] sm:$0xff]
    %v6119 = vld [vmem:[#allocation2 + $0x1f0] sm:$0xff]
    %v6120 = vld [vmem:[#allocation2 + $0x1f8] sm:$0xff]
    %v6121 = vld [vmem:[#allocation2 + $0x200] sm:$0xff]
    %v6122 = vld [vmem:[#allocation2 + $0x208] sm:$0xff]
    %v6123 = vld [vmem:[#allocation2 + $0x210] sm:$0xff]
    %v6124 = vld [vmem:[#allocation2 + $0x218] sm:$0xff]
    %v6125 = vld [vmem:[#allocation2 + $0x220] sm:$0xff]
    %v6126 = vld [vmem:[#allocation2 + $0x228] sm:$0xff]
    %v6127 = vld [vmem:[#allocation2 + $0x230] sm:$0xff]
    %v6128 = vld [vmem:[#allocation2 + $0x238] sm:$0xff]
    %v6129 = vld [vmem:[#allocation2 + $0x240] sm:$0xff]
    %v6130 = vld [vmem:[#allocation2 + $0x248] sm:$0xff]
    %v6131 = vld [vmem:[#allocation2 + $0x250] sm:$0xff]
    %v6132 = vld [vmem:[#allocation2 + $0x258] sm:$0xff]
    %v6133 = vld [vmem:[#allocation2 + $0x260] sm:$0xff]
    %v6134 = vld [vmem:[#allocation2 + $0x268] sm:$0xff]
    %v6135 = vld [vmem:[#allocation2 + $0x270] sm:$0xff]
    %v6136 = vld [vmem:[#allocation2 + $0x278] sm:$0xff]
    %v6137 = vld [vmem:[#allocation2 + $0x280] sm:$0xff]
    %v6138 = vld [vmem:[#allocation2 + $0x288] sm:$0xff]
    %v6139 = vld [vmem:[#allocation2 + $0x290] sm:$0xff]
    %v6140 = vld [vmem:[#allocation2 + $0x298] sm:$0xff]
    %v6141 = vld [vmem:[#allocation2 + $0x2a0] sm:$0xff]
    %v6142 = vld [vmem:[#allocation2 + $0x2a8] sm:$0xff]
    %v6143 = vld [vmem:[#allocation2 + $0x2b0] sm:$0xff]
    %v6144 = vld [vmem:[#allocation2 + $0x2b8] sm:$0xff]
    %v6145 = vld [vmem:[#allocation2 + $0x2c0] sm:$0xff]
    %v6146 = vld [vmem:[#allocation2 + $0x2c8] sm:$0xff]
    %v6147 = vld [vmem:[#allocation2 + $0x2d0] sm:$0xff]
    %v6148 = vld [vmem:[#allocation2 + $0x2d8] sm:$0xff]
    %v6149 = vld [vmem:[#allocation2 + $0x2e0] sm:$0xff]
    %v6150 = vld [vmem:[#allocation2 + $0x2e8] sm:$0xff]
    %v6151 = vld [vmem:[#allocation2 + $0x2f0] sm:$0xff]
    %v6152 = vld [vmem:[#allocation2 + $0x2f8] sm:$0xff]
    %v6153 = vld [vmem:[#allocation2 + $0x300] sm:$0xff]
    %v6154 = vld [vmem:[#allocation2 + $0x308] sm:$0xff]
    %v6155 = vld [vmem:[#allocation2 + $0x310] sm:$0xff]
    %v6156 = vld [vmem:[#allocation2 + $0x318] sm:$0xff]
    %v6157 = vld [vmem:[#allocation2 + $0x320] sm:$0xff]
    %v6158 = vld [vmem:[#allocation2 + $0x328] sm:$0xff]
    %v6159 = vld [vmem:[#allocation2 + $0x330] sm:$0xff]
    %v6160 = vld [vmem:[#allocation2 + $0x338] sm:$0xff]
    %v6161 = vld [vmem:[#allocation2 + $0x340] sm:$0xff]
    %v6162 = vld [vmem:[#allocation2 + $0x348] sm:$0xff]
    %v6163 = vld [vmem:[#allocation2 + $0x350] sm:$0xff]
    %v6164 = vld [vmem:[#allocation2 + $0x358] sm:$0xff]
    %v6165 = vld [vmem:[#allocation2 + $0x360] sm:$0xff]
    %v6166 = vld [vmem:[#allocation2 + $0x368] sm:$0xff]
    %v6167 = vld [vmem:[#allocation2 + $0x370] sm:$0xff]
    %v6168 = vld [vmem:[#allocation2 + $0x378] sm:$0xff]
    %v6169 = vld [vmem:[#allocation2 + $0x380] sm:$0xff]
    %v6170 = vld [vmem:[#allocation2 + $0x388] sm:$0xff]
    %v6171 = vld [vmem:[#allocation2 + $0x390] sm:$0xff]
    %v6172 = vld [vmem:[#allocation2 + $0x398] sm:$0xff]
    %v6173 = vld [vmem:[#allocation2 + $0x3a0] sm:$0xff]
    %v6174 = vld [vmem:[#allocation2 + $0x3a8] sm:$0xff]
    %v6175 = vld [vmem:[#allocation2 + $0x3b0] sm:$0xff]
    %v6176 = vld [vmem:[#allocation2 + $0x3b8] sm:$0xff]
    %v6177 = vld [vmem:[#allocation2 + $0x3c0] sm:$0xff]
    %v6178 = vld [vmem:[#allocation2 + $0x3c8] sm:$0xff]
    %v6179 = vld [vmem:[#allocation2 + $0x3d0] sm:$0xff]
    %v6180 = vld [vmem:[#allocation2 + $0x3d8] sm:$0xff]
    %v6181 = vld [vmem:[#allocation2 + $0x3e0] sm:$0xff]
    %v6182 = vld [vmem:[#allocation2 + $0x3e8] sm:$0xff]
    %v6183 = vld [vmem:[#allocation2 + $0x3f0] sm:$0xff]
    %v6184 = vld [vmem:[#allocation2 + $0x3f8] sm:$0xff]
    %6185 = vmatprep.subr.mxu0 %v6058
    %6186 = vmatpush1.msra.mxu0 %v6057
    %6187 = vmatprep.subr.mxu0 %v6062
    %6188 = vmatpush1.msra.mxu0 %v6061
    %6189 = vmatprep.subr.mxu0 %v6066
    %6190 = vmatpush1.msra.mxu0 %v6065
    %6191 = vmatprep.subr.mxu0 %v6070
    %6192 = vmatpush1.msra.mxu0 %v6069
    %6193 = vmatprep.subr.mxu0 %v6074
    %6194 = vmatpush1.msra.mxu0 %v6073
    %6195 = vmatprep.subr.mxu0 %v6078
    %6196 = vmatpush1.msra.mxu0 %v6077
    %6197 = vmatprep.subr.mxu0 %v6082
    %6198 = vmatpush1.msra.mxu0 %v6081
    %6199 = vmatprep.subr.mxu0 %v6086
    %6200 = vmatpush1.msra.mxu0 %v6085
    %6201 = vmatprep.subr.mxu0 %v6090
    %6202 = vmatpush1.msra.mxu0 %v6089
    %6203 = vmatprep.subr.mxu0 %v6094
    %6204 = vmatpush1.msra.mxu0 %v6093
    %6205 = vmatprep.subr.mxu0 %v6098
    %6206 = vmatpush1.msra.mxu0 %v6097
    %6207 = vmatprep.subr.mxu0 %v6102
    %6208 = vmatpush1.msra.mxu0 %v6101
    %6209 = vmatprep.subr.mxu0 %v6106
    %6210 = vmatpush1.msra.mxu0 %v6105
    %6211 = vmatprep.subr.mxu0 %v6110
    %6212 = vmatpush1.msra.mxu0 %v6109
    %6213 = vmatprep.subr.mxu0 %v6114
    %6214 = vmatpush1.msra.mxu0 %v6113
    %6215 = vmatprep.subr.mxu0 %v6118
    %6216 = vmatpush1.msra.mxu0 %v6117
    %6217 = vmatprep.subr.mxu0 %v6122
    %6218 = vmatpush1.msra.mxu0 %v6121
    %6219 = vmatprep.subr.mxu0 %v6126
    %6220 = vmatpush1.msra.mxu0 %v6125
    %6221 = vmatprep.subr.mxu0 %v6130
    %6222 = vmatpush1.msra.mxu0 %v6129
    %6223 = vmatprep.subr.mxu0 %v6134
    %6224 = vmatpush1.msra.mxu0 %v6133
    %6225 = vmatprep.subr.mxu0 %v6138
    %6226 = vmatpush1.msra.mxu0 %v6137
    %6227 = vmatprep.subr.mxu0 %v6142
    %6228 = vmatpush1.msra.mxu0 %v6141
    %6229 = vmatprep.subr.mxu0 %v6146
    %6230 = vmatpush1.msra.mxu0 %v6145
    %6231 = vmatprep.subr.mxu0 %v6150
    %6232 = vmatpush1.msra.mxu0 %v6149
    %6233 = vmatprep.subr.mxu0 %v6154
    %6234 = vmatpush1.msra.mxu0 %v6153
    %6235 = vmatprep.subr.mxu0 %v6158
    %6236 = vmatpush1.msra.mxu0 %v6157
    %6237 = vmatprep.subr.mxu0 %v6162
    %6238 = vmatpush1.msra.mxu0 %v6161
    %6239 = vmatprep.subr.mxu0 %v6166
    %6240 = vmatpush1.msra.mxu0 %v6165
    %6241 = vmatprep.subr.mxu0 %v6170
    %6242 = vmatpush1.msra.mxu0 %v6169
    %6243 = vmatprep.subr.mxu0 %v6174
    %6244 = vmatpush1.msra.mxu0 %v6173
    %6245 = vmatprep.subr.mxu0 %v6178
    %6246 = vmatpush1.msra.mxu0 %v6177
    %6247 = vmatprep.subr.mxu0 %v6182
    %6248 = vmatpush1.msra.mxu0 %v6181
    %6249 = vmatprep.mubr.f32.mxu0 %v6056
    %6250 = vmatmul.mubr.f32.gmra.mrb[0].mxu0 %v6055
    %v6251 = vpop.f32.mrb[0].mxu0
    %v6252 = vadd.f32 0.0, %v6251
    %v6253 = vpop.f32.mrb[0].mxu0
    %v6254 = vadd.f32 0.0, %v6253
    %6255 = vdwg.mxu0
    %6256 = vmatprep.subr.mxu0 %v6060
    %6257 = vmatpush1.msra.mxu0 %v6059
    %6258 = vmatprep.subr.mxu0 %v6064
    %6259 = vmatpush1.msra.mxu0 %v6063
    %6260 = vmatprep.subr.mxu0 %v6068
    %6261 = vmatpush1.msra.mxu0 %v6067
    %6262 = vmatprep.subr.mxu0 %v6072
    %6263 = vmatpush1.msra.mxu0 %v6071
    %6264 = vmatprep.subr.mxu0 %v6076
    %6265 = vmatpush1.msra.mxu0 %v6075
    %6266 = vmatprep.subr.mxu0 %v6080
    %6267 = vmatpush1.msra.mxu0 %v6079
    %6268 = vmatprep.subr.mxu0 %v6084
    %6269 = vmatpush1.msra.mxu0 %v6083
    %6270 = vmatprep.subr.mxu0 %v6088
    %6271 = vmatpush1.msra.mxu0 %v6087
    %6272 = vmatprep.subr.mxu0 %v6092
    %6273 = vmatpush1.msra.mxu0 %v6091
    %6274 = vmatprep.subr.mxu0 %v6096
    %6275 = vmatpush1.msra.mxu0 %v6095
    %6276 = vmatprep.subr.mxu0 %v6100
    %6277 = vmatpush1.msra.mxu0 %v6099
    %6278 = vmatprep.subr.mxu0 %v6104
    %6279 = vmatpush1.msra.mxu0 %v6103
    %6280 = vmatprep.subr.mxu0 %v6108
    %6281 = vmatpush1.msra.mxu0 %v6107
    %6282 = vmatprep.subr.mxu0 %v6112
    %6283 = vmatpush1.msra.mxu0 %v6111
    %6284 = vmatprep.subr.mxu0 %v6116
    %6285 = vmatpush1.msra.mxu0 %v6115
    %6286 = vmatprep.subr.mxu0 %v6120
    %6287 = vmatpush1.msra.mxu0 %v6119
    %6288 = vmatprep.subr.mxu0 %v6124
    %6289 = vmatpush1.msra.mxu0 %v6123
    %6290 = vmatprep.subr.mxu0 %v6128
    %6291 = vmatpush1.msra.mxu0 %v6127
    %6292 = vmatprep.subr.mxu0 %v6132
    %6293 = vmatpush1.msra.mxu0 %v6131
    %6294 = vmatprep.subr.mxu0 %v6136
    %6295 = vmatpush1.msra.mxu0 %v6135
    %6296 = vmatprep.subr.mxu0 %v6140
    %6297 = vmatpush1.msra.mxu0 %v6139
    %6298 = vmatprep.subr.mxu0 %v6144
    %6299 = vmatpush1.msra.mxu0 %v6143
    %6300 = vmatprep.subr.mxu0 %v6148
    %6301 = vmatpush1.msra.mxu0 %v6147
    %6302 = vmatprep.subr.mxu0 %v6152
    %6303 = vmatpush1.msra.mxu0 %v6151
    %6304 = vmatprep.subr.mxu0 %v6156
    %6305 = vmatpush1.msra.mxu0 %v6155
    %6306 = vmatprep.subr.mxu0 %v6160
    %6307 = vmatpush1.msra.mxu0 %v6159
    %6308 = vmatprep.subr.mxu0 %v6164
    %6309 = vmatpush1.msra.mxu0 %v6163
    %6310 = vmatprep.subr.mxu0 %v6168
    %6311 = vmatpush1.msra.mxu0 %v6167
    %6312 = vmatprep.subr.mxu0 %v6172
    %6313 = vmatpush1.msra.mxu0 %v6171
    %6314 = vmatprep.subr.mxu0 %v6176
    %6315 = vmatpush1.msra.mxu0 %v6175
    %6316 = vmatprep.subr.mxu0 %v6180
    %6317 = vmatpush1.msra.mxu0 %v6179
    %6318 = vmatprep.subr.mxu0 %v6184
    %6319 = vmatpush1.msra.mxu0 %v6183
    %6320 = vmatprep.mubr.f32.mxu0 %v6056
    %6321 = vmatmul.mubr.f32.gmra.mrb[0].mxu0 %v6055
    %v6322 = vpop.f32.mrb[0].mxu0
    %v6323 = vadd.f32 0.0, %v6322
    %v6324 = vpop.f32.mrb[0].mxu0
    %v6325 = vadd.f32 0.0, %v6324
    %6326 = vdwg.mxu0
    %v6327 = vld [vmem:[%s45] sm:$0xf]
    %v6328 = vld [vmem:[%s45 + $0x4] sm:$0xf]
    %v6329 = vld [vmem:[%s45 + $0x8] sm:$0xf]
    %v6330 = vld [vmem:[%s45 + $0xc] sm:$0xf]
    %v6331 = vld [vmem:[%s45 + $0x10] sm:$0xf]
    %v6332 = vld [vmem:[%s45 + $0x14] sm:$0xf]
    %v6333 = vld [vmem:[%s45 + $0x18] sm:$0xf]
    %v6334 = vld [vmem:[%s45 + $0x1c] sm:$0xf]
    %v6335 = vld [vmem:[%s45 + $0x20] sm:$0xf]
    %v6336 = vld [vmem:[%s45 + $0x24] sm:$0xf]
    %v6337 = vld [vmem:[%s45 + $0x28] sm:$0xf]
    %v6338 = vld [vmem:[%s45 + $0x2c] sm:$0xf]
    %v6339 = vld [vmem:[%s45 + $0x30] sm:$0xf]
    %v6340 = vld [vmem:[%s45 + $0x34] sm:$0xf]
    %v6341 = vld [vmem:[%s45 + $0x38] sm:$0xf]
    %v6342 = vld [vmem:[%s45 + $0x3c] sm:$0xf]
    %v6343 = vld [vmem:[%s45 + $0x40] sm:$0xf]
    %v6344 = vld [vmem:[%s45 + $0x44] sm:$0xf]
    %v6345 = vld [vmem:[%s45 + $0x48] sm:$0xf]
    %v6346 = vld [vmem:[%s45 + $0x4c] sm:$0xf]
    %v6347 = vld [vmem:[%s45 + $0x50] sm:$0xf]
    %v6348 = vld [vmem:[%s45 + $0x54] sm:$0xf]
    %v6349 = vld [vmem:[%s45 + $0x58] sm:$0xf]
    %v6350 = vld [vmem:[%s45 + $0x5c] sm:$0xf]
    %v6351 = vld [vmem:[%s45 + $0x60] sm:$0xf]
    %v6352 = vld [vmem:[%s45 + $0x64] sm:$0xf]
    %v6353 = vld [vmem:[%s45 + $0x68] sm:$0xf]
    %v6354 = vld [vmem:[%s45 + $0x6c] sm:$0xf]
    %v6355 = vld [vmem:[%s45 + $0x70] sm:$0xf]
    %v6356 = vld [vmem:[%s45 + $0x74] sm:$0xf]
    %v6357 = vld [vmem:[%s45 + $0x78] sm:$0xf]
    %v6358 = vld [vmem:[%s45 + $0x7c] sm:$0xf]
    %v6359 = vld [vmem:[%s45 + $0x80] sm:$0xf]
    %v6360 = vld [vmem:[%s45 + $0x84] sm:$0xf]
    %v6361 = vld [vmem:[%s45 + $0x88] sm:$0xf]
    %v6362 = vld [vmem:[%s45 + $0x8c] sm:$0xf]
    %v6363 = vld [vmem:[%s49] sm:$0xff]
    %v6364 = vld [vmem:[%s49 + $0x8] sm:$0xff]
    %v6365 = vld [vmem:[%s49 + $0x10] sm:$0xff]
    %v6366 = vld [vmem:[%s49 + $0x18] sm:$0xff]
    %v6367 = vld [vmem:[%s49 + $0x20] sm:$0x1]
    %v6368 = vld [vmem:[%s49 + $0x28] sm:$0x1]
    %v6369 = vld [vmem:[%s49 + $0x30] sm:$0x1]
    %v6370 = vld [vmem:[%s49 + $0x38] sm:$0x1]
    %6372 = vrot.lane.b32.xlu0 %v6325, 17
    %v6373 = vpop.permute.xlu0 %6372
    %6378 = vrot.lane.b32.xlu0 %v6252, 17
    %v6379 = vpop.permute.xlu0 %6378
    %6380 = vrot.lane.b32.xlu0 %v6254, 17
    %v6381 = vpop.permute.xlu0 %6380
    %6382 = vrot.lane.b32.xlu0 %v6323, 17
    %v6383 = vpop.permute.xlu0 %6382
    %v6384 = vsel %vm238, %v6379, %v6381
    %v6385 = vsel %vm238, %v6381, %v6383
    %v6386 = vsel %vm238, %v6383, %v6373
    %v6391 = vsel %vm238, %v6373, %v6379
    %v6392 = vpack.c.bf16 %v6391, %v6391
    %v6393 = vpack.c.bf16 %v6384, %v6384
    %v6394 = vpack.c.bf16 %v6385, %v6385
    %v6395 = vpack.c.bf16 %v6386, %v6386
    %v6400 = vunpack.c.l.b16 %v6327
    %v6401 = vunpack.c.l.b16 %v6328
    %v6402 = vunpack.c.l.b16 %v6329
    %v6403 = vunpack.c.l.b16 %v6330
    %v6404 = vpack.c.b16 %v6401, %v6400
    %v6405 = vpack.c.b16 %v6403, %v6402
    %v6407 = vsel %vm2093, %v6404, 0
    %v6410 = vsel %vm2093, %v6405, 0
    %v6413 = vsel %vm2097, %v6392, 0
    %v6416 = vsel %vm2097, %v6393, 0
    %v6419 = vsel %vm2097, %v6394, 0
    %v6422 = vsel %vm2097, %v6395, 0
    %6424 = vmatprep.subr.bf16.mxu0 %v6416
    %6425 = vmatpush1.bf16.msra.mxu0 %v6413
    %6426 = vmatprep.subr.bf16.mxu0 0
    %6427 = vmatpush1.bf16.msra.mxu0 0
    %6428 = vmatprep.subr.bf16.mxu0 0
    %6429 = vmatpush1.bf16.msra.mxu0 0
    %6430 = vmatprep.subr.bf16.mxu0 0
    %6431 = vmatpush1.bf16.msra.mxu0 0
    %6432 = vmatprep.subr.bf16.mxu0 0
    %6433 = vmatpush1.bf16.msra.mxu0 0
    %6434 = vmatprep.subr.bf16.mxu0 0
    %6435 = vmatpush1.bf16.msra.mxu0 0
    %6436 = vmatprep.subr.bf16.mxu0 0
    %6437 = vmatpush1.bf16.msra.mxu0 0
    %6438 = vmatprep.subr.bf16.mxu0 0
    %6439 = vmatpush1.bf16.msra.mxu0 0
    %6440 = vmatprep.subr.bf16.mxu0 0
    %6441 = vmatpush1.bf16.msra.mxu0 0
    %6442 = vmatprep.subr.bf16.mxu0 0
    %6443 = vmatpush1.bf16.msra.mxu0 0
    %6444 = vmatprep.subr.bf16.mxu0 0
    %6445 = vmatpush1.bf16.msra.mxu0 0
    %6446 = vmatprep.subr.bf16.mxu0 0
    %6447 = vmatpush1.bf16.msra.mxu0 0
    %6448 = vmatprep.subr.bf16.mxu0 0
    %6449 = vmatpush1.bf16.msra.mxu0 0
    %6450 = vmatprep.subr.bf16.mxu0 0
    %6451 = vmatpush1.bf16.msra.mxu0 0
    %6452 = vmatprep.subr.bf16.mxu0 0
    %6453 = vmatpush1.bf16.msra.mxu0 0
    %6454 = vmatprep.subr.bf16.mxu0 0
    %6455 = vmatpush1.bf16.msra.mxu0 0
    %6456 = vmatprep.mubr.bf16.mxu0 0
    %6457 = vmatmul.mubr.bf16.gmra.mrb[0].mxu0 %v6407
    %v6458 = vpop.f32.mrb[0].mxu0
    %v6459 = vadd.f32 0.0, %v6458
    %v6460 = vpop.f32.mrb[0].mxu0
    %v6461 = vadd.f32 0.0, %v6460
    %v6462 = vpop.f32.mrb[0].mxu0
    %v6463 = vadd.f32 0.0, %v6462
    %v6464 = vpop.f32.mrb[0].mxu0
    %v6465 = vadd.f32 0.0, %v6464
    %6466 = vmatprep.mubr.bf16.mxu0 0
    %6467 = vmatmul.mubr.bf16.gmra.mrb[0].mxu0 %v6410
    %v6468 = vpop.f32.mrb[0].mxu0
    %v6469 = vadd.f32 0.0, %v6468
    %v6470 = vpop.f32.mrb[0].mxu0
    %v6471 = vadd.f32 0.0, %v6470
    %v6472 = vpop.f32.mrb[0].mxu0
    %v6473 = vadd.f32 0.0, %v6472
    %v6474 = vpop.f32.mrb[0].mxu0
    %v6475 = vadd.f32 0.0, %v6474
    %6476 = vdwg.mxu0
    %6477 = vmatprep.subr.bf16.mxu0 %v6422
    %6478 = vmatpush1.bf16.msra.mxu0 %v6419
    %6479 = vmatprep.subr.bf16.mxu0 0
    %6480 = vmatpush1.bf16.msra.mxu0 0
    %6481 = vmatprep.subr.bf16.mxu0 0
    %6482 = vmatpush1.bf16.msra.mxu0 0
    %6483 = vmatprep.subr.bf16.mxu0 0
    %6484 = vmatpush1.bf16.msra.mxu0 0
    %6485 = vmatprep.subr.bf16.mxu0 0
    %6486 = vmatpush1.bf16.msra.mxu0 0
    %6487 = vmatprep.subr.bf16.mxu0 0
    %6488 = vmatpush1.bf16.msra.mxu0 0
    %6489 = vmatprep.subr.bf16.mxu0 0
    %6490 = vmatpush1.bf16.msra.mxu0 0
    %6491 = vmatprep.subr.bf16.mxu0 0
    %6492 = vmatpush1.bf16.msra.mxu0 0
    %6493 = vmatprep.subr.bf16.mxu0 0
    %6494 = vmatpush1.bf16.msra.mxu0 0
    %6495 = vmatprep.subr.bf16.mxu0 0
    %6496 = vmatpush1.bf16.msra.mxu0 0
    %6497 = vmatprep.subr.bf16.mxu0 0
    %6498 = vmatpush1.bf16.msra.mxu0 0
    %6499 = vmatprep.subr.bf16.mxu0 0
    %6500 = vmatpush1.bf16.msra.mxu0 0
    %6501 = vmatprep.subr.bf16.mxu0 0
    %6502 = vmatpush1.bf16.msra.mxu0 0
    %6503 = vmatprep.subr.bf16.mxu0 0
    %6504 = vmatpush1.bf16.msra.mxu0 0
    %6505 = vmatprep.subr.bf16.mxu0 0
    %6506 = vmatpush1.bf16.msra.mxu0 0
    %6507 = vmatprep.subr.bf16.mxu0 0
    %6508 = vmatpush1.bf16.msra.mxu0 0
    %6509 = vmatprep.mubr.bf16.mxu0 0
    %6510 = vmatmul.mubr.bf16.gmra.mrb[0].mxu0 %v6407
    %v6511 = vpop.f32.mrb[0].mxu0
    %v6512 = vadd.f32 0.0, %v6511
    %v6513 = vpop.f32.mrb[0].mxu0
    %v6514 = vadd.f32 0.0, %v6513
    %v6515 = vpop.f32.mrb[0].mxu0
    %v6516 = vadd.f32 0.0, %v6515
    %v6517 = vpop.f32.mrb[0].mxu0
    %v6518 = vadd.f32 0.0, %v6517
    %6519 = vmatprep.mubr.bf16.mxu0 0
    %6520 = vmatmul.mubr.bf16.gmra.mrb[0].mxu0 %v6410
    %v6521 = vpop.f32.mrb[0].mxu0
    %v6522 = vadd.f32 0.0, %v6521
    %v6523 = vpop.f32.mrb[0].mxu0
    %v6524 = vadd.f32 0.0, %v6523
    %v6525 = vpop.f32.mrb[0].mxu0
    %v6526 = vadd.f32 0.0, %v6525
    %v6527 = vpop.f32.mrb[0].mxu0
    %v6528 = vadd.f32 0.0, %v6527
    %6529 = vdwg.mxu0
    %v6530 = vlaneseq
    %v6531 = vshrl.u32 %v6530, 7
    %v6532 = vsub.s32 0, %v6531
    %v6533 = vrot.slane %v6363, %v6532
    %v6534 = vlaneseq
    %v6535 = vshrl.u32 %v6534, 7
    %v6536 = vsub.s32 0, %v6535
    %v6537 = vrot.slane %v6364, %v6536
    %v6538 = vlaneseq
    %v6539 = vshrl.u32 %v6538, 7
    %v6540 = vsub.s32 0, %v6539
    %v6541 = vrot.slane %v6365, %v6540
    %v6542 = vlaneseq
    %v6543 = vshrl.u32 %v6542, 7
    %v6544 = vsub.s32 0, %v6543
    %v6545 = vrot.slane %v6366, %v6544
    %v6546 = vmul.f32 %v6459, %v6533
    %v6547 = vmul.f32 %v6461, %v6537
    %v6548 = vmul.f32 %v6512, %v6541
    %v6549 = vmul.f32 %v6514, %v6545
    %v6550 = vmul.f32 %v6463, %v6533
    %v6551 = vmul.f32 %v6465, %v6537
    %v6552 = vmul.f32 %v6516, %v6541
    %v6553 = vmul.f32 %v6518, %v6545
    %v6554 = vmul.f32 %v6469, %v6533
    %v6555 = vmul.f32 %v6471, %v6537
    %v6556 = vmul.f32 %v6522, %v6541
    %v6557 = vmul.f32 %v6524, %v6545
    %v6558 = vmul.f32 %v6473, %v6533
    %v6559 = vmul.f32 %v6475, %v6537
    %v6560 = vmul.f32 %v6526, %v6541
    %v6561 = vmul.f32 %v6528, %v6545
    %v6562 = vadd.f32 %v6546, 0.0
    %v6563 = vadd.f32 %v6547, 0.0
    %v6564 = vadd.f32 %v6548, 0.0
    %v6565 = vadd.f32 %v6549, 0.0
    %v6566 = vadd.f32 %v6550, 0.0
    %v6567 = vadd.f32 %v6551, 0.0
    %v6568 = vadd.f32 %v6552, 0.0
    %v6569 = vadd.f32 %v6553, 0.0
    %v6570 = vadd.f32 %v6554, 0.0
    %v6571 = vadd.f32 %v6555, 0.0
    %v6572 = vadd.f32 %v6556, 0.0
    %v6573 = vadd.f32 %v6557, 0.0
    %v6574 = vadd.f32 %v6558, 0.0
    %v6575 = vadd.f32 %v6559, 0.0
    %v6576 = vadd.f32 %v6560, 0.0
    %v6577 = vadd.f32 %v6561, 0.0
    %6578 = vrot.lane.b32.xlu0 %v6325, 16
    %v6579 = vpop.permute.xlu0 %6578
    %6581 = vrot.lane.b32.xlu0 %v6252, 16
    %v6582 = vpop.permute.xlu0 %6581
    %6583 = vrot.lane.b32.xlu0 %v6254, 16
    %v6584 = vpop.permute.xlu0 %6583
    %6585 = vrot.lane.b32.xlu0 %v6323, 16
    %v6586 = vpop.permute.xlu0 %6585
    %v6587 = vsel %vm425, %v6582, %v6584
    %v6588 = vsel %vm425, %v6584, %v6586
    %v6589 = vsel %vm425, %v6586, %v6579
    %v6594 = vsel %vm425, %v6579, %v6582
    %v6595 = vpack.c.bf16 %v6594, %v6594
    %v6596 = vpack.c.bf16 %v6587, %v6587
    %v6597 = vpack.c.bf16 %v6588, %v6588
    %v6598 = vpack.c.bf16 %v6589, %v6589
    %v6603 = vunpack.c.l.b16 %v6331
    %v6604 = vunpack.c.l.b16 %v6332
    %v6605 = vunpack.c.l.b16 %v6333
    %v6606 = vunpack.c.l.b16 %v6334
    %v6607 = vpack.c.b16 %v6604, %v6603
    %v6608 = vpack.c.b16 %v6606, %v6605
    %v6610 = vsel %vm2093, %v6607, 0
    %v6613 = vsel %vm2093, %v6608, 0
    %v6616 = vsel %vm2097, %v6595, 0
    %v6619 = vsel %vm2097, %v6596, 0
    %v6622 = vsel %vm2097, %v6597, 0
    %v6625 = vsel %vm2097, %v6598, 0
    %6627 = vmatprep.subr.bf16.mxu0 %v6619
    %6628 = vmatpush1.bf16.msra.mxu0 %v6616
    %6629 = vmatprep.subr.bf16.mxu0 0
    %6630 = vmatpush1.bf16.msra.mxu0 0
    %6631 = vmatprep.subr.bf16.mxu0 0
    %6632 = vmatpush1.bf16.msra.mxu0 0
    %6633 = vmatprep.subr.bf16.mxu0 0
    %6634 = vmatpush1.bf16.msra.mxu0 0
    %6635 = vmatprep.subr.bf16.mxu0 0
    %6636 = vmatpush1.bf16.msra.mxu0 0
    %6637 = vmatprep.subr.bf16.mxu0 0
    %6638 = vmatpush1.bf16.msra.mxu0 0
    %6639 = vmatprep.subr.bf16.mxu0 0
    %6640 = vmatpush1.bf16.msra.mxu0 0
    %6641 = vmatprep.subr.bf16.mxu0 0
    %6642 = vmatpush1.bf16.msra.mxu0 0
    %6643 = vmatprep.subr.bf16.mxu0 0
    %6644 = vmatpush1.bf16.msra.mxu0 0
    %6645 = vmatprep.subr.bf16.mxu0 0
    %6646 = vmatpush1.bf16.msra.mxu0 0
    %6647 = vmatprep.subr.bf16.mxu0 0
    %6648 = vmatpush1.bf16.msra.mxu0 0
    %6649 = vmatprep.subr.bf16.mxu0 0
    %6650 = vmatpush1.bf16.msra.mxu0 0
    %6651 = vmatprep.subr.bf16.mxu0 0
    %6652 = vmatpush1.bf16.msra.mxu0 0
    %6653 = vmatprep.subr.bf16.mxu0 0
    %6654 = vmatpush1.bf16.msra.mxu0 0
    %6655 = vmatprep.subr.bf16.mxu0 0
    %6656 = vmatpush1.bf16.msra.mxu0 0
    %6657 = vmatprep.subr.bf16.mxu0 0
    %6658 = vmatpush1.bf16.msra.mxu0 0
    %6659 = vmatprep.mubr.bf16.mxu0 0
    %6660 = vmatmul.mubr.bf16.gmra.mrb[0].mxu0 %v6610
    %v6661 = vpop.f32.mrb[0].mxu0
    %v6662 = vadd.f32 0.0, %v6661
    %v6663 = vpop.f32.mrb[0].mxu0
    %v6664 = vadd.f32 0.0, %v6663
    %v6665 = vpop.f32.mrb[0].mxu0
    %v6666 = vadd.f32 0.0, %v6665
    %v6667 = vpop.f32.mrb[0].mxu0
    %v6668 = vadd.f32 0.0, %v6667
    %6669 = vmatprep.mubr.bf16.mxu0 0
    %6670 = vmatmul.mubr.bf16.gmra.mrb[0].mxu0 %v6613
    %v6671 = vpop.f32.mrb[0].mxu0
    %v6672 = vadd.f32 0.0, %v6671
    %v6673 = vpop.f32.mrb[0].mxu0
    %v6674 = vadd.f32 0.0, %v6673
    %v6675 = vpop.f32.mrb[0].mxu0
    %v6676 = vadd.f32 0.0, %v6675
    %v6677 = vpop.f32.mrb[0].mxu0
    %v6678 = vadd.f32 0.0, %v6677
    %6679 = vdwg.mxu0
    %6680 = vmatprep.subr.bf16.mxu0 %v6625
    %6681 = vmatpush1.bf16.msra.mxu0 %v6622
    %6682 = vmatprep.subr.bf16.mxu0 0
    %6683 = vmatpush1.bf16.msra.mxu0 0
    %6684 = vmatprep.subr.bf16.mxu0 0
    %6685 = vmatpush1.bf16.msra.mxu0 0
    %6686 = vmatprep.subr.bf16.mxu0 0
    %6687 = vmatpush1.bf16.msra.mxu0 0
    %6688 = vmatprep.subr.bf16.mxu0 0
    %6689 = vmatpush1.bf16.msra.mxu0 0
    %6690 = vmatprep.subr.bf16.mxu0 0
    %6691 = vmatpush1.bf16.msra.mxu0 0
    %6692 = vmatprep.subr.bf16.mxu0 0
    %6693 = vmatpush1.bf16.msra.mxu0 0
    %6694 = vmatprep.subr.bf16.mxu0 0
    %6695 = vmatpush1.bf16.msra.mxu0 0
    %6696 = vmatprep.subr.bf16.mxu0 0
    %6697 = vmatpush1.bf16.msra.mxu0 0
    %6698 = vmatprep.subr.bf16.mxu0 0
    %6699 = vmatpush1.bf16.msra.mxu0 0
    %6700 = vmatprep.subr.bf16.mxu0 0
    %6701 = vmatpush1.bf16.msra.mxu0 0
    %6702 = vmatprep.subr.bf16.mxu0 0
    %6703 = vmatpush1.bf16.msra.mxu0 0
    %6704 = vmatprep.subr.bf16.mxu0 0
    %6705 = vmatpush1.bf16.msra.mxu0 0
    %6706 = vmatprep.subr.bf16.mxu0 0
    %6707 = vmatpush1.bf16.msra.mxu0 0
    %6708 = vmatprep.subr.bf16.mxu0 0
    %6709 = vmatpush1.bf16.msra.mxu0 0
    %6710 = vmatprep.subr.bf16.mxu0 0
    %6711 = vmatpush1.bf16.msra.mxu0 0
    %6712 = vmatprep.mubr.bf16.mxu0 0
    %6713 = vmatmul.mubr.bf16.gmra.mrb[0].mxu0 %v6610
    %v6714 = vpop.f32.mrb[0].mxu0
    %v6715 = vadd.f32 0.0, %v6714
    %v6716 = vpop.f32.mrb[0].mxu0
    %v6717 = vadd.f32 0.0, %v6716
    %v6718 = vpop.f32.mrb[0].mxu0
    %v6719 = vadd.f32 0.0, %v6718
    %v6720 = vpop.f32.mrb[0].mxu0
    %v6721 = vadd.f32 0.0, %v6720
    %6722 = vmatprep.mubr.bf16.mxu0 0
    %6723 = vmatmul.mubr.bf16.gmra.mrb[0].mxu0 %v6613
    %v6724 = vpop.f32.mrb[0].mxu0
    %v6725 = vadd.f32 0.0, %v6724
    %v6726 = vpop.f32.mrb[0].mxu0
    %v6727 = vadd.f32 0.0, %v6726
    %v6728 = vpop.f32.mrb[0].mxu0
    %v6729 = vadd.f32 0.0, %v6728
    %v6730 = vpop.f32.mrb[0].mxu0
    %v6731 = vadd.f32 0.0, %v6730
    %6732 = vdwg.mxu0
    %v6733 = vlaneseq
    %v6734 = vshrl.u32 %v6733, 7
    %v6735 = vsub.s32 1, %v6734
    %v6736 = vrot.slane %v6363, %v6735
    %v6737 = vlaneseq
    %v6738 = vshrl.u32 %v6737, 7
    %v6739 = vsub.s32 1, %v6738
    %v6740 = vrot.slane %v6364, %v6739
    %v6741 = vlaneseq
    %v6742 = vshrl.u32 %v6741, 7
    %v6743 = vsub.s32 1, %v6742
    %v6744 = vrot.slane %v6365, %v6743
    %v6745 = vlaneseq
    %v6746 = vshrl.u32 %v6745, 7
    %v6747 = vsub.s32 1, %v6746
    %v6748 = vrot.slane %v6366, %v6747
    %v6749 = vmul.f32 %v6662, %v6736
    %v6750 = vmul.f32 %v6664, %v6740
    %v6751 = vmul.f32 %v6715, %v6744
    %v6752 = vmul.f32 %v6717, %v6748
    %v6753 = vmul.f32 %v6666, %v6736
    %v6754 = vmul.f32 %v6668, %v6740
    %v6755 = vmul.f32 %v6719, %v6744
    %v6756 = vmul.f32 %v6721, %v6748
    %v6757 = vmul.f32 %v6672, %v6736
    %v6758 = vmul.f32 %v6674, %v6740
    %v6759 = vmul.f32 %v6725, %v6744
    %v6760 = vmul.f32 %v6727, %v6748
    %v6761 = vmul.f32 %v6676, %v6736
    %v6762 = vmul.f32 %v6678, %v6740
    %v6763 = vmul.f32 %v6729, %v6744
    %v6764 = vmul.f32 %v6731, %v6748
    %v6765 = vadd.f32 %v6562, %v6749
    %v6766 = vadd.f32 %v6563, %v6750
    %v6767 = vadd.f32 %v6564, %v6751
    %v6768 = vadd.f32 %v6565, %v6752
    %v6769 = vadd.f32 %v6566, %v6753
    %v6770 = vadd.f32 %v6567, %v6754
    %v6771 = vadd.f32 %v6568, %v6755
    %v6772 = vadd.f32 %v6569, %v6756
    %v6773 = vadd.f32 %v6570, %v6757
    %v6774 = vadd.f32 %v6571, %v6758
    %v6775 = vadd.f32 %v6572, %v6759
    %v6776 = vadd.f32 %v6573, %v6760
    %v6777 = vadd.f32 %v6574, %v6761
    %v6778 = vadd.f32 %v6575, %v6762
    %v6779 = vadd.f32 %v6576, %v6763
    %v6780 = vadd.f32 %v6577, %v6764
    %6781 = vrot.lane.b32.xlu0 %v6325, 15
    %v6782 = vpop.permute.xlu0 %6781
    %6784 = vrot.lane.b32.xlu0 %v6252, 15
    %v6785 = vpop.permute.xlu0 %6784
    %6786 = vrot.lane.b32.xlu0 %v6254, 15
    %v6787 = vpop.permute.xlu0 %6786
    %6788 = vrot.lane.b32.xlu0 %v6323, 15
    %v6789 = vpop.permute.xlu0 %6788
    %v6790 = vsel %vm611, %v6785, %v6787
    %v6791 = vsel %vm611, %v6787, %v6789
    %v6792 = vsel %vm611, %v6789, %v6782
    %v6797 = vsel %vm611, %v6782, %v6785
    %v6798 = vpack.c.bf16 %v6797, %v6797
    %v6799 = vpack.c.bf16 %v6790, %v6790
    %v6800 = vpack.c.bf16 %v6791, %v6791
    %v6801 = vpack.c.bf16 %v6792, %v6792
    %v6806 = vunpack.c.l.b16 %v6335
    %v6807 = vunpack.c.l.b16 %v6336
    %v6808 = vunpack.c.l.b16 %v6337
    %v6809 = vunpack.c.l.b16 %v6338
    %v6810 = vpack.c.b16 %v6807, %v6806
    %v6811 = vpack.c.b16 %v6809, %v6808
    %v6813 = vsel %vm2093, %v6810, 0
    %v6816 = vsel %vm2093, %v6811, 0
    %v6819 = vsel %vm2097, %v6798, 0
    %v6822 = vsel %vm2097, %v6799, 0
    %v6825 = vsel %vm2097, %v6800, 0
    %v6828 = vsel %vm2097, %v6801, 0
    %6830 = vmatprep.subr.bf16.mxu0 %v6822
    %6831 = vmatpush1.bf16.msra.mxu0 %v6819
    %6832 = vmatprep.subr.bf16.mxu0 0
    %6833 = vmatpush1.bf16.msra.mxu0 0
    %6834 = vmatprep.subr.bf16.mxu0 0
    %6835 = vmatpush1.bf16.msra.mxu0 0
    %6836 = vmatprep.subr.bf16.mxu0 0
    %6837 = vmatpush1.bf16.msra.mxu0 0
    %6838 = vmatprep.subr.bf16.mxu0 0
    %6839 = vmatpush1.bf16.msra.mxu0 0
    %6840 = vmatprep.subr.bf16.mxu0 0
    %6841 = vmatpush1.bf16.msra.mxu0 0
    %6842 = vmatprep.subr.bf16.mxu0 0
    %6843 = vmatpush1.bf16.msra.mxu0 0
    %6844 = vmatprep.subr.bf16.mxu0 0
    %6845 = vmatpush1.bf16.msra.mxu0 0
    %6846 = vmatprep.subr.bf16.mxu0 0
    %6847 = vmatpush1.bf16.msra.mxu0 0
    %6848 = vmatprep.subr.bf16.mxu0 0
    %6849 = vmatpush1.bf16.msra.mxu0 0
    %6850 = vmatprep.subr.bf16.mxu0 0
    %6851 = vmatpush1.bf16.msra.mxu0 0
    %6852 = vmatprep.subr.bf16.mxu0 0
    %6853 = vmatpush1.bf16.msra.mxu0 0
    %6854 = vmatprep.subr.bf16.mxu0 0
    %6855 = vmatpush1.bf16.msra.mxu0 0
    %6856 = vmatprep.subr.bf16.mxu0 0
    %6857 = vmatpush1.bf16.msra.mxu0 0
    %6858 = vmatprep.subr.bf16.mxu0 0
    %6859 = vmatpush1.bf16.msra.mxu0 0
    %6860 = vmatprep.subr.bf16.mxu0 0
    %6861 = vmatpush1.bf16.msra.mxu0 0
    %6862 = vmatprep.mubr.bf16.mxu0 0
    %6863 = vmatmul.mubr.bf16.gmra.mrb[0].mxu0 %v6813
    %v6864 = vpop.f32.mrb[0].mxu0
    %v6865 = vadd.f32 0.0, %v6864
    %v6866 = vpop.f32.mrb[0].mxu0
    %v6867 = vadd.f32 0.0, %v6866
    %v6868 = vpop.f32.mrb[0].mxu0
    %v6869 = vadd.f32 0.0, %v6868
    %v6870 = vpop.f32.mrb[0].mxu0
    %v6871 = vadd.f32 0.0, %v6870
    %6872 = vmatprep.mubr.bf16.mxu0 0
    %6873 = vmatmul.mubr.bf16.gmra.mrb[0].mxu0 %v6816
    %v6874 = vpop.f32.mrb[0].mxu0
    %v6875 = vadd.f32 0.0, %v6874
    %v6876 = vpop.f32.mrb[0].mxu0
    %v6877 = vadd.f32 0.0, %v6876
    %v6878 = vpop.f32.mrb[0].mxu0
    %v6879 = vadd.f32 0.0, %v6878
    %v6880 = vpop.f32.mrb[0].mxu0
    %v6881 = vadd.f32 0.0, %v6880
    %6882 = vdwg.mxu0
    %6883 = vmatprep.subr.bf16.mxu0 %v6828
    %6884 = vmatpush1.bf16.msra.mxu0 %v6825
    %6885 = vmatprep.subr.bf16.mxu0 0
    %6886 = vmatpush1.bf16.msra.mxu0 0
    %6887 = vmatprep.subr.bf16.mxu0 0
    %6888 = vmatpush1.bf16.msra.mxu0 0
    %6889 = vmatprep.subr.bf16.mxu0 0
    %6890 = vmatpush1.bf16.msra.mxu0 0
    %6891 = vmatprep.subr.bf16.mxu0 0
    %6892 = vmatpush1.bf16.msra.mxu0 0
    %6893 = vmatprep.subr.bf16.mxu0 0
    %6894 = vmatpush1.bf16.msra.mxu0 0
    %6895 = vmatprep.subr.bf16.mxu0 0
    %6896 = vmatpush1.bf16.msra.mxu0 0
    %6897 = vmatprep.subr.bf16.mxu0 0
    %6898 = vmatpush1.bf16.msra.mxu0 0
    %6899 = vmatprep.subr.bf16.mxu0 0
    %6900 = vmatpush1.bf16.msra.mxu0 0
    %6901 = vmatprep.subr.bf16.mxu0 0
    %6902 = vmatpush1.bf16.msra.mxu0 0
    %6903 = vmatprep.subr.bf16.mxu0 0
    %6904 = vmatpush1.bf16.msra.mxu0 0
    %6905 = vmatprep.subr.bf16.mxu0 0
    %6906 = vmatpush1.bf16.msra.mxu0 0
    %6907 = vmatprep.subr.bf16.mxu0 0
    %6908 = vmatpush1.bf16.msra.mxu0 0
    %6909 = vmatprep.subr.bf16.mxu0 0
    %6910 = vmatpush1.bf16.msra.mxu0 0
    %6911 = vmatprep.subr.bf16.mxu0 0
    %6912 = vmatpush1.bf16.msra.mxu0 0
    %6913 = vmatprep.subr.bf16.mxu0 0
    %6914 = vmatpush1.bf16.msra.mxu0 0
    %6915 = vmatprep.mubr.bf16.mxu0 0
    %6916 = vmatmul.mubr.bf16.gmra.mrb[0].mxu0 %v6813
    %v6917 = vpop.f32.mrb[0].mxu0
    %v6918 = vadd.f32 0.0, %v6917
    %v6919 = vpop.f32.mrb[0].mxu0
    %v6920 = vadd.f32 0.0, %v6919
    %v6921 = vpop.f32.mrb[0].mxu0
    %v6922 = vadd.f32 0.0, %v6921
    %v6923 = vpop.f32.mrb[0].mxu0
    %v6924 = vadd.f32 0.0, %v6923
    %6925 = vmatprep.mubr.bf16.mxu0 0
    %6926 = vmatmul.mubr.bf16.gmra.mrb[0].mxu0 %v6816
    %v6927 = vpop.f32.mrb[0].mxu0
    %v6928 = vadd.f32 0.0, %v6927
    %v6929 = vpop.f32.mrb[0].mxu0
    %v6930 = vadd.f32 0.0, %v6929
    %v6931 = vpop.f32.mrb[0].mxu0
    %v6932 = vadd.f32 0.0, %v6931
    %v6933 = vpop.f32.mrb[0].mxu0
    %v6934 = vadd.f32 0.0, %v6933
    %6935 = vdwg.mxu0
    %v6936 = vlaneseq
    %v6937 = vshrl.u32 %v6936, 7
    %v6938 = vsub.s32 2, %v6937
    %v6939 = vrot.slane %v6363, %v6938
    %v6940 = vlaneseq
    %v6941 = vshrl.u32 %v6940, 7
    %v6942 = vsub.s32 2, %v6941
    %v6943 = vrot.slane %v6364, %v6942
    %v6944 = vlaneseq
    %v6945 = vshrl.u32 %v6944, 7
    %v6946 = vsub.s32 2, %v6945
    %v6947 = vrot.slane %v6365, %v6946
    %v6948 = vlaneseq
    %v6949 = vshrl.u32 %v6948, 7
    %v6950 = vsub.s32 2, %v6949
    %v6951 = vrot.slane %v6366, %v6950
    %v6952 = vmul.f32 %v6865, %v6939
    %v6953 = vmul.f32 %v6867, %v6943
    %v6954 = vmul.f32 %v6918, %v6947
    %v6955 = vmul.f32 %v6920, %v6951
    %v6956 = vmul.f32 %v6869, %v6939
    %v6957 = vmul.f32 %v6871, %v6943
    %v6958 = vmul.f32 %v6922, %v6947
    %v6959 = vmul.f32 %v6924, %v6951
    %v6960 = vmul.f32 %v6875, %v6939
    %v6961 = vmul.f32 %v6877, %v6943
    %v6962 = vmul.f32 %v6928, %v6947
    %v6963 = vmul.f32 %v6930, %v6951
    %v6964 = vmul.f32 %v6879, %v6939
    %v6965 = vmul.f32 %v6881, %v6943
    %v6966 = vmul.f32 %v6932, %v6947
    %v6967 = vmul.f32 %v6934, %v6951
    %v6968 = vadd.f32 %v6765, %v6952
    %v6969 = vadd.f32 %v6766, %v6953
    %v6970 = vadd.f32 %v6767, %v6954
    %v6971 = vadd.f32 %v6768, %v6955
    %v6972 = vadd.f32 %v6769, %v6956
    %v6973 = vadd.f32 %v6770, %v6957
    %v6974 = vadd.f32 %v6771, %v6958
    %v6975 = vadd.f32 %v6772, %v6959
    %v6976 = vadd.f32 %v6773, %v6960
    %v6977 = vadd.f32 %v6774, %v6961
    %v6978 = vadd.f32 %v6775, %v6962
    %v6979 = vadd.f32 %v6776, %v6963
    %v6980 = vadd.f32 %v6777, %v6964
    %v6981 = vadd.f32 %v6778, %v6965
    %v6982 = vadd.f32 %v6779, %v6966
    %v6983 = vadd.f32 %v6780, %v6967
    %6984 = vrot.lane.b32.xlu0 %v6325, 1
    %v6985 = vpop.permute.xlu0 %6984
    %6987 = vrot.lane.b32.xlu0 %v6252, 1
    %v6988 = vpop.permute.xlu0 %6987
    %6989 = vrot.lane.b32.xlu0 %v6254, 1
    %v6990 = vpop.permute.xlu0 %6989
    %6991 = vrot.lane.b32.xlu0 %v6323, 1
    %v6992 = vpop.permute.xlu0 %6991
    %v6993 = vsel %vm797, %v6988, %v6990
    %v6994 = vsel %vm797, %v6990, %v6992
    %v6995 = vsel %vm797, %v6992, %v6985
    %v7000 = vsel %vm797, %v6985, %v6988
    %v7001 = vpack.c.bf16 %v7000, %v7000
    %v7002 = vpack.c.bf16 %v6993, %v6993
    %v7003 = vpack.c.bf16 %v6994, %v6994
    %v7004 = vpack.c.bf16 %v6995, %v6995
    %v7009 = vunpack.c.l.b16 %v6339
    %v7010 = vunpack.c.l.b16 %v6340
    %v7011 = vunpack.c.l.b16 %v6341
    %v7012 = vunpack.c.l.b16 %v6342
    %v7013 = vpack.c.b16 %v7010, %v7009
    %v7014 = vpack.c.b16 %v7012, %v7011
    %v7016 = vsel %vm2093, %v7013, 0
    %v7019 = vsel %vm2093, %v7014, 0
    %v7022 = vsel %vm2097, %v7001, 0
    %v7025 = vsel %vm2097, %v7002, 0
    %v7028 = vsel %vm2097, %v7003, 0
    %v7031 = vsel %vm2097, %v7004, 0
    %7033 = vmatprep.subr.bf16.mxu0 %v7025
    %7034 = vmatpush1.bf16.msra.mxu0 %v7022
    %7035 = vmatprep.subr.bf16.mxu0 0
    %7036 = vmatpush1.bf16.msra.mxu0 0
    %7037 = vmatprep.subr.bf16.mxu0 0
    %7038 = vmatpush1.bf16.msra.mxu0 0
    %7039 = vmatprep.subr.bf16.mxu0 0
    %7040 = vmatpush1.bf16.msra.mxu0 0
    %7041 = vmatprep.subr.bf16.mxu0 0
    %7042 = vmatpush1.bf16.msra.mxu0 0
    %7043 = vmatprep.subr.bf16.mxu0 0
    %7044 = vmatpush1.bf16.msra.mxu0 0
    %7045 = vmatprep.subr.bf16.mxu0 0
    %7046 = vmatpush1.bf16.msra.mxu0 0
    %7047 = vmatprep.subr.bf16.mxu0 0
    %7048 = vmatpush1.bf16.msra.mxu0 0
    %7049 = vmatprep.subr.bf16.mxu0 0
    %7050 = vmatpush1.bf16.msra.mxu0 0
    %7051 = vmatprep.subr.bf16.mxu0 0
    %7052 = vmatpush1.bf16.msra.mxu0 0
    %7053 = vmatprep.subr.bf16.mxu0 0
    %7054 = vmatpush1.bf16.msra.mxu0 0
    %7055 = vmatprep.subr.bf16.mxu0 0
    %7056 = vmatpush1.bf16.msra.mxu0 0
    %7057 = vmatprep.subr.bf16.mxu0 0
    %7058 = vmatpush1.bf16.msra.mxu0 0
    %7059 = vmatprep.subr.bf16.mxu0 0
    %7060 = vmatpush1.bf16.msra.mxu0 0
    %7061 = vmatprep.subr.bf16.mxu0 0
    %7062 = vmatpush1.bf16.msra.mxu0 0
    %7063 = vmatprep.subr.bf16.mxu0 0
    %7064 = vmatpush1.bf16.msra.mxu0 0
    %7065 = vmatprep.mubr.bf16.mxu0 0
    %7066 = vmatmul.mubr.bf16.gmra.mrb[0].mxu0 %v7016
    %v7067 = vpop.f32.mrb[0].mxu0
    %v7068 = vadd.f32 0.0, %v7067
    %v7069 = vpop.f32.mrb[0].mxu0
    %v7070 = vadd.f32 0.0, %v7069
    %v7071 = vpop.f32.mrb[0].mxu0
    %v7072 = vadd.f32 0.0, %v7071
    %v7073 = vpop.f32.mrb[0].mxu0
    %v7074 = vadd.f32 0.0, %v7073
    %7075 = vmatprep.mubr.bf16.mxu0 0
    %7076 = vmatmul.mubr.bf16.gmra.mrb[0].mxu0 %v7019
    %v7077 = vpop.f32.mrb[0].mxu0
    %v7078 = vadd.f32 0.0, %v7077
    %v7079 = vpop.f32.mrb[0].mxu0
    %v7080 = vadd.f32 0.0, %v7079
    %v7081 = vpop.f32.mrb[0].mxu0
    %v7082 = vadd.f32 0.0, %v7081
    %v7083 = vpop.f32.mrb[0].mxu0
    %v7084 = vadd.f32 0.0, %v7083
    %7085 = vdwg.mxu0
    %7086 = vmatprep.subr.bf16.mxu0 %v7031
    %7087 = vmatpush1.bf16.msra.mxu0 %v7028
    %7088 = vmatprep.subr.bf16.mxu0 0
    %7089 = vmatpush1.bf16.msra.mxu0 0
    %7090 = vmatprep.subr.bf16.mxu0 0
    %7091 = vmatpush1.bf16.msra.mxu0 0
    %7092 = vmatprep.subr.bf16.mxu0 0
    %7093 = vmatpush1.bf16.msra.mxu0 0
    %7094 = vmatprep.subr.bf16.mxu0 0
    %7095 = vmatpush1.bf16.msra.mxu0 0
    %7096 = vmatprep.subr.bf16.mxu0 0
    %7097 = vmatpush1.bf16.msra.mxu0 0
    %7098 = vmatprep.subr.bf16.mxu0 0
    %7099 = vmatpush1.bf16.msra.mxu0 0
    %7100 = vmatprep.subr.bf16.mxu0 0
    %7101 = vmatpush1.bf16.msra.mxu0 0
    %7102 = vmatprep.subr.bf16.mxu0 0
    %7103 = vmatpush1.bf16.msra.mxu0 0
    %7104 = vmatprep.subr.bf16.mxu0 0
    %7105 = vmatpush1.bf16.msra.mxu0 0
    %7106 = vmatprep.subr.bf16.mxu0 0
    %7107 = vmatpush1.bf16.msra.mxu0 0
    %7108 = vmatprep.subr.bf16.mxu0 0
    %7109 = vmatpush1.bf16.msra.mxu0 0
    %7110 = vmatprep.subr.bf16.mxu0 0
    %7111 = vmatpush1.bf16.msra.mxu0 0
    %7112 = vmatprep.subr.bf16.mxu0 0
    %7113 = vmatpush1.bf16.msra.mxu0 0
    %7114 = vmatprep.subr.bf16.mxu0 0
    %7115 = vmatpush1.bf16.msra.mxu0 0
    %7116 = vmatprep.subr.bf16.mxu0 0
    %7117 = vmatpush1.bf16.msra.mxu0 0
    %7118 = vmatprep.mubr.bf16.mxu0 0
    %7119 = vmatmul.mubr.bf16.gmra.mrb[0].mxu0 %v7016
    %v7120 = vpop.f32.mrb[0].mxu0
    %v7121 = vadd.f32 0.0, %v7120
    %v7122 = vpop.f32.mrb[0].mxu0
    %v7123 = vadd.f32 0.0, %v7122
    %v7124 = vpop.f32.mrb[0].mxu0
    %v7125 = vadd.f32 0.0, %v7124
    %v7126 = vpop.f32.mrb[0].mxu0
    %v7127 = vadd.f32 0.0, %v7126
    %7128 = vmatprep.mubr.bf16.mxu0 0
    %7129 = vmatmul.mubr.bf16.gmra.mrb[0].mxu0 %v7019
    %v7130 = vpop.f32.mrb[0].mxu0
    %v7131 = vadd.f32 0.0, %v7130
    %v7132 = vpop.f32.mrb[0].mxu0
    %v7133 = vadd.f32 0.0, %v7132
    %v7134 = vpop.f32.mrb[0].mxu0
    %v7135 = vadd.f32 0.0, %v7134
    %v7136 = vpop.f32.mrb[0].mxu0
    %v7137 = vadd.f32 0.0, %v7136
    %7138 = vdwg.mxu0
    %v7139 = vlaneseq
    %v7140 = vshrl.u32 %v7139, 7
    %v7141 = vsub.s32 3, %v7140
    %v7142 = vrot.slane %v6363, %v7141
    %v7143 = vlaneseq
    %v7144 = vshrl.u32 %v7143, 7
    %v7145 = vsub.s32 3, %v7144
    %v7146 = vrot.slane %v6364, %v7145
    %v7147 = vlaneseq
    %v7148 = vshrl.u32 %v7147, 7
    %v7149 = vsub.s32 3, %v7148
    %v7150 = vrot.slane %v6365, %v7149
    %v7151 = vlaneseq
    %v7152 = vshrl.u32 %v7151, 7
    %v7153 = vsub.s32 3, %v7152
    %v7154 = vrot.slane %v6366, %v7153
    %v7155 = vmul.f32 %v7068, %v7142
    %v7156 = vmul.f32 %v7070, %v7146
    %v7157 = vmul.f32 %v7121, %v7150
    %v7158 = vmul.f32 %v7123, %v7154
    %v7159 = vmul.f32 %v7072, %v7142
    %v7160 = vmul.f32 %v7074, %v7146
    %v7161 = vmul.f32 %v7125, %v7150
    %v7162 = vmul.f32 %v7127, %v7154
    %v7163 = vmul.f32 %v7078, %v7142
    %v7164 = vmul.f32 %v7080, %v7146
    %v7165 = vmul.f32 %v7131, %v7150
    %v7166 = vmul.f32 %v7133, %v7154
    %v7167 = vmul.f32 %v7082, %v7142
    %v7168 = vmul.f32 %v7084, %v7146
    %v7169 = vmul.f32 %v7135, %v7150
    %v7170 = vmul.f32 %v7137, %v7154
    %v7171 = vadd.f32 %v6968, %v7155
    %v7172 = vadd.f32 %v6969, %v7156
    %v7173 = vadd.f32 %v6970, %v7157
    %v7174 = vadd.f32 %v6971, %v7158
    %v7175 = vadd.f32 %v6972, %v7159
    %v7176 = vadd.f32 %v6973, %v7160
    %v7177 = vadd.f32 %v6974, %v7161
    %v7178 = vadd.f32 %v6975, %v7162
    %v7179 = vadd.f32 %v6976, %v7163
    %v7180 = vadd.f32 %v6977, %v7164
    %v7181 = vadd.f32 %v6978, %v7165
    %v7182 = vadd.f32 %v6979, %v7166
    %v7183 = vadd.f32 %v6980, %v7167
    %v7184 = vadd.f32 %v6981, %v7168
    %v7185 = vadd.f32 %v6982, %v7169
    %v7186 = vadd.f32 %v6983, %v7170
    %v7187 = vpack.c.bf16 %v6252, %v6252
    %v7188 = vpack.c.bf16 %v6254, %v6254
    %v7189 = vpack.c.bf16 %v6323, %v6323
    %v7190 = vpack.c.bf16 %v6325, %v6325
    %v7195 = vunpack.c.l.b16 %v6343
    %v7196 = vunpack.c.l.b16 %v6344
    %v7197 = vunpack.c.l.b16 %v6345
    %v7198 = vunpack.c.l.b16 %v6346
    %v7199 = vpack.c.b16 %v7196, %v7195
    %v7200 = vpack.c.b16 %v7198, %v7197
    %v7202 = vsel %vm2093, %v7199, 0
    %v7205 = vsel %vm2093, %v7200, 0
    %v7208 = vsel %vm2097, %v7187, 0
    %v7211 = vsel %vm2097, %v7188, 0
    %v7214 = vsel %vm2097, %v7189, 0
    %v7217 = vsel %vm2097, %v7190, 0
    %7219 = vmatprep.subr.bf16.mxu0 %v7211
    %7220 = vmatpush1.bf16.msra.mxu0 %v7208
    %7221 = vmatprep.subr.bf16.mxu0 0
    %7222 = vmatpush1.bf16.msra.mxu0 0
    %7223 = vmatprep.subr.bf16.mxu0 0
    %7224 = vmatpush1.bf16.msra.mxu0 0
    %7225 = vmatprep.subr.bf16.mxu0 0
    %7226 = vmatpush1.bf16.msra.mxu0 0
    %7227 = vmatprep.subr.bf16.mxu0 0
    %7228 = vmatpush1.bf16.msra.mxu0 0
    %7229 = vmatprep.subr.bf16.mxu0 0
    %7230 = vmatpush1.bf16.msra.mxu0 0
    %7231 = vmatprep.subr.bf16.mxu0 0
    %7232 = vmatpush1.bf16.msra.mxu0 0
    %7233 = vmatprep.subr.bf16.mxu0 0
    %7234 = vmatpush1.bf16.msra.mxu0 0
    %7235 = vmatprep.subr.bf16.mxu0 0
    %7236 = vmatpush1.bf16.msra.mxu0 0
    %7237 = vmatprep.subr.bf16.mxu0 0
    %7238 = vmatpush1.bf16.msra.mxu0 0
    %7239 = vmatprep.subr.bf16.mxu0 0
    %7240 = vmatpush1.bf16.msra.mxu0 0
    %7241 = vmatprep.subr.bf16.mxu0 0
    %7242 = vmatpush1.bf16.msra.mxu0 0
    %7243 = vmatprep.subr.bf16.mxu0 0
    %7244 = vmatpush1.bf16.msra.mxu0 0
    %7245 = vmatprep.subr.bf16.mxu0 0
    %7246 = vmatpush1.bf16.msra.mxu0 0
    %7247 = vmatprep.subr.bf16.mxu0 0
    %7248 = vmatpush1.bf16.msra.mxu0 0
    %7249 = vmatprep.subr.bf16.mxu0 0
    %7250 = vmatpush1.bf16.msra.mxu0 0
    %7251 = vmatprep.mubr.bf16.mxu0 0
    %7252 = vmatmul.mubr.bf16.gmra.mrb[0].mxu0 %v7202
    %v7253 = vpop.f32.mrb[0].mxu0
    %v7254 = vadd.f32 0.0, %v7253
    %v7255 = vpop.f32.mrb[0].mxu0
    %v7256 = vadd.f32 0.0, %v7255
    %v7257 = vpop.f32.mrb[0].mxu0
    %v7258 = vadd.f32 0.0, %v7257
    %v7259 = vpop.f32.mrb[0].mxu0
    %v7260 = vadd.f32 0.0, %v7259
    %7261 = vmatprep.mubr.bf16.mxu0 0
    %7262 = vmatmul.mubr.bf16.gmra.mrb[0].mxu0 %v7205
    %v7263 = vpop.f32.mrb[0].mxu0
    %v7264 = vadd.f32 0.0, %v7263
    %v7265 = vpop.f32.mrb[0].mxu0
    %v7266 = vadd.f32 0.0, %v7265
    %v7267 = vpop.f32.mrb[0].mxu0
    %v7268 = vadd.f32 0.0, %v7267
    %v7269 = vpop.f32.mrb[0].mxu0
    %v7270 = vadd.f32 0.0, %v7269
    %7271 = vdwg.mxu0
    %7272 = vmatprep.subr.bf16.mxu0 %v7217
    %7273 = vmatpush1.bf16.msra.mxu0 %v7214
    %7274 = vmatprep.subr.bf16.mxu0 0
    %7275 = vmatpush1.bf16.msra.mxu0 0
    %7276 = vmatprep.subr.bf16.mxu0 0
    %7277 = vmatpush1.bf16.msra.mxu0 0
    %7278 = vmatprep.subr.bf16.mxu0 0
    %7279 = vmatpush1.bf16.msra.mxu0 0
    %7280 = vmatprep.subr.bf16.mxu0 0
    %7281 = vmatpush1.bf16.msra.mxu0 0
    %7282 = vmatprep.subr.bf16.mxu0 0
    %7283 = vmatpush1.bf16.msra.mxu0 0
    %7284 = vmatprep.subr.bf16.mxu0 0
    %7285 = vmatpush1.bf16.msra.mxu0 0
    %7286 = vmatprep.subr.bf16.mxu0 0
    %7287 = vmatpush1.bf16.msra.mxu0 0
    %7288 = vmatprep.subr.bf16.mxu0 0
    %7289 = vmatpush1.bf16.msra.mxu0 0
    %7290 = vmatprep.subr.bf16.mxu0 0
    %7291 = vmatpush1.bf16.msra.mxu0 0
    %7292 = vmatprep.subr.bf16.mxu0 0
    %7293 = vmatpush1.bf16.msra.mxu0 0
    %7294 = vmatprep.subr.bf16.mxu0 0
    %7295 = vmatpush1.bf16.msra.mxu0 0
    %7296 = vmatprep.subr.bf16.mxu0 0
    %7297 = vmatpush1.bf16.msra.mxu0 0
    %7298 = vmatprep.subr.bf16.mxu0 0
    %7299 = vmatpush1.bf16.msra.mxu0 0
    %7300 = vmatprep.subr.bf16.mxu0 0
    %7301 = vmatpush1.bf16.msra.mxu0 0
    %7302 = vmatprep.subr.bf16.mxu0 0
    %7303 = vmatpush1.bf16.msra.mxu0 0
    %7304 = vmatprep.mubr.bf16.mxu0 0
    %7305 = vmatmul.mubr.bf16.gmra.mrb[0].mxu0 %v7202
    %v7306 = vpop.f32.mrb[0].mxu0
    %v7307 = vadd.f32 0.0, %v7306
    %v7308 = vpop.f32.mrb[0].mxu0
    %v7309 = vadd.f32 0.0, %v7308
    %v7310 = vpop.f32.mrb[0].mxu0
    %v7311 = vadd.f32 0.0, %v7310
    %v7312 = vpop.f32.mrb[0].mxu0
    %v7313 = vadd.f32 0.0, %v7312
    %7314 = vmatprep.mubr.bf16.mxu0 0
    %7315 = vmatmul.mubr.bf16.gmra.mrb[0].mxu0 %v7205
    %v7316 = vpop.f32.mrb[0].mxu0
    %v7317 = vadd.f32 0.0, %v7316
    %v7318 = vpop.f32.mrb[0].mxu0
    %v7319 = vadd.f32 0.0, %v7318
    %v7320 = vpop.f32.mrb[0].mxu0
    %v7321 = vadd.f32 0.0, %v7320
    %v7322 = vpop.f32.mrb[0].mxu0
    %v7323 = vadd.f32 0.0, %v7322
    %7324 = vdwg.mxu0
    %v7325 = vadd.f32 %v7171, %v7254
    %v7326 = vadd.f32 %v7172, %v7256
    %v7327 = vadd.f32 %v7173, %v7307
    %v7328 = vadd.f32 %v7174, %v7309
    %v7329 = vadd.f32 %v7175, %v7258
    %v7330 = vadd.f32 %v7176, %v7260
    %v7331 = vadd.f32 %v7177, %v7311
    %v7332 = vadd.f32 %v7178, %v7313
    %v7333 = vadd.f32 %v7179, %v7264
    %v7334 = vadd.f32 %v7180, %v7266
    %v7335 = vadd.f32 %v7181, %v7317
    %v7336 = vadd.f32 %v7182, %v7319
    %v7337 = vadd.f32 %v7183, %v7268
    %v7338 = vadd.f32 %v7184, %v7270
    %v7339 = vadd.f32 %v7185, %v7321
    %v7340 = vadd.f32 %v7186, %v7323
    %7341 = vrot.lane.b32.xlu0 %v6252, 127
    %v7342 = vpop.permute.xlu0 %7341
    %7343 = vrot.lane.b32.xlu0 %v6254, 127
    %v7344 = vpop.permute.xlu0 %7343
    %7345 = vrot.lane.b32.xlu0 %v6323, 127
    %v7346 = vpop.permute.xlu0 %7345
    %7347 = vrot.lane.b32.xlu0 %v6325, 127
    %v7348 = vpop.permute.xlu0 %7347
    %v7349 = vsel %vm1076, %v7342, %v7344
    %v7350 = vsel %vm1076, %v7344, %v7346
    %v7351 = vsel %vm1076, %v7346, %v7348
    %v7357 = vsel %vm1076, %v7348, %v7342
    %v7358 = vpack.c.bf16 %v7349, %v7349
    %v7359 = vpack.c.bf16 %v7350, %v7350
    %v7360 = vpack.c.bf16 %v7351, %v7351
    %v7361 = vpack.c.bf16 %v7357, %v7357
    %v7366 = vunpack.c.l.b16 %v6347
    %v7367 = vunpack.c.l.b16 %v6348
    %v7368 = vunpack.c.l.b16 %v6349
    %v7369 = vunpack.c.l.b16 %v6350
    %v7370 = vpack.c.b16 %v7367, %v7366
    %v7371 = vpack.c.b16 %v7369, %v7368
    %v7373 = vsel %vm2093, %v7370, 0
    %v7376 = vsel %vm2093, %v7371, 0
    %v7379 = vsel %vm2097, %v7358, 0
    %v7382 = vsel %vm2097, %v7359, 0
    %v7385 = vsel %vm2097, %v7360, 0
    %v7388 = vsel %vm2097, %v7361, 0
    %7390 = vmatprep.subr.bf16.mxu0 %v7382
    %7391 = vmatpush1.bf16.msra.mxu0 %v7379
    %7392 = vmatprep.subr.bf16.mxu0 0
    %7393 = vmatpush1.bf16.msra.mxu0 0
    %7394 = vmatprep.subr.bf16.mxu0 0
    %7395 = vmatpush1.bf16.msra.mxu0 0
    %7396 = vmatprep.subr.bf16.mxu0 0
    %7397 = vmatpush1.bf16.msra.mxu0 0
    %7398 = vmatprep.subr.bf16.mxu0 0
    %7399 = vmatpush1.bf16.msra.mxu0 0
    %7400 = vmatprep.subr.bf16.mxu0 0
    %7401 = vmatpush1.bf16.msra.mxu0 0
    %7402 = vmatprep.subr.bf16.mxu0 0
    %7403 = vmatpush1.bf16.msra.mxu0 0
    %7404 = vmatprep.subr.bf16.mxu0 0
    %7405 = vmatpush1.bf16.msra.mxu0 0
    %7406 = vmatprep.subr.bf16.mxu0 0
    %7407 = vmatpush1.bf16.msra.mxu0 0
    %7408 = vmatprep.subr.bf16.mxu0 0
    %7409 = vmatpush1.bf16.msra.mxu0 0
    %7410 = vmatprep.subr.bf16.mxu0 0
    %7411 = vmatpush1.bf16.msra.mxu0 0
    %7412 = vmatprep.subr.bf16.mxu0 0
    %7413 = vmatpush1.bf16.msra.mxu0 0
    %7414 = vmatprep.subr.bf16.mxu0 0
    %7415 = vmatpush1.bf16.msra.mxu0 0
    %7416 = vmatprep.subr.bf16.mxu0 0
    %7417 = vmatpush1.bf16.msra.mxu0 0
    %7418 = vmatprep.subr.bf16.mxu0 0
    %7419 = vmatpush1.bf16.msra.mxu0 0
    %7420 = vmatprep.subr.bf16.mxu0 0
    %7421 = vmatpush1.bf16.msra.mxu0 0
    %7422 = vmatprep.mubr.bf16.mxu0 0
    %7423 = vmatmul.mubr.bf16.gmra.mrb[0].mxu0 %v7373
    %v7424 = vpop.f32.mrb[0].mxu0
    %v7425 = vadd.f32 0.0, %v7424
    %v7426 = vpop.f32.mrb[0].mxu0
    %v7427 = vadd.f32 0.0, %v7426
    %v7428 = vpop.f32.mrb[0].mxu0
    %v7429 = vadd.f32 0.0, %v7428
    %v7430 = vpop.f32.mrb[0].mxu0
    %v7431 = vadd.f32 0.0, %v7430
    %7432 = vmatprep.mubr.bf16.mxu0 0
    %7433 = vmatmul.mubr.bf16.gmra.mrb[0].mxu0 %v7376
    %v7434 = vpop.f32.mrb[0].mxu0
    %v7435 = vadd.f32 0.0, %v7434
    %v7436 = vpop.f32.mrb[0].mxu0
    %v7437 = vadd.f32 0.0, %v7436
    %v7438 = vpop.f32.mrb[0].mxu0
    %v7439 = vadd.f32 0.0, %v7438
    %v7440 = vpop.f32.mrb[0].mxu0
    %v7441 = vadd.f32 0.0, %v7440
    %7442 = vdwg.mxu0
    %7443 = vmatprep.subr.bf16.mxu0 %v7388
    %7444 = vmatpush1.bf16.msra.mxu0 %v7385
    %7445 = vmatprep.subr.bf16.mxu0 0
    %7446 = vmatpush1.bf16.msra.mxu0 0
    %7447 = vmatprep.subr.bf16.mxu0 0
    %7448 = vmatpush1.bf16.msra.mxu0 0
    %7449 = vmatprep.subr.bf16.mxu0 0
    %7450 = vmatpush1.bf16.msra.mxu0 0
    %7451 = vmatprep.subr.bf16.mxu0 0
    %7452 = vmatpush1.bf16.msra.mxu0 0
    %7453 = vmatprep.subr.bf16.mxu0 0
    %7454 = vmatpush1.bf16.msra.mxu0 0
    %7455 = vmatprep.subr.bf16.mxu0 0
    %7456 = vmatpush1.bf16.msra.mxu0 0
    %7457 = vmatprep.subr.bf16.mxu0 0
    %7458 = vmatpush1.bf16.msra.mxu0 0
    %7459 = vmatprep.subr.bf16.mxu0 0
    %7460 = vmatpush1.bf16.msra.mxu0 0
    %7461 = vmatprep.subr.bf16.mxu0 0
    %7462 = vmatpush1.bf16.msra.mxu0 0
    %7463 = vmatprep.subr.bf16.mxu0 0
    %7464 = vmatpush1.bf16.msra.mxu0 0
    %7465 = vmatprep.subr.bf16.mxu0 0
    %7466 = vmatpush1.bf16.msra.mxu0 0
    %7467 = vmatprep.subr.bf16.mxu0 0
    %7468 = vmatpush1.bf16.msra.mxu0 0
    %7469 = vmatprep.subr.bf16.mxu0 0
    %7470 = vmatpush1.bf16.msra.mxu0 0
    %7471 = vmatprep.subr.bf16.mxu0 0
    %7472 = vmatpush1.bf16.msra.mxu0 0
    %7473 = vmatprep.subr.bf16.mxu0 0
    %7474 = vmatpush1.bf16.msra.mxu0 0
    %7475 = vmatprep.mubr.bf16.mxu0 0
    %7476 = vmatmul.mubr.bf16.gmra.mrb[0].mxu0 %v7373
    %v7477 = vpop.f32.mrb[0].mxu0
    %v7478 = vadd.f32 0.0, %v7477
    %v7479 = vpop.f32.mrb[0].mxu0
    %v7480 = vadd.f32 0.0, %v7479
    %v7481 = vpop.f32.mrb[0].mxu0
    %v7482 = vadd.f32 0.0, %v7481
    %v7483 = vpop.f32.mrb[0].mxu0
    %v7484 = vadd.f32 0.0, %v7483
    %7485 = vmatprep.mubr.bf16.mxu0 0
    %7486 = vmatmul.mubr.bf16.gmra.mrb[0].mxu0 %v7376
    %v7487 = vpop.f32.mrb[0].mxu0
    %v7488 = vadd.f32 0.0, %v7487
    %v7489 = vpop.f32.mrb[0].mxu0
    %v7490 = vadd.f32 0.0, %v7489
    %v7491 = vpop.f32.mrb[0].mxu0
    %v7492 = vadd.f32 0.0, %v7491
    %v7493 = vpop.f32.mrb[0].mxu0
    %v7494 = vadd.f32 0.0, %v7493
    %7495 = vdwg.mxu0
    %v7496 = vlaneseq
    %v7497 = vshrl.u32 %v7496, 7
    %v7498 = vsub.s32 5, %v7497
    %v7499 = vrot.slane %v6363, %v7498
    %v7500 = vlaneseq
    %v7501 = vshrl.u32 %v7500, 7
    %v7502 = vsub.s32 5, %v7501
    %v7503 = vrot.slane %v6364, %v7502
    %v7504 = vlaneseq
    %v7505 = vshrl.u32 %v7504, 7
    %v7506 = vsub.s32 5, %v7505
    %v7507 = vrot.slane %v6365, %v7506
    %v7508 = vlaneseq
    %v7509 = vshrl.u32 %v7508, 7
    %v7510 = vsub.s32 5, %v7509
    %v7511 = vrot.slane %v6366, %v7510
    %v7512 = vmul.f32 %v7425, %v7499
    %v7513 = vmul.f32 %v7427, %v7503
    %v7514 = vmul.f32 %v7478, %v7507
    %v7515 = vmul.f32 %v7480, %v7511
    %v7516 = vmul.f32 %v7429, %v7499
    %v7517 = vmul.f32 %v7431, %v7503
    %v7518 = vmul.f32 %v7482, %v7507
    %v7519 = vmul.f32 %v7484, %v7511
    %v7520 = vmul.f32 %v7435, %v7499
    %v7521 = vmul.f32 %v7437, %v7503
    %v7522 = vmul.f32 %v7488, %v7507
    %v7523 = vmul.f32 %v7490, %v7511
    %v7524 = vmul.f32 %v7439, %v7499
    %v7525 = vmul.f32 %v7441, %v7503
    %v7526 = vmul.f32 %v7492, %v7507
    %v7527 = vmul.f32 %v7494, %v7511
    %v7528 = vadd.f32 %v7325, %v7512
    %v7529 = vadd.f32 %v7326, %v7513
    %v7530 = vadd.f32 %v7327, %v7514
    %v7531 = vadd.f32 %v7328, %v7515
    %v7532 = vadd.f32 %v7329, %v7516
    %v7533 = vadd.f32 %v7330, %v7517
    %v7534 = vadd.f32 %v7331, %v7518
    %v7535 = vadd.f32 %v7332, %v7519
    %v7536 = vadd.f32 %v7333, %v7520
    %v7537 = vadd.f32 %v7334, %v7521
    %v7538 = vadd.f32 %v7335, %v7522
    %v7539 = vadd.f32 %v7336, %v7523
    %v7540 = vadd.f32 %v7337, %v7524
    %v7541 = vadd.f32 %v7338, %v7525
    %v7542 = vadd.f32 %v7339, %v7526
    %v7543 = vadd.f32 %v7340, %v7527
    %7544 = vrot.lane.b32.xlu0 %v6252, 113
    %v7545 = vpop.permute.xlu0 %7544
    %7546 = vrot.lane.b32.xlu0 %v6254, 113
    %v7547 = vpop.permute.xlu0 %7546
    %7548 = vrot.lane.b32.xlu0 %v6323, 113
    %v7549 = vpop.permute.xlu0 %7548
    %7550 = vrot.lane.b32.xlu0 %v6325, 113
    %v7551 = vpop.permute.xlu0 %7550
    %v7552 = vsel %vm1262, %v7545, %v7547
    %v7553 = vsel %vm1262, %v7547, %v7549
    %v7554 = vsel %vm1262, %v7549, %v7551
    %v7560 = vsel %vm1262, %v7551, %v7545
    %v7561 = vpack.c.bf16 %v7552, %v7552
    %v7562 = vpack.c.bf16 %v7553, %v7553
    %v7563 = vpack.c.bf16 %v7554, %v7554
    %v7564 = vpack.c.bf16 %v7560, %v7560
    %v7569 = vunpack.c.l.b16 %v6351
    %v7570 = vunpack.c.l.b16 %v6352
    %v7571 = vunpack.c.l.b16 %v6353
    %v7572 = vunpack.c.l.b16 %v6354
    %v7573 = vpack.c.b16 %v7570, %v7569
    %v7574 = vpack.c.b16 %v7572, %v7571
    %v7576 = vsel %vm2093, %v7573, 0
    %v7579 = vsel %vm2093, %v7574, 0
    %v7582 = vsel %vm2097, %v7561, 0
    %v7585 = vsel %vm2097, %v7562, 0
    %v7588 = vsel %vm2097, %v7563, 0
    %v7591 = vsel %vm2097, %v7564, 0
    %7593 = vmatprep.subr.bf16.mxu0 %v7585
    %7594 = vmatpush1.bf16.msra.mxu0 %v7582
    %7595 = vmatprep.subr.bf16.mxu0 0
    %7596 = vmatpush1.bf16.msra.mxu0 0
    %7597 = vmatprep.subr.bf16.mxu0 0
    %7598 = vmatpush1.bf16.msra.mxu0 0
    %7599 = vmatprep.subr.bf16.mxu0 0
    %7600 = vmatpush1.bf16.msra.mxu0 0
    %7601 = vmatprep.subr.bf16.mxu0 0
    %7602 = vmatpush1.bf16.msra.mxu0 0
    %7603 = vmatprep.subr.bf16.mxu0 0
    %7604 = vmatpush1.bf16.msra.mxu0 0
    %7605 = vmatprep.subr.bf16.mxu0 0
    %7606 = vmatpush1.bf16.msra.mxu0 0
    %7607 = vmatprep.subr.bf16.mxu0 0
    %7608 = vmatpush1.bf16.msra.mxu0 0
    %7609 = vmatprep.subr.bf16.mxu0 0
    %7610 = vmatpush1.bf16.msra.mxu0 0
    %7611 = vmatprep.subr.bf16.mxu0 0
    %7612 = vmatpush1.bf16.msra.mxu0 0
    %7613 = vmatprep.subr.bf16.mxu0 0
    %7614 = vmatpush1.bf16.msra.mxu0 0
    %7615 = vmatprep.subr.bf16.mxu0 0
    %7616 = vmatpush1.bf16.msra.mxu0 0
    %7617 = vmatprep.subr.bf16.mxu0 0
    %7618 = vmatpush1.bf16.msra.mxu0 0
    %7619 = vmatprep.subr.bf16.mxu0 0
    %7620 = vmatpush1.bf16.msra.mxu0 0
    %7621 = vmatprep.subr.bf16.mxu0 0
    %7622 = vmatpush1.bf16.msra.mxu0 0
    %7623 = vmatprep.subr.bf16.mxu0 0
    %7624 = vmatpush1.bf16.msra.mxu0 0
    %7625 = vmatprep.mubr.bf16.mxu0 0
    %7626 = vmatmul.mubr.bf16.gmra.mrb[0].mxu0 %v7576
    %v7627 = vpop.f32.mrb[0].mxu0
    %v7628 = vadd.f32 0.0, %v7627
    %v7629 = vpop.f32.mrb[0].mxu0
    %v7630 = vadd.f32 0.0, %v7629
    %v7631 = vpop.f32.mrb[0].mxu0
    %v7632 = vadd.f32 0.0, %v7631
    %v7633 = vpop.f32.mrb[0].mxu0
    %v7634 = vadd.f32 0.0, %v7633
    %7635 = vmatprep.mubr.bf16.mxu0 0
    %7636 = vmatmul.mubr.bf16.gmra.mrb[0].mxu0 %v7579
    %v7637 = vpop.f32.mrb[0].mxu0
    %v7638 = vadd.f32 0.0, %v7637
    %v7639 = vpop.f32.mrb[0].mxu0
    %v7640 = vadd.f32 0.0, %v7639
    %v7641 = vpop.f32.mrb[0].mxu0
    %v7642 = vadd.f32 0.0, %v7641
    %v7643 = vpop.f32.mrb[0].mxu0
    %v7644 = vadd.f32 0.0, %v7643
    %7645 = vdwg.mxu0
    %7646 = vmatprep.subr.bf16.mxu0 %v7591
    %7647 = vmatpush1.bf16.msra.mxu0 %v7588
    %7648 = vmatprep.subr.bf16.mxu0 0
    %7649 = vmatpush1.bf16.msra.mxu0 0
    %7650 = vmatprep.subr.bf16.mxu0 0
    %7651 = vmatpush1.bf16.msra.mxu0 0
    %7652 = vmatprep.subr.bf16.mxu0 0
    %7653 = vmatpush1.bf16.msra.mxu0 0
    %7654 = vmatprep.subr.bf16.mxu0 0
    %7655 = vmatpush1.bf16.msra.mxu0 0
    %7656 = vmatprep.subr.bf16.mxu0 0
    %7657 = vmatpush1.bf16.msra.mxu0 0
    %7658 = vmatprep.subr.bf16.mxu0 0
    %7659 = vmatpush1.bf16.msra.mxu0 0
    %7660 = vmatprep.subr.bf16.mxu0 0
    %7661 = vmatpush1.bf16.msra.mxu0 0
    %7662 = vmatprep.subr.bf16.mxu0 0
    %7663 = vmatpush1.bf16.msra.mxu0 0
    %7664 = vmatprep.subr.bf16.mxu0 0
    %7665 = vmatpush1.bf16.msra.mxu0 0
    %7666 = vmatprep.subr.bf16.mxu0 0
    %7667 = vmatpush1.bf16.msra.mxu0 0
    %7668 = vmatprep.subr.bf16.mxu0 0
    %7669 = vmatpush1.bf16.msra.mxu0 0
    %7670 = vmatprep.subr.bf16.mxu0 0
    %7671 = vmatpush1.bf16.msra.mxu0 0
    %7672 = vmatprep.subr.bf16.mxu0 0
    %7673 = vmatpush1.bf16.msra.mxu0 0
    %7674 = vmatprep.subr.bf16.mxu0 0
    %7675 = vmatpush1.bf16.msra.mxu0 0
    %7676 = vmatprep.subr.bf16.mxu0 0
    %7677 = vmatpush1.bf16.msra.mxu0 0
    %7678 = vmatprep.mubr.bf16.mxu0 0
    %7679 = vmatmul.mubr.bf16.gmra.mrb[0].mxu0 %v7576
    %v7680 = vpop.f32.mrb[0].mxu0
    %v7681 = vadd.f32 0.0, %v7680
    %v7682 = vpop.f32.mrb[0].mxu0
    %v7683 = vadd.f32 0.0, %v7682
    %v7684 = vpop.f32.mrb[0].mxu0
    %v7685 = vadd.f32 0.0, %v7684
    %v7686 = vpop.f32.mrb[0].mxu0
    %v7687 = vadd.f32 0.0, %v7686
    %7688 = vmatprep.mubr.bf16.mxu0 0
    %7689 = vmatmul.mubr.bf16.gmra.mrb[0].mxu0 %v7579
    %v7690 = vpop.f32.mrb[0].mxu0
    %v7691 = vadd.f32 0.0, %v7690
    %v7692 = vpop.f32.mrb[0].mxu0
    %v7693 = vadd.f32 0.0, %v7692
    %v7694 = vpop.f32.mrb[0].mxu0
    %v7695 = vadd.f32 0.0, %v7694
    %v7696 = vpop.f32.mrb[0].mxu0
    %v7697 = vadd.f32 0.0, %v7696
    %7698 = vdwg.mxu0
    %v7699 = vlaneseq
    %v7700 = vshrl.u32 %v7699, 7
    %v7701 = vsub.s32 6, %v7700
    %v7702 = vrot.slane %v6363, %v7701
    %v7703 = vlaneseq
    %v7704 = vshrl.u32 %v7703, 7
    %v7705 = vsub.s32 6, %v7704
    %v7706 = vrot.slane %v6364, %v7705
    %v7707 = vlaneseq
    %v7708 = vshrl.u32 %v7707, 7
    %v7709 = vsub.s32 6, %v7708
    %v7710 = vrot.slane %v6365, %v7709
    %v7711 = vlaneseq
    %v7712 = vshrl.u32 %v7711, 7
    %v7713 = vsub.s32 6, %v7712
    %v7714 = vrot.slane %v6366, %v7713
    %v7715 = vmul.f32 %v7628, %v7702
    %v7716 = vmul.f32 %v7630, %v7706
    %v7717 = vmul.f32 %v7681, %v7710
    %v7718 = vmul.f32 %v7683, %v7714
    %v7719 = vmul.f32 %v7632, %v7702
    %v7720 = vmul.f32 %v7634, %v7706
    %v7721 = vmul.f32 %v7685, %v7710
    %v7722 = vmul.f32 %v7687, %v7714
    %v7723 = vmul.f32 %v7638, %v7702
    %v7724 = vmul.f32 %v7640, %v7706
    %v7725 = vmul.f32 %v7691, %v7710
    %v7726 = vmul.f32 %v7693, %v7714
    %v7727 = vmul.f32 %v7642, %v7702
    %v7728 = vmul.f32 %v7644, %v7706
    %v7729 = vmul.f32 %v7695, %v7710
    %v7730 = vmul.f32 %v7697, %v7714
    %v7731 = vadd.f32 %v7528, %v7715
    %v7732 = vadd.f32 %v7529, %v7716
    %v7733 = vadd.f32 %v7530, %v7717
    %v7734 = vadd.f32 %v7531, %v7718
    %v7735 = vadd.f32 %v7532, %v7719
    %v7736 = vadd.f32 %v7533, %v7720
    %v7737 = vadd.f32 %v7534, %v7721
    %v7738 = vadd.f32 %v7535, %v7722
    %v7739 = vadd.f32 %v7536, %v7723
    %v7740 = vadd.f32 %v7537, %v7724
    %v7741 = vadd.f32 %v7538, %v7725
    %v7742 = vadd.f32 %v7539, %v7726
    %v7743 = vadd.f32 %v7540, %v7727
    %v7744 = vadd.f32 %v7541, %v7728
    %v7745 = vadd.f32 %v7542, %v7729
    %v7746 = vadd.f32 %v7543, %v7730
    %7747 = vrot.lane.b32.xlu0 %v6252, 112
    %v7748 = vpop.permute.xlu0 %7747
    %7749 = vrot.lane.b32.xlu0 %v6254, 112
    %v7750 = vpop.permute.xlu0 %7749
    %7751 = vrot.lane.b32.xlu0 %v6323, 112
    %v7752 = vpop.permute.xlu0 %7751
    %7753 = vrot.lane.b32.xlu0 %v6325, 112
    %v7754 = vpop.permute.xlu0 %7753
    %v7755 = vsel %vm1448, %v7748, %v7750
    %v7756 = vsel %vm1448, %v7750, %v7752
    %v7757 = vsel %vm1448, %v7752, %v7754
    %v7763 = vsel %vm1448, %v7754, %v7748
    %v7764 = vpack.c.bf16 %v7755, %v7755
    %v7765 = vpack.c.bf16 %v7756, %v7756
    %v7766 = vpack.c.bf16 %v7757, %v7757
    %v7767 = vpack.c.bf16 %v7763, %v7763
    %v7772 = vunpack.c.l.b16 %v6355
    %v7773 = vunpack.c.l.b16 %v6356
    %v7774 = vunpack.c.l.b16 %v6357
    %v7775 = vunpack.c.l.b16 %v6358
    %v7776 = vpack.c.b16 %v7773, %v7772
    %v7777 = vpack.c.b16 %v7775, %v7774
    %v7779 = vsel %vm2093, %v7776, 0
    %v7782 = vsel %vm2093, %v7777, 0
    %v7785 = vsel %vm2097, %v7764, 0
    %v7788 = vsel %vm2097, %v7765, 0
    %v7791 = vsel %vm2097, %v7766, 0
    %v7794 = vsel %vm2097, %v7767, 0
    %7796 = vmatprep.subr.bf16.mxu0 %v7788
    %7797 = vmatpush1.bf16.msra.mxu0 %v7785
    %7798 = vmatprep.subr.bf16.mxu0 0
    %7799 = vmatpush1.bf16.msra.mxu0 0
    %7800 = vmatprep.subr.bf16.mxu0 0
    %7801 = vmatpush1.bf16.msra.mxu0 0
    %7802 = vmatprep.subr.bf16.mxu0 0
    %7803 = vmatpush1.bf16.msra.mxu0 0
    %7804 = vmatprep.subr.bf16.mxu0 0
    %7805 = vmatpush1.bf16.msra.mxu0 0
    %7806 = vmatprep.subr.bf16.mxu0 0
    %7807 = vmatpush1.bf16.msra.mxu0 0
    %7808 = vmatprep.subr.bf16.mxu0 0
    %7809 = vmatpush1.bf16.msra.mxu0 0
    %7810 = vmatprep.subr.bf16.mxu0 0
    %7811 = vmatpush1.bf16.msra.mxu0 0
    %7812 = vmatprep.subr.bf16.mxu0 0
    %7813 = vmatpush1.bf16.msra.mxu0 0
    %7814 = vmatprep.subr.bf16.mxu0 0
    %7815 = vmatpush1.bf16.msra.mxu0 0
    %7816 = vmatprep.subr.bf16.mxu0 0
    %7817 = vmatpush1.bf16.msra.mxu0 0
    %7818 = vmatprep.subr.bf16.mxu0 0
    %7819 = vmatpush1.bf16.msra.mxu0 0
    %7820 = vmatprep.subr.bf16.mxu0 0
    %7821 = vmatpush1.bf16.msra.mxu0 0
    %7822 = vmatprep.subr.bf16.mxu0 0
    %7823 = vmatpush1.bf16.msra.mxu0 0
    %7824 = vmatprep.subr.bf16.mxu0 0
    %7825 = vmatpush1.bf16.msra.mxu0 0
    %7826 = vmatprep.subr.bf16.mxu0 0
    %7827 = vmatpush1.bf16.msra.mxu0 0
    %7828 = vmatprep.mubr.bf16.mxu0 0
    %7829 = vmatmul.mubr.bf16.gmra.mrb[0].mxu0 %v7779
    %v7830 = vpop.f32.mrb[0].mxu0
    %v7831 = vadd.f32 0.0, %v7830
    %v7832 = vpop.f32.mrb[0].mxu0
    %v7833 = vadd.f32 0.0, %v7832
    %v7834 = vpop.f32.mrb[0].mxu0
    %v7835 = vadd.f32 0.0, %v7834
    %v7836 = vpop.f32.mrb[0].mxu0
    %v7837 = vadd.f32 0.0, %v7836
    %7838 = vmatprep.mubr.bf16.mxu0 0
    %7839 = vmatmul.mubr.bf16.gmra.mrb[0].mxu0 %v7782
    %v7840 = vpop.f32.mrb[0].mxu0
    %v7841 = vadd.f32 0.0, %v7840
    %v7842 = vpop.f32.mrb[0].mxu0
    %v7843 = vadd.f32 0.0, %v7842
    %v7844 = vpop.f32.mrb[0].mxu0
    %v7845 = vadd.f32 0.0, %v7844
    %v7846 = vpop.f32.mrb[0].mxu0
    %v7847 = vadd.f32 0.0, %v7846
    %7848 = vdwg.mxu0
    %7849 = vmatprep.subr.bf16.mxu0 %v7794
    %7850 = vmatpush1.bf16.msra.mxu0 %v7791
    %7851 = vmatprep.subr.bf16.mxu0 0
    %7852 = vmatpush1.bf16.msra.mxu0 0
    %7853 = vmatprep.subr.bf16.mxu0 0
    %7854 = vmatpush1.bf16.msra.mxu0 0
    %7855 = vmatprep.subr.bf16.mxu0 0
    %7856 = vmatpush1.bf16.msra.mxu0 0
    %7857 = vmatprep.subr.bf16.mxu0 0
    %7858 = vmatpush1.bf16.msra.mxu0 0
    %7859 = vmatprep.subr.bf16.mxu0 0
    %7860 = vmatpush1.bf16.msra.mxu0 0
    %7861 = vmatprep.subr.bf16.mxu0 0
    %7862 = vmatpush1.bf16.msra.mxu0 0
    %7863 = vmatprep.subr.bf16.mxu0 0
    %7864 = vmatpush1.bf16.msra.mxu0 0
    %7865 = vmatprep.subr.bf16.mxu0 0
    %7866 = vmatpush1.bf16.msra.mxu0 0
    %7867 = vmatprep.subr.bf16.mxu0 0
    %7868 = vmatpush1.bf16.msra.mxu0 0
    %7869 = vmatprep.subr.bf16.mxu0 0
    %7870 = vmatpush1.bf16.msra.mxu0 0
    %7871 = vmatprep.subr.bf16.mxu0 0
    %7872 = vmatpush1.bf16.msra.mxu0 0
    %7873 = vmatprep.subr.bf16.mxu0 0
    %7874 = vmatpush1.bf16.msra.mxu0 0
    %7875 = vmatprep.subr.bf16.mxu0 0
    %7876 = vmatpush1.bf16.msra.mxu0 0
    %7877 = vmatprep.subr.bf16.mxu0 0
    %7878 = vmatpush1.bf16.msra.mxu0 0
    %7879 = vmatprep.subr.bf16.mxu0 0
    %7880 = vmatpush1.bf16.msra.mxu0 0
    %7881 = vmatprep.mubr.bf16.mxu0 0
    %7882 = vmatmul.mubr.bf16.gmra.mrb[0].mxu0 %v7779
    %v7883 = vpop.f32.mrb[0].mxu0
    %v7884 = vadd.f32 0.0, %v7883
    %v7885 = vpop.f32.mrb[0].mxu0
    %v7886 = vadd.f32 0.0, %v7885
    %v7887 = vpop.f32.mrb[0].mxu0
    %v7888 = vadd.f32 0.0, %v7887
    %v7889 = vpop.f32.mrb[0].mxu0
    %v7890 = vadd.f32 0.0, %v7889
    %7891 = vmatprep.mubr.bf16.mxu0 0
    %7892 = vmatmul.mubr.bf16.gmra.mrb[0].mxu0 %v7782
    %v7893 = vpop.f32.mrb[0].mxu0
    %v7894 = vadd.f32 0.0, %v7893
    %v7895 = vpop.f32.mrb[0].mxu0
    %v7896 = vadd.f32 0.0, %v7895
    %v7897 = vpop.f32.mrb[0].mxu0
    %v7898 = vadd.f32 0.0, %v7897
    %v7899 = vpop.f32.mrb[0].mxu0
    %v7900 = vadd.f32 0.0, %v7899
    %7901 = vdwg.mxu0
    %v7902 = vlaneseq
    %v7903 = vshrl.u32 %v7902, 7
    %v7904 = vsub.s32 7, %v7903
    %v7905 = vrot.slane %v6363, %v7904
    %v7906 = vlaneseq
    %v7907 = vshrl.u32 %v7906, 7
    %v7908 = vsub.s32 7, %v7907
    %v7909 = vrot.slane %v6364, %v7908
    %v7910 = vlaneseq
    %v7911 = vshrl.u32 %v7910, 7
    %v7912 = vsub.s32 7, %v7911
    %v7913 = vrot.slane %v6365, %v7912
    %v7914 = vlaneseq
    %v7915 = vshrl.u32 %v7914, 7
    %v7916 = vsub.s32 7, %v7915
    %v7917 = vrot.slane %v6366, %v7916
    %v7918 = vmul.f32 %v7831, %v7905
    %v7919 = vmul.f32 %v7833, %v7909
    %v7920 = vmul.f32 %v7884, %v7913
    %v7921 = vmul.f32 %v7886, %v7917
    %v7922 = vmul.f32 %v7835, %v7905
    %v7923 = vmul.f32 %v7837, %v7909
    %v7924 = vmul.f32 %v7888, %v7913
    %v7925 = vmul.f32 %v7890, %v7917
    %v7926 = vmul.f32 %v7841, %v7905
    %v7927 = vmul.f32 %v7843, %v7909
    %v7928 = vmul.f32 %v7894, %v7913
    %v7929 = vmul.f32 %v7896, %v7917
    %v7930 = vmul.f32 %v7845, %v7905
    %v7931 = vmul.f32 %v7847, %v7909
    %v7932 = vmul.f32 %v7898, %v7913
    %v7933 = vmul.f32 %v7900, %v7917
    %v7934 = vadd.f32 %v7731, %v7918
    %v7935 = vadd.f32 %v7732, %v7919
    %v7936 = vadd.f32 %v7733, %v7920
    %v7937 = vadd.f32 %v7734, %v7921
    %v7938 = vadd.f32 %v7735, %v7922
    %v7939 = vadd.f32 %v7736, %v7923
    %v7940 = vadd.f32 %v7737, %v7924
    %v7941 = vadd.f32 %v7738, %v7925
    %v7942 = vadd.f32 %v7739, %v7926
    %v7943 = vadd.f32 %v7740, %v7927
    %v7944 = vadd.f32 %v7741, %v7928
    %v7945 = vadd.f32 %v7742, %v7929
    %v7946 = vadd.f32 %v7743, %v7930
    %v7947 = vadd.f32 %v7744, %v7931
    %v7948 = vadd.f32 %v7745, %v7932
    %v7949 = vadd.f32 %v7746, %v7933
    %7950 = vrot.lane.b32.xlu0 %v6252, 111
    %v7951 = vpop.permute.xlu0 %7950
    %7952 = vrot.lane.b32.xlu0 %v6254, 111
    %v7953 = vpop.permute.xlu0 %7952
    %7954 = vrot.lane.b32.xlu0 %v6323, 111
    %v7955 = vpop.permute.xlu0 %7954
    %7956 = vrot.lane.b32.xlu0 %v6325, 111
    %v7957 = vpop.permute.xlu0 %7956
    %v7958 = vsel %vm1634, %v7951, %v7953
    %v7959 = vsel %vm1634, %v7953, %v7955
    %v7960 = vsel %vm1634, %v7955, %v7957
    %v7966 = vsel %vm1634, %v7957, %v7951
    %v7967 = vpack.c.bf16 %v7958, %v7958
    %v7968 = vpack.c.bf16 %v7959, %v7959
    %v7969 = vpack.c.bf16 %v7960, %v7960
    %v7970 = vpack.c.bf16 %v7966, %v7966
    %v7975 = vunpack.c.l.b16 %v6359
    %v7976 = vunpack.c.l.b16 %v6360
    %v7977 = vunpack.c.l.b16 %v6361
    %v7978 = vunpack.c.l.b16 %v6362
    %v7979 = vpack.c.b16 %v7976, %v7975
    %v7980 = vpack.c.b16 %v7978, %v7977
    %v7982 = vsel %vm2093, %v7979, 0
    %v7985 = vsel %vm2093, %v7980, 0
    %v7988 = vsel %vm2097, %v7967, 0
    %v7991 = vsel %vm2097, %v7968, 0
    %v7994 = vsel %vm2097, %v7969, 0
    %v7997 = vsel %vm2097, %v7970, 0
    %7999 = vmatprep.subr.bf16.mxu0 %v7991
    %8000 = vmatpush1.bf16.msra.mxu0 %v7988
    %8001 = vmatprep.subr.bf16.mxu0 0
    %8002 = vmatpush1.bf16.msra.mxu0 0
    %8003 = vmatprep.subr.bf16.mxu0 0
    %8004 = vmatpush1.bf16.msra.mxu0 0
    %8005 = vmatprep.subr.bf16.mxu0 0
    %8006 = vmatpush1.bf16.msra.mxu0 0
    %8007 = vmatprep.subr.bf16.mxu0 0
    %8008 = vmatpush1.bf16.msra.mxu0 0
    %8009 = vmatprep.subr.bf16.mxu0 0
    %8010 = vmatpush1.bf16.msra.mxu0 0
    %8011 = vmatprep.subr.bf16.mxu0 0
    %8012 = vmatpush1.bf16.msra.mxu0 0
    %8013 = vmatprep.subr.bf16.mxu0 0
    %8014 = vmatpush1.bf16.msra.mxu0 0
    %8015 = vmatprep.subr.bf16.mxu0 0
    %8016 = vmatpush1.bf16.msra.mxu0 0
    %8017 = vmatprep.subr.bf16.mxu0 0
    %8018 = vmatpush1.bf16.msra.mxu0 0
    %8019 = vmatprep.subr.bf16.mxu0 0
    %8020 = vmatpush1.bf16.msra.mxu0 0
    %8021 = vmatprep.subr.bf16.mxu0 0
    %8022 = vmatpush1.bf16.msra.mxu0 0
    %8023 = vmatprep.subr.bf16.mxu0 0
    %8024 = vmatpush1.bf16.msra.mxu0 0
    %8025 = vmatprep.subr.bf16.mxu0 0
    %8026 = vmatpush1.bf16.msra.mxu0 0
    %8027 = vmatprep.subr.bf16.mxu0 0
    %8028 = vmatpush1.bf16.msra.mxu0 0
    %8029 = vmatprep.subr.bf16.mxu0 0
    %8030 = vmatpush1.bf16.msra.mxu0 0
    %8031 = vmatprep.mubr.bf16.mxu0 0
    %8032 = vmatmul.mubr.bf16.gmra.mrb[0].mxu0 %v7982
    %v8033 = vpop.f32.mrb[0].mxu0
    %v8034 = vadd.f32 0.0, %v8033
    %v8035 = vpop.f32.mrb[0].mxu0
    %v8036 = vadd.f32 0.0, %v8035
    %v8037 = vpop.f32.mrb[0].mxu0
    %v8038 = vadd.f32 0.0, %v8037
    %v8039 = vpop.f32.mrb[0].mxu0
    %v8040 = vadd.f32 0.0, %v8039
    %8041 = vmatprep.mubr.bf16.mxu0 0
    %8042 = vmatmul.mubr.bf16.gmra.mrb[0].mxu0 %v7985
    %v8043 = vpop.f32.mrb[0].mxu0
    %v8044 = vadd.f32 0.0, %v8043
    %v8045 = vpop.f32.mrb[0].mxu0
    %v8046 = vadd.f32 0.0, %v8045
    %v8047 = vpop.f32.mrb[0].mxu0
    %v8048 = vadd.f32 0.0, %v8047
    %v8049 = vpop.f32.mrb[0].mxu0
    %v8050 = vadd.f32 0.0, %v8049
    %8051 = vdwg.mxu0
    %8052 = vmatprep.subr.bf16.mxu0 %v7997
    %8053 = vmatpush1.bf16.msra.mxu0 %v7994
    %8054 = vmatprep.subr.bf16.mxu0 0
    %8055 = vmatpush1.bf16.msra.mxu0 0
    %8056 = vmatprep.subr.bf16.mxu0 0
    %8057 = vmatpush1.bf16.msra.mxu0 0
    %8058 = vmatprep.subr.bf16.mxu0 0
    %8059 = vmatpush1.bf16.msra.mxu0 0
    %8060 = vmatprep.subr.bf16.mxu0 0
    %8061 = vmatpush1.bf16.msra.mxu0 0
    %8062 = vmatprep.subr.bf16.mxu0 0
    %8063 = vmatpush1.bf16.msra.mxu0 0
    %8064 = vmatprep.subr.bf16.mxu0 0
    %8065 = vmatpush1.bf16.msra.mxu0 0
    %8066 = vmatprep.subr.bf16.mxu0 0
    %8067 = vmatpush1.bf16.msra.mxu0 0
    %8068 = vmatprep.subr.bf16.mxu0 0
    %8069 = vmatpush1.bf16.msra.mxu0 0
    %8070 = vmatprep.subr.bf16.mxu0 0
    %8071 = vmatpush1.bf16.msra.mxu0 0
    %8072 = vmatprep.subr.bf16.mxu0 0
    %8073 = vmatpush1.bf16.msra.mxu0 0
    %8074 = vmatprep.subr.bf16.mxu0 0
    %8075 = vmatpush1.bf16.msra.mxu0 0
    %8076 = vmatprep.subr.bf16.mxu0 0
    %8077 = vmatpush1.bf16.msra.mxu0 0
    %8078 = vmatprep.subr.bf16.mxu0 0
    %8079 = vmatpush1.bf16.msra.mxu0 0
    %8080 = vmatprep.subr.bf16.mxu0 0
    %8081 = vmatpush1.bf16.msra.mxu0 0
    %8082 = vmatprep.subr.bf16.mxu0 0
    %8083 = vmatpush1.bf16.msra.mxu0 0
    %8084 = vmatprep.mubr.bf16.mxu0 0
    %8085 = vmatmul.mubr.bf16.gmra.mrb[0].mxu0 %v7982
    %v8086 = vpop.f32.mrb[0].mxu0
    %v8087 = vadd.f32 0.0, %v8086
    %v8088 = vpop.f32.mrb[0].mxu0
    %v8089 = vadd.f32 0.0, %v8088
    %v8090 = vpop.f32.mrb[0].mxu0
    %v8091 = vadd.f32 0.0, %v8090
    %v8092 = vpop.f32.mrb[0].mxu0
    %v8093 = vadd.f32 0.0, %v8092
    %8094 = vmatprep.mubr.bf16.mxu0 0
    %8095 = vmatmul.mubr.bf16.gmra.mrb[0].mxu0 %v7985
    %v8096 = vpop.f32.mrb[0].mxu0
    %v8097 = vadd.f32 0.0, %v8096
    %v8098 = vpop.f32.mrb[0].mxu0
    %v8099 = vadd.f32 0.0, %v8098
    %v8100 = vpop.f32.mrb[0].mxu0
    %v8101 = vadd.f32 0.0, %v8100
    %v8102 = vpop.f32.mrb[0].mxu0
    %v8103 = vadd.f32 0.0, %v8102
    %8104 = vdwg.mxu0
    %v8105 = vlaneseq
    %v8106 = vshrl.u32 %v8105, 7
    %v8107 = vsub.s32 0, %v8106
    %v8108 = vrot.slane %v6367, %v8107
    %v8109 = vlaneseq
    %v8110 = vshrl.u32 %v8109, 7
    %v8111 = vsub.s32 0, %v8110
    %v8112 = vrot.slane %v6368, %v8111
    %v8113 = vlaneseq
    %v8114 = vshrl.u32 %v8113, 7
    %v8115 = vsub.s32 0, %v8114
    %v8116 = vrot.slane %v6369, %v8115
    %v8117 = vlaneseq
    %v8118 = vshrl.u32 %v8117, 7
    %v8119 = vsub.s32 0, %v8118
    %v8120 = vrot.slane %v6370, %v8119
    %v8121 = vmul.f32 %v8034, %v8108
    %v8122 = vmul.f32 %v8036, %v8112
    %v8123 = vmul.f32 %v8087, %v8116
    %v8124 = vmul.f32 %v8089, %v8120
    %v8125 = vmul.f32 %v8038, %v8108
    %v8126 = vmul.f32 %v8040, %v8112
    %v8127 = vmul.f32 %v8091, %v8116
    %v8128 = vmul.f32 %v8093, %v8120
    %v8129 = vmul.f32 %v8044, %v8108
    %v8130 = vmul.f32 %v8046, %v8112
    %v8131 = vmul.f32 %v8097, %v8116
    %v8132 = vmul.f32 %v8099, %v8120
    %v8133 = vmul.f32 %v8048, %v8108
    %v8134 = vmul.f32 %v8050, %v8112
    %v8135 = vmul.f32 %v8101, %v8116
    %v8136 = vmul.f32 %v8103, %v8120
    %v8137 = vadd.f32 %v7934, %v8121
    %v8138 = vadd.f32 %v7935, %v8122
    %v8139 = vadd.f32 %v7936, %v8123
    %v8140 = vadd.f32 %v7937, %v8124
    %v8141 = vadd.f32 %v7938, %v8125
    %v8142 = vadd.f32 %v7939, %v8126
    %v8143 = vadd.f32 %v7940, %v8127
    %v8144 = vadd.f32 %v7941, %v8128
    %v8145 = vadd.f32 %v7942, %v8129
    %v8146 = vadd.f32 %v7943, %v8130
    %v8147 = vadd.f32 %v7944, %v8131
    %v8148 = vadd.f32 %v7945, %v8132
    %v8149 = vadd.f32 %v7946, %v8133
    %v8150 = vadd.f32 %v7947, %v8134
    %v8151 = vadd.f32 %v7948, %v8135
    %v8152 = vadd.f32 %v7949, %v8136
    %v8153 = vld [vmem:[%s47] sm:$0xff]
    %v8154 = vld [vmem:[%s47 + $0x8] sm:$0xff]
    %v8155 = vld [vmem:[%s47 + $0x10] sm:$0xff]
    %v8156 = vld [vmem:[%s47 + $0x18] sm:$0xff]
    %8158 = vset.pattern.permute.xlu0 0
    %8159 = vperm.xlu0 %8158, %v8153
    %v8160 = vpop.permute.xlu0 %8159
    %8163 = vset.pattern.permute.xlu0 0
    %8164 = vperm.xlu0 %8163, %v8154
    %v8165 = vpop.permute.xlu0 %8164
    %8168 = vset.pattern.permute.xlu0 0
    %8169 = vperm.xlu0 %8168, %v8155
    %v8170 = vpop.permute.xlu0 %8169
    %8173 = vset.pattern.permute.xlu0 0
    %8174 = vperm.xlu0 %8173, %v8156
    %v8175 = vpop.permute.xlu0 %8174
    %v8177 = vadd.f32 %v8137, %v8160
    %v8178 = vadd.f32 %v8138, %v8160
    %v8179 = vadd.f32 %v8139, %v8160
    %v8180 = vadd.f32 %v8140, %v8160
    %v8181 = vadd.f32 %v8141, %v8165
    %v8182 = vadd.f32 %v8142, %v8165
    %v8183 = vadd.f32 %v8143, %v8165
    %v8184 = vadd.f32 %v8144, %v8165
    %v8185 = vadd.f32 %v8145, %v8170
    %v8186 = vadd.f32 %v8146, %v8170
    %v8187 = vadd.f32 %v8147, %v8170
    %v8188 = vadd.f32 %v8148, %v8170
    %v8189 = vadd.f32 %v8149, %v8175
    %v8190 = vadd.f32 %v8150, %v8175
    %v8191 = vadd.f32 %v8151, %v8175
    %v8192 = vadd.f32 %v8152, %v8175
    %v8193 = vmax.f32 %v8177, 0.0
    %v8194 = vmax.f32 %v8178, 0.0
    %v8195 = vmax.f32 %v8179, 0.0
    %v8196 = vmax.f32 %v8180, 0.0
    %v8197 = vmax.f32 %v8181, 0.0
    %v8198 = vmax.f32 %v8182, 0.0
    %v8199 = vmax.f32 %v8183, 0.0
    %v8200 = vmax.f32 %v8184, 0.0
    %v8201 = vmax.f32 %v8185, 0.0
    %v8202 = vmax.f32 %v8186, 0.0
    %v8203 = vmax.f32 %v8187, 0.0
    %v8204 = vmax.f32 %v8188, 0.0
    %v8205 = vmax.f32 %v8189, 0.0
    %v8206 = vmax.f32 %v8190, 0.0
    %v8207 = vmax.f32 %v8191, 0.0
    %v8208 = vmax.f32 %v8192, 0.0
    %v8209 = vadd.f32 %v8193, %v153
    %v8210 = vadd.f32 %v8194, %v154
    %v8211 = vadd.f32 %v8195, %v155
    %v8212 = vadd.f32 %v8196, %v156
    %v8213 = vadd.f32 %v8197, %v157
    %v8214 = vadd.f32 %v8198, %v158
    %v8215 = vadd.f32 %v8199, %v159
    %v8216 = vadd.f32 %v8200, %v160
    %v8217 = vadd.f32 %v8201, %v161
    %v8218 = vadd.f32 %v8202, %v162
    %v8219 = vadd.f32 %v8203, %v163
    %v8220 = vadd.f32 %v8204, %v164
    %v8221 = vadd.f32 %v8205, %v165
    %v8222 = vadd.f32 %v8206, %v166
    %v8223 = vadd.f32 %v8207, %v167
    %v8224 = vadd.f32 %v8208, %v168
    %8225 = vst [vmem:[%s67] sm:$0xff] %v8209
    %8226 = vst [vmem:[%s67 + $0x8] sm:$0xff] %v8210
    %8227 = vst [vmem:[%s67 + $0x10] sm:$0xff] %v8211
    %8228 = vst [vmem:[%s67 + $0x18] sm:$0xff] %v8212
    %8229 = vst [vmem:[%s67 + $0x20] sm:$0xff] %v8213
    %8230 = vst [vmem:[%s67 + $0x28] sm:$0xff] %v8214
    %8231 = vst [vmem:[%s67 + $0x30] sm:$0xff] %v8215
    %8232 = vst [vmem:[%s67 + $0x38] sm:$0xff] %v8216
    %8233 = vst [vmem:[%s67 + $0x40] sm:$0xff] %v8217
    %8234 = vst [vmem:[%s67 + $0x48] sm:$0xff] %v8218
    %8235 = vst [vmem:[%s67 + $0x50] sm:$0xff] %v8219
    %8236 = vst [vmem:[%s67 + $0x58] sm:$0xff] %v8220
    %8237 = vst [vmem:[%s67 + $0x60] sm:$0xff] %v8221
    %8238 = vst [vmem:[%s67 + $0x68] sm:$0xff] %v8222
    %8239 = vst [vmem:[%s67 + $0x70] sm:$0xff] %v8223
    %8240 = vst [vmem:[%s67 + $0x78] sm:$0xff] %v8224
    // Predicated region
    $region138: #{_lambda_.1} parent=1 // pred_check
      _
    $region139: #{_lambda_.1} parent=1 // pred_check_branch
      %8242 = sbr.rel (0) target = $region141
    $region140: #{_lambda_.1} parent=1 // pred_region
      _
    $region141: #{_lambda_.1} parent=1 // pred_fallthru
      _
    // Predicated region
    $region142: #{_lambda_.1} parent=1 // pred_check
      _
    $region143: #{_lambda_.1} parent=1 // pred_check_branch
      %8244 = sbr.rel (0) target = $region145
    $region144: #{_lambda_.1} parent=1 // pred_region
      _
    $region145: #{_lambda_.1} parent=1 // pred_fallthru
      _
    %8245 = vsyncpa [#allocation3], 1

</llo_original>
